<compile_context>
chip_gen: v7x
topology: tpu7x:2x2x1
jax: 0.10.0
libtpu: 0.0.40
codegen_flags: <defaults>
</compile_context>

<pallas_src>
import math
import numpy as np
import jax
import jax.numpy as jnp
from jax.experimental import pallas as pl
from jax.experimental.pallas import tpu as pltpu

# ---------------- configuration (small, consistent with the module) ----------
VOCAB = 50        # vocab_size
D     = 32        # embedding_dimension
H     = 4         # num_heads
HD    = D // H    # head dim
FF    = 64        # feedforward_internal_dimension
S     = 8         # full_sequence_length (decoder)
SE    = 8         # encoder sequence length
B     = 2         # batch
NUM_LAYERS = 2    # num_decoder_layers
LN_EPS = 1e-5     # torch.nn.LayerNorm default
SCALE  = 1.0 / math.sqrt(HD)


# ---------------- in-kernel helpers ------------------------------------------
def _layernorm(v, g, b):
    mu = jnp.mean(v, axis=-1, keepdims=True)
    var = jnp.mean((v - mu) ** 2, axis=-1, keepdims=True)
    return (v - mu) * jax.lax.rsqrt(var + LN_EPS) * g + b


def _softmax(x):
    m = jnp.max(x, axis=-1, keepdims=True)
    e = jnp.exp(x - m)
    return e * pl.reciprocal(jnp.sum(e, axis=-1, keepdims=True), approx=True)


def _proj_heads(x_h, w, b):
    """x_h: (Hn, S, D), w: (Hn, D, HD), b: (Hn, 1, HD) -> (Hn, S, HD)."""
    return jnp.einsum('hsd,hdk->hsk', x_h, w,
                      preferred_element_type=jnp.float32) + b


def _attend(q, k, v, wo, bo, mask):
    """q: (H,Sq,HD)  k,v: (H,Sk,HD)  wo: (H,HD,D)  bo: (1,D)  mask: (Sq,Sk)."""
    s = jnp.einsum('hqd,hkd->hqk', q, k,
                   preferred_element_type=jnp.float32) * SCALE + mask
    p = _softmax(s)
    o = jnp.einsum('hqk,hkd->hqd', p, v, preferred_element_type=jnp.float32)
    # per-head output projection, then reduce over heads (== concat @ Wo)
    oo = jnp.einsum('hsd,hde->hse', o, wo, preferred_element_type=jnp.float32)
    return jnp.sum(oo, axis=0) + bo


# ---------------- fused decoder-stack kernel (all layers, one batch item) ----
def decoder_stack_kernel(
    x_ref, enc_ref, smask_ref, cmask_ref,
    wqkv_s_ref, bqkv_s_ref, wo_s_ref, bo_s_ref,
    wqkv_c_ref, bqkv_c_ref, wo_c_ref, bo_c_ref,
    w1_ref, b1_ref, w2_ref, b2_ref,
    lng_ref, lnb_ref,
    out_ref,
):
    y = x_ref[0]                                        # (S, D)  f32
    enc_kv_h = jnp.broadcast_to(enc_ref[0], (2 * H, SE, D))   # hoisted out of loop
    smask = smask_ref[...]                              # (S, S)
    cmask = cmask_ref[...]                              # (S, SE)

    for l in range(NUM_LAYERS):                         # static unroll; weights stay in VMEM
        lng = lng_ref[l]                                # (3, 1, D)
        lnb = lnb_ref[l]

        # --- masked multi-head self-attention + dropout(id) + residual + LN1 ---
        qkv = _proj_heads(jnp.broadcast_to(y, (3 * H, S, D)),
                          wqkv_s_ref[l], bqkv_s_ref[l])          # (3H, S, HD)
        att = _attend(qkv[:H], qkv[H:2 * H], qkv[2 * H:],
                      wo_s_ref[l], bo_s_ref[l], smask)
        y = _layernorm(att + y, lng[0], lnb[0])

        # --- multi-head cross-attention (K,V from encoder) + residual + LN2 ---
        qc = _proj_heads(jnp.broadcast_to(y, (H, S, D)),
                         wqkv_c_ref[l][:H], bqkv_c_ref[l][:H])   # (H, S, HD)
        kvc = _proj_heads(enc_kv_h,
                          wqkv_c_ref[l][H:], bqkv_c_ref[l][H:])  # (2H, SE, HD)
        attc = _attend(qc, kvc[:H], kvc[H:],
                       wo_c_ref[l], bo_c_ref[l], cmask)
        y = _layernorm(attc + y, lng[1], lnb[1])

        # --- feed-forward (Linear -> ReLU -> Linear) + residual + LN3 ---
        hdn = jnp.dot(y, w1_ref[l], preferred_element_type=jnp.float32) + b1_ref[l]
        hdn = jnp.maximum(hdn, 0.0)
        ff = jnp.dot(hdn, w2_ref[l], preferred_element_type=jnp.float32) + b2_ref[l]
        y = _layernorm(ff + y, lng[2], lnb[2])

    out_ref[...] = y[None].astype(out_ref.dtype)


def run_decoder_stack(x, enc, smask, cmask, packed):
    def rep(a):  # full-array block, constant index (not re-fetched across grid steps)
        nd = a.ndim
        return pl.BlockSpec(a.shape, lambda b, _nd=nd: (0,) * _nd)

    in_specs = [
        pl.BlockSpec((1, S, D), lambda b: (b, 0, 0)),    # x (per-batch)
        pl.BlockSpec((1, SE, D), lambda b: (b, 0, 0)),   # encoder output (per-batch)
        rep(smask), rep(cmask),
    ] + [rep(a) for a in packed]

    return pl.pallas_call(
        decoder_stack_kernel,
        out_shape=jax.ShapeDtypeStruct((B, S, D), jnp.float32),
        grid_spec=pltpu.PrefetchScalarGridSpec(
            num_scalar_prefetch=0,
            grid=(B,),                                   # one batch item per TC on megacore
            in_specs=in_specs,
            out_specs=pl.BlockSpec((1, S, D), lambda b: (b, 0, 0)),
        ),
        compiler_params=pltpu.CompilerParams(dimension_semantics=("parallel",)),
    )(x, enc, smask, cmask, *packed)


# ---------------- parameter packing (torch-style -> stacked per-head) --------
def pack_layer_params(layer_params):
    """Stack per-layer params and pre-split attention weights per head so the
    kernel needs no unaligned lane slices of activations."""
    outs = [[] for _ in range(14)]
    for p in layer_params:
        (wqkv_s, bqkv_s, wo_s, bo_s, wq_c, bq_c, wkv_c, bkv_c, wo_c, bo_c,
         w1, b1, w2, b2, g1, be1, g2, be2, g3, be3) = p

        def wh(w):   # (D, D) -> (H, D, HD): columns split per head
            return w.reshape(D, H, HD).transpose(1, 0, 2)

        def bh(b):   # (1, D) -> (H, 1, HD)
            return b.reshape(H, HD)[:, None, :]

        w_s = jnp.stack([wh(wqkv_s[:, :D]), wh(wqkv_s[:, D:2 * D]),
                         wh(wqkv_s[:, 2 * D:])]).reshape(3 * H, D, HD)
        b_s = jnp.stack([bh(bqkv_s[:, :D]), bh(bqkv_s[:, D:2 * D]),
                         bh(bqkv_s[:, 2 * D:])]).reshape(3 * H, 1, HD)
        w_c = jnp.stack([wh(wq_c), wh(wkv_c[:, :D]),
                         wh(wkv_c[:, D:])]).reshape(3 * H, D, HD)
        b_c = jnp.stack([bh(bq_c), bh(bkv_c[:, :D]),
                         bh(bkv_c[:, D:])]).reshape(3 * H, 1, HD)

        vals = [
            w_s, b_s, wo_s.reshape(H, HD, D), bo_s,
            w_c, b_c, wo_c.reshape(H, HD, D), bo_c,
            w1, b1, w2, b2,
            jnp.stack([g1, g2, g3]), jnp.stack([be1, be2, be3]),
        ]
        for lst, v in zip(outs, vals):
            lst.append(v)
    return tuple(jnp.stack(lst) for lst in outs)


# ---------------- plain-JAX glue: embedding, positional encoding, params -----
# TODO(synk): token-embedding gather + positional-encoding table stay in plain
# JAX (HBM gather at this size has no useful Pallas formulation).
def positional_encoding(seq_len, d):
    pos = jnp.arange(seq_len, dtype=jnp.float32)[:, None]
    i = jnp.arange(0, d, 2, dtype=jnp.float32)[None, :]
    angle = pos / jnp.power(10000.0, i / d)
    pe = jnp.zeros((seq_len, d), jnp.float32)
    pe = pe.at[:, 0::2].set(jnp.sin(angle))
    pe = pe.at[:, 1::2].set(jnp.cos(angle))
    return pe


def init_layer_params(key):
    ks = jax.random.split(key, 6)
    w = lambda k, shape: (0.02 * jax.random.normal(k, shape)).astype(jnp.float32)
    zeros = lambda shape: jnp.zeros(shape, jnp.float32)
    ones = lambda shape: jnp.ones(shape, jnp.float32)
    return (
        w(ks[0], (D, 3 * D)), zeros((1, 3 * D)), w(ks[1], (D, D)), zeros((1, D)),   # self-attn
        w(ks[2], (D, D)), zeros((1, D)), w(ks[3], (D, 2 * D)), zeros((1, 2 * D)),   # cross q / kv
        w(ks[4], (D, D)), zeros((1, D)),                                            # cross out
        w(ks[5], (D, FF)), zeros((1, FF)),
        (0.02 * jax.random.normal(jax.random.fold_in(key, 7), (FF, D))).astype(jnp.float32),
        zeros((1, D)),                                                              # feed-forward
        ones((1, D)), zeros((1, D)), ones((1, D)), zeros((1, D)),                   # ln1, ln2
        ones((1, D)), zeros((1, D)),                                                # ln3
    )


# ---------------- pure-JAX reference for verification -------------------------
def ref_layer(x, enc, smask, cmask, p):
    (wqkv_s, bqkv_s, wo_s, bo_s, wq_c, bq_c, wkv_c, bkv_c, wo_c, bo_c,
     w1, b1, w2, b2, g1, be1, g2, be2, g3, be3) = p
    hp = jax.lax.Precision.HIGHEST

    def ln(v, g, b):
        mu = v.mean(-1, keepdims=True)
        var = ((v - mu) ** 2).mean(-1, keepdims=True)
        return (v - mu) / jnp.sqrt(var + LN_EPS) * g + b

    def mha(q, k, v, mask):
        qh = q.reshape(*q.shape[:-1], H, HD)
        kh = k.reshape(*k.shape[:-1], H, HD)
        vh = v.reshape(*v.shape[:-1], H, HD)
        sc = jnp.einsum("bqhd,bkhd->bhqk", qh, kh, precision=hp) / math.sqrt(HD) + mask
        pr = jax.nn.softmax(sc, axis=-1)
        o = jnp.einsum("bhqk,bkhd->bqhd", pr, vh, precision=hp)
        return o.reshape(*q.shape)

    qkv = jnp.einsum("bsd,de->bse", x, wqkv_s, precision=hp) + bqkv_s
    a = mha(qkv[..., :D], qkv[..., D:2 * D], qkv[..., 2 * D:], smask)
    a = jnp.einsum("bsd,de->bse", a, wo_s, precision=hp) + bo_s
    y = ln(a + x, g1, be1)

    qc = jnp.einsum("bsd,de->bse", y, wq_c, precision=hp) + bq_c
    kv = jnp.einsum("bsd,de->bse", enc, wkv_c, precision=hp) + bkv_c
    a = mha(qc, kv[..., :D], kv[..., D:], cmask)
    a = jnp.einsum("bsd,de->bse", a, wo_c, precision=hp) + bo_c
    y2 = ln(a + y, g2, be2)

    hdn = jnp.maximum(jnp.einsum("bsd,df->bsf", y2, w1, precision=hp) + b1, 0.0)
    ff = jnp.einsum("bsf,fd->bsd", hdn, w2, precision=hp) + b2
    return ln(ff + y2, g3, be3)


# ---------------- full Decoder forward ----------------------------------------
def decoder_forward(encoder_output, tokens, self_mask, cross_mask, emb_table, packed_params):
    y = emb_table[tokens]                                  # token embedding (gather, glue)
    y = y + positional_encoding(S, D)[None]                # + positional encoding
    # embedding_dropout / per-layer dropouts -> identity (inference)
    return run_decoder_stack(y, encoder_output, self_mask, cross_mask, packed_params)


if __name__ == "__main__":
    root = jax.random.PRNGKey(0)
    k_emb, k_enc, k_tok, k_layers = jax.random.split(root, 4)

    emb_table = (0.02 * jax.random.normal(k_emb, (VOCAB, D))).astype(jnp.float32)
    tokens = jax.random.randint(k_tok, (B, S), 0, VOCAB)
    encoder_output = jax.random.normal(k_enc, (B, SE, D), jnp.float32)

    # additive masks: causal for self-attention, all-visible for cross-attention
    causal = jnp.where(jnp.tril(jnp.ones((S, S), jnp.bool_)), 0.0, -1e9).astype(jnp.float32)
    cross_mask = jnp.zeros((S, SE), jnp.float32)

    layer_params = [init_layer_params(k) for k in jax.random.split(k_layers, NUM_LAYERS)]
    packed_params = pack_layer_params(layer_params)

    out = decoder_forward(encoder_output, tokens, causal, cross_mask, emb_table, packed_params)
    out = jax.block_until_ready(out)
    assert out.shape == (B, S, D)

    # pure-JAX reference check (original torch-style parameter layout)
    y_ref = emb_table[tokens] + positional_encoding(S, D)[None]
    smask_b = causal[None, None]
    cmask_b = cross_mask[None, None]
    for p in layer_params:
        y_ref = ref_layer(y_ref, encoder_output, smask_b, cmask_b, p)
    np.testing.assert_allclose(np.asarray(out), np.asarray(y_ref), atol=1e-2, rtol=1e-2)

    print("KERNEL_OK")
</pallas_src>

<mosaic_0001>
module attributes {stable_mosaic.version = 11 : i64} {
  func.func @decoder_stack_kernel(%arg0: i32, %arg1: memref<1x8x32xf32, #tpu.memory_space<vmem>>, %arg2: memref<1x8x32xf32, #tpu.memory_space<vmem>>, %arg3: memref<8x8xf32, #tpu.memory_space<vmem>>, %arg4: memref<8x8xf32, #tpu.memory_space<vmem>>, %arg5: memref<2x12x32x8xf32, #tpu.memory_space<vmem>>, %arg6: memref<2x12x1x8xf32, #tpu.memory_space<vmem>>, %arg7: memref<2x4x8x32xf32, #tpu.memory_space<vmem>>, %arg8: memref<2x1x32xf32, #tpu.memory_space<vmem>>, %arg9: memref<2x12x32x8xf32, #tpu.memory_space<vmem>>, %arg10: memref<2x12x1x8xf32, #tpu.memory_space<vmem>>, %arg11: memref<2x4x8x32xf32, #tpu.memory_space<vmem>>, %arg12: memref<2x1x32xf32, #tpu.memory_space<vmem>>, %arg13: memref<2x32x64xf32, #tpu.memory_space<vmem>>, %arg14: memref<2x1x64xf32, #tpu.memory_space<vmem>>, %arg15: memref<2x64x32xf32, #tpu.memory_space<vmem>>, %arg16: memref<2x1x32xf32, #tpu.memory_space<vmem>>, %arg17: memref<2x3x1x32xf32, #tpu.memory_space<vmem>>, %arg18: memref<2x3x1x32xf32, #tpu.memory_space<vmem>>, %arg19: memref<1x8x32xf32, #tpu.memory_space<vmem>>) attributes {dimension_semantics = [#tpu.dimension_semantics<parallel>], iteration_bounds = array<i64: 2>, scalar_prefetch = 0 : i64, scratch_operands = 0 : i64, tpu.core_type = #tpu.core_type<tc>, window_params = [{transform_indices = @transform_0, window_bounds = array<i64: 1, 8, 32>}, {transform_indices = @transform_1, window_bounds = array<i64: 1, 8, 32>}, {pipeline_mode = #tpu.pipeline_mode<synchronous>, transform_indices = @transform_2, window_bounds = array<i64: 8, 8>}, {pipeline_mode = #tpu.pipeline_mode<synchronous>, transform_indices = @transform_3, window_bounds = array<i64: 8, 8>}, {pipeline_mode = #tpu.pipeline_mode<synchronous>, transform_indices = @transform_4, window_bounds = array<i64: 2, 12, 32, 8>}, {pipeline_mode = #tpu.pipeline_mode<synchronous>, transform_indices = @transform_5, window_bounds = array<i64: 2, 12, 1, 8>}, {pipeline_mode = #tpu.pipeline_mode<synchronous>, transform_indices = @transform_6, window_bounds = array<i64: 2, 4, 8, 32>}, {pipeline_mode = #tpu.pipeline_mode<synchronous>, transform_indices = @transform_7, window_bounds = array<i64: 2, 1, 32>}, {pipeline_mode = #tpu.pipeline_mode<synchronous>, transform_indices = @transform_8, window_bounds = array<i64: 2, 12, 32, 8>}, {pipeline_mode = #tpu.pipeline_mode<synchronous>, transform_indices = @transform_9, window_bounds = array<i64: 2, 12, 1, 8>}, {pipeline_mode = #tpu.pipeline_mode<synchronous>, transform_indices = @transform_10, window_bounds = array<i64: 2, 4, 8, 32>}, {pipeline_mode = #tpu.pipeline_mode<synchronous>, transform_indices = @transform_11, window_bounds = array<i64: 2, 1, 32>}, {pipeline_mode = #tpu.pipeline_mode<synchronous>, transform_indices = @transform_12, window_bounds = array<i64: 2, 32, 64>}, {pipeline_mode = #tpu.pipeline_mode<synchronous>, transform_indices = @transform_13, window_bounds = array<i64: 2, 1, 64>}, {pipeline_mode = #tpu.pipeline_mode<synchronous>, transform_indices = @transform_14, window_bounds = array<i64: 2, 64, 32>}, {pipeline_mode = #tpu.pipeline_mode<synchronous>, transform_indices = @transform_15, window_bounds = array<i64: 2, 1, 32>}, {pipeline_mode = #tpu.pipeline_mode<synchronous>, transform_indices = @transform_16, window_bounds = array<i64: 2, 3, 1, 32>}, {pipeline_mode = #tpu.pipeline_mode<synchronous>, transform_indices = @transform_17, window_bounds = array<i64: 2, 3, 1, 32>}, {transform_indices = @transform_18, window_bounds = array<i64: 1, 8, 32>}]} {
    %c0 = arith.constant 0 : index
    %c0_0 = arith.constant 0 : index
    %c0_1 = arith.constant 0 : index
    %0 = vector.load %arg1[%c0, %c0_0, %c0_1] : memref<1x8x32xf32, #tpu.memory_space<vmem>>, vector<1x8x32xf32>
    %1 = vector.shape_cast %0 : vector<1x8x32xf32> to vector<8x32xf32>
    %c0_2 = arith.constant 0 : index
    %c0_3 = arith.constant 0 : index
    %c0_4 = arith.constant 0 : index
    %2 = vector.load %arg2[%c0_2, %c0_3, %c0_4] : memref<1x8x32xf32, #tpu.memory_space<vmem>>, vector<1x8x32xf32>
    %3 = vector.shape_cast %2 : vector<1x8x32xf32> to vector<8x32xf32>
    %4 = vector.shape_cast %3 : vector<8x32xf32> to vector<1x8x32xf32>
    %5 = vector.broadcast %4 : vector<1x8x32xf32> to vector<8x8x32xf32>
    %c0_5 = arith.constant 0 : index
    %c0_6 = arith.constant 0 : index
    %6 = vector.load %arg3[%c0_5, %c0_6] : memref<8x8xf32, #tpu.memory_space<vmem>>, vector<8x8xf32>
    %c0_7 = arith.constant 0 : index
    %c0_8 = arith.constant 0 : index
    %7 = vector.load %arg4[%c0_7, %c0_8] : memref<8x8xf32, #tpu.memory_space<vmem>>, vector<8x8xf32>
    %c0_9 = arith.constant 0 : index
    %c0_10 = arith.constant 0 : index
    %c0_11 = arith.constant 0 : index
    %c0_12 = arith.constant 0 : index
    %8 = vector.load %arg17[%c0_9, %c0_10, %c0_11, %c0_12] : memref<2x3x1x32xf32, #tpu.memory_space<vmem>>, vector<1x3x1x32xf32>
    %9 = vector.shape_cast %8 : vector<1x3x1x32xf32> to vector<3x1x32xf32>
    %c0_13 = arith.constant 0 : index
    %c0_14 = arith.constant 0 : index
    %c0_15 = arith.constant 0 : index
    %c0_16 = arith.constant 0 : index
    %10 = vector.load %arg18[%c0_13, %c0_14, %c0_15, %c0_16] : memref<2x3x1x32xf32, #tpu.memory_space<vmem>>, vector<1x3x1x32xf32>
    %11 = vector.shape_cast %10 : vector<1x3x1x32xf32> to vector<3x1x32xf32>
    %12 = vector.shape_cast %1 : vector<8x32xf32> to vector<1x8x32xf32>
    %13 = vector.broadcast %12 : vector<1x8x32xf32> to vector<12x8x32xf32>
    %c0_17 = arith.constant 0 : index
    %c0_18 = arith.constant 0 : index
    %c0_19 = arith.constant 0 : index
    %c0_20 = arith.constant 0 : index
    %14 = vector.load %arg5[%c0_17, %c0_18, %c0_19, %c0_20] : memref<2x12x32x8xf32, #tpu.memory_space<vmem>>, vector<1x12x32x8xf32>
    %15 = vector.shape_cast %14 : vector<1x12x32x8xf32> to vector<12x32x8xf32>
    %c0_21 = arith.constant 0 : index
    %c0_22 = arith.constant 0 : index
    %c0_23 = arith.constant 0 : index
    %c0_24 = arith.constant 0 : index
    %16 = vector.load %arg6[%c0_21, %c0_22, %c0_23, %c0_24] : memref<2x12x1x8xf32, #tpu.memory_space<vmem>>, vector<1x12x1x8xf32>
    %17 = vector.shape_cast %16 : vector<1x12x1x8xf32> to vector<12x1x8xf32>
    "tpu.trace_start"() <{level = 10 : i32, message = "hsd,hdk->hsk"}> : () -> ()
    %cst = arith.constant dense<0.000000e+00> : vector<12x8x8xf32>
    %18 = tpu.matmul %13, %15, %cst {dimension_numbers = #tpu.dot_dimension_numbers<[2], [1], [1], [2], [0, 0, 0, 1, 1, 2], [0], [0]>} : vector<12x8x32xf32>, vector<12x32x8xf32>, vector<12x8x8xf32> -> vector<12x8x8xf32>
    "tpu.trace_stop"() : () -> ()
    %19 = vector.broadcast %17 : vector<12x1x8xf32> to vector<12x8x8xf32>
    %20 = arith.addf %18, %19 : vector<12x8x8xf32>
    %21 = vector.extract_strided_slice %20 {offsets = [0, 0, 0], sizes = [4, 8, 8], strides = [1, 1, 1]} : vector<12x8x8xf32> to vector<4x8x8xf32>
    %22 = vector.extract_strided_slice %20 {offsets = [4, 0, 0], sizes = [4, 8, 8], strides = [1, 1, 1]} : vector<12x8x8xf32> to vector<4x8x8xf32>
    %23 = vector.extract_strided_slice %20 {offsets = [8, 0, 0], sizes = [4, 8, 8], strides = [1, 1, 1]} : vector<12x8x8xf32> to vector<4x8x8xf32>
    %c0_25 = arith.constant 0 : index
    %c0_26 = arith.constant 0 : index
    %c0_27 = arith.constant 0 : index
    %c0_28 = arith.constant 0 : index
    %24 = vector.load %arg7[%c0_25, %c0_26, %c0_27, %c0_28] : memref<2x4x8x32xf32, #tpu.memory_space<vmem>>, vector<1x4x8x32xf32>
    %25 = vector.shape_cast %24 : vector<1x4x8x32xf32> to vector<4x8x32xf32>
    %c0_29 = arith.constant 0 : index
    %c0_30 = arith.constant 0 : index
    %c0_31 = arith.constant 0 : index
    %26 = vector.load %arg8[%c0_29, %c0_30, %c0_31] : memref<2x1x32xf32, #tpu.memory_space<vmem>>, vector<1x1x32xf32>
    %27 = vector.shape_cast %26 : vector<1x1x32xf32> to vector<1x32xf32>
    "tpu.trace_start"() <{level = 10 : i32, message = "hqd,hkd->hqk"}> : () -> ()
    %cst_32 = arith.constant dense<0.000000e+00> : vector<4x8x8xf32>
    %28 = tpu.matmul %21, %22, %cst_32 {dimension_numbers = #tpu.dot_dimension_numbers<[2], [2], [1], [1], [0, 0, 0, 1, 1, 1], [0], [0]>} : vector<4x8x8xf32>, vector<4x8x8xf32>, vector<4x8x8xf32> -> vector<4x8x8xf32>
    "tpu.trace_stop"() : () -> ()
    %cst_33 = arith.constant 0.353553385 : f32
    %29 = vector.broadcast %cst_33 : f32 to vector<4x8x8xf32>
    %30 = arith.mulf %28, %29 : vector<4x8x8xf32>
    %31 = vector.shape_cast %6 : vector<8x8xf32> to vector<1x8x8xf32>
    %32 = vector.broadcast %31 : vector<1x8x8xf32> to vector<4x8x8xf32>
    %33 = arith.addf %30, %32 : vector<4x8x8xf32>
    %cst_34 = arith.constant dense<0xFF800000> : vector<4x8xf32>
    %34 = vector.multi_reduction <maximumf>, %33, %cst_34 [2] : vector<4x8x8xf32> to vector<4x8xf32>
    %35 = vector.shape_cast %34 : vector<4x8xf32> to vector<4x8x1xf32>
    %36 = vector.broadcast %35 : vector<4x8x1xf32> to vector<4x8x8xf32>
    %37 = arith.subf %33, %36 : vector<4x8x8xf32>
    %38 = math.exp %37 : vector<4x8x8xf32>
    %cst_35 = arith.constant dense<0.000000e+00> : vector<4x8xf32>
    %39 = vector.multi_reduction <add>, %38, %cst_35 [2] : vector<4x8x8xf32> to vector<4x8xf32>
    %40 = vector.shape_cast %39 : vector<4x8xf32> to vector<4x8x1xf32>
    %41 = tpu.reciprocal %40 {approx = true} : vector<4x8x1xf32> -> vector<4x8x1xf32>
    %42 = vector.broadcast %41 : vector<4x8x1xf32> to vector<4x8x8xf32>
    %43 = arith.mulf %38, %42 : vector<4x8x8xf32>
    "tpu.trace_start"() <{level = 10 : i32, message = "hqk,hkd->hqd"}> : () -> ()
    %cst_36 = arith.constant dense<0.000000e+00> : vector<4x8x8xf32>
    %44 = tpu.matmul %43, %23, %cst_36 {dimension_numbers = #tpu.dot_dimension_numbers<[2], [1], [1], [2], [0, 0, 0, 1, 1, 2], [0], [0]>} : vector<4x8x8xf32>, vector<4x8x8xf32>, vector<4x8x8xf32> -> vector<4x8x8xf32>
    "tpu.trace_stop"() : () -> ()
    "tpu.trace_start"() <{level = 10 : i32, message = "hsd,hde->hse"}> : () -> ()
    %cst_37 = arith.constant dense<0.000000e+00> : vector<4x8x32xf32>
    %45 = tpu.matmul %44, %25, %cst_37 {dimension_numbers = #tpu.dot_dimension_numbers<[2], [1], [1], [2], [0, 0, 0, 1, 1, 2], [0], [0]>} : vector<4x8x8xf32>, vector<4x8x32xf32>, vector<4x8x32xf32> -> vector<4x8x32xf32>
    "tpu.trace_stop"() : () -> ()
    %cst_38 = arith.constant dense<0.000000e+00> : vector<8x32xf32>
    %46 = vector.multi_reduction <add>, %45, %cst_38 [0] : vector<4x8x32xf32> to vector<8x32xf32>
    %47 = vector.broadcast %27 : vector<1x32xf32> to vector<8x32xf32>
    %48 = arith.addf %46, %47 : vector<8x32xf32>
    %49 = arith.addf %48, %1 : vector<8x32xf32>
    %50 = vector.extract_strided_slice %9 {offsets = [0, 0, 0], sizes = [1, 1, 32], strides = [1, 1, 1]} : vector<3x1x32xf32> to vector<1x1x32xf32>
    %51 = vector.shape_cast %50 : vector<1x1x32xf32> to vector<1x32xf32>
    %52 = vector.extract_strided_slice %11 {offsets = [0, 0, 0], sizes = [1, 1, 32], strides = [1, 1, 1]} : vector<3x1x32xf32> to vector<1x1x32xf32>
    %53 = vector.shape_cast %52 : vector<1x1x32xf32> to vector<1x32xf32>
    %cst_39 = arith.constant dense<0.000000e+00> : vector<8xf32>
    %54 = vector.multi_reduction <add>, %49, %cst_39 [1] : vector<8x32xf32> to vector<8xf32>
    %55 = vector.shape_cast %54 : vector<8xf32> to vector<8x1xf32>
    %cst_40 = arith.constant 3.200000e+01 : f32
    %56 = vector.broadcast %cst_40 : f32 to vector<8x1xf32>
    %57 = arith.divf %55, %56 : vector<8x1xf32>
    %58 = vector.broadcast %57 : vector<8x1xf32> to vector<8x32xf32>
    %59 = arith.subf %49, %58 : vector<8x32xf32>
    %60 = arith.mulf %59, %59 : vector<8x32xf32>
    %cst_41 = arith.constant dense<0.000000e+00> : vector<8xf32>
    %61 = vector.multi_reduction <add>, %60, %cst_41 [1] : vector<8x32xf32> to vector<8xf32>
    %62 = vector.shape_cast %61 : vector<8xf32> to vector<8x1xf32>
    %cst_42 = arith.constant 3.200000e+01 : f32
    %63 = vector.broadcast %cst_42 : f32 to vector<8x1xf32>
    %64 = arith.divf %62, %63 : vector<8x1xf32>
    %65 = vector.broadcast %57 : vector<8x1xf32> to vector<8x32xf32>
    %66 = arith.subf %49, %65 : vector<8x32xf32>
    %cst_43 = arith.constant 9.99999974E-6 : f32
    %67 = vector.broadcast %cst_43 : f32 to vector<8x1xf32>
    %68 = arith.addf %64, %67 : vector<8x1xf32>
    %69 = math.rsqrt %68 : vector<8x1xf32>
    %70 = vector.broadcast %69 : vector<8x1xf32> to vector<8x32xf32>
    %71 = arith.mulf %66, %70 : vector<8x32xf32>
    %72 = vector.broadcast %51 : vector<1x32xf32> to vector<8x32xf32>
    %73 = arith.mulf %71, %72 : vector<8x32xf32>
    %74 = vector.broadcast %53 : vector<1x32xf32> to vector<8x32xf32>
    %75 = arith.addf %73, %74 : vector<8x32xf32>
    %76 = vector.shape_cast %75 : vector<8x32xf32> to vector<1x8x32xf32>
    %77 = vector.broadcast %76 : vector<1x8x32xf32> to vector<4x8x32xf32>
    %c0_44 = arith.constant 0 : index
    %c0_45 = arith.constant 0 : index
    %c0_46 = arith.constant 0 : index
    %c0_47 = arith.constant 0 : index
    %78 = vector.load %arg9[%c0_44, %c0_45, %c0_46, %c0_47] : memref<2x12x32x8xf32, #tpu.memory_space<vmem>>, vector<1x12x32x8xf32>
    %79 = vector.shape_cast %78 : vector<1x12x32x8xf32> to vector<12x32x8xf32>
    %80 = vector.extract_strided_slice %79 {offsets = [0, 0, 0], sizes = [4, 32, 8], strides = [1, 1, 1]} : vector<12x32x8xf32> to vector<4x32x8xf32>
    %c0_48 = arith.constant 0 : index
    %c0_49 = arith.constant 0 : index
    %c0_50 = arith.constant 0 : index
    %c0_51 = arith.constant 0 : index
    %81 = vector.load %arg10[%c0_48, %c0_49, %c0_50, %c0_51] : memref<2x12x1x8xf32, #tpu.memory_space<vmem>>, vector<1x12x1x8xf32>
    %82 = vector.shape_cast %81 : vector<1x12x1x8xf32> to vector<12x1x8xf32>
    %83 = vector.extract_strided_slice %82 {offsets = [0, 0, 0], sizes = [4, 1, 8], strides = [1, 1, 1]} : vector<12x1x8xf32> to vector<4x1x8xf32>
    "tpu.trace_start"() <{level = 10 : i32, message = "hsd,hdk->hsk"}> : () -> ()
    %cst_52 = arith.constant dense<0.000000e+00> : vector<4x8x8xf32>
    %84 = tpu.matmul %77, %80, %cst_52 {dimension_numbers = #tpu.dot_dimension_numbers<[2], [1], [1], [2], [0, 0, 0, 1, 1, 2], [0], [0]>} : vector<4x8x32xf32>, vector<4x32x8xf32>, vector<4x8x8xf32> -> vector<4x8x8xf32>
    "tpu.trace_stop"() : () -> ()
    %85 = vector.broadcast %83 : vector<4x1x8xf32> to vector<4x8x8xf32>
    %86 = arith.addf %84, %85 : vector<4x8x8xf32>
    %c0_53 = arith.constant 0 : index
    %c0_54 = arith.constant 0 : index
    %c0_55 = arith.constant 0 : index
    %c0_56 = arith.constant 0 : index
    %87 = vector.load %arg9[%c0_53, %c0_54, %c0_55, %c0_56] : memref<2x12x32x8xf32, #tpu.memory_space<vmem>>, vector<1x12x32x8xf32>
    %88 = vector.shape_cast %87 : vector<1x12x32x8xf32> to vector<12x32x8xf32>
    %89 = vector.extract_strided_slice %88 {offsets = [4, 0, 0], sizes = [8, 32, 8], strides = [1, 1, 1]} : vector<12x32x8xf32> to vector<8x32x8xf32>
    %c0_57 = arith.constant 0 : index
    %c0_58 = arith.constant 0 : index
    %c0_59 = arith.constant 0 : index
    %c0_60 = arith.constant 0 : index
    %90 = vector.load %arg10[%c0_57, %c0_58, %c0_59, %c0_60] : memref<2x12x1x8xf32, #tpu.memory_space<vmem>>, vector<1x12x1x8xf32>
    %91 = vector.shape_cast %90 : vector<1x12x1x8xf32> to vector<12x1x8xf32>
    %92 = vector.extract_strided_slice %91 {offsets = [4, 0, 0], sizes = [8, 1, 8], strides = [1, 1, 1]} : vector<12x1x8xf32> to vector<8x1x8xf32>
    "tpu.trace_start"() <{level = 10 : i32, message = "hsd,hdk->hsk"}> : () -> ()
    %cst_61 = arith.constant dense<0.000000e+00> : vector<8x8x8xf32>
    %93 = tpu.matmul %5, %89, %cst_61 {dimension_numbers = #tpu.dot_dimension_numbers<[2], [1], [1], [2], [0, 0, 0, 1, 1, 2], [0], [0]>} : vector<8x8x32xf32>, vector<8x32x8xf32>, vector<8x8x8xf32> -> vector<8x8x8xf32>
    "tpu.trace_stop"() : () -> ()
    %94 = vector.broadcast %92 : vector<8x1x8xf32> to vector<8x8x8xf32>
    %95 = arith.addf %93, %94 : vector<8x8x8xf32>
    %96 = vector.extract_strided_slice %95 {offsets = [0, 0, 0], sizes = [4, 8, 8], strides = [1, 1, 1]} : vector<8x8x8xf32> to vector<4x8x8xf32>
    %97 = vector.extract_strided_slice %95 {offsets = [4, 0, 0], sizes = [4, 8, 8], strides = [1, 1, 1]} : vector<8x8x8xf32> to vector<4x8x8xf32>
    %c0_62 = arith.constant 0 : index
    %c0_63 = arith.constant 0 : index
    %c0_64 = arith.constant 0 : index
    %c0_65 = arith.constant 0 : index
    %98 = vector.load %arg11[%c0_62, %c0_63, %c0_64, %c0_65] : memref<2x4x8x32xf32, #tpu.memory_space<vmem>>, vector<1x4x8x32xf32>
    %99 = vector.shape_cast %98 : vector<1x4x8x32xf32> to vector<4x8x32xf32>
    %c0_66 = arith.constant 0 : index
    %c0_67 = arith.constant 0 : index
    %c0_68 = arith.constant 0 : index
    %100 = vector.load %arg12[%c0_66, %c0_67, %c0_68] : memref<2x1x32xf32, #tpu.memory_space<vmem>>, vector<1x1x32xf32>
    %101 = vector.shape_cast %100 : vector<1x1x32xf32> to vector<1x32xf32>
    "tpu.trace_start"() <{level = 10 : i32, message = "hqd,hkd->hqk"}> : () -> ()
    %cst_69 = arith.constant dense<0.000000e+00> : vector<4x8x8xf32>
    %102 = tpu.matmul %86, %96, %cst_69 {dimension_numbers = #tpu.dot_dimension_numbers<[2], [2], [1], [1], [0, 0, 0, 1, 1, 1], [0], [0]>} : vector<4x8x8xf32>, vector<4x8x8xf32>, vector<4x8x8xf32> -> vector<4x8x8xf32>
    "tpu.trace_stop"() : () -> ()
    %cst_70 = arith.constant 0.353553385 : f32
    %103 = vector.broadcast %cst_70 : f32 to vector<4x8x8xf32>
    %104 = arith.mulf %102, %103 : vector<4x8x8xf32>
    %105 = vector.shape_cast %7 : vector<8x8xf32> to vector<1x8x8xf32>
    %106 = vector.broadcast %105 : vector<1x8x8xf32> to vector<4x8x8xf32>
    %107 = arith.addf %104, %106 : vector<4x8x8xf32>
    %cst_71 = arith.constant dense<0xFF800000> : vector<4x8xf32>
    %108 = vector.multi_reduction <maximumf>, %107, %cst_71 [2] : vector<4x8x8xf32> to vector<4x8xf32>
    %109 = vector.shape_cast %108 : vector<4x8xf32> to vector<4x8x1xf32>
    %110 = vector.broadcast %109 : vector<4x8x1xf32> to vector<4x8x8xf32>
    %111 = arith.subf %107, %110 : vector<4x8x8xf32>
    %112 = math.exp %111 : vector<4x8x8xf32>
    %cst_72 = arith.constant dense<0.000000e+00> : vector<4x8xf32>
    %113 = vector.multi_reduction <add>, %112, %cst_72 [2] : vector<4x8x8xf32> to vector<4x8xf32>
    %114 = vector.shape_cast %113 : vector<4x8xf32> to vector<4x8x1xf32>
    %115 = tpu.reciprocal %114 {approx = true} : vector<4x8x1xf32> -> vector<4x8x1xf32>
    %116 = vector.broadcast %115 : vector<4x8x1xf32> to vector<4x8x8xf32>
    %117 = arith.mulf %112, %116 : vector<4x8x8xf32>
    "tpu.trace_start"() <{level = 10 : i32, message = "hqk,hkd->hqd"}> : () -> ()
    %cst_73 = arith.constant dense<0.000000e+00> : vector<4x8x8xf32>
    %118 = tpu.matmul %117, %97, %cst_73 {dimension_numbers = #tpu.dot_dimension_numbers<[2], [1], [1], [2], [0, 0, 0, 1, 1, 2], [0], [0]>} : vector<4x8x8xf32>, vector<4x8x8xf32>, vector<4x8x8xf32> -> vector<4x8x8xf32>
    "tpu.trace_stop"() : () -> ()
    "tpu.trace_start"() <{level = 10 : i32, message = "hsd,hde->hse"}> : () -> ()
    %cst_74 = arith.constant dense<0.000000e+00> : vector<4x8x32xf32>
    %119 = tpu.matmul %118, %99, %cst_74 {dimension_numbers = #tpu.dot_dimension_numbers<[2], [1], [1], [2], [0, 0, 0, 1, 1, 2], [0], [0]>} : vector<4x8x8xf32>, vector<4x8x32xf32>, vector<4x8x32xf32> -> vector<4x8x32xf32>
    "tpu.trace_stop"() : () -> ()
    %cst_75 = arith.constant dense<0.000000e+00> : vector<8x32xf32>
    %120 = vector.multi_reduction <add>, %119, %cst_75 [0] : vector<4x8x32xf32> to vector<8x32xf32>
    %121 = vector.broadcast %101 : vector<1x32xf32> to vector<8x32xf32>
    %122 = arith.addf %120, %121 : vector<8x32xf32>
    %123 = arith.addf %122, %75 : vector<8x32xf32>
    %124 = vector.extract_strided_slice %9 {offsets = [1, 0, 0], sizes = [1, 1, 32], strides = [1, 1, 1]} : vector<3x1x32xf32> to vector<1x1x32xf32>
    %125 = vector.shape_cast %124 : vector<1x1x32xf32> to vector<1x32xf32>
    %126 = vector.extract_strided_slice %11 {offsets = [1, 0, 0], sizes = [1, 1, 32], strides = [1, 1, 1]} : vector<3x1x32xf32> to vector<1x1x32xf32>
    %127 = vector.shape_cast %126 : vector<1x1x32xf32> to vector<1x32xf32>
    %cst_76 = arith.constant dense<0.000000e+00> : vector<8xf32>
    %128 = vector.multi_reduction <add>, %123, %cst_76 [1] : vector<8x32xf32> to vector<8xf32>
    %129 = vector.shape_cast %128 : vector<8xf32> to vector<8x1xf32>
    %cst_77 = arith.constant 3.200000e+01 : f32
    %130 = vector.broadcast %cst_77 : f32 to vector<8x1xf32>
    %131 = arith.divf %129, %130 : vector<8x1xf32>
    %132 = vector.broadcast %131 : vector<8x1xf32> to vector<8x32xf32>
    %133 = arith.subf %123, %132 : vector<8x32xf32>
    %134 = arith.mulf %133, %133 : vector<8x32xf32>
    %cst_78 = arith.constant dense<0.000000e+00> : vector<8xf32>
    %135 = vector.multi_reduction <add>, %134, %cst_78 [1] : vector<8x32xf32> to vector<8xf32>
    %136 = vector.shape_cast %135 : vector<8xf32> to vector<8x1xf32>
    %cst_79 = arith.constant 3.200000e+01 : f32
    %137 = vector.broadcast %cst_79 : f32 to vector<8x1xf32>
    %138 = arith.divf %136, %137 : vector<8x1xf32>
    %139 = vector.broadcast %131 : vector<8x1xf32> to vector<8x32xf32>
    %140 = arith.subf %123, %139 : vector<8x32xf32>
    %cst_80 = arith.constant 9.99999974E-6 : f32
    %141 = vector.broadcast %cst_80 : f32 to vector<8x1xf32>
    %142 = arith.addf %138, %141 : vector<8x1xf32>
    %143 = math.rsqrt %142 : vector<8x1xf32>
    %144 = vector.broadcast %143 : vector<8x1xf32> to vector<8x32xf32>
    %145 = arith.mulf %140, %144 : vector<8x32xf32>
    %146 = vector.broadcast %125 : vector<1x32xf32> to vector<8x32xf32>
    %147 = arith.mulf %145, %146 : vector<8x32xf32>
    %148 = vector.broadcast %127 : vector<1x32xf32> to vector<8x32xf32>
    %149 = arith.addf %147, %148 : vector<8x32xf32>
    %c0_81 = arith.constant 0 : index
    %c0_82 = arith.constant 0 : index
    %c0_83 = arith.constant 0 : index
    %150 = vector.load %arg13[%c0_81, %c0_82, %c0_83] : memref<2x32x64xf32, #tpu.memory_space<vmem>>, vector<1x32x64xf32>
    %151 = vector.shape_cast %150 : vector<1x32x64xf32> to vector<32x64xf32>
    %cst_84 = arith.constant dense<0.000000e+00> : vector<8x64xf32>
    %152 = tpu.matmul %149, %151, %cst_84 {dimension_numbers = #tpu.dot_dimension_numbers<[1], [0], [0], [1], [0, 0, 1, 1], [], []>} : vector<8x32xf32>, vector<32x64xf32>, vector<8x64xf32> -> vector<8x64xf32>
    %c0_85 = arith.constant 0 : index
    %c0_86 = arith.constant 0 : index
    %c0_87 = arith.constant 0 : index
    %153 = vector.load %arg14[%c0_85, %c0_86, %c0_87] : memref<2x1x64xf32, #tpu.memory_space<vmem>>, vector<1x1x64xf32>
    %154 = vector.shape_cast %153 : vector<1x1x64xf32> to vector<1x64xf32>
    %155 = vector.broadcast %154 : vector<1x64xf32> to vector<8x64xf32>
    %156 = arith.addf %152, %155 : vector<8x64xf32>
    %cst_88 = arith.constant 0.000000e+00 : f32
    %157 = vector.broadcast %cst_88 : f32 to vector<8x64xf32>
    %158 = arith.maximumf %156, %157 : vector<8x64xf32>
    %c0_89 = arith.constant 0 : index
    %c0_90 = arith.constant 0 : index
    %c0_91 = arith.constant 0 : index
    %159 = vector.load %arg15[%c0_89, %c0_90, %c0_91] : memref<2x64x32xf32, #tpu.memory_space<vmem>>, vector<1x64x32xf32>
    %160 = vector.shape_cast %159 : vector<1x64x32xf32> to vector<64x32xf32>
    %cst_92 = arith.constant dense<0.000000e+00> : vector<8x32xf32>
    %161 = tpu.matmul %158, %160, %cst_92 {dimension_numbers = #tpu.dot_dimension_numbers<[1], [0], [0], [1], [0, 0, 1, 1], [], []>} : vector<8x64xf32>, vector<64x32xf32>, vector<8x32xf32> -> vector<8x32xf32>
    %c0_93 = arith.constant 0 : index
    %c0_94 = arith.constant 0 : index
    %c0_95 = arith.constant 0 : index
    %162 = vector.load %arg16[%c0_93, %c0_94, %c0_95] : memref<2x1x32xf32, #tpu.memory_space<vmem>>, vector<1x1x32xf32>
    %163 = vector.shape_cast %162 : vector<1x1x32xf32> to vector<1x32xf32>
    %164 = vector.broadcast %163 : vector<1x32xf32> to vector<8x32xf32>
    %165 = arith.addf %161, %164 : vector<8x32xf32>
    %166 = arith.addf %165, %149 : vector<8x32xf32>
    %167 = vector.extract_strided_slice %9 {offsets = [2, 0, 0], sizes = [1, 1, 32], strides = [1, 1, 1]} : vector<3x1x32xf32> to vector<1x1x32xf32>
    %168 = vector.shape_cast %167 : vector<1x1x32xf32> to vector<1x32xf32>
    %169 = vector.extract_strided_slice %11 {offsets = [2, 0, 0], sizes = [1, 1, 32], strides = [1, 1, 1]} : vector<3x1x32xf32> to vector<1x1x32xf32>
    %170 = vector.shape_cast %169 : vector<1x1x32xf32> to vector<1x32xf32>
    %cst_96 = arith.constant dense<0.000000e+00> : vector<8xf32>
    %171 = vector.multi_reduction <add>, %166, %cst_96 [1] : vector<8x32xf32> to vector<8xf32>
    %172 = vector.shape_cast %171 : vector<8xf32> to vector<8x1xf32>
    %cst_97 = arith.constant 3.200000e+01 : f32
    %173 = vector.broadcast %cst_97 : f32 to vector<8x1xf32>
    %174 = arith.divf %172, %173 : vector<8x1xf32>
    %175 = vector.broadcast %174 : vector<8x1xf32> to vector<8x32xf32>
    %176 = arith.subf %166, %175 : vector<8x32xf32>
    %177 = arith.mulf %176, %176 : vector<8x32xf32>
    %cst_98 = arith.constant dense<0.000000e+00> : vector<8xf32>
    %178 = vector.multi_reduction <add>, %177, %cst_98 [1] : vector<8x32xf32> to vector<8xf32>
    %179 = vector.shape_cast %178 : vector<8xf32> to vector<8x1xf32>
    %cst_99 = arith.constant 3.200000e+01 : f32
    %180 = vector.broadcast %cst_99 : f32 to vector<8x1xf32>
    %181 = arith.divf %179, %180 : vector<8x1xf32>
    %182 = vector.broadcast %174 : vector<8x1xf32> to vector<8x32xf32>
    %183 = arith.subf %166, %182 : vector<8x32xf32>
    %cst_100 = arith.constant 9.99999974E-6 : f32
    %184 = vector.broadcast %cst_100 : f32 to vector<8x1xf32>
    %185 = arith.addf %181, %184 : vector<8x1xf32>
    %186 = math.rsqrt %185 : vector<8x1xf32>
    %187 = vector.broadcast %186 : vector<8x1xf32> to vector<8x32xf32>
    %188 = arith.mulf %183, %187 : vector<8x32xf32>
    %189 = vector.broadcast %168 : vector<1x32xf32> to vector<8x32xf32>
    %190 = arith.mulf %188, %189 : vector<8x32xf32>
    %191 = vector.broadcast %170 : vector<1x32xf32> to vector<8x32xf32>
    %192 = arith.addf %190, %191 : vector<8x32xf32>
    %c1 = arith.constant 1 : index
    %c0_101 = arith.constant 0 : index
    %c0_102 = arith.constant 0 : index
    %c0_103 = arith.constant 0 : index
    %193 = vector.load %arg17[%c1, %c0_101, %c0_102, %c0_103] : memref<2x3x1x32xf32, #tpu.memory_space<vmem>>, vector<1x3x1x32xf32>
    %194 = vector.shape_cast %193 : vector<1x3x1x32xf32> to vector<3x1x32xf32>
    %c1_104 = arith.constant 1 : index
    %c0_105 = arith.constant 0 : index
    %c0_106 = arith.constant 0 : index
    %c0_107 = arith.constant 0 : index
    %195 = vector.load %arg18[%c1_104, %c0_105, %c0_106, %c0_107] : memref<2x3x1x32xf32, #tpu.memory_space<vmem>>, vector<1x3x1x32xf32>
    %196 = vector.shape_cast %195 : vector<1x3x1x32xf32> to vector<3x1x32xf32>
    %197 = vector.shape_cast %192 : vector<8x32xf32> to vector<1x8x32xf32>
    %198 = vector.broadcast %197 : vector<1x8x32xf32> to vector<12x8x32xf32>
    %c1_108 = arith.constant 1 : index
    %c0_109 = arith.constant 0 : index
    %c0_110 = arith.constant 0 : index
    %c0_111 = arith.constant 0 : index
    %199 = vector.load %arg5[%c1_108, %c0_109, %c0_110, %c0_111] : memref<2x12x32x8xf32, #tpu.memory_space<vmem>>, vector<1x12x32x8xf32>
    %200 = vector.shape_cast %199 : vector<1x12x32x8xf32> to vector<12x32x8xf32>
    %c1_112 = arith.constant 1 : index
    %c0_113 = arith.constant 0 : index
    %c0_114 = arith.constant 0 : index
    %c0_115 = arith.constant 0 : index
    %201 = vector.load %arg6[%c1_112, %c0_113, %c0_114, %c0_115] : memref<2x12x1x8xf32, #tpu.memory_space<vmem>>, vector<1x12x1x8xf32>
    %202 = vector.shape_cast %201 : vector<1x12x1x8xf32> to vector<12x1x8xf32>
    "tpu.trace_start"() <{level = 10 : i32, message = "hsd,hdk->hsk"}> : () -> ()
    %cst_116 = arith.constant dense<0.000000e+00> : vector<12x8x8xf32>
    %203 = tpu.matmul %198, %200, %cst_116 {dimension_numbers = #tpu.dot_dimension_numbers<[2], [1], [1], [2], [0, 0, 0, 1, 1, 2], [0], [0]>} : vector<12x8x32xf32>, vector<12x32x8xf32>, vector<12x8x8xf32> -> vector<12x8x8xf32>
    "tpu.trace_stop"() : () -> ()
    %204 = vector.broadcast %202 : vector<12x1x8xf32> to vector<12x8x8xf32>
    %205 = arith.addf %203, %204 : vector<12x8x8xf32>
    %206 = vector.extract_strided_slice %205 {offsets = [0, 0, 0], sizes = [4, 8, 8], strides = [1, 1, 1]} : vector<12x8x8xf32> to vector<4x8x8xf32>
    %207 = vector.extract_strided_slice %205 {offsets = [4, 0, 0], sizes = [4, 8, 8], strides = [1, 1, 1]} : vector<12x8x8xf32> to vector<4x8x8xf32>
    %208 = vector.extract_strided_slice %205 {offsets = [8, 0, 0], sizes = [4, 8, 8], strides = [1, 1, 1]} : vector<12x8x8xf32> to vector<4x8x8xf32>
    %c1_117 = arith.constant 1 : index
    %c0_118 = arith.constant 0 : index
    %c0_119 = arith.constant 0 : index
    %c0_120 = arith.constant 0 : index
    %209 = vector.load %arg7[%c1_117, %c0_118, %c0_119, %c0_120] : memref<2x4x8x32xf32, #tpu.memory_space<vmem>>, vector<1x4x8x32xf32>
    %210 = vector.shape_cast %209 : vector<1x4x8x32xf32> to vector<4x8x32xf32>
    %c1_121 = arith.constant 1 : index
    %c0_122 = arith.constant 0 : index
    %c0_123 = arith.constant 0 : index
    %211 = vector.load %arg8[%c1_121, %c0_122, %c0_123] : memref<2x1x32xf32, #tpu.memory_space<vmem>>, vector<1x1x32xf32>
    %212 = vector.shape_cast %211 : vector<1x1x32xf32> to vector<1x32xf32>
    "tpu.trace_start"() <{level = 10 : i32, message = "hqd,hkd->hqk"}> : () -> ()
    %cst_124 = arith.constant dense<0.000000e+00> : vector<4x8x8xf32>
    %213 = tpu.matmul %206, %207, %cst_124 {dimension_numbers = #tpu.dot_dimension_numbers<[2], [2], [1], [1], [0, 0, 0, 1, 1, 1], [0], [0]>} : vector<4x8x8xf32>, vector<4x8x8xf32>, vector<4x8x8xf32> -> vector<4x8x8xf32>
    "tpu.trace_stop"() : () -> ()
    %cst_125 = arith.constant 0.353553385 : f32
    %214 = vector.broadcast %cst_125 : f32 to vector<4x8x8xf32>
    %215 = arith.mulf %213, %214 : vector<4x8x8xf32>
    %216 = vector.shape_cast %6 : vector<8x8xf32> to vector<1x8x8xf32>
    %217 = vector.broadcast %216 : vector<1x8x8xf32> to vector<4x8x8xf32>
    %218 = arith.addf %215, %217 : vector<4x8x8xf32>
    %cst_126 = arith.constant dense<0xFF800000> : vector<4x8xf32>
    %219 = vector.multi_reduction <maximumf>, %218, %cst_126 [2] : vector<4x8x8xf32> to vector<4x8xf32>
    %220 = vector.shape_cast %219 : vector<4x8xf32> to vector<4x8x1xf32>
    %221 = vector.broadcast %220 : vector<4x8x1xf32> to vector<4x8x8xf32>
    %222 = arith.subf %218, %221 : vector<4x8x8xf32>
    %223 = math.exp %222 : vector<4x8x8xf32>
    %cst_127 = arith.constant dense<0.000000e+00> : vector<4x8xf32>
    %224 = vector.multi_reduction <add>, %223, %cst_127 [2] : vector<4x8x8xf32> to vector<4x8xf32>
    %225 = vector.shape_cast %224 : vector<4x8xf32> to vector<4x8x1xf32>
    %226 = tpu.reciprocal %225 {approx = true} : vector<4x8x1xf32> -> vector<4x8x1xf32>
    %227 = vector.broadcast %226 : vector<4x8x1xf32> to vector<4x8x8xf32>
    %228 = arith.mulf %223, %227 : vector<4x8x8xf32>
    "tpu.trace_start"() <{level = 10 : i32, message = "hqk,hkd->hqd"}> : () -> ()
    %cst_128 = arith.constant dense<0.000000e+00> : vector<4x8x8xf32>
    %229 = tpu.matmul %228, %208, %cst_128 {dimension_numbers = #tpu.dot_dimension_numbers<[2], [1], [1], [2], [0, 0, 0, 1, 1, 2], [0], [0]>} : vector<4x8x8xf32>, vector<4x8x8xf32>, vector<4x8x8xf32> -> vector<4x8x8xf32>
    "tpu.trace_stop"() : () -> ()
    "tpu.trace_start"() <{level = 10 : i32, message = "hsd,hde->hse"}> : () -> ()
    %cst_129 = arith.constant dense<0.000000e+00> : vector<4x8x32xf32>
    %230 = tpu.matmul %229, %210, %cst_129 {dimension_numbers = #tpu.dot_dimension_numbers<[2], [1], [1], [2], [0, 0, 0, 1, 1, 2], [0], [0]>} : vector<4x8x8xf32>, vector<4x8x32xf32>, vector<4x8x32xf32> -> vector<4x8x32xf32>
    "tpu.trace_stop"() : () -> ()
    %cst_130 = arith.constant dense<0.000000e+00> : vector<8x32xf32>
    %231 = vector.multi_reduction <add>, %230, %cst_130 [0] : vector<4x8x32xf32> to vector<8x32xf32>
    %232 = vector.broadcast %212 : vector<1x32xf32> to vector<8x32xf32>
    %233 = arith.addf %231, %232 : vector<8x32xf32>
    %234 = arith.addf %233, %192 : vector<8x32xf32>
    %235 = vector.extract_strided_slice %194 {offsets = [0, 0, 0], sizes = [1, 1, 32], strides = [1, 1, 1]} : vector<3x1x32xf32> to vector<1x1x32xf32>
    %236 = vector.shape_cast %235 : vector<1x1x32xf32> to vector<1x32xf32>
    %237 = vector.extract_strided_slice %196 {offsets = [0, 0, 0], sizes = [1, 1, 32], strides = [1, 1, 1]} : vector<3x1x32xf32> to vector<1x1x32xf32>
    %238 = vector.shape_cast %237 : vector<1x1x32xf32> to vector<1x32xf32>
    %cst_131 = arith.constant dense<0.000000e+00> : vector<8xf32>
    %239 = vector.multi_reduction <add>, %234, %cst_131 [1] : vector<8x32xf32> to vector<8xf32>
    %240 = vector.shape_cast %239 : vector<8xf32> to vector<8x1xf32>
    %cst_132 = arith.constant 3.200000e+01 : f32
    %241 = vector.broadcast %cst_132 : f32 to vector<8x1xf32>
    %242 = arith.divf %240, %241 : vector<8x1xf32>
    %243 = vector.broadcast %242 : vector<8x1xf32> to vector<8x32xf32>
    %244 = arith.subf %234, %243 : vector<8x32xf32>
    %245 = arith.mulf %244, %244 : vector<8x32xf32>
    %cst_133 = arith.constant dense<0.000000e+00> : vector<8xf32>
    %246 = vector.multi_reduction <add>, %245, %cst_133 [1] : vector<8x32xf32> to vector<8xf32>
    %247 = vector.shape_cast %246 : vector<8xf32> to vector<8x1xf32>
    %cst_134 = arith.constant 3.200000e+01 : f32
    %248 = vector.broadcast %cst_134 : f32 to vector<8x1xf32>
    %249 = arith.divf %247, %248 : vector<8x1xf32>
    %250 = vector.broadcast %242 : vector<8x1xf32> to vector<8x32xf32>
    %251 = arith.subf %234, %250 : vector<8x32xf32>
    %cst_135 = arith.constant 9.99999974E-6 : f32
    %252 = vector.broadcast %cst_135 : f32 to vector<8x1xf32>
    %253 = arith.addf %249, %252 : vector<8x1xf32>
    %254 = math.rsqrt %253 : vector<8x1xf32>
    %255 = vector.broadcast %254 : vector<8x1xf32> to vector<8x32xf32>
    %256 = arith.mulf %251, %255 : vector<8x32xf32>
    %257 = vector.broadcast %236 : vector<1x32xf32> to vector<8x32xf32>
    %258 = arith.mulf %256, %257 : vector<8x32xf32>
    %259 = vector.broadcast %238 : vector<1x32xf32> to vector<8x32xf32>
    %260 = arith.addf %258, %259 : vector<8x32xf32>
    %261 = vector.shape_cast %260 : vector<8x32xf32> to vector<1x8x32xf32>
    %262 = vector.broadcast %261 : vector<1x8x32xf32> to vector<4x8x32xf32>
    %c1_136 = arith.constant 1 : index
    %c0_137 = arith.constant 0 : index
    %c0_138 = arith.constant 0 : index
    %c0_139 = arith.constant 0 : index
    %263 = vector.load %arg9[%c1_136, %c0_137, %c0_138, %c0_139] : memref<2x12x32x8xf32, #tpu.memory_space<vmem>>, vector<1x12x32x8xf32>
    %264 = vector.shape_cast %263 : vector<1x12x32x8xf32> to vector<12x32x8xf32>
    %265 = vector.extract_strided_slice %264 {offsets = [0, 0, 0], sizes = [4, 32, 8], strides = [1, 1, 1]} : vector<12x32x8xf32> to vector<4x32x8xf32>
    %c1_140 = arith.constant 1 : index
    %c0_141 = arith.constant 0 : index
    %c0_142 = arith.constant 0 : index
    %c0_143 = arith.constant 0 : index
    %266 = vector.load %arg10[%c1_140, %c0_141, %c0_142, %c0_143] : memref<2x12x1x8xf32, #tpu.memory_space<vmem>>, vector<1x12x1x8xf32>
    %267 = vector.shape_cast %266 : vector<1x12x1x8xf32> to vector<12x1x8xf32>
    %268 = vector.extract_strided_slice %267 {offsets = [0, 0, 0], sizes = [4, 1, 8], strides = [1, 1, 1]} : vector<12x1x8xf32> to vector<4x1x8xf32>
    "tpu.trace_start"() <{level = 10 : i32, message = "hsd,hdk->hsk"}> : () -> ()
    %cst_144 = arith.constant dense<0.000000e+00> : vector<4x8x8xf32>
    %269 = tpu.matmul %262, %265, %cst_144 {dimension_numbers = #tpu.dot_dimension_numbers<[2], [1], [1], [2], [0, 0, 0, 1, 1, 2], [0], [0]>} : vector<4x8x32xf32>, vector<4x32x8xf32>, vector<4x8x8xf32> -> vector<4x8x8xf32>
    "tpu.trace_stop"() : () -> ()
    %270 = vector.broadcast %268 : vector<4x1x8xf32> to vector<4x8x8xf32>
    %271 = arith.addf %269, %270 : vector<4x8x8xf32>
    %c1_145 = arith.constant 1 : index
    %c0_146 = arith.constant 0 : index
    %c0_147 = arith.constant 0 : index
    %c0_148 = arith.constant 0 : index
    %272 = vector.load %arg9[%c1_145, %c0_146, %c0_147, %c0_148] : memref<2x12x32x8xf32, #tpu.memory_space<vmem>>, vector<1x12x32x8xf32>
    %273 = vector.shape_cast %272 : vector<1x12x32x8xf32> to vector<12x32x8xf32>
    %274 = vector.extract_strided_slice %273 {offsets = [4, 0, 0], sizes = [8, 32, 8], strides = [1, 1, 1]} : vector<12x32x8xf32> to vector<8x32x8xf32>
    %c1_149 = arith.constant 1 : index
    %c0_150 = arith.constant 0 : index
    %c0_151 = arith.constant 0 : index
    %c0_152 = arith.constant 0 : index
    %275 = vector.load %arg10[%c1_149, %c0_150, %c0_151, %c0_152] : memref<2x12x1x8xf32, #tpu.memory_space<vmem>>, vector<1x12x1x8xf32>
    %276 = vector.shape_cast %275 : vector<1x12x1x8xf32> to vector<12x1x8xf32>
    %277 = vector.extract_strided_slice %276 {offsets = [4, 0, 0], sizes = [8, 1, 8], strides = [1, 1, 1]} : vector<12x1x8xf32> to vector<8x1x8xf32>
    "tpu.trace_start"() <{level = 10 : i32, message = "hsd,hdk->hsk"}> : () -> ()
    %cst_153 = arith.constant dense<0.000000e+00> : vector<8x8x8xf32>
    %278 = tpu.matmul %5, %274, %cst_153 {dimension_numbers = #tpu.dot_dimension_numbers<[2], [1], [1], [2], [0, 0, 0, 1, 1, 2], [0], [0]>} : vector<8x8x32xf32>, vector<8x32x8xf32>, vector<8x8x8xf32> -> vector<8x8x8xf32>
    "tpu.trace_stop"() : () -> ()
    %279 = vector.broadcast %277 : vector<8x1x8xf32> to vector<8x8x8xf32>
    %280 = arith.addf %278, %279 : vector<8x8x8xf32>
    %281 = vector.extract_strided_slice %280 {offsets = [0, 0, 0], sizes = [4, 8, 8], strides = [1, 1, 1]} : vector<8x8x8xf32> to vector<4x8x8xf32>
    %282 = vector.extract_strided_slice %280 {offsets = [4, 0, 0], sizes = [4, 8, 8], strides = [1, 1, 1]} : vector<8x8x8xf32> to vector<4x8x8xf32>
    %c1_154 = arith.constant 1 : index
    %c0_155 = arith.constant 0 : index
    %c0_156 = arith.constant 0 : index
    %c0_157 = arith.constant 0 : index
    %283 = vector.load %arg11[%c1_154, %c0_155, %c0_156, %c0_157] : memref<2x4x8x32xf32, #tpu.memory_space<vmem>>, vector<1x4x8x32xf32>
    %284 = vector.shape_cast %283 : vector<1x4x8x32xf32> to vector<4x8x32xf32>
    %c1_158 = arith.constant 1 : index
    %c0_159 = arith.constant 0 : index
    %c0_160 = arith.constant 0 : index
    %285 = vector.load %arg12[%c1_158, %c0_159, %c0_160] : memref<2x1x32xf32, #tpu.memory_space<vmem>>, vector<1x1x32xf32>
    %286 = vector.shape_cast %285 : vector<1x1x32xf32> to vector<1x32xf32>
    "tpu.trace_start"() <{level = 10 : i32, message = "hqd,hkd->hqk"}> : () -> ()
    %cst_161 = arith.constant dense<0.000000e+00> : vector<4x8x8xf32>
    %287 = tpu.matmul %271, %281, %cst_161 {dimension_numbers = #tpu.dot_dimension_numbers<[2], [2], [1], [1], [0, 0, 0, 1, 1, 1], [0], [0]>} : vector<4x8x8xf32>, vector<4x8x8xf32>, vector<4x8x8xf32> -> vector<4x8x8xf32>
    "tpu.trace_stop"() : () -> ()
    %cst_162 = arith.constant 0.353553385 : f32
    %288 = vector.broadcast %cst_162 : f32 to vector<4x8x8xf32>
    %289 = arith.mulf %287, %288 : vector<4x8x8xf32>
    %290 = vector.shape_cast %7 : vector<8x8xf32> to vector<1x8x8xf32>
    %291 = vector.broadcast %290 : vector<1x8x8xf32> to vector<4x8x8xf32>
    %292 = arith.addf %289, %291 : vector<4x8x8xf32>
    %cst_163 = arith.constant dense<0xFF800000> : vector<4x8xf32>
    %293 = vector.multi_reduction <maximumf>, %292, %cst_163 [2] : vector<4x8x8xf32> to vector<4x8xf32>
    %294 = vector.shape_cast %293 : vector<4x8xf32> to vector<4x8x1xf32>
    %295 = vector.broadcast %294 : vector<4x8x1xf32> to vector<4x8x8xf32>
    %296 = arith.subf %292, %295 : vector<4x8x8xf32>
    %297 = math.exp %296 : vector<4x8x8xf32>
    %cst_164 = arith.constant dense<0.000000e+00> : vector<4x8xf32>
    %298 = vector.multi_reduction <add>, %297, %cst_164 [2] : vector<4x8x8xf32> to vector<4x8xf32>
    %299 = vector.shape_cast %298 : vector<4x8xf32> to vector<4x8x1xf32>
    %300 = tpu.reciprocal %299 {approx = true} : vector<4x8x1xf32> -> vector<4x8x1xf32>
    %301 = vector.broadcast %300 : vector<4x8x1xf32> to vector<4x8x8xf32>
    %302 = arith.mulf %297, %301 : vector<4x8x8xf32>
    "tpu.trace_start"() <{level = 10 : i32, message = "hqk,hkd->hqd"}> : () -> ()
    %cst_165 = arith.constant dense<0.000000e+00> : vector<4x8x8xf32>
    %303 = tpu.matmul %302, %282, %cst_165 {dimension_numbers = #tpu.dot_dimension_numbers<[2], [1], [1], [2], [0, 0, 0, 1, 1, 2], [0], [0]>} : vector<4x8x8xf32>, vector<4x8x8xf32>, vector<4x8x8xf32> -> vector<4x8x8xf32>
    "tpu.trace_stop"() : () -> ()
    "tpu.trace_start"() <{level = 10 : i32, message = "hsd,hde->hse"}> : () -> ()
    %cst_166 = arith.constant dense<0.000000e+00> : vector<4x8x32xf32>
    %304 = tpu.matmul %303, %284, %cst_166 {dimension_numbers = #tpu.dot_dimension_numbers<[2], [1], [1], [2], [0, 0, 0, 1, 1, 2], [0], [0]>} : vector<4x8x8xf32>, vector<4x8x32xf32>, vector<4x8x32xf32> -> vector<4x8x32xf32>
    "tpu.trace_stop"() : () -> ()
    %cst_167 = arith.constant dense<0.000000e+00> : vector<8x32xf32>
    %305 = vector.multi_reduction <add>, %304, %cst_167 [0] : vector<4x8x32xf32> to vector<8x32xf32>
    %306 = vector.broadcast %286 : vector<1x32xf32> to vector<8x32xf32>
    %307 = arith.addf %305, %306 : vector<8x32xf32>
    %308 = arith.addf %307, %260 : vector<8x32xf32>
    %309 = vector.extract_strided_slice %194 {offsets = [1, 0, 0], sizes = [1, 1, 32], strides = [1, 1, 1]} : vector<3x1x32xf32> to vector<1x1x32xf32>
    %310 = vector.shape_cast %309 : vector<1x1x32xf32> to vector<1x32xf32>
    %311 = vector.extract_strided_slice %196 {offsets = [1, 0, 0], sizes = [1, 1, 32], strides = [1, 1, 1]} : vector<3x1x32xf32> to vector<1x1x32xf32>
    %312 = vector.shape_cast %311 : vector<1x1x32xf32> to vector<1x32xf32>
    %cst_168 = arith.constant dense<0.000000e+00> : vector<8xf32>
    %313 = vector.multi_reduction <add>, %308, %cst_168 [1] : vector<8x32xf32> to vector<8xf32>
    %314 = vector.shape_cast %313 : vector<8xf32> to vector<8x1xf32>
    %cst_169 = arith.constant 3.200000e+01 : f32
    %315 = vector.broadcast %cst_169 : f32 to vector<8x1xf32>
    %316 = arith.divf %314, %315 : vector<8x1xf32>
    %317 = vector.broadcast %316 : vector<8x1xf32> to vector<8x32xf32>
    %318 = arith.subf %308, %317 : vector<8x32xf32>
    %319 = arith.mulf %318, %318 : vector<8x32xf32>
    %cst_170 = arith.constant dense<0.000000e+00> : vector<8xf32>
    %320 = vector.multi_reduction <add>, %319, %cst_170 [1] : vector<8x32xf32> to vector<8xf32>
    %321 = vector.shape_cast %320 : vector<8xf32> to vector<8x1xf32>
    %cst_171 = arith.constant 3.200000e+01 : f32
    %322 = vector.broadcast %cst_171 : f32 to vector<8x1xf32>
    %323 = arith.divf %321, %322 : vector<8x1xf32>
    %324 = vector.broadcast %316 : vector<8x1xf32> to vector<8x32xf32>
    %325 = arith.subf %308, %324 : vector<8x32xf32>
    %cst_172 = arith.constant 9.99999974E-6 : f32
    %326 = vector.broadcast %cst_172 : f32 to vector<8x1xf32>
    %327 = arith.addf %323, %326 : vector<8x1xf32>
    %328 = math.rsqrt %327 : vector<8x1xf32>
    %329 = vector.broadcast %328 : vector<8x1xf32> to vector<8x32xf32>
    %330 = arith.mulf %325, %329 : vector<8x32xf32>
    %331 = vector.broadcast %310 : vector<1x32xf32> to vector<8x32xf32>
    %332 = arith.mulf %330, %331 : vector<8x32xf32>
    %333 = vector.broadcast %312 : vector<1x32xf32> to vector<8x32xf32>
    %334 = arith.addf %332, %333 : vector<8x32xf32>
    %c1_173 = arith.constant 1 : index
    %c0_174 = arith.constant 0 : index
    %c0_175 = arith.constant 0 : index
    %335 = vector.load %arg13[%c1_173, %c0_174, %c0_175] : memref<2x32x64xf32, #tpu.memory_space<vmem>>, vector<1x32x64xf32>
    %336 = vector.shape_cast %335 : vector<1x32x64xf32> to vector<32x64xf32>
    %cst_176 = arith.constant dense<0.000000e+00> : vector<8x64xf32>
    %337 = tpu.matmul %334, %336, %cst_176 {dimension_numbers = #tpu.dot_dimension_numbers<[1], [0], [0], [1], [0, 0, 1, 1], [], []>} : vector<8x32xf32>, vector<32x64xf32>, vector<8x64xf32> -> vector<8x64xf32>
    %c1_177 = arith.constant 1 : index
    %c0_178 = arith.constant 0 : index
    %c0_179 = arith.constant 0 : index
    %338 = vector.load %arg14[%c1_177, %c0_178, %c0_179] : memref<2x1x64xf32, #tpu.memory_space<vmem>>, vector<1x1x64xf32>
    %339 = vector.shape_cast %338 : vector<1x1x64xf32> to vector<1x64xf32>
    %340 = vector.broadcast %339 : vector<1x64xf32> to vector<8x64xf32>
    %341 = arith.addf %337, %340 : vector<8x64xf32>
    %cst_180 = arith.constant 0.000000e+00 : f32
    %342 = vector.broadcast %cst_180 : f32 to vector<8x64xf32>
    %343 = arith.maximumf %341, %342 : vector<8x64xf32>
    %c1_181 = arith.constant 1 : index
    %c0_182 = arith.constant 0 : index
    %c0_183 = arith.constant 0 : index
    %344 = vector.load %arg15[%c1_181, %c0_182, %c0_183] : memref<2x64x32xf32, #tpu.memory_space<vmem>>, vector<1x64x32xf32>
    %345 = vector.shape_cast %344 : vector<1x64x32xf32> to vector<64x32xf32>
    %cst_184 = arith.constant dense<0.000000e+00> : vector<8x32xf32>
    %346 = tpu.matmul %343, %345, %cst_184 {dimension_numbers = #tpu.dot_dimension_numbers<[1], [0], [0], [1], [0, 0, 1, 1], [], []>} : vector<8x64xf32>, vector<64x32xf32>, vector<8x32xf32> -> vector<8x32xf32>
    %c1_185 = arith.constant 1 : index
    %c0_186 = arith.constant 0 : index
    %c0_187 = arith.constant 0 : index
    %347 = vector.load %arg16[%c1_185, %c0_186, %c0_187] : memref<2x1x32xf32, #tpu.memory_space<vmem>>, vector<1x1x32xf32>
    %348 = vector.shape_cast %347 : vector<1x1x32xf32> to vector<1x32xf32>
    %349 = vector.broadcast %348 : vector<1x32xf32> to vector<8x32xf32>
    %350 = arith.addf %346, %349 : vector<8x32xf32>
    %351 = arith.addf %350, %334 : vector<8x32xf32>
    %352 = vector.extract_strided_slice %194 {offsets = [2, 0, 0], sizes = [1, 1, 32], strides = [1, 1, 1]} : vector<3x1x32xf32> to vector<1x1x32xf32>
    %353 = vector.shape_cast %352 : vector<1x1x32xf32> to vector<1x32xf32>
    %354 = vector.extract_strided_slice %196 {offsets = [2, 0, 0], sizes = [1, 1, 32], strides = [1, 1, 1]} : vector<3x1x32xf32> to vector<1x1x32xf32>
    %355 = vector.shape_cast %354 : vector<1x1x32xf32> to vector<1x32xf32>
    %cst_188 = arith.constant dense<0.000000e+00> : vector<8xf32>
    %356 = vector.multi_reduction <add>, %351, %cst_188 [1] : vector<8x32xf32> to vector<8xf32>
    %357 = vector.shape_cast %356 : vector<8xf32> to vector<8x1xf32>
    %cst_189 = arith.constant 3.200000e+01 : f32
    %358 = vector.broadcast %cst_189 : f32 to vector<8x1xf32>
    %359 = arith.divf %357, %358 : vector<8x1xf32>
    %360 = vector.broadcast %359 : vector<8x1xf32> to vector<8x32xf32>
    %361 = arith.subf %351, %360 : vector<8x32xf32>
    %362 = arith.mulf %361, %361 : vector<8x32xf32>
    %cst_190 = arith.constant dense<0.000000e+00> : vector<8xf32>
    %363 = vector.multi_reduction <add>, %362, %cst_190 [1] : vector<8x32xf32> to vector<8xf32>
    %364 = vector.shape_cast %363 : vector<8xf32> to vector<8x1xf32>
    %cst_191 = arith.constant 3.200000e+01 : f32
    %365 = vector.broadcast %cst_191 : f32 to vector<8x1xf32>
    %366 = arith.divf %364, %365 : vector<8x1xf32>
    %367 = vector.broadcast %359 : vector<8x1xf32> to vector<8x32xf32>
    %368 = arith.subf %351, %367 : vector<8x32xf32>
    %cst_192 = arith.constant 9.99999974E-6 : f32
    %369 = vector.broadcast %cst_192 : f32 to vector<8x1xf32>
    %370 = arith.addf %366, %369 : vector<8x1xf32>
    %371 = math.rsqrt %370 : vector<8x1xf32>
    %372 = vector.broadcast %371 : vector<8x1xf32> to vector<8x32xf32>
    %373 = arith.mulf %368, %372 : vector<8x32xf32>
    %374 = vector.broadcast %353 : vector<1x32xf32> to vector<8x32xf32>
    %375 = arith.mulf %373, %374 : vector<8x32xf32>
    %376 = vector.broadcast %355 : vector<1x32xf32> to vector<8x32xf32>
    %377 = arith.addf %375, %376 : vector<8x32xf32>
    %378 = vector.shape_cast %377 : vector<8x32xf32> to vector<1x8x32xf32>
    %c0_193 = arith.constant 0 : index
    %c0_194 = arith.constant 0 : index
    %c0_195 = arith.constant 0 : index
    %379 = vector.load %arg19[%c0_193, %c0_194, %c0_195] : memref<1x8x32xf32, #tpu.memory_space<vmem>>, vector<1x8x32xf32>
    tpu.vector_store %arg19[%c0_193, %c0_194, %c0_195], %378 {strides = array<i32>} : memref<1x8x32xf32, #tpu.memory_space<vmem>>, vector<1x8x32xf32>,
    return
  }
  func.func @transform_0(%arg0: i32) -> (i32, i32, i32) {
    %c0_i32 = arith.constant 0 : i32
    %c0_i32_0 = arith.constant 0 : i32
    %c0_i32_1 = arith.constant 0 : i32
    return %arg0, %c0_i32, %c0_i32_0 : i32, i32, i32
  }
  func.func @transform_1(%arg0: i32) -> (i32, i32, i32) {
    %c0_i32 = arith.constant 0 : i32
    %c0_i32_0 = arith.constant 0 : i32
    %c0_i32_1 = arith.constant 0 : i32
    return %arg0, %c0_i32, %c0_i32_0 : i32, i32, i32
  }
  func.func @transform_2(%arg0: i32) -> (i32, i32) {
    %c0_i32 = arith.constant 0 : i32
    %c0_i32_0 = arith.constant 0 : i32
    %c0_i32_1 = arith.constant 0 : i32
    return %c0_i32, %c0_i32_0 : i32, i32
  }
  func.func @transform_3(%arg0: i32) -> (i32, i32) {
    %c0_i32 = arith.constant 0 : i32
    %c0_i32_0 = arith.constant 0 : i32
    %c0_i32_1 = arith.constant 0 : i32
    return %c0_i32, %c0_i32_0 : i32, i32
  }
  func.func @transform_4(%arg0: i32) -> (i32, i32, i32, i32) {
    %c0_i32 = arith.constant 0 : i32
    %c0_i32_0 = arith.constant 0 : i32
    %c0_i32_1 = arith.constant 0 : i32
    %c0_i32_2 = arith.constant 0 : i32
    %c0_i32_3 = arith.constant 0 : i32
    return %c0_i32, %c0_i32_0, %c0_i32_1, %c0_i32_2 : i32, i32, i32, i32
  }
  func.func @transform_5(%arg0: i32) -> (i32, i32, i32, i32) {
    %c0_i32 = arith.constant 0 : i32
    %c0_i32_0 = arith.constant 0 : i32
    %c0_i32_1 = arith.constant 0 : i32
    %c0_i32_2 = arith.constant 0 : i32
    %c0_i32_3 = arith.constant 0 : i32
    return %c0_i32, %c0_i32_0, %c0_i32_1, %c0_i32_2 : i32, i32, i32, i32
  }
  func.func @transform_6(%arg0: i32) -> (i32, i32, i32, i32) {
    %c0_i32 = arith.constant 0 : i32
    %c0_i32_0 = arith.constant 0 : i32
    %c0_i32_1 = arith.constant 0 : i32
    %c0_i32_2 = arith.constant 0 : i32
    %c0_i32_3 = arith.constant 0 : i32
    return %c0_i32, %c0_i32_0, %c0_i32_1, %c0_i32_2 : i32, i32, i32, i32
  }
  func.func @transform_7(%arg0: i32) -> (i32, i32, i32) {
    %c0_i32 = arith.constant 0 : i32
    %c0_i32_0 = arith.constant 0 : i32
    %c0_i32_1 = arith.constant 0 : i32
    %c0_i32_2 = arith.constant 0 : i32
    return %c0_i32, %c0_i32_0, %c0_i32_1 : i32, i32, i32
  }
  func.func @transform_8(%arg0: i32) -> (i32, i32, i32, i32) {
    %c0_i32 = arith.constant 0 : i32
    %c0_i32_0 = arith.constant 0 : i32
    %c0_i32_1 = arith.constant 0 : i32
    %c0_i32_2 = arith.constant 0 : i32
    %c0_i32_3 = arith.constant 0 : i32
    return %c0_i32, %c0_i32_0, %c0_i32_1, %c0_i32_2 : i32, i32, i32, i32
  }
  func.func @transform_9(%arg0: i32) -> (i32, i32, i32, i32) {
    %c0_i32 = arith.constant 0 : i32
    %c0_i32_0 = arith.constant 0 : i32
    %c0_i32_1 = arith.constant 0 : i32
    %c0_i32_2 = arith.constant 0 : i32
    %c0_i32_3 = arith.constant 0 : i32
    return %c0_i32, %c0_i32_0, %c0_i32_1, %c0_i32_2 : i32, i32, i32, i32
  }
  func.func @transform_10(%arg0: i32) -> (i32, i32, i32, i32) {
    %c0_i32 = arith.constant 0 : i32
    %c0_i32_0 = arith.constant 0 : i32
    %c0_i32_1 = arith.constant 0 : i32
    %c0_i32_2 = arith.constant 0 : i32
    %c0_i32_3 = arith.constant 0 : i32
    return %c0_i32, %c0_i32_0, %c0_i32_1, %c0_i32_2 : i32, i32, i32, i32
  }
  func.func @transform_11(%arg0: i32) -> (i32, i32, i32) {
    %c0_i32 = arith.constant 0 : i32
    %c0_i32_0 = arith.constant 0 : i32
    %c0_i32_1 = arith.constant 0 : i32
    %c0_i32_2 = arith.constant 0 : i32
    return %c0_i32, %c0_i32_0, %c0_i32_1 : i32, i32, i32
  }
  func.func @transform_12(%arg0: i32) -> (i32, i32, i32) {
    %c0_i32 = arith.constant 0 : i32
    %c0_i32_0 = arith.constant 0 : i32
    %c0_i32_1 = arith.constant 0 : i32
    %c0_i32_2 = arith.constant 0 : i32
    return %c0_i32, %c0_i32_0, %c0_i32_1 : i32, i32, i32
  }
  func.func @transform_13(%arg0: i32) -> (i32, i32, i32) {
    %c0_i32 = arith.constant 0 : i32
    %c0_i32_0 = arith.constant 0 : i32
    %c0_i32_1 = arith.constant 0 : i32
    %c0_i32_2 = arith.constant 0 : i32
    return %c0_i32, %c0_i32_0, %c0_i32_1 : i32, i32, i32
  }
  func.func @transform_14(%arg0: i32) -> (i32, i32, i32) {
    %c0_i32 = arith.constant 0 : i32
    %c0_i32_0 = arith.constant 0 : i32
    %c0_i32_1 = arith.constant 0 : i32
    %c0_i32_2 = arith.constant 0 : i32
    return %c0_i32, %c0_i32_0, %c0_i32_1 : i32, i32, i32
  }
  func.func @transform_15(%arg0: i32) -> (i32, i32, i32) {
    %c0_i32 = arith.constant 0 : i32
    %c0_i32_0 = arith.constant 0 : i32
    %c0_i32_1 = arith.constant 0 : i32
    %c0_i32_2 = arith.constant 0 : i32
    return %c0_i32, %c0_i32_0, %c0_i32_1 : i32, i32, i32
  }
  func.func @transform_16(%arg0: i32) -> (i32, i32, i32, i32) {
    %c0_i32 = arith.constant 0 : i32
    %c0_i32_0 = arith.constant 0 : i32
    %c0_i32_1 = arith.constant 0 : i32
    %c0_i32_2 = arith.constant 0 : i32
    %c0_i32_3 = arith.constant 0 : i32
    return %c0_i32, %c0_i32_0, %c0_i32_1, %c0_i32_2 : i32, i32, i32, i32
  }
  func.func @transform_17(%arg0: i32) -> (i32, i32, i32, i32) {
    %c0_i32 = arith.constant 0 : i32
    %c0_i32_0 = arith.constant 0 : i32
    %c0_i32_1 = arith.constant 0 : i32
    %c0_i32_2 = arith.constant 0 : i32
    %c0_i32_3 = arith.constant 0 : i32
    return %c0_i32, %c0_i32_0, %c0_i32_1, %c0_i32_2 : i32, i32, i32, i32
  }
  func.func @transform_18(%arg0: i32) -> (i32, i32, i32) {
    %c0_i32 = arith.constant 0 : i32
    %c0_i32_0 = arith.constant 0 : i32
    %c0_i32_1 = arith.constant 0 : i32
    return %arg0, %c0_i32, %c0_i32_0 : i32, i32, i32
  }
}

</mosaic_0001>

<llo_original>
// kernel: tpu_custom_call.1
$region0: #{tpu_custom_call.1}
  #allocation0 [shape = 'u32[]', space=smem, size = 0x4, offset = 0x4, fixed_abs, tag = 'smem constant byte address 0x4 - core index']
  #allocation1 [shape = 'u32[144,128]{1,0:T(1,128)}', space=vmem, size = 0x12000, scoped, tag = 'internal scratch']
  %s0 = inlined_call_operand.vmem [shape: f32[2,8,32], index: 0, kind: input, shape index: {}]
  %s1 = inlined_call_operand.vmem [shape: f32[2,8,32], index: 1, kind: input, shape index: {}]
  %s2 = inlined_call_operand.vmem [shape: f32[8,8], index: 2, kind: input, shape index: {}]
  %s3 = inlined_call_operand.vmem [shape: f32[8,8], index: 3, kind: input, shape index: {}]
  %s4 = inlined_call_operand.vmem [shape: f32[2,12,32,8], index: 4, kind: input, shape index: {}]
  %s5 = inlined_call_operand.vmem [shape: f32[2,12,1,8], index: 5, kind: input, shape index: {}]
  %s6 = inlined_call_operand.vmem [shape: f32[2,4,8,32], index: 6, kind: input, shape index: {}]
  %s7 = inlined_call_operand.vmem [shape: f32[2,1,32], index: 7, kind: input, shape index: {}]
  %s8 = inlined_call_operand.vmem [shape: f32[2,12,32,8], index: 8, kind: input, shape index: {}]
  %s9 = inlined_call_operand.vmem [shape: f32[2,12,1,8], index: 9, kind: input, shape index: {}]
  %s10 = inlined_call_operand.vmem [shape: f32[2,4,8,32], index: 10, kind: input, shape index: {}]
  %s11 = inlined_call_operand.vmem [shape: f32[2,1,32], index: 11, kind: input, shape index: {}]
  %s12 = inlined_call_operand.vmem [shape: f32[2,32,64], index: 12, kind: input, shape index: {}]
  %s13 = inlined_call_operand.vmem [shape: f32[2,1,64], index: 13, kind: input, shape index: {}]
  %s14 = inlined_call_operand.vmem [shape: f32[2,64,32], index: 14, kind: input, shape index: {}]
  %s15 = inlined_call_operand.vmem [shape: f32[2,1,32], index: 15, kind: input, shape index: {}]
  %s16 = inlined_call_operand.vmem [shape: f32[2,3,1,32], index: 16, kind: input, shape index: {}]
  %s17 = inlined_call_operand.vmem [shape: f32[2,3,1,32], index: 17, kind: input, shape index: {}]
  %s18 = inlined_call_operand.hbm [shape: f32[2,8,32], index: 18, kind: output, shape index: {}]
  %s19 = sld [smem:[#allocation0]]
  $region105: #{tpu_custom_call.1} parent=0
    _
  %s21 = ssub.s32 1, %s19
  %s22 = scalar_select 0, %s21, %s19
  $region1: #{tpu_custom_call.1} parent=0
    #allocation2 [shape = 'u8[8192]{0}', space=vmem, size = 0x2000, scoped, tag = 'output window, operand 0']
    #allocation3 [shape = 's32[2]{0}', space=sflag, size = 0x8, scoped, tag = 'scoped memory for tpu_custom_call.1']
    %23 = vsyncpa [#allocation3], 0
    %s24 = scalar_lea.sflag [#allocation3], 1
    %25 = vsyncpa %s24, 0
    loop: start=0, step=1, limit=4
    $region2: #{tpu_custom_call.1} parent=1 // loop_pre_header
      _
    $region3: #{tpu_custom_call.1} parent=1 // loop_header
      %s27 = sphi 0, %s31
      %p28 = scmp.ge.s32.totalorder %s27, 4
      %s37 = sphi 0, %s39
      %s40 = sphi 0, %s37
      %s41 = sphi 0, %s40
      %s57 = sphi 0, %s41
      %s63 = sphi 0, %s65
      %s66 = sphi 0, %s63
      %s67 = sphi 0, %s66
      %s83 = sphi 0, %s67
      %s87 = sphi 0, %s87
      %s89 = sphi 0, %s87
      %s90 = sphi 0, %s89
      %s104 = sphi 0, %s90
      %s108 = sphi 0, %s108
      %s110 = sphi 0, %s108
      %s111 = sphi 0, %s110
      %s125 = sphi 0, %s111
      %s129 = sphi 0, %s129
      %s131 = sphi 0, %s129
      %s132 = sphi 0, %s131
      %s146 = sphi 0, %s132
      %s150 = sphi 0, %s150
      %s152 = sphi 0, %s150
      %s153 = sphi 0, %s152
      %s167 = sphi 0, %s153
      %s171 = sphi 0, %s171
      %s173 = sphi 0, %s171
      %s174 = sphi 0, %s173
      %s188 = sphi 0, %s174
      %s192 = sphi 0, %s192
      %s194 = sphi 0, %s192
      %s195 = sphi 0, %s194
      %s209 = sphi 0, %s195
      %s213 = sphi 0, %s213
      %s215 = sphi 0, %s213
      %s216 = sphi 0, %s215
      %s230 = sphi 0, %s216
      %s234 = sphi 0, %s234
      %s236 = sphi 0, %s234
      %s237 = sphi 0, %s236
      %s251 = sphi 0, %s237
      %s255 = sphi 0, %s255
      %s257 = sphi 0, %s255
      %s258 = sphi 0, %s257
      %s272 = sphi 0, %s258
      %s276 = sphi 0, %s276
      %s278 = sphi 0, %s276
      %s279 = sphi 0, %s278
      %s293 = sphi 0, %s279
      %s297 = sphi 0, %s297
      %s299 = sphi 0, %s297
      %s300 = sphi 0, %s299
      %s314 = sphi 0, %s300
      %s318 = sphi 0, %s318
      %s320 = sphi 0, %s318
      %s321 = sphi 0, %s320
      %s335 = sphi 0, %s321
      %s339 = sphi 0, %s339
      %s341 = sphi 0, %s339
      %s342 = sphi 0, %s341
      %s356 = sphi 0, %s342
      %s360 = sphi 0, %s360
      %s362 = sphi 0, %s360
      %s363 = sphi 0, %s362
      %s377 = sphi 0, %s363
      %s381 = sphi 0, %s381
      %s383 = sphi 0, %s381
      %s384 = sphi 0, %s383
      %s398 = sphi 0, %s384
      %s402 = sphi 0, %s402
      %s404 = sphi 0, %s402
      %s405 = sphi 0, %s404
      %s419 = sphi 0, %s405
      %s425 = sphi 0, %s427
      %s428 = sphi 0, %s425
      %s429 = sphi 0, %s428
      %s445 = sphi 0, %s429
    $region4: #{tpu_custom_call.1} parent=1 // loop_header_branch
      %30 = sbr.rel (%p28) target = $region8
    $region5: #{tpu_custom_call.1} parent=1 // loop_body
      %s32 = ssub.s32 %s27, 1
      %s33 = ssub.s32 %s27, 2
      %s34 = sadd.s32 %s27, 1
      %s35 = ssub.s32 %s27, %s34
      %p36 = scmp.eq.s32.totalorder %s35, 0
      %s38 = sadd.s32 %s37, 1
      %s39 = scalar_select %p36, %s37, %s38
      %p42 = pneg %p36
      %p43 = scmp.eq.s32.totalorder %s27, 1
      %p44 = por %p42, %p43
      %p45 = scmp.ne.s32.totalorder %s37, %s40
      %p46 = scmp.eq.s32.totalorder %s27, 0
      %p47 = por %p45, %p46
      %p48 = scmp.ne.s32.totalorder %s37, %s40
      %p49 = scmp.eq.s32.totalorder %s32, 1
      %p50 = por %p48, %p49
      %p51 = scmp.ne.s32.totalorder %s40, %s41
      %p52 = scmp.eq.s32.totalorder %s32, 0
      %p53 = por %p51, %p52
      %p54 = scmp.ne.s32.totalorder %s40, %s41
      %p55 = scmp.eq.s32.totalorder %s33, 1
      %p56 = por %p54, %p55
      %p58 = scmp.ne.s32.totalorder %s41, %s57
      %p59 = scmp.eq.s32.totalorder %s33, 0
      %p60 = por %p58, %p59
      %s61 = ssub.s32 %s27, %s34
      %p62 = scmp.eq.s32.totalorder %s61, 0
      %s64 = sadd.s32 %s63, 1
      %s65 = scalar_select %p62, %s63, %s64
      %p68 = pneg %p62
      %p69 = scmp.eq.s32.totalorder %s27, 1
      %p70 = por %p68, %p69
      %p71 = scmp.ne.s32.totalorder %s63, %s66
      %p72 = scmp.eq.s32.totalorder %s27, 0
      %p73 = por %p71, %p72
      %p74 = scmp.ne.s32.totalorder %s63, %s66
      %p75 = scmp.eq.s32.totalorder %s32, 1
      %p76 = por %p74, %p75
      %p77 = scmp.ne.s32.totalorder %s66, %s67
      %p78 = scmp.eq.s32.totalorder %s32, 0
      %p79 = por %p77, %p78
      %p80 = scmp.ne.s32.totalorder %s66, %s67
      %p81 = scmp.eq.s32.totalorder %s33, 1
      %p82 = por %p80, %p81
      %p84 = scmp.ne.s32.totalorder %s67, %s83
      %p85 = scmp.eq.s32.totalorder %s33, 0
      %p86 = por %p84, %p85
      %s88 = sadd.s32 %s87, 1
      %p91 = scmp.eq.s32.totalorder %s27, 1
      %p92 = scmp.ne.s32.totalorder %s87, %s89
      %p93 = scmp.eq.s32.totalorder %s27, 0
      %p94 = por %p92, %p93
      %p95 = scmp.ne.s32.totalorder %s87, %s89
      %p96 = scmp.eq.s32.totalorder %s32, 1
      %p97 = por %p95, %p96
      %p98 = scmp.ne.s32.totalorder %s89, %s90
      %p99 = scmp.eq.s32.totalorder %s32, 0
      %p100 = por %p98, %p99
      %p101 = scmp.ne.s32.totalorder %s89, %s90
      %p102 = scmp.eq.s32.totalorder %s33, 1
      %p103 = por %p101, %p102
      %p105 = scmp.ne.s32.totalorder %s90, %s104
      %p106 = scmp.eq.s32.totalorder %s33, 0
      %p107 = por %p105, %p106
      %s109 = sadd.s32 %s108, 1
      %p112 = scmp.eq.s32.totalorder %s27, 1
      %p113 = scmp.ne.s32.totalorder %s108, %s110
      %p114 = scmp.eq.s32.totalorder %s27, 0
      %p115 = por %p113, %p114
      %p116 = scmp.ne.s32.totalorder %s108, %s110
      %p117 = scmp.eq.s32.totalorder %s32, 1
      %p118 = por %p116, %p117
      %p119 = scmp.ne.s32.totalorder %s110, %s111
      %p120 = scmp.eq.s32.totalorder %s32, 0
      %p121 = por %p119, %p120
      %p122 = scmp.ne.s32.totalorder %s110, %s111
      %p123 = scmp.eq.s32.totalorder %s33, 1
      %p124 = por %p122, %p123
      %p126 = scmp.ne.s32.totalorder %s111, %s125
      %p127 = scmp.eq.s32.totalorder %s33, 0
      %p128 = por %p126, %p127
      %s130 = sadd.s32 %s129, 1
      %p133 = scmp.eq.s32.totalorder %s27, 1
      %p134 = scmp.ne.s32.totalorder %s129, %s131
      %p135 = scmp.eq.s32.totalorder %s27, 0
      %p136 = por %p134, %p135
      %p137 = scmp.ne.s32.totalorder %s129, %s131
      %p138 = scmp.eq.s32.totalorder %s32, 1
      %p139 = por %p137, %p138
      %p140 = scmp.ne.s32.totalorder %s131, %s132
      %p141 = scmp.eq.s32.totalorder %s32, 0
      %p142 = por %p140, %p141
      %p143 = scmp.ne.s32.totalorder %s131, %s132
      %p144 = scmp.eq.s32.totalorder %s33, 1
      %p145 = por %p143, %p144
      %p147 = scmp.ne.s32.totalorder %s132, %s146
      %p148 = scmp.eq.s32.totalorder %s33, 0
      %p149 = por %p147, %p148
      %s151 = sadd.s32 %s150, 1
      %p154 = scmp.eq.s32.totalorder %s27, 1
      %p155 = scmp.ne.s32.totalorder %s150, %s152
      %p156 = scmp.eq.s32.totalorder %s27, 0
      %p157 = por %p155, %p156
      %p158 = scmp.ne.s32.totalorder %s150, %s152
      %p159 = scmp.eq.s32.totalorder %s32, 1
      %p160 = por %p158, %p159
      %p161 = scmp.ne.s32.totalorder %s152, %s153
      %p162 = scmp.eq.s32.totalorder %s32, 0
      %p163 = por %p161, %p162
      %p164 = scmp.ne.s32.totalorder %s152, %s153
      %p165 = scmp.eq.s32.totalorder %s33, 1
      %p166 = por %p164, %p165
      %p168 = scmp.ne.s32.totalorder %s153, %s167
      %p169 = scmp.eq.s32.totalorder %s33, 0
      %p170 = por %p168, %p169
      %s172 = sadd.s32 %s171, 1
      %p175 = scmp.eq.s32.totalorder %s27, 1
      %p176 = scmp.ne.s32.totalorder %s171, %s173
      %p177 = scmp.eq.s32.totalorder %s27, 0
      %p178 = por %p176, %p177
      %p179 = scmp.ne.s32.totalorder %s171, %s173
      %p180 = scmp.eq.s32.totalorder %s32, 1
      %p181 = por %p179, %p180
      %p182 = scmp.ne.s32.totalorder %s173, %s174
      %p183 = scmp.eq.s32.totalorder %s32, 0
      %p184 = por %p182, %p183
      %p185 = scmp.ne.s32.totalorder %s173, %s174
      %p186 = scmp.eq.s32.totalorder %s33, 1
      %p187 = por %p185, %p186
      %p189 = scmp.ne.s32.totalorder %s174, %s188
      %p190 = scmp.eq.s32.totalorder %s33, 0
      %p191 = por %p189, %p190
      %s193 = sadd.s32 %s192, 1
      %p196 = scmp.eq.s32.totalorder %s27, 1
      %p197 = scmp.ne.s32.totalorder %s192, %s194
      %p198 = scmp.eq.s32.totalorder %s27, 0
      %p199 = por %p197, %p198
      %p200 = scmp.ne.s32.totalorder %s192, %s194
      %p201 = scmp.eq.s32.totalorder %s32, 1
      %p202 = por %p200, %p201
      %p203 = scmp.ne.s32.totalorder %s194, %s195
      %p204 = scmp.eq.s32.totalorder %s32, 0
      %p205 = por %p203, %p204
      %p206 = scmp.ne.s32.totalorder %s194, %s195
      %p207 = scmp.eq.s32.totalorder %s33, 1
      %p208 = por %p206, %p207
      %p210 = scmp.ne.s32.totalorder %s195, %s209
      %p211 = scmp.eq.s32.totalorder %s33, 0
      %p212 = por %p210, %p211
      %s214 = sadd.s32 %s213, 1
      %p217 = scmp.eq.s32.totalorder %s27, 1
      %p218 = scmp.ne.s32.totalorder %s213, %s215
      %p219 = scmp.eq.s32.totalorder %s27, 0
      %p220 = por %p218, %p219
      %p221 = scmp.ne.s32.totalorder %s213, %s215
      %p222 = scmp.eq.s32.totalorder %s32, 1
      %p223 = por %p221, %p222
      %p224 = scmp.ne.s32.totalorder %s215, %s216
      %p225 = scmp.eq.s32.totalorder %s32, 0
      %p226 = por %p224, %p225
      %p227 = scmp.ne.s32.totalorder %s215, %s216
      %p228 = scmp.eq.s32.totalorder %s33, 1
      %p229 = por %p227, %p228
      %p231 = scmp.ne.s32.totalorder %s216, %s230
      %p232 = scmp.eq.s32.totalorder %s33, 0
      %p233 = por %p231, %p232
      %s235 = sadd.s32 %s234, 1
      %p238 = scmp.eq.s32.totalorder %s27, 1
      %p239 = scmp.ne.s32.totalorder %s234, %s236
      %p240 = scmp.eq.s32.totalorder %s27, 0
      %p241 = por %p239, %p240
      %p242 = scmp.ne.s32.totalorder %s234, %s236
      %p243 = scmp.eq.s32.totalorder %s32, 1
      %p244 = por %p242, %p243
      %p245 = scmp.ne.s32.totalorder %s236, %s237
      %p246 = scmp.eq.s32.totalorder %s32, 0
      %p247 = por %p245, %p246
      %p248 = scmp.ne.s32.totalorder %s236, %s237
      %p249 = scmp.eq.s32.totalorder %s33, 1
      %p250 = por %p248, %p249
      %p252 = scmp.ne.s32.totalorder %s237, %s251
      %p253 = scmp.eq.s32.totalorder %s33, 0
      %p254 = por %p252, %p253
      %s256 = sadd.s32 %s255, 1
      %p259 = scmp.eq.s32.totalorder %s27, 1
      %p260 = scmp.ne.s32.totalorder %s255, %s257
      %p261 = scmp.eq.s32.totalorder %s27, 0
      %p262 = por %p260, %p261
      %p263 = scmp.ne.s32.totalorder %s255, %s257
      %p264 = scmp.eq.s32.totalorder %s32, 1
      %p265 = por %p263, %p264
      %p266 = scmp.ne.s32.totalorder %s257, %s258
      %p267 = scmp.eq.s32.totalorder %s32, 0
      %p268 = por %p266, %p267
      %p269 = scmp.ne.s32.totalorder %s257, %s258
      %p270 = scmp.eq.s32.totalorder %s33, 1
      %p271 = por %p269, %p270
      %p273 = scmp.ne.s32.totalorder %s258, %s272
      %p274 = scmp.eq.s32.totalorder %s33, 0
      %p275 = por %p273, %p274
      %s277 = sadd.s32 %s276, 1
      %p280 = scmp.eq.s32.totalorder %s27, 1
      %p281 = scmp.ne.s32.totalorder %s276, %s278
      %p282 = scmp.eq.s32.totalorder %s27, 0
      %p283 = por %p281, %p282
      %p284 = scmp.ne.s32.totalorder %s276, %s278
      %p285 = scmp.eq.s32.totalorder %s32, 1
      %p286 = por %p284, %p285
      %p287 = scmp.ne.s32.totalorder %s278, %s279
      %p288 = scmp.eq.s32.totalorder %s32, 0
      %p289 = por %p287, %p288
      %p290 = scmp.ne.s32.totalorder %s278, %s279
      %p291 = scmp.eq.s32.totalorder %s33, 1
      %p292 = por %p290, %p291
      %p294 = scmp.ne.s32.totalorder %s279, %s293
      %p295 = scmp.eq.s32.totalorder %s33, 0
      %p296 = por %p294, %p295
      %s298 = sadd.s32 %s297, 1
      %p301 = scmp.eq.s32.totalorder %s27, 1
      %p302 = scmp.ne.s32.totalorder %s297, %s299
      %p303 = scmp.eq.s32.totalorder %s27, 0
      %p304 = por %p302, %p303
      %p305 = scmp.ne.s32.totalorder %s297, %s299
      %p306 = scmp.eq.s32.totalorder %s32, 1
      %p307 = por %p305, %p306
      %p308 = scmp.ne.s32.totalorder %s299, %s300
      %p309 = scmp.eq.s32.totalorder %s32, 0
      %p310 = por %p308, %p309
      %p311 = scmp.ne.s32.totalorder %s299, %s300
      %p312 = scmp.eq.s32.totalorder %s33, 1
      %p313 = por %p311, %p312
      %p315 = scmp.ne.s32.totalorder %s300, %s314
      %p316 = scmp.eq.s32.totalorder %s33, 0
      %p317 = por %p315, %p316
      %s319 = sadd.s32 %s318, 1
      %p322 = scmp.eq.s32.totalorder %s27, 1
      %p323 = scmp.ne.s32.totalorder %s318, %s320
      %p324 = scmp.eq.s32.totalorder %s27, 0
      %p325 = por %p323, %p324
      %p326 = scmp.ne.s32.totalorder %s318, %s320
      %p327 = scmp.eq.s32.totalorder %s32, 1
      %p328 = por %p326, %p327
      %p329 = scmp.ne.s32.totalorder %s320, %s321
      %p330 = scmp.eq.s32.totalorder %s32, 0
      %p331 = por %p329, %p330
      %p332 = scmp.ne.s32.totalorder %s320, %s321
      %p333 = scmp.eq.s32.totalorder %s33, 1
      %p334 = por %p332, %p333
      %p336 = scmp.ne.s32.totalorder %s321, %s335
      %p337 = scmp.eq.s32.totalorder %s33, 0
      %p338 = por %p336, %p337
      %s340 = sadd.s32 %s339, 1
      %p343 = scmp.eq.s32.totalorder %s27, 1
      %p344 = scmp.ne.s32.totalorder %s339, %s341
      %p345 = scmp.eq.s32.totalorder %s27, 0
      %p346 = por %p344, %p345
      %p347 = scmp.ne.s32.totalorder %s339, %s341
      %p348 = scmp.eq.s32.totalorder %s32, 1
      %p349 = por %p347, %p348
      %p350 = scmp.ne.s32.totalorder %s341, %s342
      %p351 = scmp.eq.s32.totalorder %s32, 0
      %p352 = por %p350, %p351
      %p353 = scmp.ne.s32.totalorder %s341, %s342
      %p354 = scmp.eq.s32.totalorder %s33, 1
      %p355 = por %p353, %p354
      %p357 = scmp.ne.s32.totalorder %s342, %s356
      %p358 = scmp.eq.s32.totalorder %s33, 0
      %p359 = por %p357, %p358
      %s361 = sadd.s32 %s360, 1
      %p364 = scmp.eq.s32.totalorder %s27, 1
      %p365 = scmp.ne.s32.totalorder %s360, %s362
      %p366 = scmp.eq.s32.totalorder %s27, 0
      %p367 = por %p365, %p366
      %p368 = scmp.ne.s32.totalorder %s360, %s362
      %p369 = scmp.eq.s32.totalorder %s32, 1
      %p370 = por %p368, %p369
      %p371 = scmp.ne.s32.totalorder %s362, %s363
      %p372 = scmp.eq.s32.totalorder %s32, 0
      %p373 = por %p371, %p372
      %p374 = scmp.ne.s32.totalorder %s362, %s363
      %p375 = scmp.eq.s32.totalorder %s33, 1
      %p376 = por %p374, %p375
      %p378 = scmp.ne.s32.totalorder %s363, %s377
      %p379 = scmp.eq.s32.totalorder %s33, 0
      %p380 = por %p378, %p379
      %s382 = sadd.s32 %s381, 1
      %p385 = scmp.eq.s32.totalorder %s27, 1
      %p386 = scmp.ne.s32.totalorder %s381, %s383
      %p387 = scmp.eq.s32.totalorder %s27, 0
      %p388 = por %p386, %p387
      %p389 = scmp.ne.s32.totalorder %s381, %s383
      %p390 = scmp.eq.s32.totalorder %s32, 1
      %p391 = por %p389, %p390
      %p392 = scmp.ne.s32.totalorder %s383, %s384
      %p393 = scmp.eq.s32.totalorder %s32, 0
      %p394 = por %p392, %p393
      %p395 = scmp.ne.s32.totalorder %s383, %s384
      %p396 = scmp.eq.s32.totalorder %s33, 1
      %p397 = por %p395, %p396
      %p399 = scmp.ne.s32.totalorder %s384, %s398
      %p400 = scmp.eq.s32.totalorder %s33, 0
      %p401 = por %p399, %p400
      %s403 = sadd.s32 %s402, 1
      %p406 = scmp.eq.s32.totalorder %s27, 1
      %p407 = scmp.ne.s32.totalorder %s402, %s404
      %p408 = scmp.eq.s32.totalorder %s27, 0
      %p409 = por %p407, %p408
      %p410 = scmp.ne.s32.totalorder %s402, %s404
      %p411 = scmp.eq.s32.totalorder %s32, 1
      %p412 = por %p410, %p411
      %p413 = scmp.ne.s32.totalorder %s404, %s405
      %p414 = scmp.eq.s32.totalorder %s32, 0
      %p415 = por %p413, %p414
      %p416 = scmp.ne.s32.totalorder %s404, %s405
      %p417 = scmp.eq.s32.totalorder %s33, 1
      %p418 = por %p416, %p417
      %p420 = scmp.ne.s32.totalorder %s405, %s419
      %p421 = scmp.eq.s32.totalorder %s33, 0
      %p422 = por %p420, %p421
      %s423 = ssub.s32 %s27, %s34
      %p424 = scmp.eq.s32.totalorder %s423, 0
      %s426 = sadd.s32 %s425, 1
      %s427 = scalar_select %p424, %s425, %s426
      %p430 = pneg %p424
      %p431 = scmp.eq.s32.totalorder %s27, 1
      %p432 = por %p430, %p431
      %p433 = scmp.ne.s32.totalorder %s425, %s428
      %p434 = scmp.eq.s32.totalorder %s27, 0
      %p435 = por %p433, %p434
      %p436 = scmp.ne.s32.totalorder %s425, %s428
      %p437 = scmp.eq.s32.totalorder %s32, 1
      %p438 = por %p436, %p437
      %p439 = scmp.ne.s32.totalorder %s428, %s429
      %p440 = scmp.eq.s32.totalorder %s32, 0
      %p441 = por %p439, %p440
      %p442 = scmp.ne.s32.totalorder %s428, %s429
      %p443 = scmp.eq.s32.totalorder %s33, 1
      %p444 = por %p442, %p443
      %p446 = scmp.ne.s32.totalorder %s429, %s445
      %p447 = scmp.eq.s32.totalorder %s33, 0
      %p448 = por %p446, %p447
      %p449 = scmp.le.s32.totalorder 1, %s27
      %p450 = scmp.lt.s32.totalorder %s27, 3
      %p451 = pnand %p449, %p450
      %p452 = pneg %p451
      // Predicated region
      $region9: #{tpu_custom_call.1} parent=5 // pred_check
        _
      $region10: #{tpu_custom_call.1} parent=5 // pred_check_branch
        %454 = sbr.rel (%p451) target = $region12
      $region11: #{tpu_custom_call.1} parent=5 // pred_region
        %s455 = ssub.s32 %s27, 1
        // Predicated region
        $region13: #{tpu_custom_call.1} parent=11 // pred_check
          %p456 = pneg %p100
        $region14: #{tpu_custom_call.1} parent=11 // pred_check_branch
          %458 = sbr.rel (%p456) target = $region16
        $region15: #{tpu_custom_call.1} parent=11 // pred_region
          _
        $region16: #{tpu_custom_call.1} parent=11 // pred_fallthru
          _
        // Predicated region
        $region17: #{tpu_custom_call.1} parent=11 // pred_check
          %p459 = pneg %p121
        $region18: #{tpu_custom_call.1} parent=11 // pred_check_branch
          %461 = sbr.rel (%p459) target = $region20
        $region19: #{tpu_custom_call.1} parent=11 // pred_region
          _
        $region20: #{tpu_custom_call.1} parent=11 // pred_fallthru
          _
        // Predicated region
        $region21: #{tpu_custom_call.1} parent=11 // pred_check
          %p462 = pneg %p142
        $region22: #{tpu_custom_call.1} parent=11 // pred_check_branch
          %464 = sbr.rel (%p462) target = $region24
        $region23: #{tpu_custom_call.1} parent=11 // pred_region
          _
        $region24: #{tpu_custom_call.1} parent=11 // pred_fallthru
          _
        // Predicated region
        $region25: #{tpu_custom_call.1} parent=11 // pred_check
          %p465 = pneg %p163
        $region26: #{tpu_custom_call.1} parent=11 // pred_check_branch
          %467 = sbr.rel (%p465) target = $region28
        $region27: #{tpu_custom_call.1} parent=11 // pred_region
          _
        $region28: #{tpu_custom_call.1} parent=11 // pred_fallthru
          _
        // Predicated region
        $region29: #{tpu_custom_call.1} parent=11 // pred_check
          %p468 = pneg %p184
        $region30: #{tpu_custom_call.1} parent=11 // pred_check_branch
          %470 = sbr.rel (%p468) target = $region32
        $region31: #{tpu_custom_call.1} parent=11 // pred_region
          _
        $region32: #{tpu_custom_call.1} parent=11 // pred_fallthru
          _
        // Predicated region
        $region33: #{tpu_custom_call.1} parent=11 // pred_check
          %p471 = pneg %p205
        $region34: #{tpu_custom_call.1} parent=11 // pred_check_branch
          %473 = sbr.rel (%p471) target = $region36
        $region35: #{tpu_custom_call.1} parent=11 // pred_region
          _
        $region36: #{tpu_custom_call.1} parent=11 // pred_fallthru
          _
        // Predicated region
        $region37: #{tpu_custom_call.1} parent=11 // pred_check
          %p474 = pneg %p226
        $region38: #{tpu_custom_call.1} parent=11 // pred_check_branch
          %476 = sbr.rel (%p474) target = $region40
        $region39: #{tpu_custom_call.1} parent=11 // pred_region
          _
        $region40: #{tpu_custom_call.1} parent=11 // pred_fallthru
          _
        // Predicated region
        $region41: #{tpu_custom_call.1} parent=11 // pred_check
          %p477 = pneg %p247
        $region42: #{tpu_custom_call.1} parent=11 // pred_check_branch
          %479 = sbr.rel (%p477) target = $region44
        $region43: #{tpu_custom_call.1} parent=11 // pred_region
          _
        $region44: #{tpu_custom_call.1} parent=11 // pred_fallthru
          _
        // Predicated region
        $region45: #{tpu_custom_call.1} parent=11 // pred_check
          %p480 = pneg %p268
        $region46: #{tpu_custom_call.1} parent=11 // pred_check_branch
          %482 = sbr.rel (%p480) target = $region48
        $region47: #{tpu_custom_call.1} parent=11 // pred_region
          _
        $region48: #{tpu_custom_call.1} parent=11 // pred_fallthru
          _
        // Predicated region
        $region49: #{tpu_custom_call.1} parent=11 // pred_check
          %p483 = pneg %p289
        $region50: #{tpu_custom_call.1} parent=11 // pred_check_branch
          %485 = sbr.rel (%p483) target = $region52
        $region51: #{tpu_custom_call.1} parent=11 // pred_region
          _
        $region52: #{tpu_custom_call.1} parent=11 // pred_fallthru
          _
        // Predicated region
        $region53: #{tpu_custom_call.1} parent=11 // pred_check
          %p486 = pneg %p310
        $region54: #{tpu_custom_call.1} parent=11 // pred_check_branch
          %488 = sbr.rel (%p486) target = $region56
        $region55: #{tpu_custom_call.1} parent=11 // pred_region
          _
        $region56: #{tpu_custom_call.1} parent=11 // pred_fallthru
          _
        // Predicated region
        $region57: #{tpu_custom_call.1} parent=11 // pred_check
          %p489 = pneg %p331
        $region58: #{tpu_custom_call.1} parent=11 // pred_check_branch
          %491 = sbr.rel (%p489) target = $region60
        $region59: #{tpu_custom_call.1} parent=11 // pred_region
          _
        $region60: #{tpu_custom_call.1} parent=11 // pred_fallthru
          _
        // Predicated region
        $region61: #{tpu_custom_call.1} parent=11 // pred_check
          %p492 = pneg %p352
        $region62: #{tpu_custom_call.1} parent=11 // pred_check_branch
          %494 = sbr.rel (%p492) target = $region64
        $region63: #{tpu_custom_call.1} parent=11 // pred_region
          _
        $region64: #{tpu_custom_call.1} parent=11 // pred_fallthru
          _
        // Predicated region
        $region65: #{tpu_custom_call.1} parent=11 // pred_check
          %p495 = pneg %p373
        $region66: #{tpu_custom_call.1} parent=11 // pred_check_branch
          %497 = sbr.rel (%p495) target = $region68
        $region67: #{tpu_custom_call.1} parent=11 // pred_region
          _
        $region68: #{tpu_custom_call.1} parent=11 // pred_fallthru
          _
        // Predicated region
        $region69: #{tpu_custom_call.1} parent=11 // pred_check
          %p498 = pneg %p394
        $region70: #{tpu_custom_call.1} parent=11 // pred_check_branch
          %500 = sbr.rel (%p498) target = $region72
        $region71: #{tpu_custom_call.1} parent=11 // pred_region
          _
        $region72: #{tpu_custom_call.1} parent=11 // pred_fallthru
          _
        // Predicated region
        $region73: #{tpu_custom_call.1} parent=11 // pred_check
          %p501 = pneg %p415
        $region74: #{tpu_custom_call.1} parent=11 // pred_check_branch
          %503 = sbr.rel (%p501) target = $region76
        $region75: #{tpu_custom_call.1} parent=11 // pred_region
          _
        $region76: #{tpu_custom_call.1} parent=11 // pred_fallthru
          _
      $region12: #{tpu_custom_call.1} parent=5 // pred_fallthru
        _
      %p504 = scmp.lt.s32.totalorder %s27, 2
      // Predicated region
      $region77: #{tpu_custom_call.1} parent=5 // pred_check
        %p505 = pneg %p504
      $region78: #{tpu_custom_call.1} parent=5 // pred_check_branch
        %507 = sbr.rel (%p505) target = $region80
      $region79: #{tpu_custom_call.1} parent=5 // pred_region
        // Predicated region
        $region81: #{tpu_custom_call.1} parent=79 // pred_check
          %p508 = pneg %p47
        $region82: #{tpu_custom_call.1} parent=79 // pred_check_branch
          %510 = sbr.rel (%p508) target = $region84
        $region83: #{tpu_custom_call.1} parent=79 // pred_region
          %p511 = scmp.lt.s32.totalorder %s27, 1
          %s512 = scalar_select %p511, %s27, 1
          %s513 = smul.addr %s512, 8
          %s514 = scalar_lea.vmem %s0, %s513
        $region84: #{tpu_custom_call.1} parent=79 // pred_fallthru
          _
        // Predicated region
        $region85: #{tpu_custom_call.1} parent=79 // pred_check
          %p515 = pneg %p73
        $region86: #{tpu_custom_call.1} parent=79 // pred_check_branch
          %517 = sbr.rel (%p515) target = $region88
        $region87: #{tpu_custom_call.1} parent=79 // pred_region
          %p518 = scmp.lt.s32.totalorder %s27, 1
          %s519 = scalar_select %p518, %s27, 1
          %s520 = smul.addr %s519, 8
          %s521 = scalar_lea.vmem %s1, %s520
        $region88: #{tpu_custom_call.1} parent=79 // pred_fallthru
          _
      $region80: #{tpu_custom_call.1} parent=5 // pred_fallthru
        _
      %p522 = scmp.le.s32.totalorder 1, %s27
      %p523 = scmp.lt.s32.totalorder %s27, 3
      %p524 = pnand %p522, %p523
      %p525 = pneg %p524
      // Predicated region
      $region89: #{tpu_custom_call.1} parent=5 // pred_check
        _
      $region90: #{tpu_custom_call.1} parent=5 // pred_check_branch
        %527 = sbr.rel (%p524) target = $region92
      $region91: #{tpu_custom_call.1} parent=5 // pred_region
        %s528 = ssub.s32 %s27, 1
        %p529 = scmp.lt.s32.totalorder %s32, 1
        %s530 = scalar_select %p529, %s32, 1
        %s531 = smul.addr %s530, 8
        %s532 = scalar_lea.vmem %s0, %s531
        %p533 = pneg %p53
        %p534 = pneg %p50
        %p535 = scmp.lt.s32.totalorder %s32, 1
        %s536 = scalar_select %p535, %s32, 1
        %s537 = smul.addr %s536, 8
        %s538 = scalar_lea.vmem %s1, %s537
        %p539 = pneg %p79
        %p540 = pneg %p76
        %p541 = pneg %p100
        %p542 = pneg %p97
        %p543 = pneg %p121
        %p544 = pneg %p118
        %p545 = pneg %p142
        %p546 = pneg %p139
        %p547 = pneg %p163
        %p548 = pneg %p160
        %p549 = pneg %p184
        %p550 = pneg %p181
        %p551 = pneg %p205
        %p552 = pneg %p202
        %p553 = pneg %p226
        %p554 = pneg %p223
        %p555 = pneg %p247
        %p556 = pneg %p244
        %p557 = pneg %p268
        %p558 = pneg %p265
        %p559 = pneg %p289
        %p560 = pneg %p286
        %p561 = pneg %p310
        %p562 = pneg %p307
        %p563 = pneg %p331
        %p564 = pneg %p328
        %p565 = pneg %p352
        %p566 = pneg %p349
        %p567 = pneg %p373
        %p568 = pneg %p370
        %p569 = pneg %p394
        %p570 = pneg %p391
        %p571 = pneg %p415
        %p572 = pneg %p412
        %p573 = pneg %p441
        %p574 = pneg %p438
        %s575 = sand.u32 %s428, 1
        %s576 = scalar_lea.sflag [#allocation3], %s575
        %s577 = sand.u32 %s428, 1
        %s578 = smul.addr %s577, 8
        %s579 = scalar_lea.vmem [#allocation2], %s578
        %p580 = scmp.lt.s32.totalorder %s32, 1
        %s581 = scalar_select %p580, %s32, 1
        %s582 = smul.addr %s581, 8
        %s583 = scalar_lea.vmem %s0, %s582
        %p584 = scmp.lt.s32.totalorder %s32, 1
        %s585 = scalar_select %p584, %s32, 1
        %s586 = smul.addr %s585, 8
        %s587 = scalar_lea.vmem %s1, %s586
        %v588 = vld [vmem:[%s583] sm:$0xff]
        %v589 = vld [vmem:[%s587] sm:$0xff]
        %v590 = vld [vmem:[%s2] sm:$0xff]
        %v591 = vld [vmem:[%s3] sm:$0xff]
        %v592 = vld [vmem:[%s16] sm:$0x1]
        %v593 = vld [vmem:[%s16 + $0x1] sm:$0x1]
        %v594 = vld [vmem:[%s16 + $0x2] sm:$0x1]
        %v595 = vld [vmem:[%s17] sm:$0x1]
        %v596 = vld [vmem:[%s17 + $0x1] sm:$0x1]
        %v597 = vld [vmem:[%s17 + $0x2] sm:$0x1]
        %v598 = vld [vmem:[%s4] sm:$0xff]
        %v599 = vld [vmem:[%s4 + $0x8] sm:$0xff]
        %v600 = vld [vmem:[%s4 + $0x10] sm:$0xff]
        %v601 = vld [vmem:[%s4 + $0x18] sm:$0xff]
        %v602 = vld [vmem:[%s4 + $0x20] sm:$0xff]
        %v603 = vld [vmem:[%s4 + $0x28] sm:$0xff]
        %v604 = vld [vmem:[%s4 + $0x30] sm:$0xff]
        %v605 = vld [vmem:[%s4 + $0x38] sm:$0xff]
        %v606 = vld [vmem:[%s4 + $0x40] sm:$0xff]
        %v607 = vld [vmem:[%s4 + $0x48] sm:$0xff]
        %v608 = vld [vmem:[%s4 + $0x50] sm:$0xff]
        %v609 = vld [vmem:[%s4 + $0x58] sm:$0xff]
        %v610 = vld [vmem:[%s4 + $0x60] sm:$0xff]
        %v611 = vld [vmem:[%s4 + $0x68] sm:$0xff]
        %v612 = vld [vmem:[%s4 + $0x70] sm:$0xff]
        %v613 = vld [vmem:[%s4 + $0x78] sm:$0xff]
        %v614 = vld [vmem:[%s4 + $0x80] sm:$0xff]
        %v615 = vld [vmem:[%s4 + $0x88] sm:$0xff]
        %v616 = vld [vmem:[%s4 + $0x90] sm:$0xff]
        %v617 = vld [vmem:[%s4 + $0x98] sm:$0xff]
        %v618 = vld [vmem:[%s4 + $0xa0] sm:$0xff]
        %v619 = vld [vmem:[%s4 + $0xa8] sm:$0xff]
        %v620 = vld [vmem:[%s4 + $0xb0] sm:$0xff]
        %v621 = vld [vmem:[%s4 + $0xb8] sm:$0xff]
        %v622 = vld [vmem:[%s4 + $0xc0] sm:$0xff]
        %v623 = vld [vmem:[%s4 + $0xc8] sm:$0xff]
        %v624 = vld [vmem:[%s4 + $0xd0] sm:$0xff]
        %v625 = vld [vmem:[%s4 + $0xd8] sm:$0xff]
        %v626 = vld [vmem:[%s4 + $0xe0] sm:$0xff]
        %v627 = vld [vmem:[%s4 + $0xe8] sm:$0xff]
        %v628 = vld [vmem:[%s4 + $0xf0] sm:$0xff]
        %v629 = vld [vmem:[%s4 + $0xf8] sm:$0xff]
        %v630 = vld [vmem:[%s4 + $0x100] sm:$0xff]
        %v631 = vld [vmem:[%s4 + $0x108] sm:$0xff]
        %v632 = vld [vmem:[%s4 + $0x110] sm:$0xff]
        %v633 = vld [vmem:[%s4 + $0x118] sm:$0xff]
        %v634 = vld [vmem:[%s4 + $0x120] sm:$0xff]
        %v635 = vld [vmem:[%s4 + $0x128] sm:$0xff]
        %v636 = vld [vmem:[%s4 + $0x130] sm:$0xff]
        %v637 = vld [vmem:[%s4 + $0x138] sm:$0xff]
        %v638 = vld [vmem:[%s4 + $0x140] sm:$0xff]
        %v639 = vld [vmem:[%s4 + $0x148] sm:$0xff]
        %v640 = vld [vmem:[%s4 + $0x150] sm:$0xff]
        %v641 = vld [vmem:[%s4 + $0x158] sm:$0xff]
        %v642 = vld [vmem:[%s4 + $0x160] sm:$0xff]
        %v643 = vld [vmem:[%s4 + $0x168] sm:$0xff]
        %v644 = vld [vmem:[%s4 + $0x170] sm:$0xff]
        %v645 = vld [vmem:[%s4 + $0x178] sm:$0xff]
        %v646 = vld [vmem:[%s5] sm:$0x1]
        %v647 = vld [vmem:[%s5 + $0x1] sm:$0x1]
        %v648 = vld [vmem:[%s5 + $0x2] sm:$0x1]
        %v649 = vld [vmem:[%s5 + $0x3] sm:$0x1]
        %v650 = vld [vmem:[%s5 + $0x4] sm:$0x1]
        %v651 = vld [vmem:[%s5 + $0x5] sm:$0x1]
        %v652 = vld [vmem:[%s5 + $0x6] sm:$0x1]
        %v653 = vld [vmem:[%s5 + $0x7] sm:$0x1]
        %v654 = vld [vmem:[%s5 + $0x8] sm:$0x1]
        %v655 = vld [vmem:[%s5 + $0x9] sm:$0x1]
        %v656 = vld [vmem:[%s5 + $0xa] sm:$0x1]
        %v657 = vld [vmem:[%s5 + $0xb] sm:$0x1]
        %v670 = vlaneseq
        %v671 = vshrl.u32 %v670, 7
        %v672 = vsub.s32 0, %v671
        %v673 = vrot.slane %v646, %v672
        %v674 = vlaneseq
        %v675 = vshrl.u32 %v674, 7
        %v676 = vsub.s32 0, %v675
        %v677 = vrot.slane %v647, %v676
        %v678 = vlaneseq
        %v679 = vshrl.u32 %v678, 7
        %v680 = vsub.s32 0, %v679
        %v681 = vrot.slane %v648, %v680
        %v682 = vlaneseq
        %v683 = vshrl.u32 %v682, 7
        %v684 = vsub.s32 0, %v683
        %v685 = vrot.slane %v649, %v684
        %v686 = vlaneseq
        %v687 = vshrl.u32 %v686, 7
        %v688 = vsub.s32 0, %v687
        %v689 = vrot.slane %v650, %v688
        %v690 = vlaneseq
        %v691 = vshrl.u32 %v690, 7
        %v692 = vsub.s32 0, %v691
        %v693 = vrot.slane %v651, %v692
        %v694 = vlaneseq
        %v695 = vshrl.u32 %v694, 7
        %v696 = vsub.s32 0, %v695
        %v697 = vrot.slane %v652, %v696
        %v698 = vlaneseq
        %v699 = vshrl.u32 %v698, 7
        %v700 = vsub.s32 0, %v699
        %v701 = vrot.slane %v653, %v700
        %v702 = vlaneseq
        %v703 = vshrl.u32 %v702, 7
        %v704 = vsub.s32 0, %v703
        %v705 = vrot.slane %v654, %v704
        %v706 = vlaneseq
        %v707 = vshrl.u32 %v706, 7
        %v708 = vsub.s32 0, %v707
        %v709 = vrot.slane %v655, %v708
        %v710 = vlaneseq
        %v711 = vshrl.u32 %v710, 7
        %v712 = vsub.s32 0, %v711
        %v713 = vrot.slane %v656, %v712
        %v714 = vlaneseq
        %v715 = vshrl.u32 %v714, 7
        %v716 = vsub.s32 0, %v715
        %v717 = vrot.slane %v657, %v716
        %vm730 = vcmask 261120
        %v732 = vsel %vm730, %v588, 0
        %734 = vmatprep.subr.mxu0 0.0
        %735 = vmatpush1.msra.mxu0 %v598
        %736 = vmatprep.subr.mxu0 0.0
        %737 = vmatpush1.msra.mxu0 %v599
        %738 = vmatprep.subr.mxu0 0.0
        %739 = vmatpush1.msra.mxu0 %v600
        %740 = vmatprep.subr.mxu0 0.0
        %741 = vmatpush1.msra.mxu0 %v601
        %742 = vmatprep.subr.mxu0 0.0
        %743 = vmatpush1.msra.mxu0 0.0
        %744 = vmatprep.subr.mxu0 0.0
        %745 = vmatpush1.msra.mxu0 0.0
        %746 = vmatprep.subr.mxu0 0.0
        %747 = vmatpush1.msra.mxu0 0.0
        %748 = vmatprep.subr.mxu0 0.0
        %749 = vmatpush1.msra.mxu0 0.0
        %750 = vmatprep.subr.mxu0 0.0
        %751 = vmatpush1.msra.mxu0 0.0
        %752 = vmatprep.subr.mxu0 0.0
        %753 = vmatpush1.msra.mxu0 0.0
        %754 = vmatprep.subr.mxu0 0.0
        %755 = vmatpush1.msra.mxu0 0.0
        %756 = vmatprep.subr.mxu0 0.0
        %757 = vmatpush1.msra.mxu0 0.0
        %758 = vmatprep.subr.mxu0 0.0
        %759 = vmatpush1.msra.mxu0 0.0
        %760 = vmatprep.subr.mxu0 0.0
        %761 = vmatpush1.msra.mxu0 0.0
        %762 = vmatprep.subr.mxu0 0.0
        %763 = vmatpush1.msra.mxu0 0.0
        %764 = vmatprep.subr.mxu0 0.0
        %765 = vmatpush1.msra.mxu0 0.0
        %766 = vmatprep.subr.mxu0 0.0
        %767 = vmatpush1.msra.mxu0 0.0
        %768 = vmatprep.subr.mxu0 0.0
        %769 = vmatpush1.msra.mxu0 0.0
        %770 = vmatprep.subr.mxu0 0.0
        %771 = vmatpush1.msra.mxu0 0.0
        %772 = vmatprep.subr.mxu0 0.0
        %773 = vmatpush1.msra.mxu0 0.0
        %774 = vmatprep.subr.mxu0 0.0
        %775 = vmatpush1.msra.mxu0 0.0
        %776 = vmatprep.subr.mxu0 0.0
        %777 = vmatpush1.msra.mxu0 0.0
        %778 = vmatprep.subr.mxu0 0.0
        %779 = vmatpush1.msra.mxu0 0.0
        %780 = vmatprep.subr.mxu0 0.0
        %781 = vmatpush1.msra.mxu0 0.0
        %782 = vmatprep.subr.mxu0 0.0
        %783 = vmatpush1.msra.mxu0 0.0
        %784 = vmatprep.subr.mxu0 0.0
        %785 = vmatpush1.msra.mxu0 0.0
        %786 = vmatprep.subr.mxu0 0.0
        %787 = vmatpush1.msra.mxu0 0.0
        %788 = vmatprep.subr.mxu0 0.0
        %789 = vmatpush1.msra.mxu0 0.0
        %790 = vmatprep.subr.mxu0 0.0
        %791 = vmatpush1.msra.mxu0 0.0
        %792 = vmatprep.subr.mxu0 0.0
        %793 = vmatpush1.msra.mxu0 0.0
        %794 = vmatprep.subr.mxu0 0.0
        %795 = vmatpush1.msra.mxu0 0.0
        %796 = vmatprep.subr.mxu0 0.0
        %797 = vmatpush1.msra.mxu0 0.0
        %798 = vmatprep.mubr.f32.mxu0 0.0
        %799 = vmatmul.mubr.f32.gmra.mrb[0].mxu0 %v732
        %v800 = vpop.f32.mrb[0].mxu0
        %v801 = vadd.f32 %v673, %v800
        %v802 = vpop.f32.mrb[0].mxu0
        %803 = vdwg.mxu0
        %804 = vmatprep.subr.mxu0 0.0
        %805 = vmatpush1.msra.mxu0 %v602
        %806 = vmatprep.subr.mxu0 0.0
        %807 = vmatpush1.msra.mxu0 %v603
        %808 = vmatprep.subr.mxu0 0.0
        %809 = vmatpush1.msra.mxu0 %v604
        %810 = vmatprep.subr.mxu0 0.0
        %811 = vmatpush1.msra.mxu0 %v605
        %812 = vmatprep.subr.mxu0 0.0
        %813 = vmatpush1.msra.mxu0 0.0
        %814 = vmatprep.subr.mxu0 0.0
        %815 = vmatpush1.msra.mxu0 0.0
        %816 = vmatprep.subr.mxu0 0.0
        %817 = vmatpush1.msra.mxu0 0.0
        %818 = vmatprep.subr.mxu0 0.0
        %819 = vmatpush1.msra.mxu0 0.0
        %820 = vmatprep.subr.mxu0 0.0
        %821 = vmatpush1.msra.mxu0 0.0
        %822 = vmatprep.subr.mxu0 0.0
        %823 = vmatpush1.msra.mxu0 0.0
        %824 = vmatprep.subr.mxu0 0.0
        %825 = vmatpush1.msra.mxu0 0.0
        %826 = vmatprep.subr.mxu0 0.0
        %827 = vmatpush1.msra.mxu0 0.0
        %828 = vmatprep.subr.mxu0 0.0
        %829 = vmatpush1.msra.mxu0 0.0
        %830 = vmatprep.subr.mxu0 0.0
        %831 = vmatpush1.msra.mxu0 0.0
        %832 = vmatprep.subr.mxu0 0.0
        %833 = vmatpush1.msra.mxu0 0.0
        %834 = vmatprep.subr.mxu0 0.0
        %835 = vmatpush1.msra.mxu0 0.0
        %836 = vmatprep.subr.mxu0 0.0
        %837 = vmatpush1.msra.mxu0 0.0
        %838 = vmatprep.subr.mxu0 0.0
        %839 = vmatpush1.msra.mxu0 0.0
        %840 = vmatprep.subr.mxu0 0.0
        %841 = vmatpush1.msra.mxu0 0.0
        %842 = vmatprep.subr.mxu0 0.0
        %843 = vmatpush1.msra.mxu0 0.0
        %844 = vmatprep.subr.mxu0 0.0
        %845 = vmatpush1.msra.mxu0 0.0
        %846 = vmatprep.subr.mxu0 0.0
        %847 = vmatpush1.msra.mxu0 0.0
        %848 = vmatprep.subr.mxu0 0.0
        %849 = vmatpush1.msra.mxu0 0.0
        %850 = vmatprep.subr.mxu0 0.0
        %851 = vmatpush1.msra.mxu0 0.0
        %852 = vmatprep.subr.mxu0 0.0
        %853 = vmatpush1.msra.mxu0 0.0
        %854 = vmatprep.subr.mxu0 0.0
        %855 = vmatpush1.msra.mxu0 0.0
        %856 = vmatprep.subr.mxu0 0.0
        %857 = vmatpush1.msra.mxu0 0.0
        %858 = vmatprep.subr.mxu0 0.0
        %859 = vmatpush1.msra.mxu0 0.0
        %860 = vmatprep.subr.mxu0 0.0
        %861 = vmatpush1.msra.mxu0 0.0
        %862 = vmatprep.subr.mxu0 0.0
        %863 = vmatpush1.msra.mxu0 0.0
        %864 = vmatprep.subr.mxu0 0.0
        %865 = vmatpush1.msra.mxu0 0.0
        %866 = vmatprep.subr.mxu0 0.0
        %867 = vmatpush1.msra.mxu0 0.0
        %868 = vmatprep.mubr.f32.mxu0 0.0
        %869 = vmatmul.mubr.f32.gmra.mrb[0].mxu0 %v732
        %v870 = vpop.f32.mrb[0].mxu0
        %v871 = vadd.f32 %v677, %v870
        %v872 = vpop.f32.mrb[0].mxu0
        %873 = vdwg.mxu0
        %874 = vmatprep.subr.mxu0 0.0
        %875 = vmatpush1.msra.mxu0 %v606
        %876 = vmatprep.subr.mxu0 0.0
        %877 = vmatpush1.msra.mxu0 %v607
        %878 = vmatprep.subr.mxu0 0.0
        %879 = vmatpush1.msra.mxu0 %v608
        %880 = vmatprep.subr.mxu0 0.0
        %881 = vmatpush1.msra.mxu0 %v609
        %882 = vmatprep.subr.mxu0 0.0
        %883 = vmatpush1.msra.mxu0 0.0
        %884 = vmatprep.subr.mxu0 0.0
        %885 = vmatpush1.msra.mxu0 0.0
        %886 = vmatprep.subr.mxu0 0.0
        %887 = vmatpush1.msra.mxu0 0.0
        %888 = vmatprep.subr.mxu0 0.0
        %889 = vmatpush1.msra.mxu0 0.0
        %890 = vmatprep.subr.mxu0 0.0
        %891 = vmatpush1.msra.mxu0 0.0
        %892 = vmatprep.subr.mxu0 0.0
        %893 = vmatpush1.msra.mxu0 0.0
        %894 = vmatprep.subr.mxu0 0.0
        %895 = vmatpush1.msra.mxu0 0.0
        %896 = vmatprep.subr.mxu0 0.0
        %897 = vmatpush1.msra.mxu0 0.0
        %898 = vmatprep.subr.mxu0 0.0
        %899 = vmatpush1.msra.mxu0 0.0
        %900 = vmatprep.subr.mxu0 0.0
        %901 = vmatpush1.msra.mxu0 0.0
        %902 = vmatprep.subr.mxu0 0.0
        %903 = vmatpush1.msra.mxu0 0.0
        %904 = vmatprep.subr.mxu0 0.0
        %905 = vmatpush1.msra.mxu0 0.0
        %906 = vmatprep.subr.mxu0 0.0
        %907 = vmatpush1.msra.mxu0 0.0
        %908 = vmatprep.subr.mxu0 0.0
        %909 = vmatpush1.msra.mxu0 0.0
        %910 = vmatprep.subr.mxu0 0.0
        %911 = vmatpush1.msra.mxu0 0.0
        %912 = vmatprep.subr.mxu0 0.0
        %913 = vmatpush1.msra.mxu0 0.0
        %914 = vmatprep.subr.mxu0 0.0
        %915 = vmatpush1.msra.mxu0 0.0
        %916 = vmatprep.subr.mxu0 0.0
        %917 = vmatpush1.msra.mxu0 0.0
        %918 = vmatprep.subr.mxu0 0.0
        %919 = vmatpush1.msra.mxu0 0.0
        %920 = vmatprep.subr.mxu0 0.0
        %921 = vmatpush1.msra.mxu0 0.0
        %922 = vmatprep.subr.mxu0 0.0
        %923 = vmatpush1.msra.mxu0 0.0
        %924 = vmatprep.subr.mxu0 0.0
        %925 = vmatpush1.msra.mxu0 0.0
        %926 = vmatprep.subr.mxu0 0.0
        %927 = vmatpush1.msra.mxu0 0.0
        %928 = vmatprep.subr.mxu0 0.0
        %929 = vmatpush1.msra.mxu0 0.0
        %930 = vmatprep.subr.mxu0 0.0
        %931 = vmatpush1.msra.mxu0 0.0
        %932 = vmatprep.subr.mxu0 0.0
        %933 = vmatpush1.msra.mxu0 0.0
        %934 = vmatprep.subr.mxu0 0.0
        %935 = vmatpush1.msra.mxu0 0.0
        %936 = vmatprep.subr.mxu0 0.0
        %937 = vmatpush1.msra.mxu0 0.0
        %938 = vmatprep.mubr.f32.mxu0 0.0
        %939 = vmatmul.mubr.f32.gmra.mrb[0].mxu0 %v732
        %v940 = vpop.f32.mrb[0].mxu0
        %v941 = vadd.f32 %v681, %v940
        %v942 = vpop.f32.mrb[0].mxu0
        %943 = vdwg.mxu0
        %944 = vmatprep.subr.mxu0 0.0
        %945 = vmatpush1.msra.mxu0 %v610
        %946 = vmatprep.subr.mxu0 0.0
        %947 = vmatpush1.msra.mxu0 %v611
        %948 = vmatprep.subr.mxu0 0.0
        %949 = vmatpush1.msra.mxu0 %v612
        %950 = vmatprep.subr.mxu0 0.0
        %951 = vmatpush1.msra.mxu0 %v613
        %952 = vmatprep.subr.mxu0 0.0
        %953 = vmatpush1.msra.mxu0 0.0
        %954 = vmatprep.subr.mxu0 0.0
        %955 = vmatpush1.msra.mxu0 0.0
        %956 = vmatprep.subr.mxu0 0.0
        %957 = vmatpush1.msra.mxu0 0.0
        %958 = vmatprep.subr.mxu0 0.0
        %959 = vmatpush1.msra.mxu0 0.0
        %960 = vmatprep.subr.mxu0 0.0
        %961 = vmatpush1.msra.mxu0 0.0
        %962 = vmatprep.subr.mxu0 0.0
        %963 = vmatpush1.msra.mxu0 0.0
        %964 = vmatprep.subr.mxu0 0.0
        %965 = vmatpush1.msra.mxu0 0.0
        %966 = vmatprep.subr.mxu0 0.0
        %967 = vmatpush1.msra.mxu0 0.0
        %968 = vmatprep.subr.mxu0 0.0
        %969 = vmatpush1.msra.mxu0 0.0
        %970 = vmatprep.subr.mxu0 0.0
        %971 = vmatpush1.msra.mxu0 0.0
        %972 = vmatprep.subr.mxu0 0.0
        %973 = vmatpush1.msra.mxu0 0.0
        %974 = vmatprep.subr.mxu0 0.0
        %975 = vmatpush1.msra.mxu0 0.0
        %976 = vmatprep.subr.mxu0 0.0
        %977 = vmatpush1.msra.mxu0 0.0
        %978 = vmatprep.subr.mxu0 0.0
        %979 = vmatpush1.msra.mxu0 0.0
        %980 = vmatprep.subr.mxu0 0.0
        %981 = vmatpush1.msra.mxu0 0.0
        %982 = vmatprep.subr.mxu0 0.0
        %983 = vmatpush1.msra.mxu0 0.0
        %984 = vmatprep.subr.mxu0 0.0
        %985 = vmatpush1.msra.mxu0 0.0
        %986 = vmatprep.subr.mxu0 0.0
        %987 = vmatpush1.msra.mxu0 0.0
        %988 = vmatprep.subr.mxu0 0.0
        %989 = vmatpush1.msra.mxu0 0.0
        %990 = vmatprep.subr.mxu0 0.0
        %991 = vmatpush1.msra.mxu0 0.0
        %992 = vmatprep.subr.mxu0 0.0
        %993 = vmatpush1.msra.mxu0 0.0
        %994 = vmatprep.subr.mxu0 0.0
        %995 = vmatpush1.msra.mxu0 0.0
        %996 = vmatprep.subr.mxu0 0.0
        %997 = vmatpush1.msra.mxu0 0.0
        %998 = vmatprep.subr.mxu0 0.0
        %999 = vmatpush1.msra.mxu0 0.0
        %1000 = vmatprep.subr.mxu0 0.0
        %1001 = vmatpush1.msra.mxu0 0.0
        %1002 = vmatprep.subr.mxu0 0.0
        %1003 = vmatpush1.msra.mxu0 0.0
        %1004 = vmatprep.subr.mxu0 0.0
        %1005 = vmatpush1.msra.mxu0 0.0
        %1006 = vmatprep.subr.mxu0 0.0
        %1007 = vmatpush1.msra.mxu0 0.0
        %1008 = vmatprep.mubr.f32.mxu0 0.0
        %1009 = vmatmul.mubr.f32.gmra.mrb[0].mxu0 %v732
        %v1010 = vpop.f32.mrb[0].mxu0
        %v1011 = vadd.f32 %v685, %v1010
        %v1012 = vpop.f32.mrb[0].mxu0
        %1013 = vdwg.mxu0
        %1014 = vmatprep.subr.mxu0 0.0
        %1015 = vmatpush1.msra.mxu0 %v614
        %1016 = vmatprep.subr.mxu0 0.0
        %1017 = vmatpush1.msra.mxu0 %v615
        %1018 = vmatprep.subr.mxu0 0.0
        %1019 = vmatpush1.msra.mxu0 %v616
        %1020 = vmatprep.subr.mxu0 0.0
        %1021 = vmatpush1.msra.mxu0 %v617
        %1022 = vmatprep.subr.mxu0 0.0
        %1023 = vmatpush1.msra.mxu0 0.0
        %1024 = vmatprep.subr.mxu0 0.0
        %1025 = vmatpush1.msra.mxu0 0.0
        %1026 = vmatprep.subr.mxu0 0.0
        %1027 = vmatpush1.msra.mxu0 0.0
        %1028 = vmatprep.subr.mxu0 0.0
        %1029 = vmatpush1.msra.mxu0 0.0
        %1030 = vmatprep.subr.mxu0 0.0
        %1031 = vmatpush1.msra.mxu0 0.0
        %1032 = vmatprep.subr.mxu0 0.0
        %1033 = vmatpush1.msra.mxu0 0.0
        %1034 = vmatprep.subr.mxu0 0.0
        %1035 = vmatpush1.msra.mxu0 0.0
        %1036 = vmatprep.subr.mxu0 0.0
        %1037 = vmatpush1.msra.mxu0 0.0
        %1038 = vmatprep.subr.mxu0 0.0
        %1039 = vmatpush1.msra.mxu0 0.0
        %1040 = vmatprep.subr.mxu0 0.0
        %1041 = vmatpush1.msra.mxu0 0.0
        %1042 = vmatprep.subr.mxu0 0.0
        %1043 = vmatpush1.msra.mxu0 0.0
        %1044 = vmatprep.subr.mxu0 0.0
        %1045 = vmatpush1.msra.mxu0 0.0
        %1046 = vmatprep.subr.mxu0 0.0
        %1047 = vmatpush1.msra.mxu0 0.0
        %1048 = vmatprep.subr.mxu0 0.0
        %1049 = vmatpush1.msra.mxu0 0.0
        %1050 = vmatprep.subr.mxu0 0.0
        %1051 = vmatpush1.msra.mxu0 0.0
        %1052 = vmatprep.subr.mxu0 0.0
        %1053 = vmatpush1.msra.mxu0 0.0
        %1054 = vmatprep.subr.mxu0 0.0
        %1055 = vmatpush1.msra.mxu0 0.0
        %1056 = vmatprep.subr.mxu0 0.0
        %1057 = vmatpush1.msra.mxu0 0.0
        %1058 = vmatprep.subr.mxu0 0.0
        %1059 = vmatpush1.msra.mxu0 0.0
        %1060 = vmatprep.subr.mxu0 0.0
        %1061 = vmatpush1.msra.mxu0 0.0
        %1062 = vmatprep.subr.mxu0 0.0
        %1063 = vmatpush1.msra.mxu0 0.0
        %1064 = vmatprep.subr.mxu0 0.0
        %1065 = vmatpush1.msra.mxu0 0.0
        %1066 = vmatprep.subr.mxu0 0.0
        %1067 = vmatpush1.msra.mxu0 0.0
        %1068 = vmatprep.subr.mxu0 0.0
        %1069 = vmatpush1.msra.mxu0 0.0
        %1070 = vmatprep.subr.mxu0 0.0
        %1071 = vmatpush1.msra.mxu0 0.0
        %1072 = vmatprep.subr.mxu0 0.0
        %1073 = vmatpush1.msra.mxu0 0.0
        %1074 = vmatprep.subr.mxu0 0.0
        %1075 = vmatpush1.msra.mxu0 0.0
        %1076 = vmatprep.subr.mxu0 0.0
        %1077 = vmatpush1.msra.mxu0 0.0
        %1078 = vmatprep.mubr.f32.mxu0 0.0
        %1079 = vmatmul.mubr.f32.gmra.mrb[0].mxu0 %v732
        %v1080 = vpop.f32.mrb[0].mxu0
        %v1081 = vadd.f32 %v689, %v1080
        %v1082 = vpop.f32.mrb[0].mxu0
        %1083 = vdwg.mxu0
        %1084 = vmatprep.subr.mxu0 0.0
        %1085 = vmatpush1.msra.mxu0 %v618
        %1086 = vmatprep.subr.mxu0 0.0
        %1087 = vmatpush1.msra.mxu0 %v619
        %1088 = vmatprep.subr.mxu0 0.0
        %1089 = vmatpush1.msra.mxu0 %v620
        %1090 = vmatprep.subr.mxu0 0.0
        %1091 = vmatpush1.msra.mxu0 %v621
        %1092 = vmatprep.subr.mxu0 0.0
        %1093 = vmatpush1.msra.mxu0 0.0
        %1094 = vmatprep.subr.mxu0 0.0
        %1095 = vmatpush1.msra.mxu0 0.0
        %1096 = vmatprep.subr.mxu0 0.0
        %1097 = vmatpush1.msra.mxu0 0.0
        %1098 = vmatprep.subr.mxu0 0.0
        %1099 = vmatpush1.msra.mxu0 0.0
        %1100 = vmatprep.subr.mxu0 0.0
        %1101 = vmatpush1.msra.mxu0 0.0
        %1102 = vmatprep.subr.mxu0 0.0
        %1103 = vmatpush1.msra.mxu0 0.0
        %1104 = vmatprep.subr.mxu0 0.0
        %1105 = vmatpush1.msra.mxu0 0.0
        %1106 = vmatprep.subr.mxu0 0.0
        %1107 = vmatpush1.msra.mxu0 0.0
        %1108 = vmatprep.subr.mxu0 0.0
        %1109 = vmatpush1.msra.mxu0 0.0
        %1110 = vmatprep.subr.mxu0 0.0
        %1111 = vmatpush1.msra.mxu0 0.0
        %1112 = vmatprep.subr.mxu0 0.0
        %1113 = vmatpush1.msra.mxu0 0.0
        %1114 = vmatprep.subr.mxu0 0.0
        %1115 = vmatpush1.msra.mxu0 0.0
        %1116 = vmatprep.subr.mxu0 0.0
        %1117 = vmatpush1.msra.mxu0 0.0
        %1118 = vmatprep.subr.mxu0 0.0
        %1119 = vmatpush1.msra.mxu0 0.0
        %1120 = vmatprep.subr.mxu0 0.0
        %1121 = vmatpush1.msra.mxu0 0.0
        %1122 = vmatprep.subr.mxu0 0.0
        %1123 = vmatpush1.msra.mxu0 0.0
        %1124 = vmatprep.subr.mxu0 0.0
        %1125 = vmatpush1.msra.mxu0 0.0
        %1126 = vmatprep.subr.mxu0 0.0
        %1127 = vmatpush1.msra.mxu0 0.0
        %1128 = vmatprep.subr.mxu0 0.0
        %1129 = vmatpush1.msra.mxu0 0.0
        %1130 = vmatprep.subr.mxu0 0.0
        %1131 = vmatpush1.msra.mxu0 0.0
        %1132 = vmatprep.subr.mxu0 0.0
        %1133 = vmatpush1.msra.mxu0 0.0
        %1134 = vmatprep.subr.mxu0 0.0
        %1135 = vmatpush1.msra.mxu0 0.0
        %1136 = vmatprep.subr.mxu0 0.0
        %1137 = vmatpush1.msra.mxu0 0.0
        %1138 = vmatprep.subr.mxu0 0.0
        %1139 = vmatpush1.msra.mxu0 0.0
        %1140 = vmatprep.subr.mxu0 0.0
        %1141 = vmatpush1.msra.mxu0 0.0
        %1142 = vmatprep.subr.mxu0 0.0
        %1143 = vmatpush1.msra.mxu0 0.0
        %1144 = vmatprep.subr.mxu0 0.0
        %1145 = vmatpush1.msra.mxu0 0.0
        %1146 = vmatprep.subr.mxu0 0.0
        %1147 = vmatpush1.msra.mxu0 0.0
        %1148 = vmatprep.mubr.f32.mxu0 0.0
        %1149 = vmatmul.mubr.f32.gmra.mrb[0].mxu0 %v732
        %v1150 = vpop.f32.mrb[0].mxu0
        %v1151 = vadd.f32 %v693, %v1150
        %v1152 = vpop.f32.mrb[0].mxu0
        %1153 = vdwg.mxu0
        %1154 = vmatprep.subr.mxu0 0.0
        %1155 = vmatpush1.msra.mxu0 %v622
        %1156 = vmatprep.subr.mxu0 0.0
        %1157 = vmatpush1.msra.mxu0 %v623
        %1158 = vmatprep.subr.mxu0 0.0
        %1159 = vmatpush1.msra.mxu0 %v624
        %1160 = vmatprep.subr.mxu0 0.0
        %1161 = vmatpush1.msra.mxu0 %v625
        %1162 = vmatprep.subr.mxu0 0.0
        %1163 = vmatpush1.msra.mxu0 0.0
        %1164 = vmatprep.subr.mxu0 0.0
        %1165 = vmatpush1.msra.mxu0 0.0
        %1166 = vmatprep.subr.mxu0 0.0
        %1167 = vmatpush1.msra.mxu0 0.0
        %1168 = vmatprep.subr.mxu0 0.0
        %1169 = vmatpush1.msra.mxu0 0.0
        %1170 = vmatprep.subr.mxu0 0.0
        %1171 = vmatpush1.msra.mxu0 0.0
        %1172 = vmatprep.subr.mxu0 0.0
        %1173 = vmatpush1.msra.mxu0 0.0
        %1174 = vmatprep.subr.mxu0 0.0
        %1175 = vmatpush1.msra.mxu0 0.0
        %1176 = vmatprep.subr.mxu0 0.0
        %1177 = vmatpush1.msra.mxu0 0.0
        %1178 = vmatprep.subr.mxu0 0.0
        %1179 = vmatpush1.msra.mxu0 0.0
        %1180 = vmatprep.subr.mxu0 0.0
        %1181 = vmatpush1.msra.mxu0 0.0
        %1182 = vmatprep.subr.mxu0 0.0
        %1183 = vmatpush1.msra.mxu0 0.0
        %1184 = vmatprep.subr.mxu0 0.0
        %1185 = vmatpush1.msra.mxu0 0.0
        %1186 = vmatprep.subr.mxu0 0.0
        %1187 = vmatpush1.msra.mxu0 0.0
        %1188 = vmatprep.subr.mxu0 0.0
        %1189 = vmatpush1.msra.mxu0 0.0
        %1190 = vmatprep.subr.mxu0 0.0
        %1191 = vmatpush1.msra.mxu0 0.0
        %1192 = vmatprep.subr.mxu0 0.0
        %1193 = vmatpush1.msra.mxu0 0.0
        %1194 = vmatprep.subr.mxu0 0.0
        %1195 = vmatpush1.msra.mxu0 0.0
        %1196 = vmatprep.subr.mxu0 0.0
        %1197 = vmatpush1.msra.mxu0 0.0
        %1198 = vmatprep.subr.mxu0 0.0
        %1199 = vmatpush1.msra.mxu0 0.0
        %1200 = vmatprep.subr.mxu0 0.0
        %1201 = vmatpush1.msra.mxu0 0.0
        %1202 = vmatprep.subr.mxu0 0.0
        %1203 = vmatpush1.msra.mxu0 0.0
        %1204 = vmatprep.subr.mxu0 0.0
        %1205 = vmatpush1.msra.mxu0 0.0
        %1206 = vmatprep.subr.mxu0 0.0
        %1207 = vmatpush1.msra.mxu0 0.0
        %1208 = vmatprep.subr.mxu0 0.0
        %1209 = vmatpush1.msra.mxu0 0.0
        %1210 = vmatprep.subr.mxu0 0.0
        %1211 = vmatpush1.msra.mxu0 0.0
        %1212 = vmatprep.subr.mxu0 0.0
        %1213 = vmatpush1.msra.mxu0 0.0
        %1214 = vmatprep.subr.mxu0 0.0
        %1215 = vmatpush1.msra.mxu0 0.0
        %1216 = vmatprep.subr.mxu0 0.0
        %1217 = vmatpush1.msra.mxu0 0.0
        %1218 = vmatprep.mubr.f32.mxu0 0.0
        %1219 = vmatmul.mubr.f32.gmra.mrb[0].mxu0 %v732
        %v1220 = vpop.f32.mrb[0].mxu0
        %v1221 = vadd.f32 %v697, %v1220
        %v1222 = vpop.f32.mrb[0].mxu0
        %1223 = vdwg.mxu0
        %1224 = vmatprep.subr.mxu0 0.0
        %1225 = vmatpush1.msra.mxu0 %v626
        %1226 = vmatprep.subr.mxu0 0.0
        %1227 = vmatpush1.msra.mxu0 %v627
        %1228 = vmatprep.subr.mxu0 0.0
        %1229 = vmatpush1.msra.mxu0 %v628
        %1230 = vmatprep.subr.mxu0 0.0
        %1231 = vmatpush1.msra.mxu0 %v629
        %1232 = vmatprep.subr.mxu0 0.0
        %1233 = vmatpush1.msra.mxu0 0.0
        %1234 = vmatprep.subr.mxu0 0.0
        %1235 = vmatpush1.msra.mxu0 0.0
        %1236 = vmatprep.subr.mxu0 0.0
        %1237 = vmatpush1.msra.mxu0 0.0
        %1238 = vmatprep.subr.mxu0 0.0
        %1239 = vmatpush1.msra.mxu0 0.0
        %1240 = vmatprep.subr.mxu0 0.0
        %1241 = vmatpush1.msra.mxu0 0.0
        %1242 = vmatprep.subr.mxu0 0.0
        %1243 = vmatpush1.msra.mxu0 0.0
        %1244 = vmatprep.subr.mxu0 0.0
        %1245 = vmatpush1.msra.mxu0 0.0
        %1246 = vmatprep.subr.mxu0 0.0
        %1247 = vmatpush1.msra.mxu0 0.0
        %1248 = vmatprep.subr.mxu0 0.0
        %1249 = vmatpush1.msra.mxu0 0.0
        %1250 = vmatprep.subr.mxu0 0.0
        %1251 = vmatpush1.msra.mxu0 0.0
        %1252 = vmatprep.subr.mxu0 0.0
        %1253 = vmatpush1.msra.mxu0 0.0
        %1254 = vmatprep.subr.mxu0 0.0
        %1255 = vmatpush1.msra.mxu0 0.0
        %1256 = vmatprep.subr.mxu0 0.0
        %1257 = vmatpush1.msra.mxu0 0.0
        %1258 = vmatprep.subr.mxu0 0.0
        %1259 = vmatpush1.msra.mxu0 0.0
        %1260 = vmatprep.subr.mxu0 0.0
        %1261 = vmatpush1.msra.mxu0 0.0
        %1262 = vmatprep.subr.mxu0 0.0
        %1263 = vmatpush1.msra.mxu0 0.0
        %1264 = vmatprep.subr.mxu0 0.0
        %1265 = vmatpush1.msra.mxu0 0.0
        %1266 = vmatprep.subr.mxu0 0.0
        %1267 = vmatpush1.msra.mxu0 0.0
        %1268 = vmatprep.subr.mxu0 0.0
        %1269 = vmatpush1.msra.mxu0 0.0
        %1270 = vmatprep.subr.mxu0 0.0
        %1271 = vmatpush1.msra.mxu0 0.0
        %1272 = vmatprep.subr.mxu0 0.0
        %1273 = vmatpush1.msra.mxu0 0.0
        %1274 = vmatprep.subr.mxu0 0.0
        %1275 = vmatpush1.msra.mxu0 0.0
        %1276 = vmatprep.subr.mxu0 0.0
        %1277 = vmatpush1.msra.mxu0 0.0
        %1278 = vmatprep.subr.mxu0 0.0
        %1279 = vmatpush1.msra.mxu0 0.0
        %1280 = vmatprep.subr.mxu0 0.0
        %1281 = vmatpush1.msra.mxu0 0.0
        %1282 = vmatprep.subr.mxu0 0.0
        %1283 = vmatpush1.msra.mxu0 0.0
        %1284 = vmatprep.subr.mxu0 0.0
        %1285 = vmatpush1.msra.mxu0 0.0
        %1286 = vmatprep.subr.mxu0 0.0
        %1287 = vmatpush1.msra.mxu0 0.0
        %1288 = vmatprep.mubr.f32.mxu0 0.0
        %1289 = vmatmul.mubr.f32.gmra.mrb[0].mxu0 %v732
        %v1290 = vpop.f32.mrb[0].mxu0
        %v1291 = vadd.f32 %v701, %v1290
        %v1292 = vpop.f32.mrb[0].mxu0
        %1293 = vdwg.mxu0
        %1294 = vmatprep.subr.mxu0 0.0
        %1295 = vmatpush1.msra.mxu0 %v630
        %1296 = vmatprep.subr.mxu0 0.0
        %1297 = vmatpush1.msra.mxu0 %v631
        %1298 = vmatprep.subr.mxu0 0.0
        %1299 = vmatpush1.msra.mxu0 %v632
        %1300 = vmatprep.subr.mxu0 0.0
        %1301 = vmatpush1.msra.mxu0 %v633
        %1302 = vmatprep.subr.mxu0 0.0
        %1303 = vmatpush1.msra.mxu0 0.0
        %1304 = vmatprep.subr.mxu0 0.0
        %1305 = vmatpush1.msra.mxu0 0.0
        %1306 = vmatprep.subr.mxu0 0.0
        %1307 = vmatpush1.msra.mxu0 0.0
        %1308 = vmatprep.subr.mxu0 0.0
        %1309 = vmatpush1.msra.mxu0 0.0
        %1310 = vmatprep.subr.mxu0 0.0
        %1311 = vmatpush1.msra.mxu0 0.0
        %1312 = vmatprep.subr.mxu0 0.0
        %1313 = vmatpush1.msra.mxu0 0.0
        %1314 = vmatprep.subr.mxu0 0.0
        %1315 = vmatpush1.msra.mxu0 0.0
        %1316 = vmatprep.subr.mxu0 0.0
        %1317 = vmatpush1.msra.mxu0 0.0
        %1318 = vmatprep.subr.mxu0 0.0
        %1319 = vmatpush1.msra.mxu0 0.0
        %1320 = vmatprep.subr.mxu0 0.0
        %1321 = vmatpush1.msra.mxu0 0.0
        %1322 = vmatprep.subr.mxu0 0.0
        %1323 = vmatpush1.msra.mxu0 0.0
        %1324 = vmatprep.subr.mxu0 0.0
        %1325 = vmatpush1.msra.mxu0 0.0
        %1326 = vmatprep.subr.mxu0 0.0
        %1327 = vmatpush1.msra.mxu0 0.0
        %1328 = vmatprep.subr.mxu0 0.0
        %1329 = vmatpush1.msra.mxu0 0.0
        %1330 = vmatprep.subr.mxu0 0.0
        %1331 = vmatpush1.msra.mxu0 0.0
        %1332 = vmatprep.subr.mxu0 0.0
        %1333 = vmatpush1.msra.mxu0 0.0
        %1334 = vmatprep.subr.mxu0 0.0
        %1335 = vmatpush1.msra.mxu0 0.0
        %1336 = vmatprep.subr.mxu0 0.0
        %1337 = vmatpush1.msra.mxu0 0.0
        %1338 = vmatprep.subr.mxu0 0.0
        %1339 = vmatpush1.msra.mxu0 0.0
        %1340 = vmatprep.subr.mxu0 0.0
        %1341 = vmatpush1.msra.mxu0 0.0
        %1342 = vmatprep.subr.mxu0 0.0
        %1343 = vmatpush1.msra.mxu0 0.0
        %1344 = vmatprep.subr.mxu0 0.0
        %1345 = vmatpush1.msra.mxu0 0.0
        %1346 = vmatprep.subr.mxu0 0.0
        %1347 = vmatpush1.msra.mxu0 0.0
        %1348 = vmatprep.subr.mxu0 0.0
        %1349 = vmatpush1.msra.mxu0 0.0
        %1350 = vmatprep.subr.mxu0 0.0
        %1351 = vmatpush1.msra.mxu0 0.0
        %1352 = vmatprep.subr.mxu0 0.0
        %1353 = vmatpush1.msra.mxu0 0.0
        %1354 = vmatprep.subr.mxu0 0.0
        %1355 = vmatpush1.msra.mxu0 0.0
        %1356 = vmatprep.subr.mxu0 0.0
        %1357 = vmatpush1.msra.mxu0 0.0
        %1358 = vmatprep.mubr.f32.mxu0 0.0
        %1359 = vmatmul.mubr.f32.gmra.mrb[0].mxu0 %v732
        %v1360 = vpop.f32.mrb[0].mxu0
        %v1361 = vadd.f32 %v705, %v1360
        %v1362 = vpop.f32.mrb[0].mxu0
        %1363 = vdwg.mxu0
        %1364 = vmatprep.subr.mxu0 0.0
        %1365 = vmatpush1.msra.mxu0 %v634
        %1366 = vmatprep.subr.mxu0 0.0
        %1367 = vmatpush1.msra.mxu0 %v635
        %1368 = vmatprep.subr.mxu0 0.0
        %1369 = vmatpush1.msra.mxu0 %v636
        %1370 = vmatprep.subr.mxu0 0.0
        %1371 = vmatpush1.msra.mxu0 %v637
        %1372 = vmatprep.subr.mxu0 0.0
        %1373 = vmatpush1.msra.mxu0 0.0
        %1374 = vmatprep.subr.mxu0 0.0
        %1375 = vmatpush1.msra.mxu0 0.0
        %1376 = vmatprep.subr.mxu0 0.0
        %1377 = vmatpush1.msra.mxu0 0.0
        %1378 = vmatprep.subr.mxu0 0.0
        %1379 = vmatpush1.msra.mxu0 0.0
        %1380 = vmatprep.subr.mxu0 0.0
        %1381 = vmatpush1.msra.mxu0 0.0
        %1382 = vmatprep.subr.mxu0 0.0
        %1383 = vmatpush1.msra.mxu0 0.0
        %1384 = vmatprep.subr.mxu0 0.0
        %1385 = vmatpush1.msra.mxu0 0.0
        %1386 = vmatprep.subr.mxu0 0.0
        %1387 = vmatpush1.msra.mxu0 0.0
        %1388 = vmatprep.subr.mxu0 0.0
        %1389 = vmatpush1.msra.mxu0 0.0
        %1390 = vmatprep.subr.mxu0 0.0
        %1391 = vmatpush1.msra.mxu0 0.0
        %1392 = vmatprep.subr.mxu0 0.0
        %1393 = vmatpush1.msra.mxu0 0.0
        %1394 = vmatprep.subr.mxu0 0.0
        %1395 = vmatpush1.msra.mxu0 0.0
        %1396 = vmatprep.subr.mxu0 0.0
        %1397 = vmatpush1.msra.mxu0 0.0
        %1398 = vmatprep.subr.mxu0 0.0
        %1399 = vmatpush1.msra.mxu0 0.0
        %1400 = vmatprep.subr.mxu0 0.0
        %1401 = vmatpush1.msra.mxu0 0.0
        %1402 = vmatprep.subr.mxu0 0.0
        %1403 = vmatpush1.msra.mxu0 0.0
        %1404 = vmatprep.subr.mxu0 0.0
        %1405 = vmatpush1.msra.mxu0 0.0
        %1406 = vmatprep.subr.mxu0 0.0
        %1407 = vmatpush1.msra.mxu0 0.0
        %1408 = vmatprep.subr.mxu0 0.0
        %1409 = vmatpush1.msra.mxu0 0.0
        %1410 = vmatprep.subr.mxu0 0.0
        %1411 = vmatpush1.msra.mxu0 0.0
        %1412 = vmatprep.subr.mxu0 0.0
        %1413 = vmatpush1.msra.mxu0 0.0
        %1414 = vmatprep.subr.mxu0 0.0
        %1415 = vmatpush1.msra.mxu0 0.0
        %1416 = vmatprep.subr.mxu0 0.0
        %1417 = vmatpush1.msra.mxu0 0.0
        %1418 = vmatprep.subr.mxu0 0.0
        %1419 = vmatpush1.msra.mxu0 0.0
        %1420 = vmatprep.subr.mxu0 0.0
        %1421 = vmatpush1.msra.mxu0 0.0
        %1422 = vmatprep.subr.mxu0 0.0
        %1423 = vmatpush1.msra.mxu0 0.0
        %1424 = vmatprep.subr.mxu0 0.0
        %1425 = vmatpush1.msra.mxu0 0.0
        %1426 = vmatprep.subr.mxu0 0.0
        %1427 = vmatpush1.msra.mxu0 0.0
        %1428 = vmatprep.mubr.f32.mxu0 0.0
        %1429 = vmatmul.mubr.f32.gmra.mrb[0].mxu0 %v732
        %v1430 = vpop.f32.mrb[0].mxu0
        %v1431 = vadd.f32 %v709, %v1430
        %v1432 = vpop.f32.mrb[0].mxu0
        %1433 = vdwg.mxu0
        %1434 = vmatprep.subr.mxu0 0.0
        %1435 = vmatpush1.msra.mxu0 %v638
        %1436 = vmatprep.subr.mxu0 0.0
        %1437 = vmatpush1.msra.mxu0 %v639
        %1438 = vmatprep.subr.mxu0 0.0
        %1439 = vmatpush1.msra.mxu0 %v640
        %1440 = vmatprep.subr.mxu0 0.0
        %1441 = vmatpush1.msra.mxu0 %v641
        %1442 = vmatprep.subr.mxu0 0.0
        %1443 = vmatpush1.msra.mxu0 0.0
        %1444 = vmatprep.subr.mxu0 0.0
        %1445 = vmatpush1.msra.mxu0 0.0
        %1446 = vmatprep.subr.mxu0 0.0
        %1447 = vmatpush1.msra.mxu0 0.0
        %1448 = vmatprep.subr.mxu0 0.0
        %1449 = vmatpush1.msra.mxu0 0.0
        %1450 = vmatprep.subr.mxu0 0.0
        %1451 = vmatpush1.msra.mxu0 0.0
        %1452 = vmatprep.subr.mxu0 0.0
        %1453 = vmatpush1.msra.mxu0 0.0
        %1454 = vmatprep.subr.mxu0 0.0
        %1455 = vmatpush1.msra.mxu0 0.0
        %1456 = vmatprep.subr.mxu0 0.0
        %1457 = vmatpush1.msra.mxu0 0.0
        %1458 = vmatprep.subr.mxu0 0.0
        %1459 = vmatpush1.msra.mxu0 0.0
        %1460 = vmatprep.subr.mxu0 0.0
        %1461 = vmatpush1.msra.mxu0 0.0
        %1462 = vmatprep.subr.mxu0 0.0
        %1463 = vmatpush1.msra.mxu0 0.0
        %1464 = vmatprep.subr.mxu0 0.0
        %1465 = vmatpush1.msra.mxu0 0.0
        %1466 = vmatprep.subr.mxu0 0.0
        %1467 = vmatpush1.msra.mxu0 0.0
        %1468 = vmatprep.subr.mxu0 0.0
        %1469 = vmatpush1.msra.mxu0 0.0
        %1470 = vmatprep.subr.mxu0 0.0
        %1471 = vmatpush1.msra.mxu0 0.0
        %1472 = vmatprep.subr.mxu0 0.0
        %1473 = vmatpush1.msra.mxu0 0.0
        %1474 = vmatprep.subr.mxu0 0.0
        %1475 = vmatpush1.msra.mxu0 0.0
        %1476 = vmatprep.subr.mxu0 0.0
        %1477 = vmatpush1.msra.mxu0 0.0
        %1478 = vmatprep.subr.mxu0 0.0
        %1479 = vmatpush1.msra.mxu0 0.0
        %1480 = vmatprep.subr.mxu0 0.0
        %1481 = vmatpush1.msra.mxu0 0.0
        %1482 = vmatprep.subr.mxu0 0.0
        %1483 = vmatpush1.msra.mxu0 0.0
        %1484 = vmatprep.subr.mxu0 0.0
        %1485 = vmatpush1.msra.mxu0 0.0
        %1486 = vmatprep.subr.mxu0 0.0
        %1487 = vmatpush1.msra.mxu0 0.0
        %1488 = vmatprep.subr.mxu0 0.0
        %1489 = vmatpush1.msra.mxu0 0.0
        %1490 = vmatprep.subr.mxu0 0.0
        %1491 = vmatpush1.msra.mxu0 0.0
        %1492 = vmatprep.subr.mxu0 0.0
        %1493 = vmatpush1.msra.mxu0 0.0
        %1494 = vmatprep.subr.mxu0 0.0
        %1495 = vmatpush1.msra.mxu0 0.0
        %1496 = vmatprep.subr.mxu0 0.0
        %1497 = vmatpush1.msra.mxu0 0.0
        %1498 = vmatprep.mubr.f32.mxu0 0.0
        %1499 = vmatmul.mubr.f32.gmra.mrb[0].mxu0 %v732
        %v1500 = vpop.f32.mrb[0].mxu0
        %v1501 = vadd.f32 %v713, %v1500
        %v1502 = vpop.f32.mrb[0].mxu0
        %1503 = vdwg.mxu0
        %1504 = vmatprep.subr.mxu0 0.0
        %1505 = vmatpush1.msra.mxu0 %v642
        %1506 = vmatprep.subr.mxu0 0.0
        %1507 = vmatpush1.msra.mxu0 %v643
        %1508 = vmatprep.subr.mxu0 0.0
        %1509 = vmatpush1.msra.mxu0 %v644
        %1510 = vmatprep.subr.mxu0 0.0
        %1511 = vmatpush1.msra.mxu0 %v645
        %1512 = vmatprep.subr.mxu0 0.0
        %1513 = vmatpush1.msra.mxu0 0.0
        %1514 = vmatprep.subr.mxu0 0.0
        %1515 = vmatpush1.msra.mxu0 0.0
        %1516 = vmatprep.subr.mxu0 0.0
        %1517 = vmatpush1.msra.mxu0 0.0
        %1518 = vmatprep.subr.mxu0 0.0
        %1519 = vmatpush1.msra.mxu0 0.0
        %1520 = vmatprep.subr.mxu0 0.0
        %1521 = vmatpush1.msra.mxu0 0.0
        %1522 = vmatprep.subr.mxu0 0.0
        %1523 = vmatpush1.msra.mxu0 0.0
        %1524 = vmatprep.subr.mxu0 0.0
        %1525 = vmatpush1.msra.mxu0 0.0
        %1526 = vmatprep.subr.mxu0 0.0
        %1527 = vmatpush1.msra.mxu0 0.0
        %1528 = vmatprep.subr.mxu0 0.0
        %1529 = vmatpush1.msra.mxu0 0.0
        %1530 = vmatprep.subr.mxu0 0.0
        %1531 = vmatpush1.msra.mxu0 0.0
        %1532 = vmatprep.subr.mxu0 0.0
        %1533 = vmatpush1.msra.mxu0 0.0
        %1534 = vmatprep.subr.mxu0 0.0
        %1535 = vmatpush1.msra.mxu0 0.0
        %1536 = vmatprep.subr.mxu0 0.0
        %1537 = vmatpush1.msra.mxu0 0.0
        %1538 = vmatprep.subr.mxu0 0.0
        %1539 = vmatpush1.msra.mxu0 0.0
        %1540 = vmatprep.subr.mxu0 0.0
        %1541 = vmatpush1.msra.mxu0 0.0
        %1542 = vmatprep.subr.mxu0 0.0
        %1543 = vmatpush1.msra.mxu0 0.0
        %1544 = vmatprep.subr.mxu0 0.0
        %1545 = vmatpush1.msra.mxu0 0.0
        %1546 = vmatprep.subr.mxu0 0.0
        %1547 = vmatpush1.msra.mxu0 0.0
        %1548 = vmatprep.subr.mxu0 0.0
        %1549 = vmatpush1.msra.mxu0 0.0
        %1550 = vmatprep.subr.mxu0 0.0
        %1551 = vmatpush1.msra.mxu0 0.0
        %1552 = vmatprep.subr.mxu0 0.0
        %1553 = vmatpush1.msra.mxu0 0.0
        %1554 = vmatprep.subr.mxu0 0.0
        %1555 = vmatpush1.msra.mxu0 0.0
        %1556 = vmatprep.subr.mxu0 0.0
        %1557 = vmatpush1.msra.mxu0 0.0
        %1558 = vmatprep.subr.mxu0 0.0
        %1559 = vmatpush1.msra.mxu0 0.0
        %1560 = vmatprep.subr.mxu0 0.0
        %1561 = vmatpush1.msra.mxu0 0.0
        %1562 = vmatprep.subr.mxu0 0.0
        %1563 = vmatpush1.msra.mxu0 0.0
        %1564 = vmatprep.subr.mxu0 0.0
        %1565 = vmatpush1.msra.mxu0 0.0
        %1566 = vmatprep.subr.mxu0 0.0
        %1567 = vmatpush1.msra.mxu0 0.0
        %1568 = vmatprep.mubr.f32.mxu0 0.0
        %1569 = vmatmul.mubr.f32.gmra.mrb[0].mxu0 %v732
        %v1570 = vpop.f32.mrb[0].mxu0
        %v1571 = vadd.f32 %v717, %v1570
        %v1572 = vpop.f32.mrb[0].mxu0
        %1573 = vdwg.mxu0
        %v1574 = vld [vmem:[%s6] sm:$0xff]
        %v1575 = vld [vmem:[%s6 + $0x8] sm:$0xff]
        %v1576 = vld [vmem:[%s6 + $0x10] sm:$0xff]
        %v1577 = vld [vmem:[%s6 + $0x18] sm:$0xff]
        %v1578 = vld [vmem:[%s7] sm:$0x1]
        %vm1579 = vcmask 64512
        %v1581 = vsel %vm1579, %v801, 0
        %v1584 = vsel %vm1579, %v1081, 0
        %1586 = vmatprep.subr.mxu0 0.0
        %1587 = vmatpush1.xpose.msra.mxu0 %v1584
        %1588 = vmatprep.subr.mxu0 0.0
        %1589 = vmatpush1.xpose.msra.mxu0 0.0
        %1590 = vmatprep.subr.mxu0 0.0
        %1591 = vmatpush1.xpose.msra.mxu0 0.0
        %1592 = vmatprep.subr.mxu0 0.0
        %1593 = vmatpush1.xpose.msra.mxu0 0.0
        %1594 = vmatprep.subr.mxu0 0.0
        %1595 = vmatpush1.xpose.msra.mxu0 0.0
        %1596 = vmatprep.subr.mxu0 0.0
        %1597 = vmatpush1.xpose.msra.mxu0 0.0
        %1598 = vmatprep.subr.mxu0 0.0
        %1599 = vmatpush1.xpose.msra.mxu0 0.0
        %1600 = vmatprep.subr.mxu0 0.0
        %1601 = vmatpush1.xpose.msra.mxu0 0.0
        %1602 = vmatprep.subr.mxu0 0.0
        %1603 = vmatpush1.xpose.msra.mxu0 0.0
        %1604 = vmatprep.subr.mxu0 0.0
        %1605 = vmatpush1.xpose.msra.mxu0 0.0
        %1606 = vmatprep.subr.mxu0 0.0
        %1607 = vmatpush1.xpose.msra.mxu0 0.0
        %1608 = vmatprep.subr.mxu0 0.0
        %1609 = vmatpush1.xpose.msra.mxu0 0.0
        %1610 = vmatprep.subr.mxu0 0.0
        %1611 = vmatpush1.xpose.msra.mxu0 0.0
        %1612 = vmatprep.subr.mxu0 0.0
        %1613 = vmatpush1.xpose.msra.mxu0 0.0
        %1614 = vmatprep.subr.mxu0 0.0
        %1615 = vmatpush1.xpose.msra.mxu0 0.0
        %1616 = vmatprep.subr.mxu0 0.0
        %1617 = vmatpush1.xpose.msra.mxu0 0.0
        %1618 = vmatprep.subr.mxu0 0.0
        %1619 = vmatpush1.xpose.msra.mxu0 0.0
        %1620 = vmatprep.subr.mxu0 0.0
        %1621 = vmatpush1.xpose.msra.mxu0 0.0
        %1622 = vmatprep.subr.mxu0 0.0
        %1623 = vmatpush1.xpose.msra.mxu0 0.0
        %1624 = vmatprep.subr.mxu0 0.0
        %1625 = vmatpush1.xpose.msra.mxu0 0.0
        %1626 = vmatprep.subr.mxu0 0.0
        %1627 = vmatpush1.xpose.msra.mxu0 0.0
        %1628 = vmatprep.subr.mxu0 0.0
        %1629 = vmatpush1.xpose.msra.mxu0 0.0
        %1630 = vmatprep.subr.mxu0 0.0
        %1631 = vmatpush1.xpose.msra.mxu0 0.0
        %1632 = vmatprep.subr.mxu0 0.0
        %1633 = vmatpush1.xpose.msra.mxu0 0.0
        %1634 = vmatprep.subr.mxu0 0.0
        %1635 = vmatpush1.xpose.msra.mxu0 0.0
        %1636 = vmatprep.subr.mxu0 0.0
        %1637 = vmatpush1.xpose.msra.mxu0 0.0
        %1638 = vmatprep.subr.mxu0 0.0
        %1639 = vmatpush1.xpose.msra.mxu0 0.0
        %1640 = vmatprep.subr.mxu0 0.0
        %1641 = vmatpush1.xpose.msra.mxu0 0.0
        %1642 = vmatprep.subr.mxu0 0.0
        %1643 = vmatpush1.xpose.msra.mxu0 0.0
        %1644 = vmatprep.subr.mxu0 0.0
        %1645 = vmatpush1.xpose.msra.mxu0 0.0
        %1646 = vmatprep.subr.mxu0 0.0
        %1647 = vmatpush1.xpose.msra.mxu0 0.0
        %1648 = vmatprep.subr.mxu0 0.0
        %1649 = vmatpush1.xpose.msra.mxu0 0.0
        %1650 = vmatprep.mubr.f32.mxu0 0.0
        %1651 = vmatmul.mubr.f32.gmra.mrb[0].mxu0 %v1581
        %v1652 = vpop.f32.mrb[0].mxu0
        %v1653 = vadd.f32 0.0, %v1652
        %v1654 = vpop.f32.mrb[0].mxu0
        %1655 = vdwg.mxu0
        %v1657 = vsel %vm1579, %v871, 0
        %v1660 = vsel %vm1579, %v1151, 0
        %1662 = vmatprep.subr.mxu0 0.0
        %1663 = vmatpush1.xpose.msra.mxu0 %v1660
        %1664 = vmatprep.subr.mxu0 0.0
        %1665 = vmatpush1.xpose.msra.mxu0 0.0
        %1666 = vmatprep.subr.mxu0 0.0
        %1667 = vmatpush1.xpose.msra.mxu0 0.0
        %1668 = vmatprep.subr.mxu0 0.0
        %1669 = vmatpush1.xpose.msra.mxu0 0.0
        %1670 = vmatprep.subr.mxu0 0.0
        %1671 = vmatpush1.xpose.msra.mxu0 0.0
        %1672 = vmatprep.subr.mxu0 0.0
        %1673 = vmatpush1.xpose.msra.mxu0 0.0
        %1674 = vmatprep.subr.mxu0 0.0
        %1675 = vmatpush1.xpose.msra.mxu0 0.0
        %1676 = vmatprep.subr.mxu0 0.0
        %1677 = vmatpush1.xpose.msra.mxu0 0.0
        %1678 = vmatprep.subr.mxu0 0.0
        %1679 = vmatpush1.xpose.msra.mxu0 0.0
        %1680 = vmatprep.subr.mxu0 0.0
        %1681 = vmatpush1.xpose.msra.mxu0 0.0
        %1682 = vmatprep.subr.mxu0 0.0
        %1683 = vmatpush1.xpose.msra.mxu0 0.0
        %1684 = vmatprep.subr.mxu0 0.0
        %1685 = vmatpush1.xpose.msra.mxu0 0.0
        %1686 = vmatprep.subr.mxu0 0.0
        %1687 = vmatpush1.xpose.msra.mxu0 0.0
        %1688 = vmatprep.subr.mxu0 0.0
        %1689 = vmatpush1.xpose.msra.mxu0 0.0
        %1690 = vmatprep.subr.mxu0 0.0
        %1691 = vmatpush1.xpose.msra.mxu0 0.0
        %1692 = vmatprep.subr.mxu0 0.0
        %1693 = vmatpush1.xpose.msra.mxu0 0.0
        %1694 = vmatprep.subr.mxu0 0.0
        %1695 = vmatpush1.xpose.msra.mxu0 0.0
        %1696 = vmatprep.subr.mxu0 0.0
        %1697 = vmatpush1.xpose.msra.mxu0 0.0
        %1698 = vmatprep.subr.mxu0 0.0
        %1699 = vmatpush1.xpose.msra.mxu0 0.0
        %1700 = vmatprep.subr.mxu0 0.0
        %1701 = vmatpush1.xpose.msra.mxu0 0.0
        %1702 = vmatprep.subr.mxu0 0.0
        %1703 = vmatpush1.xpose.msra.mxu0 0.0
        %1704 = vmatprep.subr.mxu0 0.0
        %1705 = vmatpush1.xpose.msra.mxu0 0.0
        %1706 = vmatprep.subr.mxu0 0.0
        %1707 = vmatpush1.xpose.msra.mxu0 0.0
        %1708 = vmatprep.subr.mxu0 0.0
        %1709 = vmatpush1.xpose.msra.mxu0 0.0
        %1710 = vmatprep.subr.mxu0 0.0
        %1711 = vmatpush1.xpose.msra.mxu0 0.0
        %1712 = vmatprep.subr.mxu0 0.0
        %1713 = vmatpush1.xpose.msra.mxu0 0.0
        %1714 = vmatprep.subr.mxu0 0.0
        %1715 = vmatpush1.xpose.msra.mxu0 0.0
        %1716 = vmatprep.subr.mxu0 0.0
        %1717 = vmatpush1.xpose.msra.mxu0 0.0
        %1718 = vmatprep.subr.mxu0 0.0
        %1719 = vmatpush1.xpose.msra.mxu0 0.0
        %1720 = vmatprep.subr.mxu0 0.0
        %1721 = vmatpush1.xpose.msra.mxu0 0.0
        %1722 = vmatprep.subr.mxu0 0.0
        %1723 = vmatpush1.xpose.msra.mxu0 0.0
        %1724 = vmatprep.subr.mxu0 0.0
        %1725 = vmatpush1.xpose.msra.mxu0 0.0
        %1726 = vmatprep.mubr.f32.mxu0 0.0
        %1727 = vmatmul.mubr.f32.gmra.mrb[0].mxu0 %v1657
        %v1728 = vpop.f32.mrb[0].mxu0
        %v1729 = vadd.f32 0.0, %v1728
        %v1730 = vpop.f32.mrb[0].mxu0
        %1731 = vdwg.mxu0
        %v1733 = vsel %vm1579, %v941, 0
        %v1736 = vsel %vm1579, %v1221, 0
        %1738 = vmatprep.subr.mxu0 0.0
        %1739 = vmatpush1.xpose.msra.mxu0 %v1736
        %1740 = vmatprep.subr.mxu0 0.0
        %1741 = vmatpush1.xpose.msra.mxu0 0.0
        %1742 = vmatprep.subr.mxu0 0.0
        %1743 = vmatpush1.xpose.msra.mxu0 0.0
        %1744 = vmatprep.subr.mxu0 0.0
        %1745 = vmatpush1.xpose.msra.mxu0 0.0
        %1746 = vmatprep.subr.mxu0 0.0
        %1747 = vmatpush1.xpose.msra.mxu0 0.0
        %1748 = vmatprep.subr.mxu0 0.0
        %1749 = vmatpush1.xpose.msra.mxu0 0.0
        %1750 = vmatprep.subr.mxu0 0.0
        %1751 = vmatpush1.xpose.msra.mxu0 0.0
        %1752 = vmatprep.subr.mxu0 0.0
        %1753 = vmatpush1.xpose.msra.mxu0 0.0
        %1754 = vmatprep.subr.mxu0 0.0
        %1755 = vmatpush1.xpose.msra.mxu0 0.0
        %1756 = vmatprep.subr.mxu0 0.0
        %1757 = vmatpush1.xpose.msra.mxu0 0.0
        %1758 = vmatprep.subr.mxu0 0.0
        %1759 = vmatpush1.xpose.msra.mxu0 0.0
        %1760 = vmatprep.subr.mxu0 0.0
        %1761 = vmatpush1.xpose.msra.mxu0 0.0
        %1762 = vmatprep.subr.mxu0 0.0
        %1763 = vmatpush1.xpose.msra.mxu0 0.0
        %1764 = vmatprep.subr.mxu0 0.0
        %1765 = vmatpush1.xpose.msra.mxu0 0.0
        %1766 = vmatprep.subr.mxu0 0.0
        %1767 = vmatpush1.xpose.msra.mxu0 0.0
        %1768 = vmatprep.subr.mxu0 0.0
        %1769 = vmatpush1.xpose.msra.mxu0 0.0
        %1770 = vmatprep.subr.mxu0 0.0
        %1771 = vmatpush1.xpose.msra.mxu0 0.0
        %1772 = vmatprep.subr.mxu0 0.0
        %1773 = vmatpush1.xpose.msra.mxu0 0.0
        %1774 = vmatprep.subr.mxu0 0.0
        %1775 = vmatpush1.xpose.msra.mxu0 0.0
        %1776 = vmatprep.subr.mxu0 0.0
        %1777 = vmatpush1.xpose.msra.mxu0 0.0
        %1778 = vmatprep.subr.mxu0 0.0
        %1779 = vmatpush1.xpose.msra.mxu0 0.0
        %1780 = vmatprep.subr.mxu0 0.0
        %1781 = vmatpush1.xpose.msra.mxu0 0.0
        %1782 = vmatprep.subr.mxu0 0.0
        %1783 = vmatpush1.xpose.msra.mxu0 0.0
        %1784 = vmatprep.subr.mxu0 0.0
        %1785 = vmatpush1.xpose.msra.mxu0 0.0
        %1786 = vmatprep.subr.mxu0 0.0
        %1787 = vmatpush1.xpose.msra.mxu0 0.0
        %1788 = vmatprep.subr.mxu0 0.0
        %1789 = vmatpush1.xpose.msra.mxu0 0.0
        %1790 = vmatprep.subr.mxu0 0.0
        %1791 = vmatpush1.xpose.msra.mxu0 0.0
        %1792 = vmatprep.subr.mxu0 0.0
        %1793 = vmatpush1.xpose.msra.mxu0 0.0
        %1794 = vmatprep.subr.mxu0 0.0
        %1795 = vmatpush1.xpose.msra.mxu0 0.0
        %1796 = vmatprep.subr.mxu0 0.0
        %1797 = vmatpush1.xpose.msra.mxu0 0.0
        %1798 = vmatprep.subr.mxu0 0.0
        %1799 = vmatpush1.xpose.msra.mxu0 0.0
        %1800 = vmatprep.subr.mxu0 0.0
        %1801 = vmatpush1.xpose.msra.mxu0 0.0
        %1802 = vmatprep.mubr.f32.mxu0 0.0
        %1803 = vmatmul.mubr.f32.gmra.mrb[0].mxu0 %v1733
        %v1804 = vpop.f32.mrb[0].mxu0
        %v1805 = vadd.f32 0.0, %v1804
        %v1806 = vpop.f32.mrb[0].mxu0
        %1807 = vdwg.mxu0
        %v1809 = vsel %vm1579, %v1011, 0
        %v1812 = vsel %vm1579, %v1291, 0
        %1814 = vmatprep.subr.mxu0 0.0
        %1815 = vmatpush1.xpose.msra.mxu0 %v1812
        %1816 = vmatprep.subr.mxu0 0.0
        %1817 = vmatpush1.xpose.msra.mxu0 0.0
        %1818 = vmatprep.subr.mxu0 0.0
        %1819 = vmatpush1.xpose.msra.mxu0 0.0
        %1820 = vmatprep.subr.mxu0 0.0
        %1821 = vmatpush1.xpose.msra.mxu0 0.0
        %1822 = vmatprep.subr.mxu0 0.0
        %1823 = vmatpush1.xpose.msra.mxu0 0.0
        %1824 = vmatprep.subr.mxu0 0.0
        %1825 = vmatpush1.xpose.msra.mxu0 0.0
        %1826 = vmatprep.subr.mxu0 0.0
        %1827 = vmatpush1.xpose.msra.mxu0 0.0
        %1828 = vmatprep.subr.mxu0 0.0
        %1829 = vmatpush1.xpose.msra.mxu0 0.0
        %1830 = vmatprep.subr.mxu0 0.0
        %1831 = vmatpush1.xpose.msra.mxu0 0.0
        %1832 = vmatprep.subr.mxu0 0.0
        %1833 = vmatpush1.xpose.msra.mxu0 0.0
        %1834 = vmatprep.subr.mxu0 0.0
        %1835 = vmatpush1.xpose.msra.mxu0 0.0
        %1836 = vmatprep.subr.mxu0 0.0
        %1837 = vmatpush1.xpose.msra.mxu0 0.0
        %1838 = vmatprep.subr.mxu0 0.0
        %1839 = vmatpush1.xpose.msra.mxu0 0.0
        %1840 = vmatprep.subr.mxu0 0.0
        %1841 = vmatpush1.xpose.msra.mxu0 0.0
        %1842 = vmatprep.subr.mxu0 0.0
        %1843 = vmatpush1.xpose.msra.mxu0 0.0
        %1844 = vmatprep.subr.mxu0 0.0
        %1845 = vmatpush1.xpose.msra.mxu0 0.0
        %1846 = vmatprep.subr.mxu0 0.0
        %1847 = vmatpush1.xpose.msra.mxu0 0.0
        %1848 = vmatprep.subr.mxu0 0.0
        %1849 = vmatpush1.xpose.msra.mxu0 0.0
        %1850 = vmatprep.subr.mxu0 0.0
        %1851 = vmatpush1.xpose.msra.mxu0 0.0
        %1852 = vmatprep.subr.mxu0 0.0
        %1853 = vmatpush1.xpose.msra.mxu0 0.0
        %1854 = vmatprep.subr.mxu0 0.0
        %1855 = vmatpush1.xpose.msra.mxu0 0.0
        %1856 = vmatprep.subr.mxu0 0.0
        %1857 = vmatpush1.xpose.msra.mxu0 0.0
        %1858 = vmatprep.subr.mxu0 0.0
        %1859 = vmatpush1.xpose.msra.mxu0 0.0
        %1860 = vmatprep.subr.mxu0 0.0
        %1861 = vmatpush1.xpose.msra.mxu0 0.0
        %1862 = vmatprep.subr.mxu0 0.0
        %1863 = vmatpush1.xpose.msra.mxu0 0.0
        %1864 = vmatprep.subr.mxu0 0.0
        %1865 = vmatpush1.xpose.msra.mxu0 0.0
        %1866 = vmatprep.subr.mxu0 0.0
        %1867 = vmatpush1.xpose.msra.mxu0 0.0
        %1868 = vmatprep.subr.mxu0 0.0
        %1869 = vmatpush1.xpose.msra.mxu0 0.0
        %1870 = vmatprep.subr.mxu0 0.0
        %1871 = vmatpush1.xpose.msra.mxu0 0.0
        %1872 = vmatprep.subr.mxu0 0.0
        %1873 = vmatpush1.xpose.msra.mxu0 0.0
        %1874 = vmatprep.subr.mxu0 0.0
        %1875 = vmatpush1.xpose.msra.mxu0 0.0
        %1876 = vmatprep.subr.mxu0 0.0
        %1877 = vmatpush1.xpose.msra.mxu0 0.0
        %1878 = vmatprep.mubr.f32.mxu0 0.0
        %1879 = vmatmul.mubr.f32.gmra.mrb[0].mxu0 %v1809
        %v1880 = vpop.f32.mrb[0].mxu0
        %v1881 = vadd.f32 0.0, %v1880
        %v1882 = vpop.f32.mrb[0].mxu0
        %1883 = vdwg.mxu0
        %v1884 = vmul.f32 %v1653, 0.35355338
        %v1885 = vmul.f32 %v1729, 0.35355338
        %v1886 = vmul.f32 %v1805, 0.35355338
        %v1887 = vmul.f32 %v1881, 0.35355338
        %v1888 = vadd.f32 %v1884, %v590
        %v1889 = vadd.f32 %v1885, %v590
        %v1890 = vadd.f32 %v1886, %v590
        %v1891 = vadd.f32 %v1887, %v590
        %v1892 = vsel %vm1579, %v1888, -inf
        %1893 = vmax.xlane.f32.xlu0 %v1892
        %v1894 = vpop.xlane.xlu0 %1893
        %v1895 = vsel %vm1579, %v1889, -inf
        %1896 = vmax.xlane.f32.xlu0 %v1895
        %v1897 = vpop.xlane.xlu0 %1896
        %v1898 = vsel %vm1579, %v1890, -inf
        %1899 = vmax.xlane.f32.xlu0 %v1898
        %v1900 = vpop.xlane.xlu0 %1899
        %v1901 = vsel %vm1579, %v1891, -inf
        %1902 = vmax.xlane.f32.xlu0 %v1901
        %v1903 = vpop.xlane.xlu0 %1902
        %v1904 = vsub.f32 %v1888, %v1894
        %v1905 = vsub.f32 %v1889, %v1897
        %v1906 = vsub.f32 %v1890, %v1900
        %v1907 = vsub.f32 %v1891, %v1903
        %v1908 = vmul.f32 %v1904, 1.442695
        %v1909 = vpow.pop %v1908
        %v1910 = vmul.f32 %v1905, 1.442695
        %v1911 = vpow.pop %v1910
        %v1912 = vmul.f32 %v1906, 1.442695
        %v1913 = vpow.pop %v1912
        %v1914 = vmul.f32 %v1907, 1.442695
        %v1915 = vpow.pop %v1914
        %v1916 = vsel %vm1579, %v1909, 0.0
        %1917 = vadd.xlane.f32.xlu0 %v1916
        %v1918 = vpop.xlane.xlu0 %1917
        %v1919 = vsel %vm1579, %v1911, 0.0
        %1920 = vadd.xlane.f32.xlu0 %v1919
        %v1921 = vpop.xlane.xlu0 %1920
        %v1922 = vsel %vm1579, %v1913, 0.0
        %1923 = vadd.xlane.f32.xlu0 %v1922
        %v1924 = vpop.xlane.xlu0 %1923
        %v1925 = vsel %vm1579, %v1915, 0.0
        %1926 = vadd.xlane.f32.xlu0 %v1925
        %v1927 = vpop.xlane.xlu0 %1926
        %v1928 = vrcp.pop %v1918
        %v1929 = vrcp.pop %v1921
        %v1930 = vrcp.pop %v1924
        %v1931 = vrcp.pop %v1927
        %v1932 = vmul.f32 %v1909, %v1928
        %v1933 = vmul.f32 %v1911, %v1929
        %v1934 = vmul.f32 %v1913, %v1930
        %v1935 = vmul.f32 %v1915, %v1931
        %v1937 = vsel %vm1579, %v1932, 0
        %1939 = vmatprep.subr.mxu0 0.0
        %1940 = vmatpush1.msra.mxu0 %v1361
        %1941 = vmatprep.subr.mxu0 0.0
        %1942 = vmatpush1.msra.mxu0 0.0
        %1943 = vmatprep.subr.mxu0 0.0
        %1944 = vmatpush1.msra.mxu0 0.0
        %1945 = vmatprep.subr.mxu0 0.0
        %1946 = vmatpush1.msra.mxu0 0.0
        %1947 = vmatprep.subr.mxu0 0.0
        %1948 = vmatpush1.msra.mxu0 0.0
        %1949 = vmatprep.subr.mxu0 0.0
        %1950 = vmatpush1.msra.mxu0 0.0
        %1951 = vmatprep.subr.mxu0 0.0
        %1952 = vmatpush1.msra.mxu0 0.0
        %1953 = vmatprep.subr.mxu0 0.0
        %1954 = vmatpush1.msra.mxu0 0.0
        %1955 = vmatprep.subr.mxu0 0.0
        %1956 = vmatpush1.msra.mxu0 0.0
        %1957 = vmatprep.subr.mxu0 0.0
        %1958 = vmatpush1.msra.mxu0 0.0
        %1959 = vmatprep.subr.mxu0 0.0
        %1960 = vmatpush1.msra.mxu0 0.0
        %1961 = vmatprep.subr.mxu0 0.0
        %1962 = vmatpush1.msra.mxu0 0.0
        %1963 = vmatprep.subr.mxu0 0.0
        %1964 = vmatpush1.msra.mxu0 0.0
        %1965 = vmatprep.subr.mxu0 0.0
        %1966 = vmatpush1.msra.mxu0 0.0
        %1967 = vmatprep.subr.mxu0 0.0
        %1968 = vmatpush1.msra.mxu0 0.0
        %1969 = vmatprep.subr.mxu0 0.0
        %1970 = vmatpush1.msra.mxu0 0.0
        %1971 = vmatprep.subr.mxu0 0.0
        %1972 = vmatpush1.msra.mxu0 0.0
        %1973 = vmatprep.subr.mxu0 0.0
        %1974 = vmatpush1.msra.mxu0 0.0
        %1975 = vmatprep.subr.mxu0 0.0
        %1976 = vmatpush1.msra.mxu0 0.0
        %1977 = vmatprep.subr.mxu0 0.0
        %1978 = vmatpush1.msra.mxu0 0.0
        %1979 = vmatprep.subr.mxu0 0.0
        %1980 = vmatpush1.msra.mxu0 0.0
        %1981 = vmatprep.subr.mxu0 0.0
        %1982 = vmatpush1.msra.mxu0 0.0
        %1983 = vmatprep.subr.mxu0 0.0
        %1984 = vmatpush1.msra.mxu0 0.0
        %1985 = vmatprep.subr.mxu0 0.0
        %1986 = vmatpush1.msra.mxu0 0.0
        %1987 = vmatprep.subr.mxu0 0.0
        %1988 = vmatpush1.msra.mxu0 0.0
        %1989 = vmatprep.subr.mxu0 0.0
        %1990 = vmatpush1.msra.mxu0 0.0
        %1991 = vmatprep.subr.mxu0 0.0
        %1992 = vmatpush1.msra.mxu0 0.0
        %1993 = vmatprep.subr.mxu0 0.0
        %1994 = vmatpush1.msra.mxu0 0.0
        %1995 = vmatprep.subr.mxu0 0.0
        %1996 = vmatpush1.msra.mxu0 0.0
        %1997 = vmatprep.subr.mxu0 0.0
        %1998 = vmatpush1.msra.mxu0 0.0
        %1999 = vmatprep.subr.mxu0 0.0
        %2000 = vmatpush1.msra.mxu0 0.0
        %2001 = vmatprep.subr.mxu0 0.0
        %2002 = vmatpush1.msra.mxu0 0.0
        %2003 = vmatprep.mubr.f32.mxu0 0.0
        %2004 = vmatmul.mubr.f32.gmra.mrb[0].mxu0 %v1937
        %v2005 = vpop.f32.mrb[0].mxu0
        %v2006 = vadd.f32 0.0, %v2005
        %v2007 = vpop.f32.mrb[0].mxu0
        %2008 = vdwg.mxu0
        %v2010 = vsel %vm1579, %v1933, 0
        %2012 = vmatprep.subr.mxu0 0.0
        %2013 = vmatpush1.msra.mxu0 %v1431
        %2014 = vmatprep.subr.mxu0 0.0
        %2015 = vmatpush1.msra.mxu0 0.0
        %2016 = vmatprep.subr.mxu0 0.0
        %2017 = vmatpush1.msra.mxu0 0.0
        %2018 = vmatprep.subr.mxu0 0.0
        %2019 = vmatpush1.msra.mxu0 0.0
        %2020 = vmatprep.subr.mxu0 0.0
        %2021 = vmatpush1.msra.mxu0 0.0
        %2022 = vmatprep.subr.mxu0 0.0
        %2023 = vmatpush1.msra.mxu0 0.0
        %2024 = vmatprep.subr.mxu0 0.0
        %2025 = vmatpush1.msra.mxu0 0.0
        %2026 = vmatprep.subr.mxu0 0.0
        %2027 = vmatpush1.msra.mxu0 0.0
        %2028 = vmatprep.subr.mxu0 0.0
        %2029 = vmatpush1.msra.mxu0 0.0
        %2030 = vmatprep.subr.mxu0 0.0
        %2031 = vmatpush1.msra.mxu0 0.0
        %2032 = vmatprep.subr.mxu0 0.0
        %2033 = vmatpush1.msra.mxu0 0.0
        %2034 = vmatprep.subr.mxu0 0.0
        %2035 = vmatpush1.msra.mxu0 0.0
        %2036 = vmatprep.subr.mxu0 0.0
        %2037 = vmatpush1.msra.mxu0 0.0
        %2038 = vmatprep.subr.mxu0 0.0
        %2039 = vmatpush1.msra.mxu0 0.0
        %2040 = vmatprep.subr.mxu0 0.0
        %2041 = vmatpush1.msra.mxu0 0.0
        %2042 = vmatprep.subr.mxu0 0.0
        %2043 = vmatpush1.msra.mxu0 0.0
        %2044 = vmatprep.subr.mxu0 0.0
        %2045 = vmatpush1.msra.mxu0 0.0
        %2046 = vmatprep.subr.mxu0 0.0
        %2047 = vmatpush1.msra.mxu0 0.0
        %2048 = vmatprep.subr.mxu0 0.0
        %2049 = vmatpush1.msra.mxu0 0.0
        %2050 = vmatprep.subr.mxu0 0.0
        %2051 = vmatpush1.msra.mxu0 0.0
        %2052 = vmatprep.subr.mxu0 0.0
        %2053 = vmatpush1.msra.mxu0 0.0
        %2054 = vmatprep.subr.mxu0 0.0
        %2055 = vmatpush1.msra.mxu0 0.0
        %2056 = vmatprep.subr.mxu0 0.0
        %2057 = vmatpush1.msra.mxu0 0.0
        %2058 = vmatprep.subr.mxu0 0.0
        %2059 = vmatpush1.msra.mxu0 0.0
        %2060 = vmatprep.subr.mxu0 0.0
        %2061 = vmatpush1.msra.mxu0 0.0
        %2062 = vmatprep.subr.mxu0 0.0
        %2063 = vmatpush1.msra.mxu0 0.0
        %2064 = vmatprep.subr.mxu0 0.0
        %2065 = vmatpush1.msra.mxu0 0.0
        %2066 = vmatprep.subr.mxu0 0.0
        %2067 = vmatpush1.msra.mxu0 0.0
        %2068 = vmatprep.subr.mxu0 0.0
        %2069 = vmatpush1.msra.mxu0 0.0
        %2070 = vmatprep.subr.mxu0 0.0
        %2071 = vmatpush1.msra.mxu0 0.0
        %2072 = vmatprep.subr.mxu0 0.0
        %2073 = vmatpush1.msra.mxu0 0.0
        %2074 = vmatprep.subr.mxu0 0.0
        %2075 = vmatpush1.msra.mxu0 0.0
        %2076 = vmatprep.mubr.f32.mxu0 0.0
        %2077 = vmatmul.mubr.f32.gmra.mrb[0].mxu0 %v2010
        %v2078 = vpop.f32.mrb[0].mxu0
        %v2079 = vadd.f32 0.0, %v2078
        %v2080 = vpop.f32.mrb[0].mxu0
        %2081 = vdwg.mxu0
        %v2083 = vsel %vm1579, %v1934, 0
        %2085 = vmatprep.subr.mxu0 0.0
        %2086 = vmatpush1.msra.mxu0 %v1501
        %2087 = vmatprep.subr.mxu0 0.0
        %2088 = vmatpush1.msra.mxu0 0.0
        %2089 = vmatprep.subr.mxu0 0.0
        %2090 = vmatpush1.msra.mxu0 0.0
        %2091 = vmatprep.subr.mxu0 0.0
        %2092 = vmatpush1.msra.mxu0 0.0
        %2093 = vmatprep.subr.mxu0 0.0
        %2094 = vmatpush1.msra.mxu0 0.0
        %2095 = vmatprep.subr.mxu0 0.0
        %2096 = vmatpush1.msra.mxu0 0.0
        %2097 = vmatprep.subr.mxu0 0.0
        %2098 = vmatpush1.msra.mxu0 0.0
        %2099 = vmatprep.subr.mxu0 0.0
        %2100 = vmatpush1.msra.mxu0 0.0
        %2101 = vmatprep.subr.mxu0 0.0
        %2102 = vmatpush1.msra.mxu0 0.0
        %2103 = vmatprep.subr.mxu0 0.0
        %2104 = vmatpush1.msra.mxu0 0.0
        %2105 = vmatprep.subr.mxu0 0.0
        %2106 = vmatpush1.msra.mxu0 0.0
        %2107 = vmatprep.subr.mxu0 0.0
        %2108 = vmatpush1.msra.mxu0 0.0
        %2109 = vmatprep.subr.mxu0 0.0
        %2110 = vmatpush1.msra.mxu0 0.0
        %2111 = vmatprep.subr.mxu0 0.0
        %2112 = vmatpush1.msra.mxu0 0.0
        %2113 = vmatprep.subr.mxu0 0.0
        %2114 = vmatpush1.msra.mxu0 0.0
        %2115 = vmatprep.subr.mxu0 0.0
        %2116 = vmatpush1.msra.mxu0 0.0
        %2117 = vmatprep.subr.mxu0 0.0
        %2118 = vmatpush1.msra.mxu0 0.0
        %2119 = vmatprep.subr.mxu0 0.0
        %2120 = vmatpush1.msra.mxu0 0.0
        %2121 = vmatprep.subr.mxu0 0.0
        %2122 = vmatpush1.msra.mxu0 0.0
        %2123 = vmatprep.subr.mxu0 0.0
        %2124 = vmatpush1.msra.mxu0 0.0
        %2125 = vmatprep.subr.mxu0 0.0
        %2126 = vmatpush1.msra.mxu0 0.0
        %2127 = vmatprep.subr.mxu0 0.0
        %2128 = vmatpush1.msra.mxu0 0.0
        %2129 = vmatprep.subr.mxu0 0.0
        %2130 = vmatpush1.msra.mxu0 0.0
        %2131 = vmatprep.subr.mxu0 0.0
        %2132 = vmatpush1.msra.mxu0 0.0
        %2133 = vmatprep.subr.mxu0 0.0
        %2134 = vmatpush1.msra.mxu0 0.0
        %2135 = vmatprep.subr.mxu0 0.0
        %2136 = vmatpush1.msra.mxu0 0.0
        %2137 = vmatprep.subr.mxu0 0.0
        %2138 = vmatpush1.msra.mxu0 0.0
        %2139 = vmatprep.subr.mxu0 0.0
        %2140 = vmatpush1.msra.mxu0 0.0
        %2141 = vmatprep.subr.mxu0 0.0
        %2142 = vmatpush1.msra.mxu0 0.0
        %2143 = vmatprep.subr.mxu0 0.0
        %2144 = vmatpush1.msra.mxu0 0.0
        %2145 = vmatprep.subr.mxu0 0.0
        %2146 = vmatpush1.msra.mxu0 0.0
        %2147 = vmatprep.subr.mxu0 0.0
        %2148 = vmatpush1.msra.mxu0 0.0
        %2149 = vmatprep.mubr.f32.mxu0 0.0
        %2150 = vmatmul.mubr.f32.gmra.mrb[0].mxu0 %v2083
        %v2151 = vpop.f32.mrb[0].mxu0
        %v2152 = vadd.f32 0.0, %v2151
        %v2153 = vpop.f32.mrb[0].mxu0
        %2154 = vdwg.mxu0
        %v2156 = vsel %vm1579, %v1935, 0
        %2158 = vmatprep.subr.mxu0 0.0
        %2159 = vmatpush1.msra.mxu0 %v1571
        %2160 = vmatprep.subr.mxu0 0.0
        %2161 = vmatpush1.msra.mxu0 0.0
        %2162 = vmatprep.subr.mxu0 0.0
        %2163 = vmatpush1.msra.mxu0 0.0
        %2164 = vmatprep.subr.mxu0 0.0
        %2165 = vmatpush1.msra.mxu0 0.0
        %2166 = vmatprep.subr.mxu0 0.0
        %2167 = vmatpush1.msra.mxu0 0.0
        %2168 = vmatprep.subr.mxu0 0.0
        %2169 = vmatpush1.msra.mxu0 0.0
        %2170 = vmatprep.subr.mxu0 0.0
        %2171 = vmatpush1.msra.mxu0 0.0
        %2172 = vmatprep.subr.mxu0 0.0
        %2173 = vmatpush1.msra.mxu0 0.0
        %2174 = vmatprep.subr.mxu0 0.0
        %2175 = vmatpush1.msra.mxu0 0.0
        %2176 = vmatprep.subr.mxu0 0.0
        %2177 = vmatpush1.msra.mxu0 0.0
        %2178 = vmatprep.subr.mxu0 0.0
        %2179 = vmatpush1.msra.mxu0 0.0
        %2180 = vmatprep.subr.mxu0 0.0
        %2181 = vmatpush1.msra.mxu0 0.0
        %2182 = vmatprep.subr.mxu0 0.0
        %2183 = vmatpush1.msra.mxu0 0.0
        %2184 = vmatprep.subr.mxu0 0.0
        %2185 = vmatpush1.msra.mxu0 0.0
        %2186 = vmatprep.subr.mxu0 0.0
        %2187 = vmatpush1.msra.mxu0 0.0
        %2188 = vmatprep.subr.mxu0 0.0
        %2189 = vmatpush1.msra.mxu0 0.0
        %2190 = vmatprep.subr.mxu0 0.0
        %2191 = vmatpush1.msra.mxu0 0.0
        %2192 = vmatprep.subr.mxu0 0.0
        %2193 = vmatpush1.msra.mxu0 0.0
        %2194 = vmatprep.subr.mxu0 0.0
        %2195 = vmatpush1.msra.mxu0 0.0
        %2196 = vmatprep.subr.mxu0 0.0
        %2197 = vmatpush1.msra.mxu0 0.0
        %2198 = vmatprep.subr.mxu0 0.0
        %2199 = vmatpush1.msra.mxu0 0.0
        %2200 = vmatprep.subr.mxu0 0.0
        %2201 = vmatpush1.msra.mxu0 0.0
        %2202 = vmatprep.subr.mxu0 0.0
        %2203 = vmatpush1.msra.mxu0 0.0
        %2204 = vmatprep.subr.mxu0 0.0
        %2205 = vmatpush1.msra.mxu0 0.0
        %2206 = vmatprep.subr.mxu0 0.0
        %2207 = vmatpush1.msra.mxu0 0.0
        %2208 = vmatprep.subr.mxu0 0.0
        %2209 = vmatpush1.msra.mxu0 0.0
        %2210 = vmatprep.subr.mxu0 0.0
        %2211 = vmatpush1.msra.mxu0 0.0
        %2212 = vmatprep.subr.mxu0 0.0
        %2213 = vmatpush1.msra.mxu0 0.0
        %2214 = vmatprep.subr.mxu0 0.0
        %2215 = vmatpush1.msra.mxu0 0.0
        %2216 = vmatprep.subr.mxu0 0.0
        %2217 = vmatpush1.msra.mxu0 0.0
        %2218 = vmatprep.subr.mxu0 0.0
        %2219 = vmatpush1.msra.mxu0 0.0
        %2220 = vmatprep.subr.mxu0 0.0
        %2221 = vmatpush1.msra.mxu0 0.0
        %2222 = vmatprep.mubr.f32.mxu0 0.0
        %2223 = vmatmul.mubr.f32.gmra.mrb[0].mxu0 %v2156
        %v2224 = vpop.f32.mrb[0].mxu0
        %v2225 = vadd.f32 0.0, %v2224
        %v2226 = vpop.f32.mrb[0].mxu0
        %2227 = vdwg.mxu0
        %v2229 = vsel %vm1579, %v2006, 0
        %2231 = vmatprep.subr.mxu0 0.0
        %2232 = vmatpush1.msra.mxu0 %v1574
        %2233 = vmatprep.subr.mxu0 0.0
        %2234 = vmatpush1.msra.mxu0 0.0
        %2235 = vmatprep.subr.mxu0 0.0
        %2236 = vmatpush1.msra.mxu0 0.0
        %2237 = vmatprep.subr.mxu0 0.0
        %2238 = vmatpush1.msra.mxu0 0.0
        %2239 = vmatprep.subr.mxu0 0.0
        %2240 = vmatpush1.msra.mxu0 0.0
        %2241 = vmatprep.subr.mxu0 0.0
        %2242 = vmatpush1.msra.mxu0 0.0
        %2243 = vmatprep.subr.mxu0 0.0
        %2244 = vmatpush1.msra.mxu0 0.0
        %2245 = vmatprep.subr.mxu0 0.0
        %2246 = vmatpush1.msra.mxu0 0.0
        %2247 = vmatprep.subr.mxu0 0.0
        %2248 = vmatpush1.msra.mxu0 0.0
        %2249 = vmatprep.subr.mxu0 0.0
        %2250 = vmatpush1.msra.mxu0 0.0
        %2251 = vmatprep.subr.mxu0 0.0
        %2252 = vmatpush1.msra.mxu0 0.0
        %2253 = vmatprep.subr.mxu0 0.0
        %2254 = vmatpush1.msra.mxu0 0.0
        %2255 = vmatprep.subr.mxu0 0.0
        %2256 = vmatpush1.msra.mxu0 0.0
        %2257 = vmatprep.subr.mxu0 0.0
        %2258 = vmatpush1.msra.mxu0 0.0
        %2259 = vmatprep.subr.mxu0 0.0
        %2260 = vmatpush1.msra.mxu0 0.0
        %2261 = vmatprep.subr.mxu0 0.0
        %2262 = vmatpush1.msra.mxu0 0.0
        %2263 = vmatprep.subr.mxu0 0.0
        %2264 = vmatpush1.msra.mxu0 0.0
        %2265 = vmatprep.subr.mxu0 0.0
        %2266 = vmatpush1.msra.mxu0 0.0
        %2267 = vmatprep.subr.mxu0 0.0
        %2268 = vmatpush1.msra.mxu0 0.0
        %2269 = vmatprep.subr.mxu0 0.0
        %2270 = vmatpush1.msra.mxu0 0.0
        %2271 = vmatprep.subr.mxu0 0.0
        %2272 = vmatpush1.msra.mxu0 0.0
        %2273 = vmatprep.subr.mxu0 0.0
        %2274 = vmatpush1.msra.mxu0 0.0
        %2275 = vmatprep.subr.mxu0 0.0
        %2276 = vmatpush1.msra.mxu0 0.0
        %2277 = vmatprep.subr.mxu0 0.0
        %2278 = vmatpush1.msra.mxu0 0.0
        %2279 = vmatprep.subr.mxu0 0.0
        %2280 = vmatpush1.msra.mxu0 0.0
        %2281 = vmatprep.subr.mxu0 0.0
        %2282 = vmatpush1.msra.mxu0 0.0
        %2283 = vmatprep.subr.mxu0 0.0
        %2284 = vmatpush1.msra.mxu0 0.0
        %2285 = vmatprep.subr.mxu0 0.0
        %2286 = vmatpush1.msra.mxu0 0.0
        %2287 = vmatprep.subr.mxu0 0.0
        %2288 = vmatpush1.msra.mxu0 0.0
        %2289 = vmatprep.subr.mxu0 0.0
        %2290 = vmatpush1.msra.mxu0 0.0
        %2291 = vmatprep.subr.mxu0 0.0
        %2292 = vmatpush1.msra.mxu0 0.0
        %2293 = vmatprep.subr.mxu0 0.0
        %2294 = vmatpush1.msra.mxu0 0.0
        %2295 = vmatprep.mubr.f32.mxu0 0.0
        %2296 = vmatmul.mubr.f32.gmra.mrb[0].mxu0 %v2229
        %v2297 = vpop.f32.mrb[0].mxu0
        %v2298 = vadd.f32 0.0, %v2297
        %v2299 = vpop.f32.mrb[0].mxu0
        %2300 = vdwg.mxu0
        %v2302 = vsel %vm1579, %v2079, 0
        %2304 = vmatprep.subr.mxu0 0.0
        %2305 = vmatpush1.msra.mxu0 %v1575
        %2306 = vmatprep.subr.mxu0 0.0
        %2307 = vmatpush1.msra.mxu0 0.0
        %2308 = vmatprep.subr.mxu0 0.0
        %2309 = vmatpush1.msra.mxu0 0.0
        %2310 = vmatprep.subr.mxu0 0.0
        %2311 = vmatpush1.msra.mxu0 0.0
        %2312 = vmatprep.subr.mxu0 0.0
        %2313 = vmatpush1.msra.mxu0 0.0
        %2314 = vmatprep.subr.mxu0 0.0
        %2315 = vmatpush1.msra.mxu0 0.0
        %2316 = vmatprep.subr.mxu0 0.0
        %2317 = vmatpush1.msra.mxu0 0.0
        %2318 = vmatprep.subr.mxu0 0.0
        %2319 = vmatpush1.msra.mxu0 0.0
        %2320 = vmatprep.subr.mxu0 0.0
        %2321 = vmatpush1.msra.mxu0 0.0
        %2322 = vmatprep.subr.mxu0 0.0
        %2323 = vmatpush1.msra.mxu0 0.0
        %2324 = vmatprep.subr.mxu0 0.0
        %2325 = vmatpush1.msra.mxu0 0.0
        %2326 = vmatprep.subr.mxu0 0.0
        %2327 = vmatpush1.msra.mxu0 0.0
        %2328 = vmatprep.subr.mxu0 0.0
        %2329 = vmatpush1.msra.mxu0 0.0
        %2330 = vmatprep.subr.mxu0 0.0
        %2331 = vmatpush1.msra.mxu0 0.0
        %2332 = vmatprep.subr.mxu0 0.0
        %2333 = vmatpush1.msra.mxu0 0.0
        %2334 = vmatprep.subr.mxu0 0.0
        %2335 = vmatpush1.msra.mxu0 0.0
        %2336 = vmatprep.subr.mxu0 0.0
        %2337 = vmatpush1.msra.mxu0 0.0
        %2338 = vmatprep.subr.mxu0 0.0
        %2339 = vmatpush1.msra.mxu0 0.0
        %2340 = vmatprep.subr.mxu0 0.0
        %2341 = vmatpush1.msra.mxu0 0.0
        %2342 = vmatprep.subr.mxu0 0.0
        %2343 = vmatpush1.msra.mxu0 0.0
        %2344 = vmatprep.subr.mxu0 0.0
        %2345 = vmatpush1.msra.mxu0 0.0
        %2346 = vmatprep.subr.mxu0 0.0
        %2347 = vmatpush1.msra.mxu0 0.0
        %2348 = vmatprep.subr.mxu0 0.0
        %2349 = vmatpush1.msra.mxu0 0.0
        %2350 = vmatprep.subr.mxu0 0.0
        %2351 = vmatpush1.msra.mxu0 0.0
        %2352 = vmatprep.subr.mxu0 0.0
        %2353 = vmatpush1.msra.mxu0 0.0
        %2354 = vmatprep.subr.mxu0 0.0
        %2355 = vmatpush1.msra.mxu0 0.0
        %2356 = vmatprep.subr.mxu0 0.0
        %2357 = vmatpush1.msra.mxu0 0.0
        %2358 = vmatprep.subr.mxu0 0.0
        %2359 = vmatpush1.msra.mxu0 0.0
        %2360 = vmatprep.subr.mxu0 0.0
        %2361 = vmatpush1.msra.mxu0 0.0
        %2362 = vmatprep.subr.mxu0 0.0
        %2363 = vmatpush1.msra.mxu0 0.0
        %2364 = vmatprep.subr.mxu0 0.0
        %2365 = vmatpush1.msra.mxu0 0.0
        %2366 = vmatprep.subr.mxu0 0.0
        %2367 = vmatpush1.msra.mxu0 0.0
        %2368 = vmatprep.mubr.f32.mxu0 0.0
        %2369 = vmatmul.mubr.f32.gmra.mrb[0].mxu0 %v2302
        %v2370 = vpop.f32.mrb[0].mxu0
        %v2371 = vadd.f32 0.0, %v2370
        %v2372 = vpop.f32.mrb[0].mxu0
        %2373 = vdwg.mxu0
        %v2375 = vsel %vm1579, %v2152, 0
        %2377 = vmatprep.subr.mxu0 0.0
        %2378 = vmatpush1.msra.mxu0 %v1576
        %2379 = vmatprep.subr.mxu0 0.0
        %2380 = vmatpush1.msra.mxu0 0.0
        %2381 = vmatprep.subr.mxu0 0.0
        %2382 = vmatpush1.msra.mxu0 0.0
        %2383 = vmatprep.subr.mxu0 0.0
        %2384 = vmatpush1.msra.mxu0 0.0
        %2385 = vmatprep.subr.mxu0 0.0
        %2386 = vmatpush1.msra.mxu0 0.0
        %2387 = vmatprep.subr.mxu0 0.0
        %2388 = vmatpush1.msra.mxu0 0.0
        %2389 = vmatprep.subr.mxu0 0.0
        %2390 = vmatpush1.msra.mxu0 0.0
        %2391 = vmatprep.subr.mxu0 0.0
        %2392 = vmatpush1.msra.mxu0 0.0
        %2393 = vmatprep.subr.mxu0 0.0
        %2394 = vmatpush1.msra.mxu0 0.0
        %2395 = vmatprep.subr.mxu0 0.0
        %2396 = vmatpush1.msra.mxu0 0.0
        %2397 = vmatprep.subr.mxu0 0.0
        %2398 = vmatpush1.msra.mxu0 0.0
        %2399 = vmatprep.subr.mxu0 0.0
        %2400 = vmatpush1.msra.mxu0 0.0
        %2401 = vmatprep.subr.mxu0 0.0
        %2402 = vmatpush1.msra.mxu0 0.0
        %2403 = vmatprep.subr.mxu0 0.0
        %2404 = vmatpush1.msra.mxu0 0.0
        %2405 = vmatprep.subr.mxu0 0.0
        %2406 = vmatpush1.msra.mxu0 0.0
        %2407 = vmatprep.subr.mxu0 0.0
        %2408 = vmatpush1.msra.mxu0 0.0
        %2409 = vmatprep.subr.mxu0 0.0
        %2410 = vmatpush1.msra.mxu0 0.0
        %2411 = vmatprep.subr.mxu0 0.0
        %2412 = vmatpush1.msra.mxu0 0.0
        %2413 = vmatprep.subr.mxu0 0.0
        %2414 = vmatpush1.msra.mxu0 0.0
        %2415 = vmatprep.subr.mxu0 0.0
        %2416 = vmatpush1.msra.mxu0 0.0
        %2417 = vmatprep.subr.mxu0 0.0
        %2418 = vmatpush1.msra.mxu0 0.0
        %2419 = vmatprep.subr.mxu0 0.0
        %2420 = vmatpush1.msra.mxu0 0.0
        %2421 = vmatprep.subr.mxu0 0.0
        %2422 = vmatpush1.msra.mxu0 0.0
        %2423 = vmatprep.subr.mxu0 0.0
        %2424 = vmatpush1.msra.mxu0 0.0
        %2425 = vmatprep.subr.mxu0 0.0
        %2426 = vmatpush1.msra.mxu0 0.0
        %2427 = vmatprep.subr.mxu0 0.0
        %2428 = vmatpush1.msra.mxu0 0.0
        %2429 = vmatprep.subr.mxu0 0.0
        %2430 = vmatpush1.msra.mxu0 0.0
        %2431 = vmatprep.subr.mxu0 0.0
        %2432 = vmatpush1.msra.mxu0 0.0
        %2433 = vmatprep.subr.mxu0 0.0
        %2434 = vmatpush1.msra.mxu0 0.0
        %2435 = vmatprep.subr.mxu0 0.0
        %2436 = vmatpush1.msra.mxu0 0.0
        %2437 = vmatprep.subr.mxu0 0.0
        %2438 = vmatpush1.msra.mxu0 0.0
        %2439 = vmatprep.subr.mxu0 0.0
        %2440 = vmatpush1.msra.mxu0 0.0
        %2441 = vmatprep.mubr.f32.mxu0 0.0
        %2442 = vmatmul.mubr.f32.gmra.mrb[0].mxu0 %v2375
        %v2443 = vpop.f32.mrb[0].mxu0
        %v2444 = vadd.f32 0.0, %v2443
        %v2445 = vpop.f32.mrb[0].mxu0
        %2446 = vdwg.mxu0
        %v2448 = vsel %vm1579, %v2225, 0
        %2450 = vmatprep.subr.mxu0 0.0
        %2451 = vmatpush1.msra.mxu0 %v1577
        %2452 = vmatprep.subr.mxu0 0.0
        %2453 = vmatpush1.msra.mxu0 0.0
        %2454 = vmatprep.subr.mxu0 0.0
        %2455 = vmatpush1.msra.mxu0 0.0
        %2456 = vmatprep.subr.mxu0 0.0
        %2457 = vmatpush1.msra.mxu0 0.0
        %2458 = vmatprep.subr.mxu0 0.0
        %2459 = vmatpush1.msra.mxu0 0.0
        %2460 = vmatprep.subr.mxu0 0.0
        %2461 = vmatpush1.msra.mxu0 0.0
        %2462 = vmatprep.subr.mxu0 0.0
        %2463 = vmatpush1.msra.mxu0 0.0
        %2464 = vmatprep.subr.mxu0 0.0
        %2465 = vmatpush1.msra.mxu0 0.0
        %2466 = vmatprep.subr.mxu0 0.0
        %2467 = vmatpush1.msra.mxu0 0.0
        %2468 = vmatprep.subr.mxu0 0.0
        %2469 = vmatpush1.msra.mxu0 0.0
        %2470 = vmatprep.subr.mxu0 0.0
        %2471 = vmatpush1.msra.mxu0 0.0
        %2472 = vmatprep.subr.mxu0 0.0
        %2473 = vmatpush1.msra.mxu0 0.0
        %2474 = vmatprep.subr.mxu0 0.0
        %2475 = vmatpush1.msra.mxu0 0.0
        %2476 = vmatprep.subr.mxu0 0.0
        %2477 = vmatpush1.msra.mxu0 0.0
        %2478 = vmatprep.subr.mxu0 0.0
        %2479 = vmatpush1.msra.mxu0 0.0
        %2480 = vmatprep.subr.mxu0 0.0
        %2481 = vmatpush1.msra.mxu0 0.0
        %2482 = vmatprep.subr.mxu0 0.0
        %2483 = vmatpush1.msra.mxu0 0.0
        %2484 = vmatprep.subr.mxu0 0.0
        %2485 = vmatpush1.msra.mxu0 0.0
        %2486 = vmatprep.subr.mxu0 0.0
        %2487 = vmatpush1.msra.mxu0 0.0
        %2488 = vmatprep.subr.mxu0 0.0
        %2489 = vmatpush1.msra.mxu0 0.0
        %2490 = vmatprep.subr.mxu0 0.0
        %2491 = vmatpush1.msra.mxu0 0.0
        %2492 = vmatprep.subr.mxu0 0.0
        %2493 = vmatpush1.msra.mxu0 0.0
        %2494 = vmatprep.subr.mxu0 0.0
        %2495 = vmatpush1.msra.mxu0 0.0
        %2496 = vmatprep.subr.mxu0 0.0
        %2497 = vmatpush1.msra.mxu0 0.0
        %2498 = vmatprep.subr.mxu0 0.0
        %2499 = vmatpush1.msra.mxu0 0.0
        %2500 = vmatprep.subr.mxu0 0.0
        %2501 = vmatpush1.msra.mxu0 0.0
        %2502 = vmatprep.subr.mxu0 0.0
        %2503 = vmatpush1.msra.mxu0 0.0
        %2504 = vmatprep.subr.mxu0 0.0
        %2505 = vmatpush1.msra.mxu0 0.0
        %2506 = vmatprep.subr.mxu0 0.0
        %2507 = vmatpush1.msra.mxu0 0.0
        %2508 = vmatprep.subr.mxu0 0.0
        %2509 = vmatpush1.msra.mxu0 0.0
        %2510 = vmatprep.subr.mxu0 0.0
        %2511 = vmatpush1.msra.mxu0 0.0
        %2512 = vmatprep.subr.mxu0 0.0
        %2513 = vmatpush1.msra.mxu0 0.0
        %2514 = vmatprep.mubr.f32.mxu0 0.0
        %2515 = vmatmul.mubr.f32.gmra.mrb[0].mxu0 %v2448
        %v2516 = vpop.f32.mrb[0].mxu0
        %v2517 = vadd.f32 0.0, %v2516
        %v2518 = vpop.f32.mrb[0].mxu0
        %2519 = vdwg.mxu0
        %v2520 = vsel %vm730, %v2298, 0.0
        %v2521 = vsel %vm730, %v2371, 0.0
        %v2522 = vadd.f32 %v2520, %v2521
        %v2523 = vsel %vm730, %v2444, 0.0
        %v2524 = vadd.f32 %v2522, %v2523
        %v2525 = vsel %vm730, %v2517, 0.0
        %v2526 = vadd.f32 %v2524, %v2525
        %v2528 = vlaneseq
        %v2529 = vshrl.u32 %v2528, 7
        %v2530 = vsub.s32 0, %v2529
        %v2531 = vrot.slane %v1578, %v2530
        %v2533 = vadd.f32 %v2526, %v2531
        %v2534 = vadd.f32 %v2533, %v588
        %v2535 = vsel %vm730, %v2534, 0.0
        %2536 = vadd.xlane.f32.xlu0 %v2535
        %v2537 = vpop.xlane.xlu0 %2536
        %v2538 = vrcp.pop 32.0
        %v2539 = vmul.f32 %v2537, %v2538
        %v2540 = vsub.f32 %v2534, %v2539
        %v2541 = vmul.f32 %v2540, %v2540
        %v2542 = vsel %vm730, %v2541, 0.0
        %2543 = vadd.xlane.f32.xlu0 %v2542
        %v2544 = vpop.xlane.xlu0 %2543
        %v2545 = vmul.f32 %v2544, %v2538
        %v2546 = vadd.f32 %v2545, 1e-05
        %v2547 = vrsqrt.pop %v2546
        %v2548 = vmul.f32 %v2540, %v2547
        %v2550 = vlaneseq
        %v2551 = vshrl.u32 %v2550, 7
        %v2552 = vsub.s32 0, %v2551
        %v2553 = vrot.slane %v592, %v2552
        %v2555 = vmul.f32 %v2548, %v2553
        %v2557 = vlaneseq
        %v2558 = vshrl.u32 %v2557, 7
        %v2559 = vsub.s32 0, %v2558
        %v2560 = vrot.slane %v595, %v2559
        %v2562 = vadd.f32 %v2555, %v2560
        %v2563 = vld [vmem:[%s8] sm:$0xff]
        %v2564 = vld [vmem:[%s8 + $0x8] sm:$0xff]
        %v2565 = vld [vmem:[%s8 + $0x10] sm:$0xff]
        %v2566 = vld [vmem:[%s8 + $0x18] sm:$0xff]
        %v2567 = vld [vmem:[%s8 + $0x20] sm:$0xff]
        %v2568 = vld [vmem:[%s8 + $0x28] sm:$0xff]
        %v2569 = vld [vmem:[%s8 + $0x30] sm:$0xff]
        %v2570 = vld [vmem:[%s8 + $0x38] sm:$0xff]
        %v2571 = vld [vmem:[%s8 + $0x40] sm:$0xff]
        %v2572 = vld [vmem:[%s8 + $0x48] sm:$0xff]
        %v2573 = vld [vmem:[%s8 + $0x50] sm:$0xff]
        %v2574 = vld [vmem:[%s8 + $0x58] sm:$0xff]
        %v2575 = vld [vmem:[%s8 + $0x60] sm:$0xff]
        %v2576 = vld [vmem:[%s8 + $0x68] sm:$0xff]
        %v2577 = vld [vmem:[%s8 + $0x70] sm:$0xff]
        %v2578 = vld [vmem:[%s8 + $0x78] sm:$0xff]
        %v2579 = vld [vmem:[%s9] sm:$0x1]
        %v2580 = vld [vmem:[%s9 + $0x1] sm:$0x1]
        %v2581 = vld [vmem:[%s9 + $0x2] sm:$0x1]
        %v2582 = vld [vmem:[%s9 + $0x3] sm:$0x1]
        %v2587 = vlaneseq
        %v2588 = vshrl.u32 %v2587, 7
        %v2589 = vsub.s32 0, %v2588
        %v2590 = vrot.slane %v2579, %v2589
        %v2591 = vlaneseq
        %v2592 = vshrl.u32 %v2591, 7
        %v2593 = vsub.s32 0, %v2592
        %v2594 = vrot.slane %v2580, %v2593
        %v2595 = vlaneseq
        %v2596 = vshrl.u32 %v2595, 7
        %v2597 = vsub.s32 0, %v2596
        %v2598 = vrot.slane %v2581, %v2597
        %v2599 = vlaneseq
        %v2600 = vshrl.u32 %v2599, 7
        %v2601 = vsub.s32 0, %v2600
        %v2602 = vrot.slane %v2582, %v2601
        %v2608 = vsel %vm730, %v2562, 0
        %2610 = vmatprep.subr.mxu0 0.0
        %2611 = vmatpush1.msra.mxu0 %v2563
        %2612 = vmatprep.subr.mxu0 0.0
        %2613 = vmatpush1.msra.mxu0 %v2564
        %2614 = vmatprep.subr.mxu0 0.0
        %2615 = vmatpush1.msra.mxu0 %v2565
        %2616 = vmatprep.subr.mxu0 0.0
        %2617 = vmatpush1.msra.mxu0 %v2566
        %2618 = vmatprep.subr.mxu0 0.0
        %2619 = vmatpush1.msra.mxu0 0.0
        %2620 = vmatprep.subr.mxu0 0.0
        %2621 = vmatpush1.msra.mxu0 0.0
        %2622 = vmatprep.subr.mxu0 0.0
        %2623 = vmatpush1.msra.mxu0 0.0
        %2624 = vmatprep.subr.mxu0 0.0
        %2625 = vmatpush1.msra.mxu0 0.0
        %2626 = vmatprep.subr.mxu0 0.0
        %2627 = vmatpush1.msra.mxu0 0.0
        %2628 = vmatprep.subr.mxu0 0.0
        %2629 = vmatpush1.msra.mxu0 0.0
        %2630 = vmatprep.subr.mxu0 0.0
        %2631 = vmatpush1.msra.mxu0 0.0
        %2632 = vmatprep.subr.mxu0 0.0
        %2633 = vmatpush1.msra.mxu0 0.0
        %2634 = vmatprep.subr.mxu0 0.0
        %2635 = vmatpush1.msra.mxu0 0.0
        %2636 = vmatprep.subr.mxu0 0.0
        %2637 = vmatpush1.msra.mxu0 0.0
        %2638 = vmatprep.subr.mxu0 0.0
        %2639 = vmatpush1.msra.mxu0 0.0
        %2640 = vmatprep.subr.mxu0 0.0
        %2641 = vmatpush1.msra.mxu0 0.0
        %2642 = vmatprep.subr.mxu0 0.0
        %2643 = vmatpush1.msra.mxu0 0.0
        %2644 = vmatprep.subr.mxu0 0.0
        %2645 = vmatpush1.msra.mxu0 0.0
        %2646 = vmatprep.subr.mxu0 0.0
        %2647 = vmatpush1.msra.mxu0 0.0
        %2648 = vmatprep.subr.mxu0 0.0
        %2649 = vmatpush1.msra.mxu0 0.0
        %2650 = vmatprep.subr.mxu0 0.0
        %2651 = vmatpush1.msra.mxu0 0.0
        %2652 = vmatprep.subr.mxu0 0.0
        %2653 = vmatpush1.msra.mxu0 0.0
        %2654 = vmatprep.subr.mxu0 0.0
        %2655 = vmatpush1.msra.mxu0 0.0
        %2656 = vmatprep.subr.mxu0 0.0
        %2657 = vmatpush1.msra.mxu0 0.0
        %2658 = vmatprep.subr.mxu0 0.0
        %2659 = vmatpush1.msra.mxu0 0.0
        %2660 = vmatprep.subr.mxu0 0.0
        %2661 = vmatpush1.msra.mxu0 0.0
        %2662 = vmatprep.subr.mxu0 0.0
        %2663 = vmatpush1.msra.mxu0 0.0
        %2664 = vmatprep.subr.mxu0 0.0
        %2665 = vmatpush1.msra.mxu0 0.0
        %2666 = vmatprep.subr.mxu0 0.0
        %2667 = vmatpush1.msra.mxu0 0.0
        %2668 = vmatprep.subr.mxu0 0.0
        %2669 = vmatpush1.msra.mxu0 0.0
        %2670 = vmatprep.subr.mxu0 0.0
        %2671 = vmatpush1.msra.mxu0 0.0
        %2672 = vmatprep.subr.mxu0 0.0
        %2673 = vmatpush1.msra.mxu0 0.0
        %2674 = vmatprep.mubr.f32.mxu0 0.0
        %2675 = vmatmul.mubr.f32.gmra.mrb[0].mxu0 %v2608
        %v2676 = vpop.f32.mrb[0].mxu0
        %v2677 = vadd.f32 %v2590, %v2676
        %v2678 = vpop.f32.mrb[0].mxu0
        %2679 = vdwg.mxu0
        %2680 = vmatprep.subr.mxu0 0.0
        %2681 = vmatpush1.msra.mxu0 %v2567
        %2682 = vmatprep.subr.mxu0 0.0
        %2683 = vmatpush1.msra.mxu0 %v2568
        %2684 = vmatprep.subr.mxu0 0.0
        %2685 = vmatpush1.msra.mxu0 %v2569
        %2686 = vmatprep.subr.mxu0 0.0
        %2687 = vmatpush1.msra.mxu0 %v2570
        %2688 = vmatprep.subr.mxu0 0.0
        %2689 = vmatpush1.msra.mxu0 0.0
        %2690 = vmatprep.subr.mxu0 0.0
        %2691 = vmatpush1.msra.mxu0 0.0
        %2692 = vmatprep.subr.mxu0 0.0
        %2693 = vmatpush1.msra.mxu0 0.0
        %2694 = vmatprep.subr.mxu0 0.0
        %2695 = vmatpush1.msra.mxu0 0.0
        %2696 = vmatprep.subr.mxu0 0.0
        %2697 = vmatpush1.msra.mxu0 0.0
        %2698 = vmatprep.subr.mxu0 0.0
        %2699 = vmatpush1.msra.mxu0 0.0
        %2700 = vmatprep.subr.mxu0 0.0
        %2701 = vmatpush1.msra.mxu0 0.0
        %2702 = vmatprep.subr.mxu0 0.0
        %2703 = vmatpush1.msra.mxu0 0.0
        %2704 = vmatprep.subr.mxu0 0.0
        %2705 = vmatpush1.msra.mxu0 0.0
        %2706 = vmatprep.subr.mxu0 0.0
        %2707 = vmatpush1.msra.mxu0 0.0
        %2708 = vmatprep.subr.mxu0 0.0
        %2709 = vmatpush1.msra.mxu0 0.0
        %2710 = vmatprep.subr.mxu0 0.0
        %2711 = vmatpush1.msra.mxu0 0.0
        %2712 = vmatprep.subr.mxu0 0.0
        %2713 = vmatpush1.msra.mxu0 0.0
        %2714 = vmatprep.subr.mxu0 0.0
        %2715 = vmatpush1.msra.mxu0 0.0
        %2716 = vmatprep.subr.mxu0 0.0
        %2717 = vmatpush1.msra.mxu0 0.0
        %2718 = vmatprep.subr.mxu0 0.0
        %2719 = vmatpush1.msra.mxu0 0.0
        %2720 = vmatprep.subr.mxu0 0.0
        %2721 = vmatpush1.msra.mxu0 0.0
        %2722 = vmatprep.subr.mxu0 0.0
        %2723 = vmatpush1.msra.mxu0 0.0
        %2724 = vmatprep.subr.mxu0 0.0
        %2725 = vmatpush1.msra.mxu0 0.0
        %2726 = vmatprep.subr.mxu0 0.0
        %2727 = vmatpush1.msra.mxu0 0.0
        %2728 = vmatprep.subr.mxu0 0.0
        %2729 = vmatpush1.msra.mxu0 0.0
        %2730 = vmatprep.subr.mxu0 0.0
        %2731 = vmatpush1.msra.mxu0 0.0
        %2732 = vmatprep.subr.mxu0 0.0
        %2733 = vmatpush1.msra.mxu0 0.0
        %2734 = vmatprep.subr.mxu0 0.0
        %2735 = vmatpush1.msra.mxu0 0.0
        %2736 = vmatprep.subr.mxu0 0.0
        %2737 = vmatpush1.msra.mxu0 0.0
        %2738 = vmatprep.subr.mxu0 0.0
        %2739 = vmatpush1.msra.mxu0 0.0
        %2740 = vmatprep.subr.mxu0 0.0
        %2741 = vmatpush1.msra.mxu0 0.0
        %2742 = vmatprep.subr.mxu0 0.0
        %2743 = vmatpush1.msra.mxu0 0.0
        %2744 = vmatprep.mubr.f32.mxu0 0.0
        %2745 = vmatmul.mubr.f32.gmra.mrb[0].mxu0 %v2608
        %v2746 = vpop.f32.mrb[0].mxu0
        %v2747 = vadd.f32 %v2594, %v2746
        %v2748 = vpop.f32.mrb[0].mxu0
        %2749 = vdwg.mxu0
        %2750 = vmatprep.subr.mxu0 0.0
        %2751 = vmatpush1.msra.mxu0 %v2571
        %2752 = vmatprep.subr.mxu0 0.0
        %2753 = vmatpush1.msra.mxu0 %v2572
        %2754 = vmatprep.subr.mxu0 0.0
        %2755 = vmatpush1.msra.mxu0 %v2573
        %2756 = vmatprep.subr.mxu0 0.0
        %2757 = vmatpush1.msra.mxu0 %v2574
        %2758 = vmatprep.subr.mxu0 0.0
        %2759 = vmatpush1.msra.mxu0 0.0
        %2760 = vmatprep.subr.mxu0 0.0
        %2761 = vmatpush1.msra.mxu0 0.0
        %2762 = vmatprep.subr.mxu0 0.0
        %2763 = vmatpush1.msra.mxu0 0.0
        %2764 = vmatprep.subr.mxu0 0.0
        %2765 = vmatpush1.msra.mxu0 0.0
        %2766 = vmatprep.subr.mxu0 0.0
        %2767 = vmatpush1.msra.mxu0 0.0
        %2768 = vmatprep.subr.mxu0 0.0
        %2769 = vmatpush1.msra.mxu0 0.0
        %2770 = vmatprep.subr.mxu0 0.0
        %2771 = vmatpush1.msra.mxu0 0.0
        %2772 = vmatprep.subr.mxu0 0.0
        %2773 = vmatpush1.msra.mxu0 0.0
        %2774 = vmatprep.subr.mxu0 0.0
        %2775 = vmatpush1.msra.mxu0 0.0
        %2776 = vmatprep.subr.mxu0 0.0
        %2777 = vmatpush1.msra.mxu0 0.0
        %2778 = vmatprep.subr.mxu0 0.0
        %2779 = vmatpush1.msra.mxu0 0.0
        %2780 = vmatprep.subr.mxu0 0.0
        %2781 = vmatpush1.msra.mxu0 0.0
        %2782 = vmatprep.subr.mxu0 0.0
        %2783 = vmatpush1.msra.mxu0 0.0
        %2784 = vmatprep.subr.mxu0 0.0
        %2785 = vmatpush1.msra.mxu0 0.0
        %2786 = vmatprep.subr.mxu0 0.0
        %2787 = vmatpush1.msra.mxu0 0.0
        %2788 = vmatprep.subr.mxu0 0.0
        %2789 = vmatpush1.msra.mxu0 0.0
        %2790 = vmatprep.subr.mxu0 0.0
        %2791 = vmatpush1.msra.mxu0 0.0
        %2792 = vmatprep.subr.mxu0 0.0
        %2793 = vmatpush1.msra.mxu0 0.0
        %2794 = vmatprep.subr.mxu0 0.0
        %2795 = vmatpush1.msra.mxu0 0.0
        %2796 = vmatprep.subr.mxu0 0.0
        %2797 = vmatpush1.msra.mxu0 0.0
        %2798 = vmatprep.subr.mxu0 0.0
        %2799 = vmatpush1.msra.mxu0 0.0
        %2800 = vmatprep.subr.mxu0 0.0
        %2801 = vmatpush1.msra.mxu0 0.0
        %2802 = vmatprep.subr.mxu0 0.0
        %2803 = vmatpush1.msra.mxu0 0.0
        %2804 = vmatprep.subr.mxu0 0.0
        %2805 = vmatpush1.msra.mxu0 0.0
        %2806 = vmatprep.subr.mxu0 0.0
        %2807 = vmatpush1.msra.mxu0 0.0
        %2808 = vmatprep.subr.mxu0 0.0
        %2809 = vmatpush1.msra.mxu0 0.0
        %2810 = vmatprep.subr.mxu0 0.0
        %2811 = vmatpush1.msra.mxu0 0.0
        %2812 = vmatprep.subr.mxu0 0.0
        %2813 = vmatpush1.msra.mxu0 0.0
        %2814 = vmatprep.mubr.f32.mxu0 0.0
        %2815 = vmatmul.mubr.f32.gmra.mrb[0].mxu0 %v2608
        %v2816 = vpop.f32.mrb[0].mxu0
        %v2817 = vadd.f32 %v2598, %v2816
        %v2818 = vpop.f32.mrb[0].mxu0
        %2819 = vdwg.mxu0
        %2820 = vmatprep.subr.mxu0 0.0
        %2821 = vmatpush1.msra.mxu0 %v2575
        %2822 = vmatprep.subr.mxu0 0.0
        %2823 = vmatpush1.msra.mxu0 %v2576
        %2824 = vmatprep.subr.mxu0 0.0
        %2825 = vmatpush1.msra.mxu0 %v2577
        %2826 = vmatprep.subr.mxu0 0.0
        %2827 = vmatpush1.msra.mxu0 %v2578
        %2828 = vmatprep.subr.mxu0 0.0
        %2829 = vmatpush1.msra.mxu0 0.0
        %2830 = vmatprep.subr.mxu0 0.0
        %2831 = vmatpush1.msra.mxu0 0.0
        %2832 = vmatprep.subr.mxu0 0.0
        %2833 = vmatpush1.msra.mxu0 0.0
        %2834 = vmatprep.subr.mxu0 0.0
        %2835 = vmatpush1.msra.mxu0 0.0
        %2836 = vmatprep.subr.mxu0 0.0
        %2837 = vmatpush1.msra.mxu0 0.0
        %2838 = vmatprep.subr.mxu0 0.0
        %2839 = vmatpush1.msra.mxu0 0.0
        %2840 = vmatprep.subr.mxu0 0.0
        %2841 = vmatpush1.msra.mxu0 0.0
        %2842 = vmatprep.subr.mxu0 0.0
        %2843 = vmatpush1.msra.mxu0 0.0
        %2844 = vmatprep.subr.mxu0 0.0
        %2845 = vmatpush1.msra.mxu0 0.0
        %2846 = vmatprep.subr.mxu0 0.0
        %2847 = vmatpush1.msra.mxu0 0.0
        %2848 = vmatprep.subr.mxu0 0.0
        %2849 = vmatpush1.msra.mxu0 0.0
        %2850 = vmatprep.subr.mxu0 0.0
        %2851 = vmatpush1.msra.mxu0 0.0
        %2852 = vmatprep.subr.mxu0 0.0
        %2853 = vmatpush1.msra.mxu0 0.0
        %2854 = vmatprep.subr.mxu0 0.0
        %2855 = vmatpush1.msra.mxu0 0.0
        %2856 = vmatprep.subr.mxu0 0.0
        %2857 = vmatpush1.msra.mxu0 0.0
        %2858 = vmatprep.subr.mxu0 0.0
        %2859 = vmatpush1.msra.mxu0 0.0
        %2860 = vmatprep.subr.mxu0 0.0
        %2861 = vmatpush1.msra.mxu0 0.0
        %2862 = vmatprep.subr.mxu0 0.0
        %2863 = vmatpush1.msra.mxu0 0.0
        %2864 = vmatprep.subr.mxu0 0.0
        %2865 = vmatpush1.msra.mxu0 0.0
        %2866 = vmatprep.subr.mxu0 0.0
        %2867 = vmatpush1.msra.mxu0 0.0
        %2868 = vmatprep.subr.mxu0 0.0
        %2869 = vmatpush1.msra.mxu0 0.0
        %2870 = vmatprep.subr.mxu0 0.0
        %2871 = vmatpush1.msra.mxu0 0.0
        %2872 = vmatprep.subr.mxu0 0.0
        %2873 = vmatpush1.msra.mxu0 0.0
        %2874 = vmatprep.subr.mxu0 0.0
        %2875 = vmatpush1.msra.mxu0 0.0
        %2876 = vmatprep.subr.mxu0 0.0
        %2877 = vmatpush1.msra.mxu0 0.0
        %2878 = vmatprep.subr.mxu0 0.0
        %2879 = vmatpush1.msra.mxu0 0.0
        %2880 = vmatprep.subr.mxu0 0.0
        %2881 = vmatpush1.msra.mxu0 0.0
        %2882 = vmatprep.subr.mxu0 0.0
        %2883 = vmatpush1.msra.mxu0 0.0
        %2884 = vmatprep.mubr.f32.mxu0 0.0
        %2885 = vmatmul.mubr.f32.gmra.mrb[0].mxu0 %v2608
        %v2886 = vpop.f32.mrb[0].mxu0
        %v2887 = vadd.f32 %v2602, %v2886
        %v2888 = vpop.f32.mrb[0].mxu0
        %2889 = vdwg.mxu0
        %v2890 = vld [vmem:[%s8 + $0x80] sm:$0xff]
        %v2891 = vld [vmem:[%s8 + $0x88] sm:$0xff]
        %v2892 = vld [vmem:[%s8 + $0x90] sm:$0xff]
        %v2893 = vld [vmem:[%s8 + $0x98] sm:$0xff]
        %v2894 = vld [vmem:[%s8 + $0xa0] sm:$0xff]
        %v2895 = vld [vmem:[%s8 + $0xa8] sm:$0xff]
        %v2896 = vld [vmem:[%s8 + $0xb0] sm:$0xff]
        %v2897 = vld [vmem:[%s8 + $0xb8] sm:$0xff]
        %v2898 = vld [vmem:[%s8 + $0xc0] sm:$0xff]
        %v2899 = vld [vmem:[%s8 + $0xc8] sm:$0xff]
        %v2900 = vld [vmem:[%s8 + $0xd0] sm:$0xff]
        %v2901 = vld [vmem:[%s8 + $0xd8] sm:$0xff]
        %v2902 = vld [vmem:[%s8 + $0xe0] sm:$0xff]
        %v2903 = vld [vmem:[%s8 + $0xe8] sm:$0xff]
        %v2904 = vld [vmem:[%s8 + $0xf0] sm:$0xff]
        %v2905 = vld [vmem:[%s8 + $0xf8] sm:$0xff]
        %v2906 = vld [vmem:[%s8 + $0x100] sm:$0xff]
        %v2907 = vld [vmem:[%s8 + $0x108] sm:$0xff]
        %v2908 = vld [vmem:[%s8 + $0x110] sm:$0xff]
        %v2909 = vld [vmem:[%s8 + $0x118] sm:$0xff]
        %v2910 = vld [vmem:[%s8 + $0x120] sm:$0xff]
        %v2911 = vld [vmem:[%s8 + $0x128] sm:$0xff]
        %v2912 = vld [vmem:[%s8 + $0x130] sm:$0xff]
        %v2913 = vld [vmem:[%s8 + $0x138] sm:$0xff]
        %v2914 = vld [vmem:[%s8 + $0x140] sm:$0xff]
        %v2915 = vld [vmem:[%s8 + $0x148] sm:$0xff]
        %v2916 = vld [vmem:[%s8 + $0x150] sm:$0xff]
        %v2917 = vld [vmem:[%s8 + $0x158] sm:$0xff]
        %v2918 = vld [vmem:[%s8 + $0x160] sm:$0xff]
        %v2919 = vld [vmem:[%s8 + $0x168] sm:$0xff]
        %v2920 = vld [vmem:[%s8 + $0x170] sm:$0xff]
        %v2921 = vld [vmem:[%s8 + $0x178] sm:$0xff]
        %v2922 = vld [vmem:[%s9 + $0x4] sm:$0x1]
        %v2923 = vld [vmem:[%s9 + $0x5] sm:$0x1]
        %v2924 = vld [vmem:[%s9 + $0x6] sm:$0x1]
        %v2925 = vld [vmem:[%s9 + $0x7] sm:$0x1]
        %v2926 = vld [vmem:[%s9 + $0x8] sm:$0x1]
        %v2927 = vld [vmem:[%s9 + $0x9] sm:$0x1]
        %v2928 = vld [vmem:[%s9 + $0xa] sm:$0x1]
        %v2929 = vld [vmem:[%s9 + $0xb] sm:$0x1]
        %v2938 = vlaneseq
        %v2939 = vshrl.u32 %v2938, 7
        %v2940 = vsub.s32 0, %v2939
        %v2941 = vrot.slane %v2922, %v2940
        %v2942 = vlaneseq
        %v2943 = vshrl.u32 %v2942, 7
        %v2944 = vsub.s32 0, %v2943
        %v2945 = vrot.slane %v2923, %v2944
        %v2946 = vlaneseq
        %v2947 = vshrl.u32 %v2946, 7
        %v2948 = vsub.s32 0, %v2947
        %v2949 = vrot.slane %v2924, %v2948
        %v2950 = vlaneseq
        %v2951 = vshrl.u32 %v2950, 7
        %v2952 = vsub.s32 0, %v2951
        %v2953 = vrot.slane %v2925, %v2952
        %v2954 = vlaneseq
        %v2955 = vshrl.u32 %v2954, 7
        %v2956 = vsub.s32 0, %v2955
        %v2957 = vrot.slane %v2926, %v2956
        %v2958 = vlaneseq
        %v2959 = vshrl.u32 %v2958, 7
        %v2960 = vsub.s32 0, %v2959
        %v2961 = vrot.slane %v2927, %v2960
        %v2962 = vlaneseq
        %v2963 = vshrl.u32 %v2962, 7
        %v2964 = vsub.s32 0, %v2963
        %v2965 = vrot.slane %v2928, %v2964
        %v2966 = vlaneseq
        %v2967 = vshrl.u32 %v2966, 7
        %v2968 = vsub.s32 0, %v2967
        %v2969 = vrot.slane %v2929, %v2968
        %v2979 = vsel %vm730, %v589, 0
        %2981 = vmatprep.subr.mxu0 0.0
        %2982 = vmatpush1.msra.mxu0 %v2890
        %2983 = vmatprep.subr.mxu0 0.0
        %2984 = vmatpush1.msra.mxu0 %v2891
        %2985 = vmatprep.subr.mxu0 0.0
        %2986 = vmatpush1.msra.mxu0 %v2892
        %2987 = vmatprep.subr.mxu0 0.0
        %2988 = vmatpush1.msra.mxu0 %v2893
        %2989 = vmatprep.subr.mxu0 0.0
        %2990 = vmatpush1.msra.mxu0 0.0
        %2991 = vmatprep.subr.mxu0 0.0
        %2992 = vmatpush1.msra.mxu0 0.0
        %2993 = vmatprep.subr.mxu0 0.0
        %2994 = vmatpush1.msra.mxu0 0.0
        %2995 = vmatprep.subr.mxu0 0.0
        %2996 = vmatpush1.msra.mxu0 0.0
        %2997 = vmatprep.subr.mxu0 0.0
        %2998 = vmatpush1.msra.mxu0 0.0
        %2999 = vmatprep.subr.mxu0 0.0
        %3000 = vmatpush1.msra.mxu0 0.0
        %3001 = vmatprep.subr.mxu0 0.0
        %3002 = vmatpush1.msra.mxu0 0.0
        %3003 = vmatprep.subr.mxu0 0.0
        %3004 = vmatpush1.msra.mxu0 0.0
        %3005 = vmatprep.subr.mxu0 0.0
        %3006 = vmatpush1.msra.mxu0 0.0
        %3007 = vmatprep.subr.mxu0 0.0
        %3008 = vmatpush1.msra.mxu0 0.0
        %3009 = vmatprep.subr.mxu0 0.0
        %3010 = vmatpush1.msra.mxu0 0.0
        %3011 = vmatprep.subr.mxu0 0.0
        %3012 = vmatpush1.msra.mxu0 0.0
        %3013 = vmatprep.subr.mxu0 0.0
        %3014 = vmatpush1.msra.mxu0 0.0
        %3015 = vmatprep.subr.mxu0 0.0
        %3016 = vmatpush1.msra.mxu0 0.0
        %3017 = vmatprep.subr.mxu0 0.0
        %3018 = vmatpush1.msra.mxu0 0.0
        %3019 = vmatprep.subr.mxu0 0.0
        %3020 = vmatpush1.msra.mxu0 0.0
        %3021 = vmatprep.subr.mxu0 0.0
        %3022 = vmatpush1.msra.mxu0 0.0
        %3023 = vmatprep.subr.mxu0 0.0
        %3024 = vmatpush1.msra.mxu0 0.0
        %3025 = vmatprep.subr.mxu0 0.0
        %3026 = vmatpush1.msra.mxu0 0.0
        %3027 = vmatprep.subr.mxu0 0.0
        %3028 = vmatpush1.msra.mxu0 0.0
        %3029 = vmatprep.subr.mxu0 0.0
        %3030 = vmatpush1.msra.mxu0 0.0
        %3031 = vmatprep.subr.mxu0 0.0
        %3032 = vmatpush1.msra.mxu0 0.0
        %3033 = vmatprep.subr.mxu0 0.0
        %3034 = vmatpush1.msra.mxu0 0.0
        %3035 = vmatprep.subr.mxu0 0.0
        %3036 = vmatpush1.msra.mxu0 0.0
        %3037 = vmatprep.subr.mxu0 0.0
        %3038 = vmatpush1.msra.mxu0 0.0
        %3039 = vmatprep.subr.mxu0 0.0
        %3040 = vmatpush1.msra.mxu0 0.0
        %3041 = vmatprep.subr.mxu0 0.0
        %3042 = vmatpush1.msra.mxu0 0.0
        %3043 = vmatprep.subr.mxu0 0.0
        %3044 = vmatpush1.msra.mxu0 0.0
        %3045 = vmatprep.mubr.f32.mxu0 0.0
        %3046 = vmatmul.mubr.f32.gmra.mrb[0].mxu0 %v2979
        %v3047 = vpop.f32.mrb[0].mxu0
        %v3048 = vadd.f32 %v2941, %v3047
        %v3049 = vpop.f32.mrb[0].mxu0
        %3050 = vdwg.mxu0
        %3051 = vmatprep.subr.mxu0 0.0
        %3052 = vmatpush1.msra.mxu0 %v2894
        %3053 = vmatprep.subr.mxu0 0.0
        %3054 = vmatpush1.msra.mxu0 %v2895
        %3055 = vmatprep.subr.mxu0 0.0
        %3056 = vmatpush1.msra.mxu0 %v2896
        %3057 = vmatprep.subr.mxu0 0.0
        %3058 = vmatpush1.msra.mxu0 %v2897
        %3059 = vmatprep.subr.mxu0 0.0
        %3060 = vmatpush1.msra.mxu0 0.0
        %3061 = vmatprep.subr.mxu0 0.0
        %3062 = vmatpush1.msra.mxu0 0.0
        %3063 = vmatprep.subr.mxu0 0.0
        %3064 = vmatpush1.msra.mxu0 0.0
        %3065 = vmatprep.subr.mxu0 0.0
        %3066 = vmatpush1.msra.mxu0 0.0
        %3067 = vmatprep.subr.mxu0 0.0
        %3068 = vmatpush1.msra.mxu0 0.0
        %3069 = vmatprep.subr.mxu0 0.0
        %3070 = vmatpush1.msra.mxu0 0.0
        %3071 = vmatprep.subr.mxu0 0.0
        %3072 = vmatpush1.msra.mxu0 0.0
        %3073 = vmatprep.subr.mxu0 0.0
        %3074 = vmatpush1.msra.mxu0 0.0
        %3075 = vmatprep.subr.mxu0 0.0
        %3076 = vmatpush1.msra.mxu0 0.0
        %3077 = vmatprep.subr.mxu0 0.0
        %3078 = vmatpush1.msra.mxu0 0.0
        %3079 = vmatprep.subr.mxu0 0.0
        %3080 = vmatpush1.msra.mxu0 0.0
        %3081 = vmatprep.subr.mxu0 0.0
        %3082 = vmatpush1.msra.mxu0 0.0
        %3083 = vmatprep.subr.mxu0 0.0
        %3084 = vmatpush1.msra.mxu0 0.0
        %3085 = vmatprep.subr.mxu0 0.0
        %3086 = vmatpush1.msra.mxu0 0.0
        %3087 = vmatprep.subr.mxu0 0.0
        %3088 = vmatpush1.msra.mxu0 0.0
        %3089 = vmatprep.subr.mxu0 0.0
        %3090 = vmatpush1.msra.mxu0 0.0
        %3091 = vmatprep.subr.mxu0 0.0
        %3092 = vmatpush1.msra.mxu0 0.0
        %3093 = vmatprep.subr.mxu0 0.0
        %3094 = vmatpush1.msra.mxu0 0.0
        %3095 = vmatprep.subr.mxu0 0.0
        %3096 = vmatpush1.msra.mxu0 0.0
        %3097 = vmatprep.subr.mxu0 0.0
        %3098 = vmatpush1.msra.mxu0 0.0
        %3099 = vmatprep.subr.mxu0 0.0
        %3100 = vmatpush1.msra.mxu0 0.0
        %3101 = vmatprep.subr.mxu0 0.0
        %3102 = vmatpush1.msra.mxu0 0.0
        %3103 = vmatprep.subr.mxu0 0.0
        %3104 = vmatpush1.msra.mxu0 0.0
        %3105 = vmatprep.subr.mxu0 0.0
        %3106 = vmatpush1.msra.mxu0 0.0
        %3107 = vmatprep.subr.mxu0 0.0
        %3108 = vmatpush1.msra.mxu0 0.0
        %3109 = vmatprep.subr.mxu0 0.0
        %3110 = vmatpush1.msra.mxu0 0.0
        %3111 = vmatprep.subr.mxu0 0.0
        %3112 = vmatpush1.msra.mxu0 0.0
        %3113 = vmatprep.subr.mxu0 0.0
        %3114 = vmatpush1.msra.mxu0 0.0
        %3115 = vmatprep.mubr.f32.mxu0 0.0
        %3116 = vmatmul.mubr.f32.gmra.mrb[0].mxu0 %v2979
        %v3117 = vpop.f32.mrb[0].mxu0
        %v3118 = vadd.f32 %v2945, %v3117
        %v3119 = vpop.f32.mrb[0].mxu0
        %3120 = vdwg.mxu0
        %3121 = vmatprep.subr.mxu0 0.0
        %3122 = vmatpush1.msra.mxu0 %v2898
        %3123 = vmatprep.subr.mxu0 0.0
        %3124 = vmatpush1.msra.mxu0 %v2899
        %3125 = vmatprep.subr.mxu0 0.0
        %3126 = vmatpush1.msra.mxu0 %v2900
        %3127 = vmatprep.subr.mxu0 0.0
        %3128 = vmatpush1.msra.mxu0 %v2901
        %3129 = vmatprep.subr.mxu0 0.0
        %3130 = vmatpush1.msra.mxu0 0.0
        %3131 = vmatprep.subr.mxu0 0.0
        %3132 = vmatpush1.msra.mxu0 0.0
        %3133 = vmatprep.subr.mxu0 0.0
        %3134 = vmatpush1.msra.mxu0 0.0
        %3135 = vmatprep.subr.mxu0 0.0
        %3136 = vmatpush1.msra.mxu0 0.0
        %3137 = vmatprep.subr.mxu0 0.0
        %3138 = vmatpush1.msra.mxu0 0.0
        %3139 = vmatprep.subr.mxu0 0.0
        %3140 = vmatpush1.msra.mxu0 0.0
        %3141 = vmatprep.subr.mxu0 0.0
        %3142 = vmatpush1.msra.mxu0 0.0
        %3143 = vmatprep.subr.mxu0 0.0
        %3144 = vmatpush1.msra.mxu0 0.0
        %3145 = vmatprep.subr.mxu0 0.0
        %3146 = vmatpush1.msra.mxu0 0.0
        %3147 = vmatprep.subr.mxu0 0.0
        %3148 = vmatpush1.msra.mxu0 0.0
        %3149 = vmatprep.subr.mxu0 0.0
        %3150 = vmatpush1.msra.mxu0 0.0
        %3151 = vmatprep.subr.mxu0 0.0
        %3152 = vmatpush1.msra.mxu0 0.0
        %3153 = vmatprep.subr.mxu0 0.0
        %3154 = vmatpush1.msra.mxu0 0.0
        %3155 = vmatprep.subr.mxu0 0.0
        %3156 = vmatpush1.msra.mxu0 0.0
        %3157 = vmatprep.subr.mxu0 0.0
        %3158 = vmatpush1.msra.mxu0 0.0
        %3159 = vmatprep.subr.mxu0 0.0
        %3160 = vmatpush1.msra.mxu0 0.0
        %3161 = vmatprep.subr.mxu0 0.0
        %3162 = vmatpush1.msra.mxu0 0.0
        %3163 = vmatprep.subr.mxu0 0.0
        %3164 = vmatpush1.msra.mxu0 0.0
        %3165 = vmatprep.subr.mxu0 0.0
        %3166 = vmatpush1.msra.mxu0 0.0
        %3167 = vmatprep.subr.mxu0 0.0
        %3168 = vmatpush1.msra.mxu0 0.0
        %3169 = vmatprep.subr.mxu0 0.0
        %3170 = vmatpush1.msra.mxu0 0.0
        %3171 = vmatprep.subr.mxu0 0.0
        %3172 = vmatpush1.msra.mxu0 0.0
        %3173 = vmatprep.subr.mxu0 0.0
        %3174 = vmatpush1.msra.mxu0 0.0
        %3175 = vmatprep.subr.mxu0 0.0
        %3176 = vmatpush1.msra.mxu0 0.0
        %3177 = vmatprep.subr.mxu0 0.0
        %3178 = vmatpush1.msra.mxu0 0.0
        %3179 = vmatprep.subr.mxu0 0.0
        %3180 = vmatpush1.msra.mxu0 0.0
        %3181 = vmatprep.subr.mxu0 0.0
        %3182 = vmatpush1.msra.mxu0 0.0
        %3183 = vmatprep.subr.mxu0 0.0
        %3184 = vmatpush1.msra.mxu0 0.0
        %3185 = vmatprep.mubr.f32.mxu0 0.0
        %3186 = vmatmul.mubr.f32.gmra.mrb[0].mxu0 %v2979
        %v3187 = vpop.f32.mrb[0].mxu0
        %v3188 = vadd.f32 %v2949, %v3187
        %v3189 = vpop.f32.mrb[0].mxu0
        %3190 = vdwg.mxu0
        %3191 = vmatprep.subr.mxu0 0.0
        %3192 = vmatpush1.msra.mxu0 %v2902
        %3193 = vmatprep.subr.mxu0 0.0
        %3194 = vmatpush1.msra.mxu0 %v2903
        %3195 = vmatprep.subr.mxu0 0.0
        %3196 = vmatpush1.msra.mxu0 %v2904
        %3197 = vmatprep.subr.mxu0 0.0
        %3198 = vmatpush1.msra.mxu0 %v2905
        %3199 = vmatprep.subr.mxu0 0.0
        %3200 = vmatpush1.msra.mxu0 0.0
        %3201 = vmatprep.subr.mxu0 0.0
        %3202 = vmatpush1.msra.mxu0 0.0
        %3203 = vmatprep.subr.mxu0 0.0
        %3204 = vmatpush1.msra.mxu0 0.0
        %3205 = vmatprep.subr.mxu0 0.0
        %3206 = vmatpush1.msra.mxu0 0.0
        %3207 = vmatprep.subr.mxu0 0.0
        %3208 = vmatpush1.msra.mxu0 0.0
        %3209 = vmatprep.subr.mxu0 0.0
        %3210 = vmatpush1.msra.mxu0 0.0
        %3211 = vmatprep.subr.mxu0 0.0
        %3212 = vmatpush1.msra.mxu0 0.0
        %3213 = vmatprep.subr.mxu0 0.0
        %3214 = vmatpush1.msra.mxu0 0.0
        %3215 = vmatprep.subr.mxu0 0.0
        %3216 = vmatpush1.msra.mxu0 0.0
        %3217 = vmatprep.subr.mxu0 0.0
        %3218 = vmatpush1.msra.mxu0 0.0
        %3219 = vmatprep.subr.mxu0 0.0
        %3220 = vmatpush1.msra.mxu0 0.0
        %3221 = vmatprep.subr.mxu0 0.0
        %3222 = vmatpush1.msra.mxu0 0.0
        %3223 = vmatprep.subr.mxu0 0.0
        %3224 = vmatpush1.msra.mxu0 0.0
        %3225 = vmatprep.subr.mxu0 0.0
        %3226 = vmatpush1.msra.mxu0 0.0
        %3227 = vmatprep.subr.mxu0 0.0
        %3228 = vmatpush1.msra.mxu0 0.0
        %3229 = vmatprep.subr.mxu0 0.0
        %3230 = vmatpush1.msra.mxu0 0.0
        %3231 = vmatprep.subr.mxu0 0.0
        %3232 = vmatpush1.msra.mxu0 0.0
        %3233 = vmatprep.subr.mxu0 0.0
        %3234 = vmatpush1.msra.mxu0 0.0
        %3235 = vmatprep.subr.mxu0 0.0
        %3236 = vmatpush1.msra.mxu0 0.0
        %3237 = vmatprep.subr.mxu0 0.0
        %3238 = vmatpush1.msra.mxu0 0.0
        %3239 = vmatprep.subr.mxu0 0.0
        %3240 = vmatpush1.msra.mxu0 0.0
        %3241 = vmatprep.subr.mxu0 0.0
        %3242 = vmatpush1.msra.mxu0 0.0
        %3243 = vmatprep.subr.mxu0 0.0
        %3244 = vmatpush1.msra.mxu0 0.0
        %3245 = vmatprep.subr.mxu0 0.0
        %3246 = vmatpush1.msra.mxu0 0.0
        %3247 = vmatprep.subr.mxu0 0.0
        %3248 = vmatpush1.msra.mxu0 0.0
        %3249 = vmatprep.subr.mxu0 0.0
        %3250 = vmatpush1.msra.mxu0 0.0
        %3251 = vmatprep.subr.mxu0 0.0
        %3252 = vmatpush1.msra.mxu0 0.0
        %3253 = vmatprep.subr.mxu0 0.0
        %3254 = vmatpush1.msra.mxu0 0.0
        %3255 = vmatprep.mubr.f32.mxu0 0.0
        %3256 = vmatmul.mubr.f32.gmra.mrb[0].mxu0 %v2979
        %v3257 = vpop.f32.mrb[0].mxu0
        %v3258 = vadd.f32 %v2953, %v3257
        %v3259 = vpop.f32.mrb[0].mxu0
        %3260 = vdwg.mxu0
        %3261 = vmatprep.subr.mxu0 0.0
        %3262 = vmatpush1.msra.mxu0 %v2906
        %3263 = vmatprep.subr.mxu0 0.0
        %3264 = vmatpush1.msra.mxu0 %v2907
        %3265 = vmatprep.subr.mxu0 0.0
        %3266 = vmatpush1.msra.mxu0 %v2908
        %3267 = vmatprep.subr.mxu0 0.0
        %3268 = vmatpush1.msra.mxu0 %v2909
        %3269 = vmatprep.subr.mxu0 0.0
        %3270 = vmatpush1.msra.mxu0 0.0
        %3271 = vmatprep.subr.mxu0 0.0
        %3272 = vmatpush1.msra.mxu0 0.0
        %3273 = vmatprep.subr.mxu0 0.0
        %3274 = vmatpush1.msra.mxu0 0.0
        %3275 = vmatprep.subr.mxu0 0.0
        %3276 = vmatpush1.msra.mxu0 0.0
        %3277 = vmatprep.subr.mxu0 0.0
        %3278 = vmatpush1.msra.mxu0 0.0
        %3279 = vmatprep.subr.mxu0 0.0
        %3280 = vmatpush1.msra.mxu0 0.0
        %3281 = vmatprep.subr.mxu0 0.0
        %3282 = vmatpush1.msra.mxu0 0.0
        %3283 = vmatprep.subr.mxu0 0.0
        %3284 = vmatpush1.msra.mxu0 0.0
        %3285 = vmatprep.subr.mxu0 0.0
        %3286 = vmatpush1.msra.mxu0 0.0
        %3287 = vmatprep.subr.mxu0 0.0
        %3288 = vmatpush1.msra.mxu0 0.0
        %3289 = vmatprep.subr.mxu0 0.0
        %3290 = vmatpush1.msra.mxu0 0.0
        %3291 = vmatprep.subr.mxu0 0.0
        %3292 = vmatpush1.msra.mxu0 0.0
        %3293 = vmatprep.subr.mxu0 0.0
        %3294 = vmatpush1.msra.mxu0 0.0
        %3295 = vmatprep.subr.mxu0 0.0
        %3296 = vmatpush1.msra.mxu0 0.0
        %3297 = vmatprep.subr.mxu0 0.0
        %3298 = vmatpush1.msra.mxu0 0.0
        %3299 = vmatprep.subr.mxu0 0.0
        %3300 = vmatpush1.msra.mxu0 0.0
        %3301 = vmatprep.subr.mxu0 0.0
        %3302 = vmatpush1.msra.mxu0 0.0
        %3303 = vmatprep.subr.mxu0 0.0
        %3304 = vmatpush1.msra.mxu0 0.0
        %3305 = vmatprep.subr.mxu0 0.0
        %3306 = vmatpush1.msra.mxu0 0.0
        %3307 = vmatprep.subr.mxu0 0.0
        %3308 = vmatpush1.msra.mxu0 0.0
        %3309 = vmatprep.subr.mxu0 0.0
        %3310 = vmatpush1.msra.mxu0 0.0
        %3311 = vmatprep.subr.mxu0 0.0
        %3312 = vmatpush1.msra.mxu0 0.0
        %3313 = vmatprep.subr.mxu0 0.0
        %3314 = vmatpush1.msra.mxu0 0.0
        %3315 = vmatprep.subr.mxu0 0.0
        %3316 = vmatpush1.msra.mxu0 0.0
        %3317 = vmatprep.subr.mxu0 0.0
        %3318 = vmatpush1.msra.mxu0 0.0
        %3319 = vmatprep.subr.mxu0 0.0
        %3320 = vmatpush1.msra.mxu0 0.0
        %3321 = vmatprep.subr.mxu0 0.0
        %3322 = vmatpush1.msra.mxu0 0.0
        %3323 = vmatprep.subr.mxu0 0.0
        %3324 = vmatpush1.msra.mxu0 0.0
        %3325 = vmatprep.mubr.f32.mxu0 0.0
        %3326 = vmatmul.mubr.f32.gmra.mrb[0].mxu0 %v2979
        %v3327 = vpop.f32.mrb[0].mxu0
        %v3328 = vadd.f32 %v2957, %v3327
        %v3329 = vpop.f32.mrb[0].mxu0
        %3330 = vdwg.mxu0
        %3331 = vmatprep.subr.mxu0 0.0
        %3332 = vmatpush1.msra.mxu0 %v2910
        %3333 = vmatprep.subr.mxu0 0.0
        %3334 = vmatpush1.msra.mxu0 %v2911
        %3335 = vmatprep.subr.mxu0 0.0
        %3336 = vmatpush1.msra.mxu0 %v2912
        %3337 = vmatprep.subr.mxu0 0.0
        %3338 = vmatpush1.msra.mxu0 %v2913
        %3339 = vmatprep.subr.mxu0 0.0
        %3340 = vmatpush1.msra.mxu0 0.0
        %3341 = vmatprep.subr.mxu0 0.0
        %3342 = vmatpush1.msra.mxu0 0.0
        %3343 = vmatprep.subr.mxu0 0.0
        %3344 = vmatpush1.msra.mxu0 0.0
        %3345 = vmatprep.subr.mxu0 0.0
        %3346 = vmatpush1.msra.mxu0 0.0
        %3347 = vmatprep.subr.mxu0 0.0
        %3348 = vmatpush1.msra.mxu0 0.0
        %3349 = vmatprep.subr.mxu0 0.0
        %3350 = vmatpush1.msra.mxu0 0.0
        %3351 = vmatprep.subr.mxu0 0.0
        %3352 = vmatpush1.msra.mxu0 0.0
        %3353 = vmatprep.subr.mxu0 0.0
        %3354 = vmatpush1.msra.mxu0 0.0
        %3355 = vmatprep.subr.mxu0 0.0
        %3356 = vmatpush1.msra.mxu0 0.0
        %3357 = vmatprep.subr.mxu0 0.0
        %3358 = vmatpush1.msra.mxu0 0.0
        %3359 = vmatprep.subr.mxu0 0.0
        %3360 = vmatpush1.msra.mxu0 0.0
        %3361 = vmatprep.subr.mxu0 0.0
        %3362 = vmatpush1.msra.mxu0 0.0
        %3363 = vmatprep.subr.mxu0 0.0
        %3364 = vmatpush1.msra.mxu0 0.0
        %3365 = vmatprep.subr.mxu0 0.0
        %3366 = vmatpush1.msra.mxu0 0.0
        %3367 = vmatprep.subr.mxu0 0.0
        %3368 = vmatpush1.msra.mxu0 0.0
        %3369 = vmatprep.subr.mxu0 0.0
        %3370 = vmatpush1.msra.mxu0 0.0
        %3371 = vmatprep.subr.mxu0 0.0
        %3372 = vmatpush1.msra.mxu0 0.0
        %3373 = vmatprep.subr.mxu0 0.0
        %3374 = vmatpush1.msra.mxu0 0.0
        %3375 = vmatprep.subr.mxu0 0.0
        %3376 = vmatpush1.msra.mxu0 0.0
        %3377 = vmatprep.subr.mxu0 0.0
        %3378 = vmatpush1.msra.mxu0 0.0
        %3379 = vmatprep.subr.mxu0 0.0
        %3380 = vmatpush1.msra.mxu0 0.0
        %3381 = vmatprep.subr.mxu0 0.0
        %3382 = vmatpush1.msra.mxu0 0.0
        %3383 = vmatprep.subr.mxu0 0.0
        %3384 = vmatpush1.msra.mxu0 0.0
        %3385 = vmatprep.subr.mxu0 0.0
        %3386 = vmatpush1.msra.mxu0 0.0
        %3387 = vmatprep.subr.mxu0 0.0
        %3388 = vmatpush1.msra.mxu0 0.0
        %3389 = vmatprep.subr.mxu0 0.0
        %3390 = vmatpush1.msra.mxu0 0.0
        %3391 = vmatprep.subr.mxu0 0.0
        %3392 = vmatpush1.msra.mxu0 0.0
        %3393 = vmatprep.subr.mxu0 0.0
        %3394 = vmatpush1.msra.mxu0 0.0
        %3395 = vmatprep.mubr.f32.mxu0 0.0
        %3396 = vmatmul.mubr.f32.gmra.mrb[0].mxu0 %v2979
        %v3397 = vpop.f32.mrb[0].mxu0
        %v3398 = vadd.f32 %v2961, %v3397
        %v3399 = vpop.f32.mrb[0].mxu0
        %3400 = vdwg.mxu0
        %3401 = vmatprep.subr.mxu0 0.0
        %3402 = vmatpush1.msra.mxu0 %v2914
        %3403 = vmatprep.subr.mxu0 0.0
        %3404 = vmatpush1.msra.mxu0 %v2915
        %3405 = vmatprep.subr.mxu0 0.0
        %3406 = vmatpush1.msra.mxu0 %v2916
        %3407 = vmatprep.subr.mxu0 0.0
        %3408 = vmatpush1.msra.mxu0 %v2917
        %3409 = vmatprep.subr.mxu0 0.0
        %3410 = vmatpush1.msra.mxu0 0.0
        %3411 = vmatprep.subr.mxu0 0.0
        %3412 = vmatpush1.msra.mxu0 0.0
        %3413 = vmatprep.subr.mxu0 0.0
        %3414 = vmatpush1.msra.mxu0 0.0
        %3415 = vmatprep.subr.mxu0 0.0
        %3416 = vmatpush1.msra.mxu0 0.0
        %3417 = vmatprep.subr.mxu0 0.0
        %3418 = vmatpush1.msra.mxu0 0.0
        %3419 = vmatprep.subr.mxu0 0.0
        %3420 = vmatpush1.msra.mxu0 0.0
        %3421 = vmatprep.subr.mxu0 0.0
        %3422 = vmatpush1.msra.mxu0 0.0
        %3423 = vmatprep.subr.mxu0 0.0
        %3424 = vmatpush1.msra.mxu0 0.0
        %3425 = vmatprep.subr.mxu0 0.0
        %3426 = vmatpush1.msra.mxu0 0.0
        %3427 = vmatprep.subr.mxu0 0.0
        %3428 = vmatpush1.msra.mxu0 0.0
        %3429 = vmatprep.subr.mxu0 0.0
        %3430 = vmatpush1.msra.mxu0 0.0
        %3431 = vmatprep.subr.mxu0 0.0
        %3432 = vmatpush1.msra.mxu0 0.0
        %3433 = vmatprep.subr.mxu0 0.0
        %3434 = vmatpush1.msra.mxu0 0.0
        %3435 = vmatprep.subr.mxu0 0.0
        %3436 = vmatpush1.msra.mxu0 0.0
        %3437 = vmatprep.subr.mxu0 0.0
        %3438 = vmatpush1.msra.mxu0 0.0
        %3439 = vmatprep.subr.mxu0 0.0
        %3440 = vmatpush1.msra.mxu0 0.0
        %3441 = vmatprep.subr.mxu0 0.0
        %3442 = vmatpush1.msra.mxu0 0.0
        %3443 = vmatprep.subr.mxu0 0.0
        %3444 = vmatpush1.msra.mxu0 0.0
        %3445 = vmatprep.subr.mxu0 0.0
        %3446 = vmatpush1.msra.mxu0 0.0
        %3447 = vmatprep.subr.mxu0 0.0
        %3448 = vmatpush1.msra.mxu0 0.0
        %3449 = vmatprep.subr.mxu0 0.0
        %3450 = vmatpush1.msra.mxu0 0.0
        %3451 = vmatprep.subr.mxu0 0.0
        %3452 = vmatpush1.msra.mxu0 0.0
        %3453 = vmatprep.subr.mxu0 0.0
        %3454 = vmatpush1.msra.mxu0 0.0
        %3455 = vmatprep.subr.mxu0 0.0
        %3456 = vmatpush1.msra.mxu0 0.0
        %3457 = vmatprep.subr.mxu0 0.0
        %3458 = vmatpush1.msra.mxu0 0.0
        %3459 = vmatprep.subr.mxu0 0.0
        %3460 = vmatpush1.msra.mxu0 0.0
        %3461 = vmatprep.subr.mxu0 0.0
        %3462 = vmatpush1.msra.mxu0 0.0
        %3463 = vmatprep.subr.mxu0 0.0
        %3464 = vmatpush1.msra.mxu0 0.0
        %3465 = vmatprep.mubr.f32.mxu0 0.0
        %3466 = vmatmul.mubr.f32.gmra.mrb[0].mxu0 %v2979
        %v3467 = vpop.f32.mrb[0].mxu0
        %v3468 = vadd.f32 %v2965, %v3467
        %v3469 = vpop.f32.mrb[0].mxu0
        %3470 = vdwg.mxu0
        %3471 = vmatprep.subr.mxu0 0.0
        %3472 = vmatpush1.msra.mxu0 %v2918
        %3473 = vmatprep.subr.mxu0 0.0
        %3474 = vmatpush1.msra.mxu0 %v2919
        %3475 = vmatprep.subr.mxu0 0.0
        %3476 = vmatpush1.msra.mxu0 %v2920
        %3477 = vmatprep.subr.mxu0 0.0
        %3478 = vmatpush1.msra.mxu0 %v2921
        %3479 = vmatprep.subr.mxu0 0.0
        %3480 = vmatpush1.msra.mxu0 0.0
        %3481 = vmatprep.subr.mxu0 0.0
        %3482 = vmatpush1.msra.mxu0 0.0
        %3483 = vmatprep.subr.mxu0 0.0
        %3484 = vmatpush1.msra.mxu0 0.0
        %3485 = vmatprep.subr.mxu0 0.0
        %3486 = vmatpush1.msra.mxu0 0.0
        %3487 = vmatprep.subr.mxu0 0.0
        %3488 = vmatpush1.msra.mxu0 0.0
        %3489 = vmatprep.subr.mxu0 0.0
        %3490 = vmatpush1.msra.mxu0 0.0
        %3491 = vmatprep.subr.mxu0 0.0
        %3492 = vmatpush1.msra.mxu0 0.0
        %3493 = vmatprep.subr.mxu0 0.0
        %3494 = vmatpush1.msra.mxu0 0.0
        %3495 = vmatprep.subr.mxu0 0.0
        %3496 = vmatpush1.msra.mxu0 0.0
        %3497 = vmatprep.subr.mxu0 0.0
        %3498 = vmatpush1.msra.mxu0 0.0
        %3499 = vmatprep.subr.mxu0 0.0
        %3500 = vmatpush1.msra.mxu0 0.0
        %3501 = vmatprep.subr.mxu0 0.0
        %3502 = vmatpush1.msra.mxu0 0.0
        %3503 = vmatprep.subr.mxu0 0.0
        %3504 = vmatpush1.msra.mxu0 0.0
        %3505 = vmatprep.subr.mxu0 0.0
        %3506 = vmatpush1.msra.mxu0 0.0
        %3507 = vmatprep.subr.mxu0 0.0
        %3508 = vmatpush1.msra.mxu0 0.0
        %3509 = vmatprep.subr.mxu0 0.0
        %3510 = vmatpush1.msra.mxu0 0.0
        %3511 = vmatprep.subr.mxu0 0.0
        %3512 = vmatpush1.msra.mxu0 0.0
        %3513 = vmatprep.subr.mxu0 0.0
        %3514 = vmatpush1.msra.mxu0 0.0
        %3515 = vmatprep.subr.mxu0 0.0
        %3516 = vmatpush1.msra.mxu0 0.0
        %3517 = vmatprep.subr.mxu0 0.0
        %3518 = vmatpush1.msra.mxu0 0.0
        %3519 = vmatprep.subr.mxu0 0.0
        %3520 = vmatpush1.msra.mxu0 0.0
        %3521 = vmatprep.subr.mxu0 0.0
        %3522 = vmatpush1.msra.mxu0 0.0
        %3523 = vmatprep.subr.mxu0 0.0
        %3524 = vmatpush1.msra.mxu0 0.0
        %3525 = vmatprep.subr.mxu0 0.0
        %3526 = vmatpush1.msra.mxu0 0.0
        %3527 = vmatprep.subr.mxu0 0.0
        %3528 = vmatpush1.msra.mxu0 0.0
        %3529 = vmatprep.subr.mxu0 0.0
        %3530 = vmatpush1.msra.mxu0 0.0
        %3531 = vmatprep.subr.mxu0 0.0
        %3532 = vmatpush1.msra.mxu0 0.0
        %3533 = vmatprep.subr.mxu0 0.0
        %3534 = vmatpush1.msra.mxu0 0.0
        %3535 = vmatprep.mubr.f32.mxu0 0.0
        %3536 = vmatmul.mubr.f32.gmra.mrb[0].mxu0 %v2979
        %v3537 = vpop.f32.mrb[0].mxu0
        %v3538 = vadd.f32 %v2969, %v3537
        %v3539 = vpop.f32.mrb[0].mxu0
        %3540 = vdwg.mxu0
        %v3541 = vld [vmem:[%s10] sm:$0xff]
        %v3542 = vld [vmem:[%s10 + $0x8] sm:$0xff]
        %v3543 = vld [vmem:[%s10 + $0x10] sm:$0xff]
        %v3544 = vld [vmem:[%s10 + $0x18] sm:$0xff]
        %v3545 = vld [vmem:[%s11] sm:$0x1]
        %v3547 = vsel %vm1579, %v2677, 0
        %v3550 = vsel %vm1579, %v3048, 0
        %3552 = vmatprep.subr.mxu0 0.0
        %3553 = vmatpush1.xpose.msra.mxu0 %v3550
        %3554 = vmatprep.subr.mxu0 0.0
        %3555 = vmatpush1.xpose.msra.mxu0 0.0
        %3556 = vmatprep.subr.mxu0 0.0
        %3557 = vmatpush1.xpose.msra.mxu0 0.0
        %3558 = vmatprep.subr.mxu0 0.0
        %3559 = vmatpush1.xpose.msra.mxu0 0.0
        %3560 = vmatprep.subr.mxu0 0.0
        %3561 = vmatpush1.xpose.msra.mxu0 0.0
        %3562 = vmatprep.subr.mxu0 0.0
        %3563 = vmatpush1.xpose.msra.mxu0 0.0
        %3564 = vmatprep.subr.mxu0 0.0
        %3565 = vmatpush1.xpose.msra.mxu0 0.0
        %3566 = vmatprep.subr.mxu0 0.0
        %3567 = vmatpush1.xpose.msra.mxu0 0.0
        %3568 = vmatprep.subr.mxu0 0.0
        %3569 = vmatpush1.xpose.msra.mxu0 0.0
        %3570 = vmatprep.subr.mxu0 0.0
        %3571 = vmatpush1.xpose.msra.mxu0 0.0
        %3572 = vmatprep.subr.mxu0 0.0
        %3573 = vmatpush1.xpose.msra.mxu0 0.0
        %3574 = vmatprep.subr.mxu0 0.0
        %3575 = vmatpush1.xpose.msra.mxu0 0.0
        %3576 = vmatprep.subr.mxu0 0.0
        %3577 = vmatpush1.xpose.msra.mxu0 0.0
        %3578 = vmatprep.subr.mxu0 0.0
        %3579 = vmatpush1.xpose.msra.mxu0 0.0
        %3580 = vmatprep.subr.mxu0 0.0
        %3581 = vmatpush1.xpose.msra.mxu0 0.0
        %3582 = vmatprep.subr.mxu0 0.0
        %3583 = vmatpush1.xpose.msra.mxu0 0.0
        %3584 = vmatprep.subr.mxu0 0.0
        %3585 = vmatpush1.xpose.msra.mxu0 0.0
        %3586 = vmatprep.subr.mxu0 0.0
        %3587 = vmatpush1.xpose.msra.mxu0 0.0
        %3588 = vmatprep.subr.mxu0 0.0
        %3589 = vmatpush1.xpose.msra.mxu0 0.0
        %3590 = vmatprep.subr.mxu0 0.0
        %3591 = vmatpush1.xpose.msra.mxu0 0.0
        %3592 = vmatprep.subr.mxu0 0.0
        %3593 = vmatpush1.xpose.msra.mxu0 0.0
        %3594 = vmatprep.subr.mxu0 0.0
        %3595 = vmatpush1.xpose.msra.mxu0 0.0
        %3596 = vmatprep.subr.mxu0 0.0
        %3597 = vmatpush1.xpose.msra.mxu0 0.0
        %3598 = vmatprep.subr.mxu0 0.0
        %3599 = vmatpush1.xpose.msra.mxu0 0.0
        %3600 = vmatprep.subr.mxu0 0.0
        %3601 = vmatpush1.xpose.msra.mxu0 0.0
        %3602 = vmatprep.subr.mxu0 0.0
        %3603 = vmatpush1.xpose.msra.mxu0 0.0
        %3604 = vmatprep.subr.mxu0 0.0
        %3605 = vmatpush1.xpose.msra.mxu0 0.0
        %3606 = vmatprep.subr.mxu0 0.0
        %3607 = vmatpush1.xpose.msra.mxu0 0.0
        %3608 = vmatprep.subr.mxu0 0.0
        %3609 = vmatpush1.xpose.msra.mxu0 0.0
        %3610 = vmatprep.subr.mxu0 0.0
        %3611 = vmatpush1.xpose.msra.mxu0 0.0
        %3612 = vmatprep.subr.mxu0 0.0
        %3613 = vmatpush1.xpose.msra.mxu0 0.0
        %3614 = vmatprep.subr.mxu0 0.0
        %3615 = vmatpush1.xpose.msra.mxu0 0.0
        %3616 = vmatprep.mubr.f32.mxu0 0.0
        %3617 = vmatmul.mubr.f32.gmra.mrb[0].mxu0 %v3547
        %v3618 = vpop.f32.mrb[0].mxu0
        %v3619 = vadd.f32 0.0, %v3618
        %v3620 = vpop.f32.mrb[0].mxu0
        %3621 = vdwg.mxu0
        %v3623 = vsel %vm1579, %v2747, 0
        %v3626 = vsel %vm1579, %v3118, 0
        %3628 = vmatprep.subr.mxu0 0.0
        %3629 = vmatpush1.xpose.msra.mxu0 %v3626
        %3630 = vmatprep.subr.mxu0 0.0
        %3631 = vmatpush1.xpose.msra.mxu0 0.0
        %3632 = vmatprep.subr.mxu0 0.0
        %3633 = vmatpush1.xpose.msra.mxu0 0.0
        %3634 = vmatprep.subr.mxu0 0.0
        %3635 = vmatpush1.xpose.msra.mxu0 0.0
        %3636 = vmatprep.subr.mxu0 0.0
        %3637 = vmatpush1.xpose.msra.mxu0 0.0
        %3638 = vmatprep.subr.mxu0 0.0
        %3639 = vmatpush1.xpose.msra.mxu0 0.0
        %3640 = vmatprep.subr.mxu0 0.0
        %3641 = vmatpush1.xpose.msra.mxu0 0.0
        %3642 = vmatprep.subr.mxu0 0.0
        %3643 = vmatpush1.xpose.msra.mxu0 0.0
        %3644 = vmatprep.subr.mxu0 0.0
        %3645 = vmatpush1.xpose.msra.mxu0 0.0
        %3646 = vmatprep.subr.mxu0 0.0
        %3647 = vmatpush1.xpose.msra.mxu0 0.0
        %3648 = vmatprep.subr.mxu0 0.0
        %3649 = vmatpush1.xpose.msra.mxu0 0.0
        %3650 = vmatprep.subr.mxu0 0.0
        %3651 = vmatpush1.xpose.msra.mxu0 0.0
        %3652 = vmatprep.subr.mxu0 0.0
        %3653 = vmatpush1.xpose.msra.mxu0 0.0
        %3654 = vmatprep.subr.mxu0 0.0
        %3655 = vmatpush1.xpose.msra.mxu0 0.0
        %3656 = vmatprep.subr.mxu0 0.0
        %3657 = vmatpush1.xpose.msra.mxu0 0.0
        %3658 = vmatprep.subr.mxu0 0.0
        %3659 = vmatpush1.xpose.msra.mxu0 0.0
        %3660 = vmatprep.subr.mxu0 0.0
        %3661 = vmatpush1.xpose.msra.mxu0 0.0
        %3662 = vmatprep.subr.mxu0 0.0
        %3663 = vmatpush1.xpose.msra.mxu0 0.0
        %3664 = vmatprep.subr.mxu0 0.0
        %3665 = vmatpush1.xpose.msra.mxu0 0.0
        %3666 = vmatprep.subr.mxu0 0.0
        %3667 = vmatpush1.xpose.msra.mxu0 0.0
        %3668 = vmatprep.subr.mxu0 0.0
        %3669 = vmatpush1.xpose.msra.mxu0 0.0
        %3670 = vmatprep.subr.mxu0 0.0
        %3671 = vmatpush1.xpose.msra.mxu0 0.0
        %3672 = vmatprep.subr.mxu0 0.0
        %3673 = vmatpush1.xpose.msra.mxu0 0.0
        %3674 = vmatprep.subr.mxu0 0.0
        %3675 = vmatpush1.xpose.msra.mxu0 0.0
        %3676 = vmatprep.subr.mxu0 0.0
        %3677 = vmatpush1.xpose.msra.mxu0 0.0
        %3678 = vmatprep.subr.mxu0 0.0
        %3679 = vmatpush1.xpose.msra.mxu0 0.0
        %3680 = vmatprep.subr.mxu0 0.0
        %3681 = vmatpush1.xpose.msra.mxu0 0.0
        %3682 = vmatprep.subr.mxu0 0.0
        %3683 = vmatpush1.xpose.msra.mxu0 0.0
        %3684 = vmatprep.subr.mxu0 0.0
        %3685 = vmatpush1.xpose.msra.mxu0 0.0
        %3686 = vmatprep.subr.mxu0 0.0
        %3687 = vmatpush1.xpose.msra.mxu0 0.0
        %3688 = vmatprep.subr.mxu0 0.0
        %3689 = vmatpush1.xpose.msra.mxu0 0.0
        %3690 = vmatprep.subr.mxu0 0.0
        %3691 = vmatpush1.xpose.msra.mxu0 0.0
        %3692 = vmatprep.mubr.f32.mxu0 0.0
        %3693 = vmatmul.mubr.f32.gmra.mrb[0].mxu0 %v3623
        %v3694 = vpop.f32.mrb[0].mxu0
        %v3695 = vadd.f32 0.0, %v3694
        %v3696 = vpop.f32.mrb[0].mxu0
        %3697 = vdwg.mxu0
        %v3699 = vsel %vm1579, %v2817, 0
        %v3702 = vsel %vm1579, %v3188, 0
        %3704 = vmatprep.subr.mxu0 0.0
        %3705 = vmatpush1.xpose.msra.mxu0 %v3702
        %3706 = vmatprep.subr.mxu0 0.0
        %3707 = vmatpush1.xpose.msra.mxu0 0.0
        %3708 = vmatprep.subr.mxu0 0.0
        %3709 = vmatpush1.xpose.msra.mxu0 0.0
        %3710 = vmatprep.subr.mxu0 0.0
        %3711 = vmatpush1.xpose.msra.mxu0 0.0
        %3712 = vmatprep.subr.mxu0 0.0
        %3713 = vmatpush1.xpose.msra.mxu0 0.0
        %3714 = vmatprep.subr.mxu0 0.0
        %3715 = vmatpush1.xpose.msra.mxu0 0.0
        %3716 = vmatprep.subr.mxu0 0.0
        %3717 = vmatpush1.xpose.msra.mxu0 0.0
        %3718 = vmatprep.subr.mxu0 0.0
        %3719 = vmatpush1.xpose.msra.mxu0 0.0
        %3720 = vmatprep.subr.mxu0 0.0
        %3721 = vmatpush1.xpose.msra.mxu0 0.0
        %3722 = vmatprep.subr.mxu0 0.0
        %3723 = vmatpush1.xpose.msra.mxu0 0.0
        %3724 = vmatprep.subr.mxu0 0.0
        %3725 = vmatpush1.xpose.msra.mxu0 0.0
        %3726 = vmatprep.subr.mxu0 0.0
        %3727 = vmatpush1.xpose.msra.mxu0 0.0
        %3728 = vmatprep.subr.mxu0 0.0
        %3729 = vmatpush1.xpose.msra.mxu0 0.0
        %3730 = vmatprep.subr.mxu0 0.0
        %3731 = vmatpush1.xpose.msra.mxu0 0.0
        %3732 = vmatprep.subr.mxu0 0.0
        %3733 = vmatpush1.xpose.msra.mxu0 0.0
        %3734 = vmatprep.subr.mxu0 0.0
        %3735 = vmatpush1.xpose.msra.mxu0 0.0
        %3736 = vmatprep.subr.mxu0 0.0
        %3737 = vmatpush1.xpose.msra.mxu0 0.0
        %3738 = vmatprep.subr.mxu0 0.0
        %3739 = vmatpush1.xpose.msra.mxu0 0.0
        %3740 = vmatprep.subr.mxu0 0.0
        %3741 = vmatpush1.xpose.msra.mxu0 0.0
        %3742 = vmatprep.subr.mxu0 0.0
        %3743 = vmatpush1.xpose.msra.mxu0 0.0
        %3744 = vmatprep.subr.mxu0 0.0
        %3745 = vmatpush1.xpose.msra.mxu0 0.0
        %3746 = vmatprep.subr.mxu0 0.0
        %3747 = vmatpush1.xpose.msra.mxu0 0.0
        %3748 = vmatprep.subr.mxu0 0.0
        %3749 = vmatpush1.xpose.msra.mxu0 0.0
        %3750 = vmatprep.subr.mxu0 0.0
        %3751 = vmatpush1.xpose.msra.mxu0 0.0
        %3752 = vmatprep.subr.mxu0 0.0
        %3753 = vmatpush1.xpose.msra.mxu0 0.0
        %3754 = vmatprep.subr.mxu0 0.0
        %3755 = vmatpush1.xpose.msra.mxu0 0.0
        %3756 = vmatprep.subr.mxu0 0.0
        %3757 = vmatpush1.xpose.msra.mxu0 0.0
        %3758 = vmatprep.subr.mxu0 0.0
        %3759 = vmatpush1.xpose.msra.mxu0 0.0
        %3760 = vmatprep.subr.mxu0 0.0
        %3761 = vmatpush1.xpose.msra.mxu0 0.0
        %3762 = vmatprep.subr.mxu0 0.0
        %3763 = vmatpush1.xpose.msra.mxu0 0.0
        %3764 = vmatprep.subr.mxu0 0.0
        %3765 = vmatpush1.xpose.msra.mxu0 0.0
        %3766 = vmatprep.subr.mxu0 0.0
        %3767 = vmatpush1.xpose.msra.mxu0 0.0
        %3768 = vmatprep.mubr.f32.mxu0 0.0
        %3769 = vmatmul.mubr.f32.gmra.mrb[0].mxu0 %v3699
        %v3770 = vpop.f32.mrb[0].mxu0
        %v3771 = vadd.f32 0.0, %v3770
        %v3772 = vpop.f32.mrb[0].mxu0
        %3773 = vdwg.mxu0
        %v3775 = vsel %vm1579, %v2887, 0
        %v3778 = vsel %vm1579, %v3258, 0
        %3780 = vmatprep.subr.mxu0 0.0
        %3781 = vmatpush1.xpose.msra.mxu0 %v3778
        %3782 = vmatprep.subr.mxu0 0.0
        %3783 = vmatpush1.xpose.msra.mxu0 0.0
        %3784 = vmatprep.subr.mxu0 0.0
        %3785 = vmatpush1.xpose.msra.mxu0 0.0
        %3786 = vmatprep.subr.mxu0 0.0
        %3787 = vmatpush1.xpose.msra.mxu0 0.0
        %3788 = vmatprep.subr.mxu0 0.0
        %3789 = vmatpush1.xpose.msra.mxu0 0.0
        %3790 = vmatprep.subr.mxu0 0.0
        %3791 = vmatpush1.xpose.msra.mxu0 0.0
        %3792 = vmatprep.subr.mxu0 0.0
        %3793 = vmatpush1.xpose.msra.mxu0 0.0
        %3794 = vmatprep.subr.mxu0 0.0
        %3795 = vmatpush1.xpose.msra.mxu0 0.0
        %3796 = vmatprep.subr.mxu0 0.0
        %3797 = vmatpush1.xpose.msra.mxu0 0.0
        %3798 = vmatprep.subr.mxu0 0.0
        %3799 = vmatpush1.xpose.msra.mxu0 0.0
        %3800 = vmatprep.subr.mxu0 0.0
        %3801 = vmatpush1.xpose.msra.mxu0 0.0
        %3802 = vmatprep.subr.mxu0 0.0
        %3803 = vmatpush1.xpose.msra.mxu0 0.0
        %3804 = vmatprep.subr.mxu0 0.0
        %3805 = vmatpush1.xpose.msra.mxu0 0.0
        %3806 = vmatprep.subr.mxu0 0.0
        %3807 = vmatpush1.xpose.msra.mxu0 0.0
        %3808 = vmatprep.subr.mxu0 0.0
        %3809 = vmatpush1.xpose.msra.mxu0 0.0
        %3810 = vmatprep.subr.mxu0 0.0
        %3811 = vmatpush1.xpose.msra.mxu0 0.0
        %3812 = vmatprep.subr.mxu0 0.0
        %3813 = vmatpush1.xpose.msra.mxu0 0.0
        %3814 = vmatprep.subr.mxu0 0.0
        %3815 = vmatpush1.xpose.msra.mxu0 0.0
        %3816 = vmatprep.subr.mxu0 0.0
        %3817 = vmatpush1.xpose.msra.mxu0 0.0
        %3818 = vmatprep.subr.mxu0 0.0
        %3819 = vmatpush1.xpose.msra.mxu0 0.0
        %3820 = vmatprep.subr.mxu0 0.0
        %3821 = vmatpush1.xpose.msra.mxu0 0.0
        %3822 = vmatprep.subr.mxu0 0.0
        %3823 = vmatpush1.xpose.msra.mxu0 0.0
        %3824 = vmatprep.subr.mxu0 0.0
        %3825 = vmatpush1.xpose.msra.mxu0 0.0
        %3826 = vmatprep.subr.mxu0 0.0
        %3827 = vmatpush1.xpose.msra.mxu0 0.0
        %3828 = vmatprep.subr.mxu0 0.0
        %3829 = vmatpush1.xpose.msra.mxu0 0.0
        %3830 = vmatprep.subr.mxu0 0.0
        %3831 = vmatpush1.xpose.msra.mxu0 0.0
        %3832 = vmatprep.subr.mxu0 0.0
        %3833 = vmatpush1.xpose.msra.mxu0 0.0
        %3834 = vmatprep.subr.mxu0 0.0
        %3835 = vmatpush1.xpose.msra.mxu0 0.0
        %3836 = vmatprep.subr.mxu0 0.0
        %3837 = vmatpush1.xpose.msra.mxu0 0.0
        %3838 = vmatprep.subr.mxu0 0.0
        %3839 = vmatpush1.xpose.msra.mxu0 0.0
        %3840 = vmatprep.subr.mxu0 0.0
        %3841 = vmatpush1.xpose.msra.mxu0 0.0
        %3842 = vmatprep.subr.mxu0 0.0
        %3843 = vmatpush1.xpose.msra.mxu0 0.0
        %3844 = vmatprep.mubr.f32.mxu0 0.0
        %3845 = vmatmul.mubr.f32.gmra.mrb[0].mxu0 %v3775
        %v3846 = vpop.f32.mrb[0].mxu0
        %v3847 = vadd.f32 0.0, %v3846
        %v3848 = vpop.f32.mrb[0].mxu0
        %3849 = vdwg.mxu0
        %v3850 = vmul.f32 %v3619, 0.35355338
        %v3851 = vmul.f32 %v3695, 0.35355338
        %v3852 = vmul.f32 %v3771, 0.35355338
        %v3853 = vmul.f32 %v3847, 0.35355338
        %v3854 = vadd.f32 %v3850, %v591
        %v3855 = vadd.f32 %v3851, %v591
        %v3856 = vadd.f32 %v3852, %v591
        %v3857 = vadd.f32 %v3853, %v591
        %v3858 = vsel %vm1579, %v3854, -inf
        %3859 = vmax.xlane.f32.xlu0 %v3858
        %v3860 = vpop.xlane.xlu0 %3859
        %v3861 = vsel %vm1579, %v3855, -inf
        %3862 = vmax.xlane.f32.xlu0 %v3861
        %v3863 = vpop.xlane.xlu0 %3862
        %v3864 = vsel %vm1579, %v3856, -inf
        %3865 = vmax.xlane.f32.xlu0 %v3864
        %v3866 = vpop.xlane.xlu0 %3865
        %v3867 = vsel %vm1579, %v3857, -inf
        %3868 = vmax.xlane.f32.xlu0 %v3867
        %v3869 = vpop.xlane.xlu0 %3868
        %v3870 = vsub.f32 %v3854, %v3860
        %v3871 = vsub.f32 %v3855, %v3863
        %v3872 = vsub.f32 %v3856, %v3866
        %v3873 = vsub.f32 %v3857, %v3869
        %v3874 = vmul.f32 %v3870, 1.442695
        %v3875 = vpow.pop %v3874
        %v3876 = vmul.f32 %v3871, 1.442695
        %v3877 = vpow.pop %v3876
        %v3878 = vmul.f32 %v3872, 1.442695
        %v3879 = vpow.pop %v3878
        %v3880 = vmul.f32 %v3873, 1.442695
        %v3881 = vpow.pop %v3880
        %v3882 = vsel %vm1579, %v3875, 0.0
        %3883 = vadd.xlane.f32.xlu0 %v3882
        %v3884 = vpop.xlane.xlu0 %3883
        %v3885 = vsel %vm1579, %v3877, 0.0
        %3886 = vadd.xlane.f32.xlu0 %v3885
        %v3887 = vpop.xlane.xlu0 %3886
        %v3888 = vsel %vm1579, %v3879, 0.0
        %3889 = vadd.xlane.f32.xlu0 %v3888
        %v3890 = vpop.xlane.xlu0 %3889
        %v3891 = vsel %vm1579, %v3881, 0.0
        %3892 = vadd.xlane.f32.xlu0 %v3891
        %v3893 = vpop.xlane.xlu0 %3892
        %v3894 = vrcp.pop %v3884
        %v3895 = vrcp.pop %v3887
        %v3896 = vrcp.pop %v3890
        %v3897 = vrcp.pop %v3893
        %v3898 = vmul.f32 %v3875, %v3894
        %v3899 = vmul.f32 %v3877, %v3895
        %v3900 = vmul.f32 %v3879, %v3896
        %v3901 = vmul.f32 %v3881, %v3897
        %v3903 = vsel %vm1579, %v3898, 0
        %3905 = vmatprep.subr.mxu0 0.0
        %3906 = vmatpush1.msra.mxu0 %v3328
        %3907 = vmatprep.subr.mxu0 0.0
        %3908 = vmatpush1.msra.mxu0 0.0
        %3909 = vmatprep.subr.mxu0 0.0
        %3910 = vmatpush1.msra.mxu0 0.0
        %3911 = vmatprep.subr.mxu0 0.0
        %3912 = vmatpush1.msra.mxu0 0.0
        %3913 = vmatprep.subr.mxu0 0.0
        %3914 = vmatpush1.msra.mxu0 0.0
        %3915 = vmatprep.subr.mxu0 0.0
        %3916 = vmatpush1.msra.mxu0 0.0
        %3917 = vmatprep.subr.mxu0 0.0
        %3918 = vmatpush1.msra.mxu0 0.0
        %3919 = vmatprep.subr.mxu0 0.0
        %3920 = vmatpush1.msra.mxu0 0.0
        %3921 = vmatprep.subr.mxu0 0.0
        %3922 = vmatpush1.msra.mxu0 0.0
        %3923 = vmatprep.subr.mxu0 0.0
        %3924 = vmatpush1.msra.mxu0 0.0
        %3925 = vmatprep.subr.mxu0 0.0
        %3926 = vmatpush1.msra.mxu0 0.0
        %3927 = vmatprep.subr.mxu0 0.0
        %3928 = vmatpush1.msra.mxu0 0.0
        %3929 = vmatprep.subr.mxu0 0.0
        %3930 = vmatpush1.msra.mxu0 0.0
        %3931 = vmatprep.subr.mxu0 0.0
        %3932 = vmatpush1.msra.mxu0 0.0
        %3933 = vmatprep.subr.mxu0 0.0
        %3934 = vmatpush1.msra.mxu0 0.0
        %3935 = vmatprep.subr.mxu0 0.0
        %3936 = vmatpush1.msra.mxu0 0.0
        %3937 = vmatprep.subr.mxu0 0.0
        %3938 = vmatpush1.msra.mxu0 0.0
        %3939 = vmatprep.subr.mxu0 0.0
        %3940 = vmatpush1.msra.mxu0 0.0
        %3941 = vmatprep.subr.mxu0 0.0
        %3942 = vmatpush1.msra.mxu0 0.0
        %3943 = vmatprep.subr.mxu0 0.0
        %3944 = vmatpush1.msra.mxu0 0.0
        %3945 = vmatprep.subr.mxu0 0.0
        %3946 = vmatpush1.msra.mxu0 0.0
        %3947 = vmatprep.subr.mxu0 0.0
        %3948 = vmatpush1.msra.mxu0 0.0
        %3949 = vmatprep.subr.mxu0 0.0
        %3950 = vmatpush1.msra.mxu0 0.0
        %3951 = vmatprep.subr.mxu0 0.0
        %3952 = vmatpush1.msra.mxu0 0.0
        %3953 = vmatprep.subr.mxu0 0.0
        %3954 = vmatpush1.msra.mxu0 0.0
        %3955 = vmatprep.subr.mxu0 0.0
        %3956 = vmatpush1.msra.mxu0 0.0
        %3957 = vmatprep.subr.mxu0 0.0
        %3958 = vmatpush1.msra.mxu0 0.0
        %3959 = vmatprep.subr.mxu0 0.0
        %3960 = vmatpush1.msra.mxu0 0.0
        %3961 = vmatprep.subr.mxu0 0.0
        %3962 = vmatpush1.msra.mxu0 0.0
        %3963 = vmatprep.subr.mxu0 0.0
        %3964 = vmatpush1.msra.mxu0 0.0
        %3965 = vmatprep.subr.mxu0 0.0
        %3966 = vmatpush1.msra.mxu0 0.0
        %3967 = vmatprep.subr.mxu0 0.0
        %3968 = vmatpush1.msra.mxu0 0.0
        %3969 = vmatprep.mubr.f32.mxu0 0.0
        %3970 = vmatmul.mubr.f32.gmra.mrb[0].mxu0 %v3903
        %v3971 = vpop.f32.mrb[0].mxu0
        %v3972 = vadd.f32 0.0, %v3971
        %v3973 = vpop.f32.mrb[0].mxu0
        %3974 = vdwg.mxu0
        %v3976 = vsel %vm1579, %v3899, 0
        %3978 = vmatprep.subr.mxu0 0.0
        %3979 = vmatpush1.msra.mxu0 %v3398
        %3980 = vmatprep.subr.mxu0 0.0
        %3981 = vmatpush1.msra.mxu0 0.0
        %3982 = vmatprep.subr.mxu0 0.0
        %3983 = vmatpush1.msra.mxu0 0.0
        %3984 = vmatprep.subr.mxu0 0.0
        %3985 = vmatpush1.msra.mxu0 0.0
        %3986 = vmatprep.subr.mxu0 0.0
        %3987 = vmatpush1.msra.mxu0 0.0
        %3988 = vmatprep.subr.mxu0 0.0
        %3989 = vmatpush1.msra.mxu0 0.0
        %3990 = vmatprep.subr.mxu0 0.0
        %3991 = vmatpush1.msra.mxu0 0.0
        %3992 = vmatprep.subr.mxu0 0.0
        %3993 = vmatpush1.msra.mxu0 0.0
        %3994 = vmatprep.subr.mxu0 0.0
        %3995 = vmatpush1.msra.mxu0 0.0
        %3996 = vmatprep.subr.mxu0 0.0
        %3997 = vmatpush1.msra.mxu0 0.0
        %3998 = vmatprep.subr.mxu0 0.0
        %3999 = vmatpush1.msra.mxu0 0.0
        %4000 = vmatprep.subr.mxu0 0.0
        %4001 = vmatpush1.msra.mxu0 0.0
        %4002 = vmatprep.subr.mxu0 0.0
        %4003 = vmatpush1.msra.mxu0 0.0
        %4004 = vmatprep.subr.mxu0 0.0
        %4005 = vmatpush1.msra.mxu0 0.0
        %4006 = vmatprep.subr.mxu0 0.0
        %4007 = vmatpush1.msra.mxu0 0.0
        %4008 = vmatprep.subr.mxu0 0.0
        %4009 = vmatpush1.msra.mxu0 0.0
        %4010 = vmatprep.subr.mxu0 0.0
        %4011 = vmatpush1.msra.mxu0 0.0
        %4012 = vmatprep.subr.mxu0 0.0
        %4013 = vmatpush1.msra.mxu0 0.0
        %4014 = vmatprep.subr.mxu0 0.0
        %4015 = vmatpush1.msra.mxu0 0.0
        %4016 = vmatprep.subr.mxu0 0.0
        %4017 = vmatpush1.msra.mxu0 0.0
        %4018 = vmatprep.subr.mxu0 0.0
        %4019 = vmatpush1.msra.mxu0 0.0
        %4020 = vmatprep.subr.mxu0 0.0
        %4021 = vmatpush1.msra.mxu0 0.0
        %4022 = vmatprep.subr.mxu0 0.0
        %4023 = vmatpush1.msra.mxu0 0.0
        %4024 = vmatprep.subr.mxu0 0.0
        %4025 = vmatpush1.msra.mxu0 0.0
        %4026 = vmatprep.subr.mxu0 0.0
        %4027 = vmatpush1.msra.mxu0 0.0
        %4028 = vmatprep.subr.mxu0 0.0
        %4029 = vmatpush1.msra.mxu0 0.0
        %4030 = vmatprep.subr.mxu0 0.0
        %4031 = vmatpush1.msra.mxu0 0.0
        %4032 = vmatprep.subr.mxu0 0.0
        %4033 = vmatpush1.msra.mxu0 0.0
        %4034 = vmatprep.subr.mxu0 0.0
        %4035 = vmatpush1.msra.mxu0 0.0
        %4036 = vmatprep.subr.mxu0 0.0
        %4037 = vmatpush1.msra.mxu0 0.0
        %4038 = vmatprep.subr.mxu0 0.0
        %4039 = vmatpush1.msra.mxu0 0.0
        %4040 = vmatprep.subr.mxu0 0.0
        %4041 = vmatpush1.msra.mxu0 0.0
        %4042 = vmatprep.mubr.f32.mxu0 0.0
        %4043 = vmatmul.mubr.f32.gmra.mrb[0].mxu0 %v3976
        %v4044 = vpop.f32.mrb[0].mxu0
        %v4045 = vadd.f32 0.0, %v4044
        %v4046 = vpop.f32.mrb[0].mxu0
        %4047 = vdwg.mxu0
        %v4049 = vsel %vm1579, %v3900, 0
        %4051 = vmatprep.subr.mxu0 0.0
        %4052 = vmatpush1.msra.mxu0 %v3468
        %4053 = vmatprep.subr.mxu0 0.0
        %4054 = vmatpush1.msra.mxu0 0.0
        %4055 = vmatprep.subr.mxu0 0.0
        %4056 = vmatpush1.msra.mxu0 0.0
        %4057 = vmatprep.subr.mxu0 0.0
        %4058 = vmatpush1.msra.mxu0 0.0
        %4059 = vmatprep.subr.mxu0 0.0
        %4060 = vmatpush1.msra.mxu0 0.0
        %4061 = vmatprep.subr.mxu0 0.0
        %4062 = vmatpush1.msra.mxu0 0.0
        %4063 = vmatprep.subr.mxu0 0.0
        %4064 = vmatpush1.msra.mxu0 0.0
        %4065 = vmatprep.subr.mxu0 0.0
        %4066 = vmatpush1.msra.mxu0 0.0
        %4067 = vmatprep.subr.mxu0 0.0
        %4068 = vmatpush1.msra.mxu0 0.0
        %4069 = vmatprep.subr.mxu0 0.0
        %4070 = vmatpush1.msra.mxu0 0.0
        %4071 = vmatprep.subr.mxu0 0.0
        %4072 = vmatpush1.msra.mxu0 0.0
        %4073 = vmatprep.subr.mxu0 0.0
        %4074 = vmatpush1.msra.mxu0 0.0
        %4075 = vmatprep.subr.mxu0 0.0
        %4076 = vmatpush1.msra.mxu0 0.0
        %4077 = vmatprep.subr.mxu0 0.0
        %4078 = vmatpush1.msra.mxu0 0.0
        %4079 = vmatprep.subr.mxu0 0.0
        %4080 = vmatpush1.msra.mxu0 0.0
        %4081 = vmatprep.subr.mxu0 0.0
        %4082 = vmatpush1.msra.mxu0 0.0
        %4083 = vmatprep.subr.mxu0 0.0
        %4084 = vmatpush1.msra.mxu0 0.0
        %4085 = vmatprep.subr.mxu0 0.0
        %4086 = vmatpush1.msra.mxu0 0.0
        %4087 = vmatprep.subr.mxu0 0.0
        %4088 = vmatpush1.msra.mxu0 0.0
        %4089 = vmatprep.subr.mxu0 0.0
        %4090 = vmatpush1.msra.mxu0 0.0
        %4091 = vmatprep.subr.mxu0 0.0
        %4092 = vmatpush1.msra.mxu0 0.0
        %4093 = vmatprep.subr.mxu0 0.0
        %4094 = vmatpush1.msra.mxu0 0.0
        %4095 = vmatprep.subr.mxu0 0.0
        %4096 = vmatpush1.msra.mxu0 0.0
        %4097 = vmatprep.subr.mxu0 0.0
        %4098 = vmatpush1.msra.mxu0 0.0
        %4099 = vmatprep.subr.mxu0 0.0
        %4100 = vmatpush1.msra.mxu0 0.0
        %4101 = vmatprep.subr.mxu0 0.0
        %4102 = vmatpush1.msra.mxu0 0.0
        %4103 = vmatprep.subr.mxu0 0.0
        %4104 = vmatpush1.msra.mxu0 0.0
        %4105 = vmatprep.subr.mxu0 0.0
        %4106 = vmatpush1.msra.mxu0 0.0
        %4107 = vmatprep.subr.mxu0 0.0
        %4108 = vmatpush1.msra.mxu0 0.0
        %4109 = vmatprep.subr.mxu0 0.0
        %4110 = vmatpush1.msra.mxu0 0.0
        %4111 = vmatprep.subr.mxu0 0.0
        %4112 = vmatpush1.msra.mxu0 0.0
        %4113 = vmatprep.subr.mxu0 0.0
        %4114 = vmatpush1.msra.mxu0 0.0
        %4115 = vmatprep.mubr.f32.mxu0 0.0
        %4116 = vmatmul.mubr.f32.gmra.mrb[0].mxu0 %v4049
        %v4117 = vpop.f32.mrb[0].mxu0
        %v4118 = vadd.f32 0.0, %v4117
        %v4119 = vpop.f32.mrb[0].mxu0
        %4120 = vdwg.mxu0
        %v4122 = vsel %vm1579, %v3901, 0
        %4124 = vmatprep.subr.mxu0 0.0
        %4125 = vmatpush1.msra.mxu0 %v3538
        %4126 = vmatprep.subr.mxu0 0.0
        %4127 = vmatpush1.msra.mxu0 0.0
        %4128 = vmatprep.subr.mxu0 0.0
        %4129 = vmatpush1.msra.mxu0 0.0
        %4130 = vmatprep.subr.mxu0 0.0
        %4131 = vmatpush1.msra.mxu0 0.0
        %4132 = vmatprep.subr.mxu0 0.0
        %4133 = vmatpush1.msra.mxu0 0.0
        %4134 = vmatprep.subr.mxu0 0.0
        %4135 = vmatpush1.msra.mxu0 0.0
        %4136 = vmatprep.subr.mxu0 0.0
        %4137 = vmatpush1.msra.mxu0 0.0
        %4138 = vmatprep.subr.mxu0 0.0
        %4139 = vmatpush1.msra.mxu0 0.0
        %4140 = vmatprep.subr.mxu0 0.0
        %4141 = vmatpush1.msra.mxu0 0.0
        %4142 = vmatprep.subr.mxu0 0.0
        %4143 = vmatpush1.msra.mxu0 0.0
        %4144 = vmatprep.subr.mxu0 0.0
        %4145 = vmatpush1.msra.mxu0 0.0
        %4146 = vmatprep.subr.mxu0 0.0
        %4147 = vmatpush1.msra.mxu0 0.0
        %4148 = vmatprep.subr.mxu0 0.0
        %4149 = vmatpush1.msra.mxu0 0.0
        %4150 = vmatprep.subr.mxu0 0.0
        %4151 = vmatpush1.msra.mxu0 0.0
        %4152 = vmatprep.subr.mxu0 0.0
        %4153 = vmatpush1.msra.mxu0 0.0
        %4154 = vmatprep.subr.mxu0 0.0
        %4155 = vmatpush1.msra.mxu0 0.0
        %4156 = vmatprep.subr.mxu0 0.0
        %4157 = vmatpush1.msra.mxu0 0.0
        %4158 = vmatprep.subr.mxu0 0.0
        %4159 = vmatpush1.msra.mxu0 0.0
        %4160 = vmatprep.subr.mxu0 0.0
        %4161 = vmatpush1.msra.mxu0 0.0
        %4162 = vmatprep.subr.mxu0 0.0
        %4163 = vmatpush1.msra.mxu0 0.0
        %4164 = vmatprep.subr.mxu0 0.0
        %4165 = vmatpush1.msra.mxu0 0.0
        %4166 = vmatprep.subr.mxu0 0.0
        %4167 = vmatpush1.msra.mxu0 0.0
        %4168 = vmatprep.subr.mxu0 0.0
        %4169 = vmatpush1.msra.mxu0 0.0
        %4170 = vmatprep.subr.mxu0 0.0
        %4171 = vmatpush1.msra.mxu0 0.0
        %4172 = vmatprep.subr.mxu0 0.0
        %4173 = vmatpush1.msra.mxu0 0.0
        %4174 = vmatprep.subr.mxu0 0.0
        %4175 = vmatpush1.msra.mxu0 0.0
        %4176 = vmatprep.subr.mxu0 0.0
        %4177 = vmatpush1.msra.mxu0 0.0
        %4178 = vmatprep.subr.mxu0 0.0
        %4179 = vmatpush1.msra.mxu0 0.0
        %4180 = vmatprep.subr.mxu0 0.0
        %4181 = vmatpush1.msra.mxu0 0.0
        %4182 = vmatprep.subr.mxu0 0.0
        %4183 = vmatpush1.msra.mxu0 0.0
        %4184 = vmatprep.subr.mxu0 0.0
        %4185 = vmatpush1.msra.mxu0 0.0
        %4186 = vmatprep.subr.mxu0 0.0
        %4187 = vmatpush1.msra.mxu0 0.0
        %4188 = vmatprep.mubr.f32.mxu0 0.0
        %4189 = vmatmul.mubr.f32.gmra.mrb[0].mxu0 %v4122
        %v4190 = vpop.f32.mrb[0].mxu0
        %v4191 = vadd.f32 0.0, %v4190
        %v4192 = vpop.f32.mrb[0].mxu0
        %4193 = vdwg.mxu0
        %v4195 = vsel %vm1579, %v3972, 0
        %4197 = vmatprep.subr.mxu0 0.0
        %4198 = vmatpush1.msra.mxu0 %v3541
        %4199 = vmatprep.subr.mxu0 0.0
        %4200 = vmatpush1.msra.mxu0 0.0
        %4201 = vmatprep.subr.mxu0 0.0
        %4202 = vmatpush1.msra.mxu0 0.0
        %4203 = vmatprep.subr.mxu0 0.0
        %4204 = vmatpush1.msra.mxu0 0.0
        %4205 = vmatprep.subr.mxu0 0.0
        %4206 = vmatpush1.msra.mxu0 0.0
        %4207 = vmatprep.subr.mxu0 0.0
        %4208 = vmatpush1.msra.mxu0 0.0
        %4209 = vmatprep.subr.mxu0 0.0
        %4210 = vmatpush1.msra.mxu0 0.0
        %4211 = vmatprep.subr.mxu0 0.0
        %4212 = vmatpush1.msra.mxu0 0.0
        %4213 = vmatprep.subr.mxu0 0.0
        %4214 = vmatpush1.msra.mxu0 0.0
        %4215 = vmatprep.subr.mxu0 0.0
        %4216 = vmatpush1.msra.mxu0 0.0
        %4217 = vmatprep.subr.mxu0 0.0
        %4218 = vmatpush1.msra.mxu0 0.0
        %4219 = vmatprep.subr.mxu0 0.0
        %4220 = vmatpush1.msra.mxu0 0.0
        %4221 = vmatprep.subr.mxu0 0.0
        %4222 = vmatpush1.msra.mxu0 0.0
        %4223 = vmatprep.subr.mxu0 0.0
        %4224 = vmatpush1.msra.mxu0 0.0
        %4225 = vmatprep.subr.mxu0 0.0
        %4226 = vmatpush1.msra.mxu0 0.0
        %4227 = vmatprep.subr.mxu0 0.0
        %4228 = vmatpush1.msra.mxu0 0.0
        %4229 = vmatprep.subr.mxu0 0.0
        %4230 = vmatpush1.msra.mxu0 0.0
        %4231 = vmatprep.subr.mxu0 0.0
        %4232 = vmatpush1.msra.mxu0 0.0
        %4233 = vmatprep.subr.mxu0 0.0
        %4234 = vmatpush1.msra.mxu0 0.0
        %4235 = vmatprep.subr.mxu0 0.0
        %4236 = vmatpush1.msra.mxu0 0.0
        %4237 = vmatprep.subr.mxu0 0.0
        %4238 = vmatpush1.msra.mxu0 0.0
        %4239 = vmatprep.subr.mxu0 0.0
        %4240 = vmatpush1.msra.mxu0 0.0
        %4241 = vmatprep.subr.mxu0 0.0
        %4242 = vmatpush1.msra.mxu0 0.0
        %4243 = vmatprep.subr.mxu0 0.0
        %4244 = vmatpush1.msra.mxu0 0.0
        %4245 = vmatprep.subr.mxu0 0.0
        %4246 = vmatpush1.msra.mxu0 0.0
        %4247 = vmatprep.subr.mxu0 0.0
        %4248 = vmatpush1.msra.mxu0 0.0
        %4249 = vmatprep.subr.mxu0 0.0
        %4250 = vmatpush1.msra.mxu0 0.0
        %4251 = vmatprep.subr.mxu0 0.0
        %4252 = vmatpush1.msra.mxu0 0.0
        %4253 = vmatprep.subr.mxu0 0.0
        %4254 = vmatpush1.msra.mxu0 0.0
        %4255 = vmatprep.subr.mxu0 0.0
        %4256 = vmatpush1.msra.mxu0 0.0
        %4257 = vmatprep.subr.mxu0 0.0
        %4258 = vmatpush1.msra.mxu0 0.0
        %4259 = vmatprep.subr.mxu0 0.0
        %4260 = vmatpush1.msra.mxu0 0.0
        %4261 = vmatprep.mubr.f32.mxu0 0.0
        %4262 = vmatmul.mubr.f32.gmra.mrb[0].mxu0 %v4195
        %v4263 = vpop.f32.mrb[0].mxu0
        %v4264 = vadd.f32 0.0, %v4263
        %v4265 = vpop.f32.mrb[0].mxu0
        %4266 = vdwg.mxu0
        %v4268 = vsel %vm1579, %v4045, 0
        %4270 = vmatprep.subr.mxu0 0.0
        %4271 = vmatpush1.msra.mxu0 %v3542
        %4272 = vmatprep.subr.mxu0 0.0
        %4273 = vmatpush1.msra.mxu0 0.0
        %4274 = vmatprep.subr.mxu0 0.0
        %4275 = vmatpush1.msra.mxu0 0.0
        %4276 = vmatprep.subr.mxu0 0.0
        %4277 = vmatpush1.msra.mxu0 0.0
        %4278 = vmatprep.subr.mxu0 0.0
        %4279 = vmatpush1.msra.mxu0 0.0
        %4280 = vmatprep.subr.mxu0 0.0
        %4281 = vmatpush1.msra.mxu0 0.0
        %4282 = vmatprep.subr.mxu0 0.0
        %4283 = vmatpush1.msra.mxu0 0.0
        %4284 = vmatprep.subr.mxu0 0.0
        %4285 = vmatpush1.msra.mxu0 0.0
        %4286 = vmatprep.subr.mxu0 0.0
        %4287 = vmatpush1.msra.mxu0 0.0
        %4288 = vmatprep.subr.mxu0 0.0
        %4289 = vmatpush1.msra.mxu0 0.0
        %4290 = vmatprep.subr.mxu0 0.0
        %4291 = vmatpush1.msra.mxu0 0.0
        %4292 = vmatprep.subr.mxu0 0.0
        %4293 = vmatpush1.msra.mxu0 0.0
        %4294 = vmatprep.subr.mxu0 0.0
        %4295 = vmatpush1.msra.mxu0 0.0
        %4296 = vmatprep.subr.mxu0 0.0
        %4297 = vmatpush1.msra.mxu0 0.0
        %4298 = vmatprep.subr.mxu0 0.0
        %4299 = vmatpush1.msra.mxu0 0.0
        %4300 = vmatprep.subr.mxu0 0.0
        %4301 = vmatpush1.msra.mxu0 0.0
        %4302 = vmatprep.subr.mxu0 0.0
        %4303 = vmatpush1.msra.mxu0 0.0
        %4304 = vmatprep.subr.mxu0 0.0
        %4305 = vmatpush1.msra.mxu0 0.0
        %4306 = vmatprep.subr.mxu0 0.0
        %4307 = vmatpush1.msra.mxu0 0.0
        %4308 = vmatprep.subr.mxu0 0.0
        %4309 = vmatpush1.msra.mxu0 0.0
        %4310 = vmatprep.subr.mxu0 0.0
        %4311 = vmatpush1.msra.mxu0 0.0
        %4312 = vmatprep.subr.mxu0 0.0
        %4313 = vmatpush1.msra.mxu0 0.0
        %4314 = vmatprep.subr.mxu0 0.0
        %4315 = vmatpush1.msra.mxu0 0.0
        %4316 = vmatprep.subr.mxu0 0.0
        %4317 = vmatpush1.msra.mxu0 0.0
        %4318 = vmatprep.subr.mxu0 0.0
        %4319 = vmatpush1.msra.mxu0 0.0
        %4320 = vmatprep.subr.mxu0 0.0
        %4321 = vmatpush1.msra.mxu0 0.0
        %4322 = vmatprep.subr.mxu0 0.0
        %4323 = vmatpush1.msra.mxu0 0.0
        %4324 = vmatprep.subr.mxu0 0.0
        %4325 = vmatpush1.msra.mxu0 0.0
        %4326 = vmatprep.subr.mxu0 0.0
        %4327 = vmatpush1.msra.mxu0 0.0
        %4328 = vmatprep.subr.mxu0 0.0
        %4329 = vmatpush1.msra.mxu0 0.0
        %4330 = vmatprep.subr.mxu0 0.0
        %4331 = vmatpush1.msra.mxu0 0.0
        %4332 = vmatprep.subr.mxu0 0.0
        %4333 = vmatpush1.msra.mxu0 0.0
        %4334 = vmatprep.mubr.f32.mxu0 0.0
        %4335 = vmatmul.mubr.f32.gmra.mrb[0].mxu0 %v4268
        %v4336 = vpop.f32.mrb[0].mxu0
        %v4337 = vadd.f32 0.0, %v4336
        %v4338 = vpop.f32.mrb[0].mxu0
        %4339 = vdwg.mxu0
        %v4341 = vsel %vm1579, %v4118, 0
        %4343 = vmatprep.subr.mxu0 0.0
        %4344 = vmatpush1.msra.mxu0 %v3543
        %4345 = vmatprep.subr.mxu0 0.0
        %4346 = vmatpush1.msra.mxu0 0.0
        %4347 = vmatprep.subr.mxu0 0.0
        %4348 = vmatpush1.msra.mxu0 0.0
        %4349 = vmatprep.subr.mxu0 0.0
        %4350 = vmatpush1.msra.mxu0 0.0
        %4351 = vmatprep.subr.mxu0 0.0
        %4352 = vmatpush1.msra.mxu0 0.0
        %4353 = vmatprep.subr.mxu0 0.0
        %4354 = vmatpush1.msra.mxu0 0.0
        %4355 = vmatprep.subr.mxu0 0.0
        %4356 = vmatpush1.msra.mxu0 0.0
        %4357 = vmatprep.subr.mxu0 0.0
        %4358 = vmatpush1.msra.mxu0 0.0
        %4359 = vmatprep.subr.mxu0 0.0
        %4360 = vmatpush1.msra.mxu0 0.0
        %4361 = vmatprep.subr.mxu0 0.0
        %4362 = vmatpush1.msra.mxu0 0.0
        %4363 = vmatprep.subr.mxu0 0.0
        %4364 = vmatpush1.msra.mxu0 0.0
        %4365 = vmatprep.subr.mxu0 0.0
        %4366 = vmatpush1.msra.mxu0 0.0
        %4367 = vmatprep.subr.mxu0 0.0
        %4368 = vmatpush1.msra.mxu0 0.0
        %4369 = vmatprep.subr.mxu0 0.0
        %4370 = vmatpush1.msra.mxu0 0.0
        %4371 = vmatprep.subr.mxu0 0.0
        %4372 = vmatpush1.msra.mxu0 0.0
        %4373 = vmatprep.subr.mxu0 0.0
        %4374 = vmatpush1.msra.mxu0 0.0
        %4375 = vmatprep.subr.mxu0 0.0
        %4376 = vmatpush1.msra.mxu0 0.0
        %4377 = vmatprep.subr.mxu0 0.0
        %4378 = vmatpush1.msra.mxu0 0.0
        %4379 = vmatprep.subr.mxu0 0.0
        %4380 = vmatpush1.msra.mxu0 0.0
        %4381 = vmatprep.subr.mxu0 0.0
        %4382 = vmatpush1.msra.mxu0 0.0
        %4383 = vmatprep.subr.mxu0 0.0
        %4384 = vmatpush1.msra.mxu0 0.0
        %4385 = vmatprep.subr.mxu0 0.0
        %4386 = vmatpush1.msra.mxu0 0.0
        %4387 = vmatprep.subr.mxu0 0.0
        %4388 = vmatpush1.msra.mxu0 0.0
        %4389 = vmatprep.subr.mxu0 0.0
        %4390 = vmatpush1.msra.mxu0 0.0
        %4391 = vmatprep.subr.mxu0 0.0
        %4392 = vmatpush1.msra.mxu0 0.0
        %4393 = vmatprep.subr.mxu0 0.0
        %4394 = vmatpush1.msra.mxu0 0.0
        %4395 = vmatprep.subr.mxu0 0.0
        %4396 = vmatpush1.msra.mxu0 0.0
        %4397 = vmatprep.subr.mxu0 0.0
        %4398 = vmatpush1.msra.mxu0 0.0
        %4399 = vmatprep.subr.mxu0 0.0
        %4400 = vmatpush1.msra.mxu0 0.0
        %4401 = vmatprep.subr.mxu0 0.0
        %4402 = vmatpush1.msra.mxu0 0.0
        %4403 = vmatprep.subr.mxu0 0.0
        %4404 = vmatpush1.msra.mxu0 0.0
        %4405 = vmatprep.subr.mxu0 0.0
        %4406 = vmatpush1.msra.mxu0 0.0
        %4407 = vmatprep.mubr.f32.mxu0 0.0
        %4408 = vmatmul.mubr.f32.gmra.mrb[0].mxu0 %v4341
        %v4409 = vpop.f32.mrb[0].mxu0
        %v4410 = vadd.f32 0.0, %v4409
        %v4411 = vpop.f32.mrb[0].mxu0
        %4412 = vdwg.mxu0
        %v4414 = vsel %vm1579, %v4191, 0
        %4416 = vmatprep.subr.mxu0 0.0
        %4417 = vmatpush1.msra.mxu0 %v3544
        %4418 = vmatprep.subr.mxu0 0.0
        %4419 = vmatpush1.msra.mxu0 0.0
        %4420 = vmatprep.subr.mxu0 0.0
        %4421 = vmatpush1.msra.mxu0 0.0
        %4422 = vmatprep.subr.mxu0 0.0
        %4423 = vmatpush1.msra.mxu0 0.0
        %4424 = vmatprep.subr.mxu0 0.0
        %4425 = vmatpush1.msra.mxu0 0.0
        %4426 = vmatprep.subr.mxu0 0.0
        %4427 = vmatpush1.msra.mxu0 0.0
        %4428 = vmatprep.subr.mxu0 0.0
        %4429 = vmatpush1.msra.mxu0 0.0
        %4430 = vmatprep.subr.mxu0 0.0
        %4431 = vmatpush1.msra.mxu0 0.0
        %4432 = vmatprep.subr.mxu0 0.0
        %4433 = vmatpush1.msra.mxu0 0.0
        %4434 = vmatprep.subr.mxu0 0.0
        %4435 = vmatpush1.msra.mxu0 0.0
        %4436 = vmatprep.subr.mxu0 0.0
        %4437 = vmatpush1.msra.mxu0 0.0
        %4438 = vmatprep.subr.mxu0 0.0
        %4439 = vmatpush1.msra.mxu0 0.0
        %4440 = vmatprep.subr.mxu0 0.0
        %4441 = vmatpush1.msra.mxu0 0.0
        %4442 = vmatprep.subr.mxu0 0.0
        %4443 = vmatpush1.msra.mxu0 0.0
        %4444 = vmatprep.subr.mxu0 0.0
        %4445 = vmatpush1.msra.mxu0 0.0
        %4446 = vmatprep.subr.mxu0 0.0
        %4447 = vmatpush1.msra.mxu0 0.0
        %4448 = vmatprep.subr.mxu0 0.0
        %4449 = vmatpush1.msra.mxu0 0.0
        %4450 = vmatprep.subr.mxu0 0.0
        %4451 = vmatpush1.msra.mxu0 0.0
        %4452 = vmatprep.subr.mxu0 0.0
        %4453 = vmatpush1.msra.mxu0 0.0
        %4454 = vmatprep.subr.mxu0 0.0
        %4455 = vmatpush1.msra.mxu0 0.0
        %4456 = vmatprep.subr.mxu0 0.0
        %4457 = vmatpush1.msra.mxu0 0.0
        %4458 = vmatprep.subr.mxu0 0.0
        %4459 = vmatpush1.msra.mxu0 0.0
        %4460 = vmatprep.subr.mxu0 0.0
        %4461 = vmatpush1.msra.mxu0 0.0
        %4462 = vmatprep.subr.mxu0 0.0
        %4463 = vmatpush1.msra.mxu0 0.0
        %4464 = vmatprep.subr.mxu0 0.0
        %4465 = vmatpush1.msra.mxu0 0.0
        %4466 = vmatprep.subr.mxu0 0.0
        %4467 = vmatpush1.msra.mxu0 0.0
        %4468 = vmatprep.subr.mxu0 0.0
        %4469 = vmatpush1.msra.mxu0 0.0
        %4470 = vmatprep.subr.mxu0 0.0
        %4471 = vmatpush1.msra.mxu0 0.0
        %4472 = vmatprep.subr.mxu0 0.0
        %4473 = vmatpush1.msra.mxu0 0.0
        %4474 = vmatprep.subr.mxu0 0.0
        %4475 = vmatpush1.msra.mxu0 0.0
        %4476 = vmatprep.subr.mxu0 0.0
        %4477 = vmatpush1.msra.mxu0 0.0
        %4478 = vmatprep.subr.mxu0 0.0
        %4479 = vmatpush1.msra.mxu0 0.0
        %4480 = vmatprep.mubr.f32.mxu0 0.0
        %4481 = vmatmul.mubr.f32.gmra.mrb[0].mxu0 %v4414
        %v4482 = vpop.f32.mrb[0].mxu0
        %v4483 = vadd.f32 0.0, %v4482
        %v4484 = vpop.f32.mrb[0].mxu0
        %4485 = vdwg.mxu0
        %v4486 = vsel %vm730, %v4264, 0.0
        %v4487 = vsel %vm730, %v4337, 0.0
        %v4488 = vadd.f32 %v4486, %v4487
        %v4489 = vsel %vm730, %v4410, 0.0
        %v4490 = vadd.f32 %v4488, %v4489
        %v4491 = vsel %vm730, %v4483, 0.0
        %v4492 = vadd.f32 %v4490, %v4491
        %v4494 = vlaneseq
        %v4495 = vshrl.u32 %v4494, 7
        %v4496 = vsub.s32 0, %v4495
        %v4497 = vrot.slane %v3545, %v4496
        %v4499 = vadd.f32 %v4492, %v4497
        %v4500 = vadd.f32 %v4499, %v2562
        %v4501 = vsel %vm730, %v4500, 0.0
        %4502 = vadd.xlane.f32.xlu0 %v4501
        %v4503 = vpop.xlane.xlu0 %4502
        %v4504 = vmul.f32 %v4503, %v2538
        %v4505 = vsub.f32 %v4500, %v4504
        %v4506 = vmul.f32 %v4505, %v4505
        %v4507 = vsel %vm730, %v4506, 0.0
        %4508 = vadd.xlane.f32.xlu0 %v4507
        %v4509 = vpop.xlane.xlu0 %4508
        %v4510 = vmul.f32 %v4509, %v2538
        %v4511 = vadd.f32 %v4510, 1e-05
        %v4512 = vrsqrt.pop %v4511
        %v4513 = vmul.f32 %v4505, %v4512
        %v4515 = vlaneseq
        %v4516 = vshrl.u32 %v4515, 7
        %v4517 = vsub.s32 0, %v4516
        %v4518 = vrot.slane %v593, %v4517
        %v4520 = vmul.f32 %v4513, %v4518
        %v4522 = vlaneseq
        %v4523 = vshrl.u32 %v4522, 7
        %v4524 = vsub.s32 0, %v4523
        %v4525 = vrot.slane %v596, %v4524
        %v4527 = vadd.f32 %v4520, %v4525
        %v4528 = vld [vmem:[%s12] sm:$0xff]
        %v4529 = vld [vmem:[%s12 + $0x8] sm:$0xff]
        %v4530 = vld [vmem:[%s12 + $0x10] sm:$0xff]
        %v4531 = vld [vmem:[%s12 + $0x18] sm:$0xff]
        %v4532 = vld [vmem:[%s13] sm:$0x1]
        %v4534 = vlaneseq
        %v4535 = vshrl.u32 %v4534, 7
        %v4536 = vsub.s32 0, %v4535
        %v4537 = vrot.slane %v4532, %v4536
        %v4540 = vsel %vm730, %v4527, 0
        %4542 = vmatprep.subr.mxu0 0.0
        %4543 = vmatpush1.msra.mxu0 %v4528
        %4544 = vmatprep.subr.mxu0 0.0
        %4545 = vmatpush1.msra.mxu0 %v4529
        %4546 = vmatprep.subr.mxu0 0.0
        %4547 = vmatpush1.msra.mxu0 %v4530
        %4548 = vmatprep.subr.mxu0 0.0
        %4549 = vmatpush1.msra.mxu0 %v4531
        %4550 = vmatprep.subr.mxu0 0.0
        %4551 = vmatpush1.msra.mxu0 0.0
        %4552 = vmatprep.subr.mxu0 0.0
        %4553 = vmatpush1.msra.mxu0 0.0
        %4554 = vmatprep.subr.mxu0 0.0
        %4555 = vmatpush1.msra.mxu0 0.0
        %4556 = vmatprep.subr.mxu0 0.0
        %4557 = vmatpush1.msra.mxu0 0.0
        %4558 = vmatprep.subr.mxu0 0.0
        %4559 = vmatpush1.msra.mxu0 0.0
        %4560 = vmatprep.subr.mxu0 0.0
        %4561 = vmatpush1.msra.mxu0 0.0
        %4562 = vmatprep.subr.mxu0 0.0
        %4563 = vmatpush1.msra.mxu0 0.0
        %4564 = vmatprep.subr.mxu0 0.0
        %4565 = vmatpush1.msra.mxu0 0.0
        %4566 = vmatprep.subr.mxu0 0.0
        %4567 = vmatpush1.msra.mxu0 0.0
        %4568 = vmatprep.subr.mxu0 0.0
        %4569 = vmatpush1.msra.mxu0 0.0
        %4570 = vmatprep.subr.mxu0 0.0
        %4571 = vmatpush1.msra.mxu0 0.0
        %4572 = vmatprep.subr.mxu0 0.0
        %4573 = vmatpush1.msra.mxu0 0.0
        %4574 = vmatprep.subr.mxu0 0.0
        %4575 = vmatpush1.msra.mxu0 0.0
        %4576 = vmatprep.subr.mxu0 0.0
        %4577 = vmatpush1.msra.mxu0 0.0
        %4578 = vmatprep.subr.mxu0 0.0
        %4579 = vmatpush1.msra.mxu0 0.0
        %4580 = vmatprep.subr.mxu0 0.0
        %4581 = vmatpush1.msra.mxu0 0.0
        %4582 = vmatprep.subr.mxu0 0.0
        %4583 = vmatpush1.msra.mxu0 0.0
        %4584 = vmatprep.subr.mxu0 0.0
        %4585 = vmatpush1.msra.mxu0 0.0
        %4586 = vmatprep.subr.mxu0 0.0
        %4587 = vmatpush1.msra.mxu0 0.0
        %4588 = vmatprep.subr.mxu0 0.0
        %4589 = vmatpush1.msra.mxu0 0.0
        %4590 = vmatprep.subr.mxu0 0.0
        %4591 = vmatpush1.msra.mxu0 0.0
        %4592 = vmatprep.subr.mxu0 0.0
        %4593 = vmatpush1.msra.mxu0 0.0
        %4594 = vmatprep.subr.mxu0 0.0
        %4595 = vmatpush1.msra.mxu0 0.0
        %4596 = vmatprep.subr.mxu0 0.0
        %4597 = vmatpush1.msra.mxu0 0.0
        %4598 = vmatprep.subr.mxu0 0.0
        %4599 = vmatpush1.msra.mxu0 0.0
        %4600 = vmatprep.subr.mxu0 0.0
        %4601 = vmatpush1.msra.mxu0 0.0
        %4602 = vmatprep.subr.mxu0 0.0
        %4603 = vmatpush1.msra.mxu0 0.0
        %4604 = vmatprep.subr.mxu0 0.0
        %4605 = vmatpush1.msra.mxu0 0.0
        %4606 = vmatprep.mubr.f32.mxu0 0.0
        %4607 = vmatmul.mubr.f32.gmra.mrb[0].mxu0 %v4540
        %v4608 = vpop.f32.mrb[0].mxu0
        %v4609 = vadd.f32 %v4537, %v4608
        %v4610 = vpop.f32.mrb[0].mxu0
        %4611 = vdwg.mxu0
        %v4612 = vmax.f32 %v4609, 0.0
        %v4613 = vld [vmem:[%s14] sm:$0xff]
        %v4614 = vld [vmem:[%s14 + $0x8] sm:$0xff]
        %v4615 = vld [vmem:[%s14 + $0x10] sm:$0xff]
        %v4616 = vld [vmem:[%s14 + $0x18] sm:$0xff]
        %v4617 = vld [vmem:[%s14 + $0x20] sm:$0xff]
        %v4618 = vld [vmem:[%s14 + $0x28] sm:$0xff]
        %v4619 = vld [vmem:[%s14 + $0x30] sm:$0xff]
        %v4620 = vld [vmem:[%s14 + $0x38] sm:$0xff]
        %v4621 = vld [vmem:[%s15] sm:$0x1]
        %v4623 = vlaneseq
        %v4624 = vshrl.u32 %v4623, 7
        %v4625 = vsub.s32 0, %v4624
        %v4626 = vrot.slane %v4621, %v4625
        %vm4628 = vcmask 523264
        %v4630 = vsel %vm4628, %v4612, 0
        %4632 = vmatprep.subr.mxu0 0.0
        %4633 = vmatpush1.msra.mxu0 %v4613
        %4634 = vmatprep.subr.mxu0 0.0
        %4635 = vmatpush1.msra.mxu0 %v4614
        %4636 = vmatprep.subr.mxu0 0.0
        %4637 = vmatpush1.msra.mxu0 %v4615
        %4638 = vmatprep.subr.mxu0 0.0
        %4639 = vmatpush1.msra.mxu0 %v4616
        %4640 = vmatprep.subr.mxu0 0.0
        %4641 = vmatpush1.msra.mxu0 %v4617
        %4642 = vmatprep.subr.mxu0 0.0
        %4643 = vmatpush1.msra.mxu0 %v4618
        %4644 = vmatprep.subr.mxu0 0.0
        %4645 = vmatpush1.msra.mxu0 %v4619
        %4646 = vmatprep.subr.mxu0 0.0
        %4647 = vmatpush1.msra.mxu0 %v4620
        %4648 = vmatprep.subr.mxu0 0.0
        %4649 = vmatpush1.msra.mxu0 0.0
        %4650 = vmatprep.subr.mxu0 0.0
        %4651 = vmatpush1.msra.mxu0 0.0
        %4652 = vmatprep.subr.mxu0 0.0
        %4653 = vmatpush1.msra.mxu0 0.0
        %4654 = vmatprep.subr.mxu0 0.0
        %4655 = vmatpush1.msra.mxu0 0.0
        %4656 = vmatprep.subr.mxu0 0.0
        %4657 = vmatpush1.msra.mxu0 0.0
        %4658 = vmatprep.subr.mxu0 0.0
        %4659 = vmatpush1.msra.mxu0 0.0
        %4660 = vmatprep.subr.mxu0 0.0
        %4661 = vmatpush1.msra.mxu0 0.0
        %4662 = vmatprep.subr.mxu0 0.0
        %4663 = vmatpush1.msra.mxu0 0.0
        %4664 = vmatprep.subr.mxu0 0.0
        %4665 = vmatpush1.msra.mxu0 0.0
        %4666 = vmatprep.subr.mxu0 0.0
        %4667 = vmatpush1.msra.mxu0 0.0
        %4668 = vmatprep.subr.mxu0 0.0
        %4669 = vmatpush1.msra.mxu0 0.0
        %4670 = vmatprep.subr.mxu0 0.0
        %4671 = vmatpush1.msra.mxu0 0.0
        %4672 = vmatprep.subr.mxu0 0.0
        %4673 = vmatpush1.msra.mxu0 0.0
        %4674 = vmatprep.subr.mxu0 0.0
        %4675 = vmatpush1.msra.mxu0 0.0
        %4676 = vmatprep.subr.mxu0 0.0
        %4677 = vmatpush1.msra.mxu0 0.0
        %4678 = vmatprep.subr.mxu0 0.0
        %4679 = vmatpush1.msra.mxu0 0.0
        %4680 = vmatprep.subr.mxu0 0.0
        %4681 = vmatpush1.msra.mxu0 0.0
        %4682 = vmatprep.subr.mxu0 0.0
        %4683 = vmatpush1.msra.mxu0 0.0
        %4684 = vmatprep.subr.mxu0 0.0
        %4685 = vmatpush1.msra.mxu0 0.0
        %4686 = vmatprep.subr.mxu0 0.0
        %4687 = vmatpush1.msra.mxu0 0.0
        %4688 = vmatprep.subr.mxu0 0.0
        %4689 = vmatpush1.msra.mxu0 0.0
        %4690 = vmatprep.subr.mxu0 0.0
        %4691 = vmatpush1.msra.mxu0 0.0
        %4692 = vmatprep.subr.mxu0 0.0
        %4693 = vmatpush1.msra.mxu0 0.0
        %4694 = vmatprep.subr.mxu0 0.0
        %4695 = vmatpush1.msra.mxu0 0.0
        %4696 = vmatprep.mubr.f32.mxu0 0.0
        %4697 = vmatmul.mubr.f32.gmra.mrb[0].mxu0 %v4630
        %v4698 = vpop.f32.mrb[0].mxu0
        %v4699 = vadd.f32 %v4626, %v4698
        %v4700 = vpop.f32.mrb[0].mxu0
        %4701 = vdwg.mxu0
        %v4702 = vadd.f32 %v4699, %v4527
        %v4703 = vsel %vm730, %v4702, 0.0
        %4704 = vadd.xlane.f32.xlu0 %v4703
        %v4705 = vpop.xlane.xlu0 %4704
        %v4706 = vmul.f32 %v4705, %v2538
        %v4707 = vsub.f32 %v4702, %v4706
        %v4708 = vmul.f32 %v4707, %v4707
        %v4709 = vsel %vm730, %v4708, 0.0
        %4710 = vadd.xlane.f32.xlu0 %v4709
        %v4711 = vpop.xlane.xlu0 %4710
        %v4712 = vmul.f32 %v4711, %v2538
        %v4713 = vadd.f32 %v4712, 1e-05
        %v4714 = vrsqrt.pop %v4713
        %v4715 = vmul.f32 %v4707, %v4714
        %v4717 = vlaneseq
        %v4718 = vshrl.u32 %v4717, 7
        %v4719 = vsub.s32 0, %v4718
        %v4720 = vrot.slane %v594, %v4719
        %v4722 = vmul.f32 %v4715, %v4720
        %v4724 = vlaneseq
        %v4725 = vshrl.u32 %v4724, 7
        %v4726 = vsub.s32 0, %v4725
        %v4727 = vrot.slane %v597, %v4726
        %v4729 = vadd.f32 %v4722, %v4727
        %s4730 = scalar_lea.vmem %s16, 3
        %v4731 = vld [vmem:[%s4730] sm:$0x1]
        %v4732 = vld [vmem:[%s4730 + $0x1] sm:$0x1]
        %v4733 = vld [vmem:[%s4730 + $0x2] sm:$0x1]
        %s4734 = scalar_lea.vmem %s17, 3
        %v4735 = vld [vmem:[%s4734] sm:$0x1]
        %v4736 = vld [vmem:[%s4734 + $0x1] sm:$0x1]
        %v4737 = vld [vmem:[%s4734 + $0x2] sm:$0x1]
        %s4738 = scalar_lea.vmem %s4, 384
        %v4739 = vld [vmem:[%s4738] sm:$0xff]
        %v4740 = vld [vmem:[%s4738 + $0x8] sm:$0xff]
        %v4741 = vld [vmem:[%s4738 + $0x10] sm:$0xff]
        %v4742 = vld [vmem:[%s4738 + $0x18] sm:$0xff]
        %v4743 = vld [vmem:[%s4738 + $0x20] sm:$0xff]
        %v4744 = vld [vmem:[%s4738 + $0x28] sm:$0xff]
        %v4745 = vld [vmem:[%s4738 + $0x30] sm:$0xff]
        %v4746 = vld [vmem:[%s4738 + $0x38] sm:$0xff]
        %v4747 = vld [vmem:[%s4738 + $0x40] sm:$0xff]
        %v4748 = vld [vmem:[%s4738 + $0x48] sm:$0xff]
        %v4749 = vld [vmem:[%s4738 + $0x50] sm:$0xff]
        %v4750 = vld [vmem:[%s4738 + $0x58] sm:$0xff]
        %v4751 = vld [vmem:[%s4738 + $0x60] sm:$0xff]
        %v4752 = vld [vmem:[%s4738 + $0x68] sm:$0xff]
        %v4753 = vld [vmem:[%s4738 + $0x70] sm:$0xff]
        %v4754 = vld [vmem:[%s4738 + $0x78] sm:$0xff]
        %v4755 = vld [vmem:[%s4738 + $0x80] sm:$0xff]
        %v4756 = vld [vmem:[%s4738 + $0x88] sm:$0xff]
        %v4757 = vld [vmem:[%s4738 + $0x90] sm:$0xff]
        %v4758 = vld [vmem:[%s4738 + $0x98] sm:$0xff]
        %v4759 = vld [vmem:[%s4738 + $0xa0] sm:$0xff]
        %v4760 = vld [vmem:[%s4738 + $0xa8] sm:$0xff]
        %v4761 = vld [vmem:[%s4738 + $0xb0] sm:$0xff]
        %v4762 = vld [vmem:[%s4738 + $0xb8] sm:$0xff]
        %v4763 = vld [vmem:[%s4738 + $0xc0] sm:$0xff]
        %v4764 = vld [vmem:[%s4738 + $0xc8] sm:$0xff]
        %v4765 = vld [vmem:[%s4738 + $0xd0] sm:$0xff]
        %v4766 = vld [vmem:[%s4738 + $0xd8] sm:$0xff]
        %v4767 = vld [vmem:[%s4738 + $0xe0] sm:$0xff]
        %v4768 = vld [vmem:[%s4738 + $0xe8] sm:$0xff]
        %v4769 = vld [vmem:[%s4738 + $0xf0] sm:$0xff]
        %v4770 = vld [vmem:[%s4738 + $0xf8] sm:$0xff]
        %v4771 = vld [vmem:[%s4738 + $0x100] sm:$0xff]
        %v4772 = vld [vmem:[%s4738 + $0x108] sm:$0xff]
        %v4773 = vld [vmem:[%s4738 + $0x110] sm:$0xff]
        %v4774 = vld [vmem:[%s4738 + $0x118] sm:$0xff]
        %v4775 = vld [vmem:[%s4738 + $0x120] sm:$0xff]
        %v4776 = vld [vmem:[%s4738 + $0x128] sm:$0xff]
        %v4777 = vld [vmem:[%s4738 + $0x130] sm:$0xff]
        %v4778 = vld [vmem:[%s4738 + $0x138] sm:$0xff]
        %v4779 = vld [vmem:[%s4738 + $0x140] sm:$0xff]
        %v4780 = vld [vmem:[%s4738 + $0x148] sm:$0xff]
        %v4781 = vld [vmem:[%s4738 + $0x150] sm:$0xff]
        %v4782 = vld [vmem:[%s4738 + $0x158] sm:$0xff]
        %v4783 = vld [vmem:[%s4738 + $0x160] sm:$0xff]
        %v4784 = vld [vmem:[%s4738 + $0x168] sm:$0xff]
        %v4785 = vld [vmem:[%s4738 + $0x170] sm:$0xff]
        %v4786 = vld [vmem:[%s4738 + $0x178] sm:$0xff]
        %s4787 = scalar_lea.vmem %s5, 12
        %v4788 = vld [vmem:[%s4787] sm:$0x1]
        %v4789 = vld [vmem:[%s4787 + $0x1] sm:$0x1]
        %v4790 = vld [vmem:[%s4787 + $0x2] sm:$0x1]
        %v4791 = vld [vmem:[%s4787 + $0x3] sm:$0x1]
        %v4792 = vld [vmem:[%s4787 + $0x4] sm:$0x1]
        %v4793 = vld [vmem:[%s4787 + $0x5] sm:$0x1]
        %v4794 = vld [vmem:[%s4787 + $0x6] sm:$0x1]
        %v4795 = vld [vmem:[%s4787 + $0x7] sm:$0x1]
        %v4796 = vld [vmem:[%s4787 + $0x8] sm:$0x1]
        %v4797 = vld [vmem:[%s4787 + $0x9] sm:$0x1]
        %v4798 = vld [vmem:[%s4787 + $0xa] sm:$0x1]
        %v4799 = vld [vmem:[%s4787 + $0xb] sm:$0x1]
        %v4812 = vlaneseq
        %v4813 = vshrl.u32 %v4812, 7
        %v4814 = vsub.s32 0, %v4813
        %v4815 = vrot.slane %v4788, %v4814
        %v4816 = vlaneseq
        %v4817 = vshrl.u32 %v4816, 7
        %v4818 = vsub.s32 0, %v4817
        %v4819 = vrot.slane %v4789, %v4818
        %v4820 = vlaneseq
        %v4821 = vshrl.u32 %v4820, 7
        %v4822 = vsub.s32 0, %v4821
        %v4823 = vrot.slane %v4790, %v4822
        %v4824 = vlaneseq
        %v4825 = vshrl.u32 %v4824, 7
        %v4826 = vsub.s32 0, %v4825
        %v4827 = vrot.slane %v4791, %v4826
        %v4828 = vlaneseq
        %v4829 = vshrl.u32 %v4828, 7
        %v4830 = vsub.s32 0, %v4829
        %v4831 = vrot.slane %v4792, %v4830
        %v4832 = vlaneseq
        %v4833 = vshrl.u32 %v4832, 7
        %v4834 = vsub.s32 0, %v4833
        %v4835 = vrot.slane %v4793, %v4834
        %v4836 = vlaneseq
        %v4837 = vshrl.u32 %v4836, 7
        %v4838 = vsub.s32 0, %v4837
        %v4839 = vrot.slane %v4794, %v4838
        %v4840 = vlaneseq
        %v4841 = vshrl.u32 %v4840, 7
        %v4842 = vsub.s32 0, %v4841
        %v4843 = vrot.slane %v4795, %v4842
        %v4844 = vlaneseq
        %v4845 = vshrl.u32 %v4844, 7
        %v4846 = vsub.s32 0, %v4845
        %v4847 = vrot.slane %v4796, %v4846
        %v4848 = vlaneseq
        %v4849 = vshrl.u32 %v4848, 7
        %v4850 = vsub.s32 0, %v4849
        %v4851 = vrot.slane %v4797, %v4850
        %v4852 = vlaneseq
        %v4853 = vshrl.u32 %v4852, 7
        %v4854 = vsub.s32 0, %v4853
        %v4855 = vrot.slane %v4798, %v4854
        %v4856 = vlaneseq
        %v4857 = vshrl.u32 %v4856, 7
        %v4858 = vsub.s32 0, %v4857
        %v4859 = vrot.slane %v4799, %v4858
        %v4873 = vsel %vm730, %v4729, 0
        %4875 = vmatprep.subr.mxu0 0.0
        %4876 = vmatpush1.msra.mxu0 %v4739
        %4877 = vmatprep.subr.mxu0 0.0
        %4878 = vmatpush1.msra.mxu0 %v4740
        %4879 = vmatprep.subr.mxu0 0.0
        %4880 = vmatpush1.msra.mxu0 %v4741
        %4881 = vmatprep.subr.mxu0 0.0
        %4882 = vmatpush1.msra.mxu0 %v4742
        %4883 = vmatprep.subr.mxu0 0.0
        %4884 = vmatpush1.msra.mxu0 0.0
        %4885 = vmatprep.subr.mxu0 0.0
        %4886 = vmatpush1.msra.mxu0 0.0
        %4887 = vmatprep.subr.mxu0 0.0
        %4888 = vmatpush1.msra.mxu0 0.0
        %4889 = vmatprep.subr.mxu0 0.0
        %4890 = vmatpush1.msra.mxu0 0.0
        %4891 = vmatprep.subr.mxu0 0.0
        %4892 = vmatpush1.msra.mxu0 0.0
        %4893 = vmatprep.subr.mxu0 0.0
        %4894 = vmatpush1.msra.mxu0 0.0
        %4895 = vmatprep.subr.mxu0 0.0
        %4896 = vmatpush1.msra.mxu0 0.0
        %4897 = vmatprep.subr.mxu0 0.0
        %4898 = vmatpush1.msra.mxu0 0.0
        %4899 = vmatprep.subr.mxu0 0.0
        %4900 = vmatpush1.msra.mxu0 0.0
        %4901 = vmatprep.subr.mxu0 0.0
        %4902 = vmatpush1.msra.mxu0 0.0
        %4903 = vmatprep.subr.mxu0 0.0
        %4904 = vmatpush1.msra.mxu0 0.0
        %4905 = vmatprep.subr.mxu0 0.0
        %4906 = vmatpush1.msra.mxu0 0.0
        %4907 = vmatprep.subr.mxu0 0.0
        %4908 = vmatpush1.msra.mxu0 0.0
        %4909 = vmatprep.subr.mxu0 0.0
        %4910 = vmatpush1.msra.mxu0 0.0
        %4911 = vmatprep.subr.mxu0 0.0
        %4912 = vmatpush1.msra.mxu0 0.0
        %4913 = vmatprep.subr.mxu0 0.0
        %4914 = vmatpush1.msra.mxu0 0.0
        %4915 = vmatprep.subr.mxu0 0.0
        %4916 = vmatpush1.msra.mxu0 0.0
        %4917 = vmatprep.subr.mxu0 0.0
        %4918 = vmatpush1.msra.mxu0 0.0
        %4919 = vmatprep.subr.mxu0 0.0
        %4920 = vmatpush1.msra.mxu0 0.0
        %4921 = vmatprep.subr.mxu0 0.0
        %4922 = vmatpush1.msra.mxu0 0.0
        %4923 = vmatprep.subr.mxu0 0.0
        %4924 = vmatpush1.msra.mxu0 0.0
        %4925 = vmatprep.subr.mxu0 0.0
        %4926 = vmatpush1.msra.mxu0 0.0
        %4927 = vmatprep.subr.mxu0 0.0
        %4928 = vmatpush1.msra.mxu0 0.0
        %4929 = vmatprep.subr.mxu0 0.0
        %4930 = vmatpush1.msra.mxu0 0.0
        %4931 = vmatprep.subr.mxu0 0.0
        %4932 = vmatpush1.msra.mxu0 0.0
        %4933 = vmatprep.subr.mxu0 0.0
        %4934 = vmatpush1.msra.mxu0 0.0
        %4935 = vmatprep.subr.mxu0 0.0
        %4936 = vmatpush1.msra.mxu0 0.0
        %4937 = vmatprep.subr.mxu0 0.0
        %4938 = vmatpush1.msra.mxu0 0.0
        %4939 = vmatprep.mubr.f32.mxu0 0.0
        %4940 = vmatmul.mubr.f32.gmra.mrb[0].mxu0 %v4873
        %v4941 = vpop.f32.mrb[0].mxu0
        %v4942 = vadd.f32 %v4815, %v4941
        %v4943 = vpop.f32.mrb[0].mxu0
        %4944 = vdwg.mxu0
        %4945 = vmatprep.subr.mxu0 0.0
        %4946 = vmatpush1.msra.mxu0 %v4743
        %4947 = vmatprep.subr.mxu0 0.0
        %4948 = vmatpush1.msra.mxu0 %v4744
        %4949 = vmatprep.subr.mxu0 0.0
        %4950 = vmatpush1.msra.mxu0 %v4745
        %4951 = vmatprep.subr.mxu0 0.0
        %4952 = vmatpush1.msra.mxu0 %v4746
        %4953 = vmatprep.subr.mxu0 0.0
        %4954 = vmatpush1.msra.mxu0 0.0
        %4955 = vmatprep.subr.mxu0 0.0
        %4956 = vmatpush1.msra.mxu0 0.0
        %4957 = vmatprep.subr.mxu0 0.0
        %4958 = vmatpush1.msra.mxu0 0.0
        %4959 = vmatprep.subr.mxu0 0.0
        %4960 = vmatpush1.msra.mxu0 0.0
        %4961 = vmatprep.subr.mxu0 0.0
        %4962 = vmatpush1.msra.mxu0 0.0
        %4963 = vmatprep.subr.mxu0 0.0
        %4964 = vmatpush1.msra.mxu0 0.0
        %4965 = vmatprep.subr.mxu0 0.0
        %4966 = vmatpush1.msra.mxu0 0.0
        %4967 = vmatprep.subr.mxu0 0.0
        %4968 = vmatpush1.msra.mxu0 0.0
        %4969 = vmatprep.subr.mxu0 0.0
        %4970 = vmatpush1.msra.mxu0 0.0
        %4971 = vmatprep.subr.mxu0 0.0
        %4972 = vmatpush1.msra.mxu0 0.0
        %4973 = vmatprep.subr.mxu0 0.0
        %4974 = vmatpush1.msra.mxu0 0.0
        %4975 = vmatprep.subr.mxu0 0.0
        %4976 = vmatpush1.msra.mxu0 0.0
        %4977 = vmatprep.subr.mxu0 0.0
        %4978 = vmatpush1.msra.mxu0 0.0
        %4979 = vmatprep.subr.mxu0 0.0
        %4980 = vmatpush1.msra.mxu0 0.0
        %4981 = vmatprep.subr.mxu0 0.0
        %4982 = vmatpush1.msra.mxu0 0.0
        %4983 = vmatprep.subr.mxu0 0.0
        %4984 = vmatpush1.msra.mxu0 0.0
        %4985 = vmatprep.subr.mxu0 0.0
        %4986 = vmatpush1.msra.mxu0 0.0
        %4987 = vmatprep.subr.mxu0 0.0
        %4988 = vmatpush1.msra.mxu0 0.0
        %4989 = vmatprep.subr.mxu0 0.0
        %4990 = vmatpush1.msra.mxu0 0.0
        %4991 = vmatprep.subr.mxu0 0.0
        %4992 = vmatpush1.msra.mxu0 0.0
        %4993 = vmatprep.subr.mxu0 0.0
        %4994 = vmatpush1.msra.mxu0 0.0
        %4995 = vmatprep.subr.mxu0 0.0
        %4996 = vmatpush1.msra.mxu0 0.0
        %4997 = vmatprep.subr.mxu0 0.0
        %4998 = vmatpush1.msra.mxu0 0.0
        %4999 = vmatprep.subr.mxu0 0.0
        %5000 = vmatpush1.msra.mxu0 0.0
        %5001 = vmatprep.subr.mxu0 0.0
        %5002 = vmatpush1.msra.mxu0 0.0
        %5003 = vmatprep.subr.mxu0 0.0
        %5004 = vmatpush1.msra.mxu0 0.0
        %5005 = vmatprep.subr.mxu0 0.0
        %5006 = vmatpush1.msra.mxu0 0.0
        %5007 = vmatprep.subr.mxu0 0.0
        %5008 = vmatpush1.msra.mxu0 0.0
        %5009 = vmatprep.mubr.f32.mxu0 0.0
        %5010 = vmatmul.mubr.f32.gmra.mrb[0].mxu0 %v4873
        %v5011 = vpop.f32.mrb[0].mxu0
        %v5012 = vadd.f32 %v4819, %v5011
        %v5013 = vpop.f32.mrb[0].mxu0
        %5014 = vdwg.mxu0
        %5015 = vmatprep.subr.mxu0 0.0
        %5016 = vmatpush1.msra.mxu0 %v4747
        %5017 = vmatprep.subr.mxu0 0.0
        %5018 = vmatpush1.msra.mxu0 %v4748
        %5019 = vmatprep.subr.mxu0 0.0
        %5020 = vmatpush1.msra.mxu0 %v4749
        %5021 = vmatprep.subr.mxu0 0.0
        %5022 = vmatpush1.msra.mxu0 %v4750
        %5023 = vmatprep.subr.mxu0 0.0
        %5024 = vmatpush1.msra.mxu0 0.0
        %5025 = vmatprep.subr.mxu0 0.0
        %5026 = vmatpush1.msra.mxu0 0.0
        %5027 = vmatprep.subr.mxu0 0.0
        %5028 = vmatpush1.msra.mxu0 0.0
        %5029 = vmatprep.subr.mxu0 0.0
        %5030 = vmatpush1.msra.mxu0 0.0
        %5031 = vmatprep.subr.mxu0 0.0
        %5032 = vmatpush1.msra.mxu0 0.0
        %5033 = vmatprep.subr.mxu0 0.0
        %5034 = vmatpush1.msra.mxu0 0.0
        %5035 = vmatprep.subr.mxu0 0.0
        %5036 = vmatpush1.msra.mxu0 0.0
        %5037 = vmatprep.subr.mxu0 0.0
        %5038 = vmatpush1.msra.mxu0 0.0
        %5039 = vmatprep.subr.mxu0 0.0
        %5040 = vmatpush1.msra.mxu0 0.0
        %5041 = vmatprep.subr.mxu0 0.0
        %5042 = vmatpush1.msra.mxu0 0.0
        %5043 = vmatprep.subr.mxu0 0.0
        %5044 = vmatpush1.msra.mxu0 0.0
        %5045 = vmatprep.subr.mxu0 0.0
        %5046 = vmatpush1.msra.mxu0 0.0
        %5047 = vmatprep.subr.mxu0 0.0
        %5048 = vmatpush1.msra.mxu0 0.0
        %5049 = vmatprep.subr.mxu0 0.0
        %5050 = vmatpush1.msra.mxu0 0.0
        %5051 = vmatprep.subr.mxu0 0.0
        %5052 = vmatpush1.msra.mxu0 0.0
        %5053 = vmatprep.subr.mxu0 0.0
        %5054 = vmatpush1.msra.mxu0 0.0
        %5055 = vmatprep.subr.mxu0 0.0
        %5056 = vmatpush1.msra.mxu0 0.0
        %5057 = vmatprep.subr.mxu0 0.0
        %5058 = vmatpush1.msra.mxu0 0.0
        %5059 = vmatprep.subr.mxu0 0.0
        %5060 = vmatpush1.msra.mxu0 0.0
        %5061 = vmatprep.subr.mxu0 0.0
        %5062 = vmatpush1.msra.mxu0 0.0
        %5063 = vmatprep.subr.mxu0 0.0
        %5064 = vmatpush1.msra.mxu0 0.0
        %5065 = vmatprep.subr.mxu0 0.0
        %5066 = vmatpush1.msra.mxu0 0.0
        %5067 = vmatprep.subr.mxu0 0.0
        %5068 = vmatpush1.msra.mxu0 0.0
        %5069 = vmatprep.subr.mxu0 0.0
        %5070 = vmatpush1.msra.mxu0 0.0
        %5071 = vmatprep.subr.mxu0 0.0
        %5072 = vmatpush1.msra.mxu0 0.0
        %5073 = vmatprep.subr.mxu0 0.0
        %5074 = vmatpush1.msra.mxu0 0.0
        %5075 = vmatprep.subr.mxu0 0.0
        %5076 = vmatpush1.msra.mxu0 0.0
        %5077 = vmatprep.subr.mxu0 0.0
        %5078 = vmatpush1.msra.mxu0 0.0
        %5079 = vmatprep.mubr.f32.mxu0 0.0
        %5080 = vmatmul.mubr.f32.gmra.mrb[0].mxu0 %v4873
        %v5081 = vpop.f32.mrb[0].mxu0
        %v5082 = vadd.f32 %v4823, %v5081
        %v5083 = vpop.f32.mrb[0].mxu0
        %5084 = vdwg.mxu0
        %5085 = vmatprep.subr.mxu0 0.0
        %5086 = vmatpush1.msra.mxu0 %v4751
        %5087 = vmatprep.subr.mxu0 0.0
        %5088 = vmatpush1.msra.mxu0 %v4752
        %5089 = vmatprep.subr.mxu0 0.0
        %5090 = vmatpush1.msra.mxu0 %v4753
        %5091 = vmatprep.subr.mxu0 0.0
        %5092 = vmatpush1.msra.mxu0 %v4754
        %5093 = vmatprep.subr.mxu0 0.0
        %5094 = vmatpush1.msra.mxu0 0.0
        %5095 = vmatprep.subr.mxu0 0.0
        %5096 = vmatpush1.msra.mxu0 0.0
        %5097 = vmatprep.subr.mxu0 0.0
        %5098 = vmatpush1.msra.mxu0 0.0
        %5099 = vmatprep.subr.mxu0 0.0
        %5100 = vmatpush1.msra.mxu0 0.0
        %5101 = vmatprep.subr.mxu0 0.0
        %5102 = vmatpush1.msra.mxu0 0.0
        %5103 = vmatprep.subr.mxu0 0.0
        %5104 = vmatpush1.msra.mxu0 0.0
        %5105 = vmatprep.subr.mxu0 0.0
        %5106 = vmatpush1.msra.mxu0 0.0
        %5107 = vmatprep.subr.mxu0 0.0
        %5108 = vmatpush1.msra.mxu0 0.0
        %5109 = vmatprep.subr.mxu0 0.0
        %5110 = vmatpush1.msra.mxu0 0.0
        %5111 = vmatprep.subr.mxu0 0.0
        %5112 = vmatpush1.msra.mxu0 0.0
        %5113 = vmatprep.subr.mxu0 0.0
        %5114 = vmatpush1.msra.mxu0 0.0
        %5115 = vmatprep.subr.mxu0 0.0
        %5116 = vmatpush1.msra.mxu0 0.0
        %5117 = vmatprep.subr.mxu0 0.0
        %5118 = vmatpush1.msra.mxu0 0.0
        %5119 = vmatprep.subr.mxu0 0.0
        %5120 = vmatpush1.msra.mxu0 0.0
        %5121 = vmatprep.subr.mxu0 0.0
        %5122 = vmatpush1.msra.mxu0 0.0
        %5123 = vmatprep.subr.mxu0 0.0
        %5124 = vmatpush1.msra.mxu0 0.0
        %5125 = vmatprep.subr.mxu0 0.0
        %5126 = vmatpush1.msra.mxu0 0.0
        %5127 = vmatprep.subr.mxu0 0.0
        %5128 = vmatpush1.msra.mxu0 0.0
        %5129 = vmatprep.subr.mxu0 0.0
        %5130 = vmatpush1.msra.mxu0 0.0
        %5131 = vmatprep.subr.mxu0 0.0
        %5132 = vmatpush1.msra.mxu0 0.0
        %5133 = vmatprep.subr.mxu0 0.0
        %5134 = vmatpush1.msra.mxu0 0.0
        %5135 = vmatprep.subr.mxu0 0.0
        %5136 = vmatpush1.msra.mxu0 0.0
        %5137 = vmatprep.subr.mxu0 0.0
        %5138 = vmatpush1.msra.mxu0 0.0
        %5139 = vmatprep.subr.mxu0 0.0
        %5140 = vmatpush1.msra.mxu0 0.0
        %5141 = vmatprep.subr.mxu0 0.0
        %5142 = vmatpush1.msra.mxu0 0.0
        %5143 = vmatprep.subr.mxu0 0.0
        %5144 = vmatpush1.msra.mxu0 0.0
        %5145 = vmatprep.subr.mxu0 0.0
        %5146 = vmatpush1.msra.mxu0 0.0
        %5147 = vmatprep.subr.mxu0 0.0
        %5148 = vmatpush1.msra.mxu0 0.0
        %5149 = vmatprep.mubr.f32.mxu0 0.0
        %5150 = vmatmul.mubr.f32.gmra.mrb[0].mxu0 %v4873
        %v5151 = vpop.f32.mrb[0].mxu0
        %v5152 = vadd.f32 %v4827, %v5151
        %v5153 = vpop.f32.mrb[0].mxu0
        %5154 = vdwg.mxu0
        %5155 = vmatprep.subr.mxu0 0.0
        %5156 = vmatpush1.msra.mxu0 %v4755
        %5157 = vmatprep.subr.mxu0 0.0
        %5158 = vmatpush1.msra.mxu0 %v4756
        %5159 = vmatprep.subr.mxu0 0.0
        %5160 = vmatpush1.msra.mxu0 %v4757
        %5161 = vmatprep.subr.mxu0 0.0
        %5162 = vmatpush1.msra.mxu0 %v4758
        %5163 = vmatprep.subr.mxu0 0.0
        %5164 = vmatpush1.msra.mxu0 0.0
        %5165 = vmatprep.subr.mxu0 0.0
        %5166 = vmatpush1.msra.mxu0 0.0
        %5167 = vmatprep.subr.mxu0 0.0
        %5168 = vmatpush1.msra.mxu0 0.0
        %5169 = vmatprep.subr.mxu0 0.0
        %5170 = vmatpush1.msra.mxu0 0.0
        %5171 = vmatprep.subr.mxu0 0.0
        %5172 = vmatpush1.msra.mxu0 0.0
        %5173 = vmatprep.subr.mxu0 0.0
        %5174 = vmatpush1.msra.mxu0 0.0
        %5175 = vmatprep.subr.mxu0 0.0
        %5176 = vmatpush1.msra.mxu0 0.0
        %5177 = vmatprep.subr.mxu0 0.0
        %5178 = vmatpush1.msra.mxu0 0.0
        %5179 = vmatprep.subr.mxu0 0.0
        %5180 = vmatpush1.msra.mxu0 0.0
        %5181 = vmatprep.subr.mxu0 0.0
        %5182 = vmatpush1.msra.mxu0 0.0
        %5183 = vmatprep.subr.mxu0 0.0
        %5184 = vmatpush1.msra.mxu0 0.0
        %5185 = vmatprep.subr.mxu0 0.0
        %5186 = vmatpush1.msra.mxu0 0.0
        %5187 = vmatprep.subr.mxu0 0.0
        %5188 = vmatpush1.msra.mxu0 0.0
        %5189 = vmatprep.subr.mxu0 0.0
        %5190 = vmatpush1.msra.mxu0 0.0
        %5191 = vmatprep.subr.mxu0 0.0
        %5192 = vmatpush1.msra.mxu0 0.0
        %5193 = vmatprep.subr.mxu0 0.0
        %5194 = vmatpush1.msra.mxu0 0.0
        %5195 = vmatprep.subr.mxu0 0.0
        %5196 = vmatpush1.msra.mxu0 0.0
        %5197 = vmatprep.subr.mxu0 0.0
        %5198 = vmatpush1.msra.mxu0 0.0
        %5199 = vmatprep.subr.mxu0 0.0
        %5200 = vmatpush1.msra.mxu0 0.0
        %5201 = vmatprep.subr.mxu0 0.0
        %5202 = vmatpush1.msra.mxu0 0.0
        %5203 = vmatprep.subr.mxu0 0.0
        %5204 = vmatpush1.msra.mxu0 0.0
        %5205 = vmatprep.subr.mxu0 0.0
        %5206 = vmatpush1.msra.mxu0 0.0
        %5207 = vmatprep.subr.mxu0 0.0
        %5208 = vmatpush1.msra.mxu0 0.0
        %5209 = vmatprep.subr.mxu0 0.0
        %5210 = vmatpush1.msra.mxu0 0.0
        %5211 = vmatprep.subr.mxu0 0.0
        %5212 = vmatpush1.msra.mxu0 0.0
        %5213 = vmatprep.subr.mxu0 0.0
        %5214 = vmatpush1.msra.mxu0 0.0
        %5215 = vmatprep.subr.mxu0 0.0
        %5216 = vmatpush1.msra.mxu0 0.0
        %5217 = vmatprep.subr.mxu0 0.0
        %5218 = vmatpush1.msra.mxu0 0.0
        %5219 = vmatprep.mubr.f32.mxu0 0.0
        %5220 = vmatmul.mubr.f32.gmra.mrb[0].mxu0 %v4873
        %v5221 = vpop.f32.mrb[0].mxu0
        %v5222 = vadd.f32 %v4831, %v5221
        %v5223 = vpop.f32.mrb[0].mxu0
        %5224 = vdwg.mxu0
        %5225 = vmatprep.subr.mxu0 0.0
        %5226 = vmatpush1.msra.mxu0 %v4759
        %5227 = vmatprep.subr.mxu0 0.0
        %5228 = vmatpush1.msra.mxu0 %v4760
        %5229 = vmatprep.subr.mxu0 0.0
        %5230 = vmatpush1.msra.mxu0 %v4761
        %5231 = vmatprep.subr.mxu0 0.0
        %5232 = vmatpush1.msra.mxu0 %v4762
        %5233 = vmatprep.subr.mxu0 0.0
        %5234 = vmatpush1.msra.mxu0 0.0
        %5235 = vmatprep.subr.mxu0 0.0
        %5236 = vmatpush1.msra.mxu0 0.0
        %5237 = vmatprep.subr.mxu0 0.0
        %5238 = vmatpush1.msra.mxu0 0.0
        %5239 = vmatprep.subr.mxu0 0.0
        %5240 = vmatpush1.msra.mxu0 0.0
        %5241 = vmatprep.subr.mxu0 0.0
        %5242 = vmatpush1.msra.mxu0 0.0
        %5243 = vmatprep.subr.mxu0 0.0
        %5244 = vmatpush1.msra.mxu0 0.0
        %5245 = vmatprep.subr.mxu0 0.0
        %5246 = vmatpush1.msra.mxu0 0.0
        %5247 = vmatprep.subr.mxu0 0.0
        %5248 = vmatpush1.msra.mxu0 0.0
        %5249 = vmatprep.subr.mxu0 0.0
        %5250 = vmatpush1.msra.mxu0 0.0
        %5251 = vmatprep.subr.mxu0 0.0
        %5252 = vmatpush1.msra.mxu0 0.0
        %5253 = vmatprep.subr.mxu0 0.0
        %5254 = vmatpush1.msra.mxu0 0.0
        %5255 = vmatprep.subr.mxu0 0.0
        %5256 = vmatpush1.msra.mxu0 0.0
        %5257 = vmatprep.subr.mxu0 0.0
        %5258 = vmatpush1.msra.mxu0 0.0
        %5259 = vmatprep.subr.mxu0 0.0
        %5260 = vmatpush1.msra.mxu0 0.0
        %5261 = vmatprep.subr.mxu0 0.0
        %5262 = vmatpush1.msra.mxu0 0.0
        %5263 = vmatprep.subr.mxu0 0.0
        %5264 = vmatpush1.msra.mxu0 0.0
        %5265 = vmatprep.subr.mxu0 0.0
        %5266 = vmatpush1.msra.mxu0 0.0
        %5267 = vmatprep.subr.mxu0 0.0
        %5268 = vmatpush1.msra.mxu0 0.0
        %5269 = vmatprep.subr.mxu0 0.0
        %5270 = vmatpush1.msra.mxu0 0.0
        %5271 = vmatprep.subr.mxu0 0.0
        %5272 = vmatpush1.msra.mxu0 0.0
        %5273 = vmatprep.subr.mxu0 0.0
        %5274 = vmatpush1.msra.mxu0 0.0
        %5275 = vmatprep.subr.mxu0 0.0
        %5276 = vmatpush1.msra.mxu0 0.0
        %5277 = vmatprep.subr.mxu0 0.0
        %5278 = vmatpush1.msra.mxu0 0.0
        %5279 = vmatprep.subr.mxu0 0.0
        %5280 = vmatpush1.msra.mxu0 0.0
        %5281 = vmatprep.subr.mxu0 0.0
        %5282 = vmatpush1.msra.mxu0 0.0
        %5283 = vmatprep.subr.mxu0 0.0
        %5284 = vmatpush1.msra.mxu0 0.0
        %5285 = vmatprep.subr.mxu0 0.0
        %5286 = vmatpush1.msra.mxu0 0.0
        %5287 = vmatprep.subr.mxu0 0.0
        %5288 = vmatpush1.msra.mxu0 0.0
        %5289 = vmatprep.mubr.f32.mxu0 0.0
        %5290 = vmatmul.mubr.f32.gmra.mrb[0].mxu0 %v4873
        %v5291 = vpop.f32.mrb[0].mxu0
        %v5292 = vadd.f32 %v4835, %v5291
        %v5293 = vpop.f32.mrb[0].mxu0
        %5294 = vdwg.mxu0
        %5295 = vmatprep.subr.mxu0 0.0
        %5296 = vmatpush1.msra.mxu0 %v4763
        %5297 = vmatprep.subr.mxu0 0.0
        %5298 = vmatpush1.msra.mxu0 %v4764
        %5299 = vmatprep.subr.mxu0 0.0
        %5300 = vmatpush1.msra.mxu0 %v4765
        %5301 = vmatprep.subr.mxu0 0.0
        %5302 = vmatpush1.msra.mxu0 %v4766
        %5303 = vmatprep.subr.mxu0 0.0
        %5304 = vmatpush1.msra.mxu0 0.0
        %5305 = vmatprep.subr.mxu0 0.0
        %5306 = vmatpush1.msra.mxu0 0.0
        %5307 = vmatprep.subr.mxu0 0.0
        %5308 = vmatpush1.msra.mxu0 0.0
        %5309 = vmatprep.subr.mxu0 0.0
        %5310 = vmatpush1.msra.mxu0 0.0
        %5311 = vmatprep.subr.mxu0 0.0
        %5312 = vmatpush1.msra.mxu0 0.0
        %5313 = vmatprep.subr.mxu0 0.0
        %5314 = vmatpush1.msra.mxu0 0.0
        %5315 = vmatprep.subr.mxu0 0.0
        %5316 = vmatpush1.msra.mxu0 0.0
        %5317 = vmatprep.subr.mxu0 0.0
        %5318 = vmatpush1.msra.mxu0 0.0
        %5319 = vmatprep.subr.mxu0 0.0
        %5320 = vmatpush1.msra.mxu0 0.0
        %5321 = vmatprep.subr.mxu0 0.0
        %5322 = vmatpush1.msra.mxu0 0.0
        %5323 = vmatprep.subr.mxu0 0.0
        %5324 = vmatpush1.msra.mxu0 0.0
        %5325 = vmatprep.subr.mxu0 0.0
        %5326 = vmatpush1.msra.mxu0 0.0
        %5327 = vmatprep.subr.mxu0 0.0
        %5328 = vmatpush1.msra.mxu0 0.0
        %5329 = vmatprep.subr.mxu0 0.0
        %5330 = vmatpush1.msra.mxu0 0.0
        %5331 = vmatprep.subr.mxu0 0.0
        %5332 = vmatpush1.msra.mxu0 0.0
        %5333 = vmatprep.subr.mxu0 0.0
        %5334 = vmatpush1.msra.mxu0 0.0
        %5335 = vmatprep.subr.mxu0 0.0
        %5336 = vmatpush1.msra.mxu0 0.0
        %5337 = vmatprep.subr.mxu0 0.0
        %5338 = vmatpush1.msra.mxu0 0.0
        %5339 = vmatprep.subr.mxu0 0.0
        %5340 = vmatpush1.msra.mxu0 0.0
        %5341 = vmatprep.subr.mxu0 0.0
        %5342 = vmatpush1.msra.mxu0 0.0
        %5343 = vmatprep.subr.mxu0 0.0
        %5344 = vmatpush1.msra.mxu0 0.0
        %5345 = vmatprep.subr.mxu0 0.0
        %5346 = vmatpush1.msra.mxu0 0.0
        %5347 = vmatprep.subr.mxu0 0.0
        %5348 = vmatpush1.msra.mxu0 0.0
        %5349 = vmatprep.subr.mxu0 0.0
        %5350 = vmatpush1.msra.mxu0 0.0
        %5351 = vmatprep.subr.mxu0 0.0
        %5352 = vmatpush1.msra.mxu0 0.0
        %5353 = vmatprep.subr.mxu0 0.0
        %5354 = vmatpush1.msra.mxu0 0.0
        %5355 = vmatprep.subr.mxu0 0.0
        %5356 = vmatpush1.msra.mxu0 0.0
        %5357 = vmatprep.subr.mxu0 0.0
        %5358 = vmatpush1.msra.mxu0 0.0
        %5359 = vmatprep.mubr.f32.mxu0 0.0
        %5360 = vmatmul.mubr.f32.gmra.mrb[0].mxu0 %v4873
        %v5361 = vpop.f32.mrb[0].mxu0
        %v5362 = vadd.f32 %v4839, %v5361
        %v5363 = vpop.f32.mrb[0].mxu0
        %5364 = vdwg.mxu0
        %5365 = vmatprep.subr.mxu0 0.0
        %5366 = vmatpush1.msra.mxu0 %v4767
        %5367 = vmatprep.subr.mxu0 0.0
        %5368 = vmatpush1.msra.mxu0 %v4768
        %5369 = vmatprep.subr.mxu0 0.0
        %5370 = vmatpush1.msra.mxu0 %v4769
        %5371 = vmatprep.subr.mxu0 0.0
        %5372 = vmatpush1.msra.mxu0 %v4770
        %5373 = vmatprep.subr.mxu0 0.0
        %5374 = vmatpush1.msra.mxu0 0.0
        %5375 = vmatprep.subr.mxu0 0.0
        %5376 = vmatpush1.msra.mxu0 0.0
        %5377 = vmatprep.subr.mxu0 0.0
        %5378 = vmatpush1.msra.mxu0 0.0
        %5379 = vmatprep.subr.mxu0 0.0
        %5380 = vmatpush1.msra.mxu0 0.0
        %5381 = vmatprep.subr.mxu0 0.0
        %5382 = vmatpush1.msra.mxu0 0.0
        %5383 = vmatprep.subr.mxu0 0.0
        %5384 = vmatpush1.msra.mxu0 0.0
        %5385 = vmatprep.subr.mxu0 0.0
        %5386 = vmatpush1.msra.mxu0 0.0
        %5387 = vmatprep.subr.mxu0 0.0
        %5388 = vmatpush1.msra.mxu0 0.0
        %5389 = vmatprep.subr.mxu0 0.0
        %5390 = vmatpush1.msra.mxu0 0.0
        %5391 = vmatprep.subr.mxu0 0.0
        %5392 = vmatpush1.msra.mxu0 0.0
        %5393 = vmatprep.subr.mxu0 0.0
        %5394 = vmatpush1.msra.mxu0 0.0
        %5395 = vmatprep.subr.mxu0 0.0
        %5396 = vmatpush1.msra.mxu0 0.0
        %5397 = vmatprep.subr.mxu0 0.0
        %5398 = vmatpush1.msra.mxu0 0.0
        %5399 = vmatprep.subr.mxu0 0.0
        %5400 = vmatpush1.msra.mxu0 0.0
        %5401 = vmatprep.subr.mxu0 0.0
        %5402 = vmatpush1.msra.mxu0 0.0
        %5403 = vmatprep.subr.mxu0 0.0
        %5404 = vmatpush1.msra.mxu0 0.0
        %5405 = vmatprep.subr.mxu0 0.0
        %5406 = vmatpush1.msra.mxu0 0.0
        %5407 = vmatprep.subr.mxu0 0.0
        %5408 = vmatpush1.msra.mxu0 0.0
        %5409 = vmatprep.subr.mxu0 0.0
        %5410 = vmatpush1.msra.mxu0 0.0
        %5411 = vmatprep.subr.mxu0 0.0
        %5412 = vmatpush1.msra.mxu0 0.0
        %5413 = vmatprep.subr.mxu0 0.0
        %5414 = vmatpush1.msra.mxu0 0.0
        %5415 = vmatprep.subr.mxu0 0.0
        %5416 = vmatpush1.msra.mxu0 0.0
        %5417 = vmatprep.subr.mxu0 0.0
        %5418 = vmatpush1.msra.mxu0 0.0
        %5419 = vmatprep.subr.mxu0 0.0
        %5420 = vmatpush1.msra.mxu0 0.0
        %5421 = vmatprep.subr.mxu0 0.0
        %5422 = vmatpush1.msra.mxu0 0.0
        %5423 = vmatprep.subr.mxu0 0.0
        %5424 = vmatpush1.msra.mxu0 0.0
        %5425 = vmatprep.subr.mxu0 0.0
        %5426 = vmatpush1.msra.mxu0 0.0
        %5427 = vmatprep.subr.mxu0 0.0
        %5428 = vmatpush1.msra.mxu0 0.0
        %5429 = vmatprep.mubr.f32.mxu0 0.0
        %5430 = vmatmul.mubr.f32.gmra.mrb[0].mxu0 %v4873
        %v5431 = vpop.f32.mrb[0].mxu0
        %v5432 = vadd.f32 %v4843, %v5431
        %v5433 = vpop.f32.mrb[0].mxu0
        %5434 = vdwg.mxu0
        %5435 = vmatprep.subr.mxu0 0.0
        %5436 = vmatpush1.msra.mxu0 %v4771
        %5437 = vmatprep.subr.mxu0 0.0
        %5438 = vmatpush1.msra.mxu0 %v4772
        %5439 = vmatprep.subr.mxu0 0.0
        %5440 = vmatpush1.msra.mxu0 %v4773
        %5441 = vmatprep.subr.mxu0 0.0
        %5442 = vmatpush1.msra.mxu0 %v4774
        %5443 = vmatprep.subr.mxu0 0.0
        %5444 = vmatpush1.msra.mxu0 0.0
        %5445 = vmatprep.subr.mxu0 0.0
        %5446 = vmatpush1.msra.mxu0 0.0
        %5447 = vmatprep.subr.mxu0 0.0
        %5448 = vmatpush1.msra.mxu0 0.0
        %5449 = vmatprep.subr.mxu0 0.0
        %5450 = vmatpush1.msra.mxu0 0.0
        %5451 = vmatprep.subr.mxu0 0.0
        %5452 = vmatpush1.msra.mxu0 0.0
        %5453 = vmatprep.subr.mxu0 0.0
        %5454 = vmatpush1.msra.mxu0 0.0
        %5455 = vmatprep.subr.mxu0 0.0
        %5456 = vmatpush1.msra.mxu0 0.0
        %5457 = vmatprep.subr.mxu0 0.0
        %5458 = vmatpush1.msra.mxu0 0.0
        %5459 = vmatprep.subr.mxu0 0.0
        %5460 = vmatpush1.msra.mxu0 0.0
        %5461 = vmatprep.subr.mxu0 0.0
        %5462 = vmatpush1.msra.mxu0 0.0
        %5463 = vmatprep.subr.mxu0 0.0
        %5464 = vmatpush1.msra.mxu0 0.0
        %5465 = vmatprep.subr.mxu0 0.0
        %5466 = vmatpush1.msra.mxu0 0.0
        %5467 = vmatprep.subr.mxu0 0.0
        %5468 = vmatpush1.msra.mxu0 0.0
        %5469 = vmatprep.subr.mxu0 0.0
        %5470 = vmatpush1.msra.mxu0 0.0
        %5471 = vmatprep.subr.mxu0 0.0
        %5472 = vmatpush1.msra.mxu0 0.0
        %5473 = vmatprep.subr.mxu0 0.0
        %5474 = vmatpush1.msra.mxu0 0.0
        %5475 = vmatprep.subr.mxu0 0.0
        %5476 = vmatpush1.msra.mxu0 0.0
        %5477 = vmatprep.subr.mxu0 0.0
        %5478 = vmatpush1.msra.mxu0 0.0
        %5479 = vmatprep.subr.mxu0 0.0
        %5480 = vmatpush1.msra.mxu0 0.0
        %5481 = vmatprep.subr.mxu0 0.0
        %5482 = vmatpush1.msra.mxu0 0.0
        %5483 = vmatprep.subr.mxu0 0.0
        %5484 = vmatpush1.msra.mxu0 0.0
        %5485 = vmatprep.subr.mxu0 0.0
        %5486 = vmatpush1.msra.mxu0 0.0
        %5487 = vmatprep.subr.mxu0 0.0
        %5488 = vmatpush1.msra.mxu0 0.0
        %5489 = vmatprep.subr.mxu0 0.0
        %5490 = vmatpush1.msra.mxu0 0.0
        %5491 = vmatprep.subr.mxu0 0.0
        %5492 = vmatpush1.msra.mxu0 0.0
        %5493 = vmatprep.subr.mxu0 0.0
        %5494 = vmatpush1.msra.mxu0 0.0
        %5495 = vmatprep.subr.mxu0 0.0
        %5496 = vmatpush1.msra.mxu0 0.0
        %5497 = vmatprep.subr.mxu0 0.0
        %5498 = vmatpush1.msra.mxu0 0.0
        %5499 = vmatprep.mubr.f32.mxu0 0.0
        %5500 = vmatmul.mubr.f32.gmra.mrb[0].mxu0 %v4873
        %v5501 = vpop.f32.mrb[0].mxu0
        %v5502 = vadd.f32 %v4847, %v5501
        %v5503 = vpop.f32.mrb[0].mxu0
        %5504 = vdwg.mxu0
        %5505 = vmatprep.subr.mxu0 0.0
        %5506 = vmatpush1.msra.mxu0 %v4775
        %5507 = vmatprep.subr.mxu0 0.0
        %5508 = vmatpush1.msra.mxu0 %v4776
        %5509 = vmatprep.subr.mxu0 0.0
        %5510 = vmatpush1.msra.mxu0 %v4777
        %5511 = vmatprep.subr.mxu0 0.0
        %5512 = vmatpush1.msra.mxu0 %v4778
        %5513 = vmatprep.subr.mxu0 0.0
        %5514 = vmatpush1.msra.mxu0 0.0
        %5515 = vmatprep.subr.mxu0 0.0
        %5516 = vmatpush1.msra.mxu0 0.0
        %5517 = vmatprep.subr.mxu0 0.0
        %5518 = vmatpush1.msra.mxu0 0.0
        %5519 = vmatprep.subr.mxu0 0.0
        %5520 = vmatpush1.msra.mxu0 0.0
        %5521 = vmatprep.subr.mxu0 0.0
        %5522 = vmatpush1.msra.mxu0 0.0
        %5523 = vmatprep.subr.mxu0 0.0
        %5524 = vmatpush1.msra.mxu0 0.0
        %5525 = vmatprep.subr.mxu0 0.0
        %5526 = vmatpush1.msra.mxu0 0.0
        %5527 = vmatprep.subr.mxu0 0.0
        %5528 = vmatpush1.msra.mxu0 0.0
        %5529 = vmatprep.subr.mxu0 0.0
        %5530 = vmatpush1.msra.mxu0 0.0
        %5531 = vmatprep.subr.mxu0 0.0
        %5532 = vmatpush1.msra.mxu0 0.0
        %5533 = vmatprep.subr.mxu0 0.0
        %5534 = vmatpush1.msra.mxu0 0.0
        %5535 = vmatprep.subr.mxu0 0.0
        %5536 = vmatpush1.msra.mxu0 0.0
        %5537 = vmatprep.subr.mxu0 0.0
        %5538 = vmatpush1.msra.mxu0 0.0
        %5539 = vmatprep.subr.mxu0 0.0
        %5540 = vmatpush1.msra.mxu0 0.0
        %5541 = vmatprep.subr.mxu0 0.0
        %5542 = vmatpush1.msra.mxu0 0.0
        %5543 = vmatprep.subr.mxu0 0.0
        %5544 = vmatpush1.msra.mxu0 0.0
        %5545 = vmatprep.subr.mxu0 0.0
        %5546 = vmatpush1.msra.mxu0 0.0
        %5547 = vmatprep.subr.mxu0 0.0
        %5548 = vmatpush1.msra.mxu0 0.0
        %5549 = vmatprep.subr.mxu0 0.0
        %5550 = vmatpush1.msra.mxu0 0.0
        %5551 = vmatprep.subr.mxu0 0.0
        %5552 = vmatpush1.msra.mxu0 0.0
        %5553 = vmatprep.subr.mxu0 0.0
        %5554 = vmatpush1.msra.mxu0 0.0
        %5555 = vmatprep.subr.mxu0 0.0
        %5556 = vmatpush1.msra.mxu0 0.0
        %5557 = vmatprep.subr.mxu0 0.0
        %5558 = vmatpush1.msra.mxu0 0.0
        %5559 = vmatprep.subr.mxu0 0.0
        %5560 = vmatpush1.msra.mxu0 0.0
        %5561 = vmatprep.subr.mxu0 0.0
        %5562 = vmatpush1.msra.mxu0 0.0
        %5563 = vmatprep.subr.mxu0 0.0
        %5564 = vmatpush1.msra.mxu0 0.0
        %5565 = vmatprep.subr.mxu0 0.0
        %5566 = vmatpush1.msra.mxu0 0.0
        %5567 = vmatprep.subr.mxu0 0.0
        %5568 = vmatpush1.msra.mxu0 0.0
        %5569 = vmatprep.mubr.f32.mxu0 0.0
        %5570 = vmatmul.mubr.f32.gmra.mrb[0].mxu0 %v4873
        %v5571 = vpop.f32.mrb[0].mxu0
        %v5572 = vadd.f32 %v4851, %v5571
        %v5573 = vpop.f32.mrb[0].mxu0
        %5574 = vdwg.mxu0
        %5575 = vmatprep.subr.mxu0 0.0
        %5576 = vmatpush1.msra.mxu0 %v4779
        %5577 = vmatprep.subr.mxu0 0.0
        %5578 = vmatpush1.msra.mxu0 %v4780
        %5579 = vmatprep.subr.mxu0 0.0
        %5580 = vmatpush1.msra.mxu0 %v4781
        %5581 = vmatprep.subr.mxu0 0.0
        %5582 = vmatpush1.msra.mxu0 %v4782
        %5583 = vmatprep.subr.mxu0 0.0
        %5584 = vmatpush1.msra.mxu0 0.0
        %5585 = vmatprep.subr.mxu0 0.0
        %5586 = vmatpush1.msra.mxu0 0.0
        %5587 = vmatprep.subr.mxu0 0.0
        %5588 = vmatpush1.msra.mxu0 0.0
        %5589 = vmatprep.subr.mxu0 0.0
        %5590 = vmatpush1.msra.mxu0 0.0
        %5591 = vmatprep.subr.mxu0 0.0
        %5592 = vmatpush1.msra.mxu0 0.0
        %5593 = vmatprep.subr.mxu0 0.0
        %5594 = vmatpush1.msra.mxu0 0.0
        %5595 = vmatprep.subr.mxu0 0.0
        %5596 = vmatpush1.msra.mxu0 0.0
        %5597 = vmatprep.subr.mxu0 0.0
        %5598 = vmatpush1.msra.mxu0 0.0
        %5599 = vmatprep.subr.mxu0 0.0
        %5600 = vmatpush1.msra.mxu0 0.0
        %5601 = vmatprep.subr.mxu0 0.0
        %5602 = vmatpush1.msra.mxu0 0.0
        %5603 = vmatprep.subr.mxu0 0.0
        %5604 = vmatpush1.msra.mxu0 0.0
        %5605 = vmatprep.subr.mxu0 0.0
        %5606 = vmatpush1.msra.mxu0 0.0
        %5607 = vmatprep.subr.mxu0 0.0
        %5608 = vmatpush1.msra.mxu0 0.0
        %5609 = vmatprep.subr.mxu0 0.0
        %5610 = vmatpush1.msra.mxu0 0.0
        %5611 = vmatprep.subr.mxu0 0.0
        %5612 = vmatpush1.msra.mxu0 0.0
        %5613 = vmatprep.subr.mxu0 0.0
        %5614 = vmatpush1.msra.mxu0 0.0
        %5615 = vmatprep.subr.mxu0 0.0
        %5616 = vmatpush1.msra.mxu0 0.0
        %5617 = vmatprep.subr.mxu0 0.0
        %5618 = vmatpush1.msra.mxu0 0.0
        %5619 = vmatprep.subr.mxu0 0.0
        %5620 = vmatpush1.msra.mxu0 0.0
        %5621 = vmatprep.subr.mxu0 0.0
        %5622 = vmatpush1.msra.mxu0 0.0
        %5623 = vmatprep.subr.mxu0 0.0
        %5624 = vmatpush1.msra.mxu0 0.0
        %5625 = vmatprep.subr.mxu0 0.0
        %5626 = vmatpush1.msra.mxu0 0.0
        %5627 = vmatprep.subr.mxu0 0.0
        %5628 = vmatpush1.msra.mxu0 0.0
        %5629 = vmatprep.subr.mxu0 0.0
        %5630 = vmatpush1.msra.mxu0 0.0
        %5631 = vmatprep.subr.mxu0 0.0
        %5632 = vmatpush1.msra.mxu0 0.0
        %5633 = vmatprep.subr.mxu0 0.0
        %5634 = vmatpush1.msra.mxu0 0.0
        %5635 = vmatprep.subr.mxu0 0.0
        %5636 = vmatpush1.msra.mxu0 0.0
        %5637 = vmatprep.subr.mxu0 0.0
        %5638 = vmatpush1.msra.mxu0 0.0
        %5639 = vmatprep.mubr.f32.mxu0 0.0
        %5640 = vmatmul.mubr.f32.gmra.mrb[0].mxu0 %v4873
        %v5641 = vpop.f32.mrb[0].mxu0
        %v5642 = vadd.f32 %v4855, %v5641
        %v5643 = vpop.f32.mrb[0].mxu0
        %5644 = vdwg.mxu0
        %5645 = vmatprep.subr.mxu0 0.0
        %5646 = vmatpush1.msra.mxu0 %v4783
        %5647 = vmatprep.subr.mxu0 0.0
        %5648 = vmatpush1.msra.mxu0 %v4784
        %5649 = vmatprep.subr.mxu0 0.0
        %5650 = vmatpush1.msra.mxu0 %v4785
        %5651 = vmatprep.subr.mxu0 0.0
        %5652 = vmatpush1.msra.mxu0 %v4786
        %5653 = vmatprep.subr.mxu0 0.0
        %5654 = vmatpush1.msra.mxu0 0.0
        %5655 = vmatprep.subr.mxu0 0.0
        %5656 = vmatpush1.msra.mxu0 0.0
        %5657 = vmatprep.subr.mxu0 0.0
        %5658 = vmatpush1.msra.mxu0 0.0
        %5659 = vmatprep.subr.mxu0 0.0
        %5660 = vmatpush1.msra.mxu0 0.0
        %5661 = vmatprep.subr.mxu0 0.0
        %5662 = vmatpush1.msra.mxu0 0.0
        %5663 = vmatprep.subr.mxu0 0.0
        %5664 = vmatpush1.msra.mxu0 0.0
        %5665 = vmatprep.subr.mxu0 0.0
        %5666 = vmatpush1.msra.mxu0 0.0
        %5667 = vmatprep.subr.mxu0 0.0
        %5668 = vmatpush1.msra.mxu0 0.0
        %5669 = vmatprep.subr.mxu0 0.0
        %5670 = vmatpush1.msra.mxu0 0.0
        %5671 = vmatprep.subr.mxu0 0.0
        %5672 = vmatpush1.msra.mxu0 0.0
        %5673 = vmatprep.subr.mxu0 0.0
        %5674 = vmatpush1.msra.mxu0 0.0
        %5675 = vmatprep.subr.mxu0 0.0
        %5676 = vmatpush1.msra.mxu0 0.0
        %5677 = vmatprep.subr.mxu0 0.0
        %5678 = vmatpush1.msra.mxu0 0.0
        %5679 = vmatprep.subr.mxu0 0.0
        %5680 = vmatpush1.msra.mxu0 0.0
        %5681 = vmatprep.subr.mxu0 0.0
        %5682 = vmatpush1.msra.mxu0 0.0
        %5683 = vmatprep.subr.mxu0 0.0
        %5684 = vmatpush1.msra.mxu0 0.0
        %5685 = vmatprep.subr.mxu0 0.0
        %5686 = vmatpush1.msra.mxu0 0.0
        %5687 = vmatprep.subr.mxu0 0.0
        %5688 = vmatpush1.msra.mxu0 0.0
        %5689 = vmatprep.subr.mxu0 0.0
        %5690 = vmatpush1.msra.mxu0 0.0
        %5691 = vmatprep.subr.mxu0 0.0
        %5692 = vmatpush1.msra.mxu0 0.0
        %5693 = vmatprep.subr.mxu0 0.0
        %5694 = vmatpush1.msra.mxu0 0.0
        %5695 = vmatprep.subr.mxu0 0.0
        %5696 = vmatpush1.msra.mxu0 0.0
        %5697 = vmatprep.subr.mxu0 0.0
        %5698 = vmatpush1.msra.mxu0 0.0
        %5699 = vmatprep.subr.mxu0 0.0
        %5700 = vmatpush1.msra.mxu0 0.0
        %5701 = vmatprep.subr.mxu0 0.0
        %5702 = vmatpush1.msra.mxu0 0.0
        %5703 = vmatprep.subr.mxu0 0.0
        %5704 = vmatpush1.msra.mxu0 0.0
        %5705 = vmatprep.subr.mxu0 0.0
        %5706 = vmatpush1.msra.mxu0 0.0
        %5707 = vmatprep.subr.mxu0 0.0
        %5708 = vmatpush1.msra.mxu0 0.0
        %5709 = vmatprep.mubr.f32.mxu0 0.0
        %5710 = vmatmul.mubr.f32.gmra.mrb[0].mxu0 %v4873
        %v5711 = vpop.f32.mrb[0].mxu0
        %v5712 = vadd.f32 %v4859, %v5711
        %v5713 = vpop.f32.mrb[0].mxu0
        %5714 = vdwg.mxu0
        %s5715 = scalar_lea.vmem %s6, 32
        %v5716 = vld [vmem:[%s5715] sm:$0xff]
        %v5717 = vld [vmem:[%s5715 + $0x8] sm:$0xff]
        %v5718 = vld [vmem:[%s5715 + $0x10] sm:$0xff]
        %v5719 = vld [vmem:[%s5715 + $0x18] sm:$0xff]
        %s5720 = scalar_lea.vmem %s7, 1
        %v5721 = vld [vmem:[%s5720] sm:$0x1]
        %v5723 = vsel %vm1579, %v4942, 0
        %v5726 = vsel %vm1579, %v5222, 0
        %5728 = vmatprep.subr.mxu0 0.0
        %5729 = vmatpush1.xpose.msra.mxu0 %v5726
        %5730 = vmatprep.subr.mxu0 0.0
        %5731 = vmatpush1.xpose.msra.mxu0 0.0
        %5732 = vmatprep.subr.mxu0 0.0
        %5733 = vmatpush1.xpose.msra.mxu0 0.0
        %5734 = vmatprep.subr.mxu0 0.0
        %5735 = vmatpush1.xpose.msra.mxu0 0.0
        %5736 = vmatprep.subr.mxu0 0.0
        %5737 = vmatpush1.xpose.msra.mxu0 0.0
        %5738 = vmatprep.subr.mxu0 0.0
        %5739 = vmatpush1.xpose.msra.mxu0 0.0
        %5740 = vmatprep.subr.mxu0 0.0
        %5741 = vmatpush1.xpose.msra.mxu0 0.0
        %5742 = vmatprep.subr.mxu0 0.0
        %5743 = vmatpush1.xpose.msra.mxu0 0.0
        %5744 = vmatprep.subr.mxu0 0.0
        %5745 = vmatpush1.xpose.msra.mxu0 0.0
        %5746 = vmatprep.subr.mxu0 0.0
        %5747 = vmatpush1.xpose.msra.mxu0 0.0
        %5748 = vmatprep.subr.mxu0 0.0
        %5749 = vmatpush1.xpose.msra.mxu0 0.0
        %5750 = vmatprep.subr.mxu0 0.0
        %5751 = vmatpush1.xpose.msra.mxu0 0.0
        %5752 = vmatprep.subr.mxu0 0.0
        %5753 = vmatpush1.xpose.msra.mxu0 0.0
        %5754 = vmatprep.subr.mxu0 0.0
        %5755 = vmatpush1.xpose.msra.mxu0 0.0
        %5756 = vmatprep.subr.mxu0 0.0
        %5757 = vmatpush1.xpose.msra.mxu0 0.0
        %5758 = vmatprep.subr.mxu0 0.0
        %5759 = vmatpush1.xpose.msra.mxu0 0.0
        %5760 = vmatprep.subr.mxu0 0.0
        %5761 = vmatpush1.xpose.msra.mxu0 0.0
        %5762 = vmatprep.subr.mxu0 0.0
        %5763 = vmatpush1.xpose.msra.mxu0 0.0
        %5764 = vmatprep.subr.mxu0 0.0
        %5765 = vmatpush1.xpose.msra.mxu0 0.0
        %5766 = vmatprep.subr.mxu0 0.0
        %5767 = vmatpush1.xpose.msra.mxu0 0.0
        %5768 = vmatprep.subr.mxu0 0.0
        %5769 = vmatpush1.xpose.msra.mxu0 0.0
        %5770 = vmatprep.subr.mxu0 0.0
        %5771 = vmatpush1.xpose.msra.mxu0 0.0
        %5772 = vmatprep.subr.mxu0 0.0
        %5773 = vmatpush1.xpose.msra.mxu0 0.0
        %5774 = vmatprep.subr.mxu0 0.0
        %5775 = vmatpush1.xpose.msra.mxu0 0.0
        %5776 = vmatprep.subr.mxu0 0.0
        %5777 = vmatpush1.xpose.msra.mxu0 0.0
        %5778 = vmatprep.subr.mxu0 0.0
        %5779 = vmatpush1.xpose.msra.mxu0 0.0
        %5780 = vmatprep.subr.mxu0 0.0
        %5781 = vmatpush1.xpose.msra.mxu0 0.0
        %5782 = vmatprep.subr.mxu0 0.0
        %5783 = vmatpush1.xpose.msra.mxu0 0.0
        %5784 = vmatprep.subr.mxu0 0.0
        %5785 = vmatpush1.xpose.msra.mxu0 0.0
        %5786 = vmatprep.subr.mxu0 0.0
        %5787 = vmatpush1.xpose.msra.mxu0 0.0
        %5788 = vmatprep.subr.mxu0 0.0
        %5789 = vmatpush1.xpose.msra.mxu0 0.0
        %5790 = vmatprep.subr.mxu0 0.0
        %5791 = vmatpush1.xpose.msra.mxu0 0.0
        %5792 = vmatprep.mubr.f32.mxu0 0.0
        %5793 = vmatmul.mubr.f32.gmra.mrb[0].mxu0 %v5723
        %v5794 = vpop.f32.mrb[0].mxu0
        %v5795 = vadd.f32 0.0, %v5794
        %v5796 = vpop.f32.mrb[0].mxu0
        %5797 = vdwg.mxu0
        %v5799 = vsel %vm1579, %v5012, 0
        %v5802 = vsel %vm1579, %v5292, 0
        %5804 = vmatprep.subr.mxu0 0.0
        %5805 = vmatpush1.xpose.msra.mxu0 %v5802
        %5806 = vmatprep.subr.mxu0 0.0
        %5807 = vmatpush1.xpose.msra.mxu0 0.0
        %5808 = vmatprep.subr.mxu0 0.0
        %5809 = vmatpush1.xpose.msra.mxu0 0.0
        %5810 = vmatprep.subr.mxu0 0.0
        %5811 = vmatpush1.xpose.msra.mxu0 0.0
        %5812 = vmatprep.subr.mxu0 0.0
        %5813 = vmatpush1.xpose.msra.mxu0 0.0
        %5814 = vmatprep.subr.mxu0 0.0
        %5815 = vmatpush1.xpose.msra.mxu0 0.0
        %5816 = vmatprep.subr.mxu0 0.0
        %5817 = vmatpush1.xpose.msra.mxu0 0.0
        %5818 = vmatprep.subr.mxu0 0.0
        %5819 = vmatpush1.xpose.msra.mxu0 0.0
        %5820 = vmatprep.subr.mxu0 0.0
        %5821 = vmatpush1.xpose.msra.mxu0 0.0
        %5822 = vmatprep.subr.mxu0 0.0
        %5823 = vmatpush1.xpose.msra.mxu0 0.0
        %5824 = vmatprep.subr.mxu0 0.0
        %5825 = vmatpush1.xpose.msra.mxu0 0.0
        %5826 = vmatprep.subr.mxu0 0.0
        %5827 = vmatpush1.xpose.msra.mxu0 0.0
        %5828 = vmatprep.subr.mxu0 0.0
        %5829 = vmatpush1.xpose.msra.mxu0 0.0
        %5830 = vmatprep.subr.mxu0 0.0
        %5831 = vmatpush1.xpose.msra.mxu0 0.0
        %5832 = vmatprep.subr.mxu0 0.0
        %5833 = vmatpush1.xpose.msra.mxu0 0.0
        %5834 = vmatprep.subr.mxu0 0.0
        %5835 = vmatpush1.xpose.msra.mxu0 0.0
        %5836 = vmatprep.subr.mxu0 0.0
        %5837 = vmatpush1.xpose.msra.mxu0 0.0
        %5838 = vmatprep.subr.mxu0 0.0
        %5839 = vmatpush1.xpose.msra.mxu0 0.0
        %5840 = vmatprep.subr.mxu0 0.0
        %5841 = vmatpush1.xpose.msra.mxu0 0.0
        %5842 = vmatprep.subr.mxu0 0.0
        %5843 = vmatpush1.xpose.msra.mxu0 0.0
        %5844 = vmatprep.subr.mxu0 0.0
        %5845 = vmatpush1.xpose.msra.mxu0 0.0
        %5846 = vmatprep.subr.mxu0 0.0
        %5847 = vmatpush1.xpose.msra.mxu0 0.0
        %5848 = vmatprep.subr.mxu0 0.0
        %5849 = vmatpush1.xpose.msra.mxu0 0.0
        %5850 = vmatprep.subr.mxu0 0.0
        %5851 = vmatpush1.xpose.msra.mxu0 0.0
        %5852 = vmatprep.subr.mxu0 0.0
        %5853 = vmatpush1.xpose.msra.mxu0 0.0
        %5854 = vmatprep.subr.mxu0 0.0
        %5855 = vmatpush1.xpose.msra.mxu0 0.0
        %5856 = vmatprep.subr.mxu0 0.0
        %5857 = vmatpush1.xpose.msra.mxu0 0.0
        %5858 = vmatprep.subr.mxu0 0.0
        %5859 = vmatpush1.xpose.msra.mxu0 0.0
        %5860 = vmatprep.subr.mxu0 0.0
        %5861 = vmatpush1.xpose.msra.mxu0 0.0
        %5862 = vmatprep.subr.mxu0 0.0
        %5863 = vmatpush1.xpose.msra.mxu0 0.0
        %5864 = vmatprep.subr.mxu0 0.0
        %5865 = vmatpush1.xpose.msra.mxu0 0.0
        %5866 = vmatprep.subr.mxu0 0.0
        %5867 = vmatpush1.xpose.msra.mxu0 0.0
        %5868 = vmatprep.mubr.f32.mxu0 0.0
        %5869 = vmatmul.mubr.f32.gmra.mrb[0].mxu0 %v5799
        %v5870 = vpop.f32.mrb[0].mxu0
        %v5871 = vadd.f32 0.0, %v5870
        %v5872 = vpop.f32.mrb[0].mxu0
        %5873 = vdwg.mxu0
        %v5875 = vsel %vm1579, %v5082, 0
        %v5878 = vsel %vm1579, %v5362, 0
        %5880 = vmatprep.subr.mxu0 0.0
        %5881 = vmatpush1.xpose.msra.mxu0 %v5878
        %5882 = vmatprep.subr.mxu0 0.0
        %5883 = vmatpush1.xpose.msra.mxu0 0.0
        %5884 = vmatprep.subr.mxu0 0.0
        %5885 = vmatpush1.xpose.msra.mxu0 0.0
        %5886 = vmatprep.subr.mxu0 0.0
        %5887 = vmatpush1.xpose.msra.mxu0 0.0
        %5888 = vmatprep.subr.mxu0 0.0
        %5889 = vmatpush1.xpose.msra.mxu0 0.0
        %5890 = vmatprep.subr.mxu0 0.0
        %5891 = vmatpush1.xpose.msra.mxu0 0.0
        %5892 = vmatprep.subr.mxu0 0.0
        %5893 = vmatpush1.xpose.msra.mxu0 0.0
        %5894 = vmatprep.subr.mxu0 0.0
        %5895 = vmatpush1.xpose.msra.mxu0 0.0
        %5896 = vmatprep.subr.mxu0 0.0
        %5897 = vmatpush1.xpose.msra.mxu0 0.0
        %5898 = vmatprep.subr.mxu0 0.0
        %5899 = vmatpush1.xpose.msra.mxu0 0.0
        %5900 = vmatprep.subr.mxu0 0.0
        %5901 = vmatpush1.xpose.msra.mxu0 0.0
        %5902 = vmatprep.subr.mxu0 0.0
        %5903 = vmatpush1.xpose.msra.mxu0 0.0
        %5904 = vmatprep.subr.mxu0 0.0
        %5905 = vmatpush1.xpose.msra.mxu0 0.0
        %5906 = vmatprep.subr.mxu0 0.0
        %5907 = vmatpush1.xpose.msra.mxu0 0.0
        %5908 = vmatprep.subr.mxu0 0.0
        %5909 = vmatpush1.xpose.msra.mxu0 0.0
        %5910 = vmatprep.subr.mxu0 0.0
        %5911 = vmatpush1.xpose.msra.mxu0 0.0
        %5912 = vmatprep.subr.mxu0 0.0
        %5913 = vmatpush1.xpose.msra.mxu0 0.0
        %5914 = vmatprep.subr.mxu0 0.0
        %5915 = vmatpush1.xpose.msra.mxu0 0.0
        %5916 = vmatprep.subr.mxu0 0.0
        %5917 = vmatpush1.xpose.msra.mxu0 0.0
        %5918 = vmatprep.subr.mxu0 0.0
        %5919 = vmatpush1.xpose.msra.mxu0 0.0
        %5920 = vmatprep.subr.mxu0 0.0
        %5921 = vmatpush1.xpose.msra.mxu0 0.0
        %5922 = vmatprep.subr.mxu0 0.0
        %5923 = vmatpush1.xpose.msra.mxu0 0.0
        %5924 = vmatprep.subr.mxu0 0.0
        %5925 = vmatpush1.xpose.msra.mxu0 0.0
        %5926 = vmatprep.subr.mxu0 0.0
        %5927 = vmatpush1.xpose.msra.mxu0 0.0
        %5928 = vmatprep.subr.mxu0 0.0
        %5929 = vmatpush1.xpose.msra.mxu0 0.0
        %5930 = vmatprep.subr.mxu0 0.0
        %5931 = vmatpush1.xpose.msra.mxu0 0.0
        %5932 = vmatprep.subr.mxu0 0.0
        %5933 = vmatpush1.xpose.msra.mxu0 0.0
        %5934 = vmatprep.subr.mxu0 0.0
        %5935 = vmatpush1.xpose.msra.mxu0 0.0
        %5936 = vmatprep.subr.mxu0 0.0
        %5937 = vmatpush1.xpose.msra.mxu0 0.0
        %5938 = vmatprep.subr.mxu0 0.0
        %5939 = vmatpush1.xpose.msra.mxu0 0.0
        %5940 = vmatprep.subr.mxu0 0.0
        %5941 = vmatpush1.xpose.msra.mxu0 0.0
        %5942 = vmatprep.subr.mxu0 0.0
        %5943 = vmatpush1.xpose.msra.mxu0 0.0
        %5944 = vmatprep.mubr.f32.mxu0 0.0
        %5945 = vmatmul.mubr.f32.gmra.mrb[0].mxu0 %v5875
        %v5946 = vpop.f32.mrb[0].mxu0
        %v5947 = vadd.f32 0.0, %v5946
        %v5948 = vpop.f32.mrb[0].mxu0
        %5949 = vdwg.mxu0
        %v5951 = vsel %vm1579, %v5152, 0
        %v5954 = vsel %vm1579, %v5432, 0
        %5956 = vmatprep.subr.mxu0 0.0
        %5957 = vmatpush1.xpose.msra.mxu0 %v5954
        %5958 = vmatprep.subr.mxu0 0.0
        %5959 = vmatpush1.xpose.msra.mxu0 0.0
        %5960 = vmatprep.subr.mxu0 0.0
        %5961 = vmatpush1.xpose.msra.mxu0 0.0
        %5962 = vmatprep.subr.mxu0 0.0
        %5963 = vmatpush1.xpose.msra.mxu0 0.0
        %5964 = vmatprep.subr.mxu0 0.0
        %5965 = vmatpush1.xpose.msra.mxu0 0.0
        %5966 = vmatprep.subr.mxu0 0.0
        %5967 = vmatpush1.xpose.msra.mxu0 0.0
        %5968 = vmatprep.subr.mxu0 0.0
        %5969 = vmatpush1.xpose.msra.mxu0 0.0
        %5970 = vmatprep.subr.mxu0 0.0
        %5971 = vmatpush1.xpose.msra.mxu0 0.0
        %5972 = vmatprep.subr.mxu0 0.0
        %5973 = vmatpush1.xpose.msra.mxu0 0.0
        %5974 = vmatprep.subr.mxu0 0.0
        %5975 = vmatpush1.xpose.msra.mxu0 0.0
        %5976 = vmatprep.subr.mxu0 0.0
        %5977 = vmatpush1.xpose.msra.mxu0 0.0
        %5978 = vmatprep.subr.mxu0 0.0
        %5979 = vmatpush1.xpose.msra.mxu0 0.0
        %5980 = vmatprep.subr.mxu0 0.0
        %5981 = vmatpush1.xpose.msra.mxu0 0.0
        %5982 = vmatprep.subr.mxu0 0.0
        %5983 = vmatpush1.xpose.msra.mxu0 0.0
        %5984 = vmatprep.subr.mxu0 0.0
        %5985 = vmatpush1.xpose.msra.mxu0 0.0
        %5986 = vmatprep.subr.mxu0 0.0
        %5987 = vmatpush1.xpose.msra.mxu0 0.0
        %5988 = vmatprep.subr.mxu0 0.0
        %5989 = vmatpush1.xpose.msra.mxu0 0.0
        %5990 = vmatprep.subr.mxu0 0.0
        %5991 = vmatpush1.xpose.msra.mxu0 0.0
        %5992 = vmatprep.subr.mxu0 0.0
        %5993 = vmatpush1.xpose.msra.mxu0 0.0
        %5994 = vmatprep.subr.mxu0 0.0
        %5995 = vmatpush1.xpose.msra.mxu0 0.0
        %5996 = vmatprep.subr.mxu0 0.0
        %5997 = vmatpush1.xpose.msra.mxu0 0.0
        %5998 = vmatprep.subr.mxu0 0.0
        %5999 = vmatpush1.xpose.msra.mxu0 0.0
        %6000 = vmatprep.subr.mxu0 0.0
        %6001 = vmatpush1.xpose.msra.mxu0 0.0
        %6002 = vmatprep.subr.mxu0 0.0
        %6003 = vmatpush1.xpose.msra.mxu0 0.0
        %6004 = vmatprep.subr.mxu0 0.0
        %6005 = vmatpush1.xpose.msra.mxu0 0.0
        %6006 = vmatprep.subr.mxu0 0.0
        %6007 = vmatpush1.xpose.msra.mxu0 0.0
        %6008 = vmatprep.subr.mxu0 0.0
        %6009 = vmatpush1.xpose.msra.mxu0 0.0
        %6010 = vmatprep.subr.mxu0 0.0
        %6011 = vmatpush1.xpose.msra.mxu0 0.0
        %6012 = vmatprep.subr.mxu0 0.0
        %6013 = vmatpush1.xpose.msra.mxu0 0.0
        %6014 = vmatprep.subr.mxu0 0.0
        %6015 = vmatpush1.xpose.msra.mxu0 0.0
        %6016 = vmatprep.subr.mxu0 0.0
        %6017 = vmatpush1.xpose.msra.mxu0 0.0
        %6018 = vmatprep.subr.mxu0 0.0
        %6019 = vmatpush1.xpose.msra.mxu0 0.0
        %6020 = vmatprep.mubr.f32.mxu0 0.0
        %6021 = vmatmul.mubr.f32.gmra.mrb[0].mxu0 %v5951
        %v6022 = vpop.f32.mrb[0].mxu0
        %v6023 = vadd.f32 0.0, %v6022
        %v6024 = vpop.f32.mrb[0].mxu0
        %6025 = vdwg.mxu0
        %v6026 = vmul.f32 %v5795, 0.35355338
        %v6027 = vmul.f32 %v5871, 0.35355338
        %v6028 = vmul.f32 %v5947, 0.35355338
        %v6029 = vmul.f32 %v6023, 0.35355338
        %v6030 = vadd.f32 %v6026, %v590
        %v6031 = vadd.f32 %v6027, %v590
        %v6032 = vadd.f32 %v6028, %v590
        %v6033 = vadd.f32 %v6029, %v590
        %v6034 = vsel %vm1579, %v6030, -inf
        %6035 = vmax.xlane.f32.xlu0 %v6034
        %v6036 = vpop.xlane.xlu0 %6035
        %v6037 = vsel %vm1579, %v6031, -inf
        %6038 = vmax.xlane.f32.xlu0 %v6037
        %v6039 = vpop.xlane.xlu0 %6038
        %v6040 = vsel %vm1579, %v6032, -inf
        %6041 = vmax.xlane.f32.xlu0 %v6040
        %v6042 = vpop.xlane.xlu0 %6041
        %v6043 = vsel %vm1579, %v6033, -inf
        %6044 = vmax.xlane.f32.xlu0 %v6043
        %v6045 = vpop.xlane.xlu0 %6044
        %v6046 = vsub.f32 %v6030, %v6036
        %v6047 = vsub.f32 %v6031, %v6039
        %v6048 = vsub.f32 %v6032, %v6042
        %v6049 = vsub.f32 %v6033, %v6045
        %v6050 = vmul.f32 %v6046, 1.442695
        %v6051 = vpow.pop %v6050
        %v6052 = vmul.f32 %v6047, 1.442695
        %v6053 = vpow.pop %v6052
        %v6054 = vmul.f32 %v6048, 1.442695
        %v6055 = vpow.pop %v6054
        %v6056 = vmul.f32 %v6049, 1.442695
        %v6057 = vpow.pop %v6056
        %v6058 = vsel %vm1579, %v6051, 0.0
        %6059 = vadd.xlane.f32.xlu0 %v6058
        %v6060 = vpop.xlane.xlu0 %6059
        %v6061 = vsel %vm1579, %v6053, 0.0
        %6062 = vadd.xlane.f32.xlu0 %v6061
        %v6063 = vpop.xlane.xlu0 %6062
        %v6064 = vsel %vm1579, %v6055, 0.0
        %6065 = vadd.xlane.f32.xlu0 %v6064
        %v6066 = vpop.xlane.xlu0 %6065
        %v6067 = vsel %vm1579, %v6057, 0.0
        %6068 = vadd.xlane.f32.xlu0 %v6067
        %v6069 = vpop.xlane.xlu0 %6068
        %v6070 = vrcp.pop %v6060
        %v6071 = vrcp.pop %v6063
        %v6072 = vrcp.pop %v6066
        %v6073 = vrcp.pop %v6069
        %v6074 = vmul.f32 %v6051, %v6070
        %v6075 = vmul.f32 %v6053, %v6071
        %v6076 = vmul.f32 %v6055, %v6072
        %v6077 = vmul.f32 %v6057, %v6073
        %v6079 = vsel %vm1579, %v6074, 0
        %6081 = vmatprep.subr.mxu0 0.0
        %6082 = vmatpush1.msra.mxu0 %v5502
        %6083 = vmatprep.subr.mxu0 0.0
        %6084 = vmatpush1.msra.mxu0 0.0
        %6085 = vmatprep.subr.mxu0 0.0
        %6086 = vmatpush1.msra.mxu0 0.0
        %6087 = vmatprep.subr.mxu0 0.0
        %6088 = vmatpush1.msra.mxu0 0.0
        %6089 = vmatprep.subr.mxu0 0.0
        %6090 = vmatpush1.msra.mxu0 0.0
        %6091 = vmatprep.subr.mxu0 0.0
        %6092 = vmatpush1.msra.mxu0 0.0
        %6093 = vmatprep.subr.mxu0 0.0
        %6094 = vmatpush1.msra.mxu0 0.0
        %6095 = vmatprep.subr.mxu0 0.0
        %6096 = vmatpush1.msra.mxu0 0.0
        %6097 = vmatprep.subr.mxu0 0.0
        %6098 = vmatpush1.msra.mxu0 0.0
        %6099 = vmatprep.subr.mxu0 0.0
        %6100 = vmatpush1.msra.mxu0 0.0
        %6101 = vmatprep.subr.mxu0 0.0
        %6102 = vmatpush1.msra.mxu0 0.0
        %6103 = vmatprep.subr.mxu0 0.0
        %6104 = vmatpush1.msra.mxu0 0.0
        %6105 = vmatprep.subr.mxu0 0.0
        %6106 = vmatpush1.msra.mxu0 0.0
        %6107 = vmatprep.subr.mxu0 0.0
        %6108 = vmatpush1.msra.mxu0 0.0
        %6109 = vmatprep.subr.mxu0 0.0
        %6110 = vmatpush1.msra.mxu0 0.0
        %6111 = vmatprep.subr.mxu0 0.0
        %6112 = vmatpush1.msra.mxu0 0.0
        %6113 = vmatprep.subr.mxu0 0.0
        %6114 = vmatpush1.msra.mxu0 0.0
        %6115 = vmatprep.subr.mxu0 0.0
        %6116 = vmatpush1.msra.mxu0 0.0
        %6117 = vmatprep.subr.mxu0 0.0
        %6118 = vmatpush1.msra.mxu0 0.0
        %6119 = vmatprep.subr.mxu0 0.0
        %6120 = vmatpush1.msra.mxu0 0.0
        %6121 = vmatprep.subr.mxu0 0.0
        %6122 = vmatpush1.msra.mxu0 0.0
        %6123 = vmatprep.subr.mxu0 0.0
        %6124 = vmatpush1.msra.mxu0 0.0
        %6125 = vmatprep.subr.mxu0 0.0
        %6126 = vmatpush1.msra.mxu0 0.0
        %6127 = vmatprep.subr.mxu0 0.0
        %6128 = vmatpush1.msra.mxu0 0.0
        %6129 = vmatprep.subr.mxu0 0.0
        %6130 = vmatpush1.msra.mxu0 0.0
        %6131 = vmatprep.subr.mxu0 0.0
        %6132 = vmatpush1.msra.mxu0 0.0
        %6133 = vmatprep.subr.mxu0 0.0
        %6134 = vmatpush1.msra.mxu0 0.0
        %6135 = vmatprep.subr.mxu0 0.0
        %6136 = vmatpush1.msra.mxu0 0.0
        %6137 = vmatprep.subr.mxu0 0.0
        %6138 = vmatpush1.msra.mxu0 0.0
        %6139 = vmatprep.subr.mxu0 0.0
        %6140 = vmatpush1.msra.mxu0 0.0
        %6141 = vmatprep.subr.mxu0 0.0
        %6142 = vmatpush1.msra.mxu0 0.0
        %6143 = vmatprep.subr.mxu0 0.0
        %6144 = vmatpush1.msra.mxu0 0.0
        %6145 = vmatprep.mubr.f32.mxu0 0.0
        %6146 = vmatmul.mubr.f32.gmra.mrb[0].mxu0 %v6079
        %v6147 = vpop.f32.mrb[0].mxu0
        %v6148 = vadd.f32 0.0, %v6147
        %v6149 = vpop.f32.mrb[0].mxu0
        %6150 = vdwg.mxu0
        %v6152 = vsel %vm1579, %v6075, 0
        %6154 = vmatprep.subr.mxu0 0.0
        %6155 = vmatpush1.msra.mxu0 %v5572
        %6156 = vmatprep.subr.mxu0 0.0
        %6157 = vmatpush1.msra.mxu0 0.0
        %6158 = vmatprep.subr.mxu0 0.0
        %6159 = vmatpush1.msra.mxu0 0.0
        %6160 = vmatprep.subr.mxu0 0.0
        %6161 = vmatpush1.msra.mxu0 0.0
        %6162 = vmatprep.subr.mxu0 0.0
        %6163 = vmatpush1.msra.mxu0 0.0
        %6164 = vmatprep.subr.mxu0 0.0
        %6165 = vmatpush1.msra.mxu0 0.0
        %6166 = vmatprep.subr.mxu0 0.0
        %6167 = vmatpush1.msra.mxu0 0.0
        %6168 = vmatprep.subr.mxu0 0.0
        %6169 = vmatpush1.msra.mxu0 0.0
        %6170 = vmatprep.subr.mxu0 0.0
        %6171 = vmatpush1.msra.mxu0 0.0
        %6172 = vmatprep.subr.mxu0 0.0
        %6173 = vmatpush1.msra.mxu0 0.0
        %6174 = vmatprep.subr.mxu0 0.0
        %6175 = vmatpush1.msra.mxu0 0.0
        %6176 = vmatprep.subr.mxu0 0.0
        %6177 = vmatpush1.msra.mxu0 0.0
        %6178 = vmatprep.subr.mxu0 0.0
        %6179 = vmatpush1.msra.mxu0 0.0
        %6180 = vmatprep.subr.mxu0 0.0
        %6181 = vmatpush1.msra.mxu0 0.0
        %6182 = vmatprep.subr.mxu0 0.0
        %6183 = vmatpush1.msra.mxu0 0.0
        %6184 = vmatprep.subr.mxu0 0.0
        %6185 = vmatpush1.msra.mxu0 0.0
        %6186 = vmatprep.subr.mxu0 0.0
        %6187 = vmatpush1.msra.mxu0 0.0
        %6188 = vmatprep.subr.mxu0 0.0
        %6189 = vmatpush1.msra.mxu0 0.0
        %6190 = vmatprep.subr.mxu0 0.0
        %6191 = vmatpush1.msra.mxu0 0.0
        %6192 = vmatprep.subr.mxu0 0.0
        %6193 = vmatpush1.msra.mxu0 0.0
        %6194 = vmatprep.subr.mxu0 0.0
        %6195 = vmatpush1.msra.mxu0 0.0
        %6196 = vmatprep.subr.mxu0 0.0
        %6197 = vmatpush1.msra.mxu0 0.0
        %6198 = vmatprep.subr.mxu0 0.0
        %6199 = vmatpush1.msra.mxu0 0.0
        %6200 = vmatprep.subr.mxu0 0.0
        %6201 = vmatpush1.msra.mxu0 0.0
        %6202 = vmatprep.subr.mxu0 0.0
        %6203 = vmatpush1.msra.mxu0 0.0
        %6204 = vmatprep.subr.mxu0 0.0
        %6205 = vmatpush1.msra.mxu0 0.0
        %6206 = vmatprep.subr.mxu0 0.0
        %6207 = vmatpush1.msra.mxu0 0.0
        %6208 = vmatprep.subr.mxu0 0.0
        %6209 = vmatpush1.msra.mxu0 0.0
        %6210 = vmatprep.subr.mxu0 0.0
        %6211 = vmatpush1.msra.mxu0 0.0
        %6212 = vmatprep.subr.mxu0 0.0
        %6213 = vmatpush1.msra.mxu0 0.0
        %6214 = vmatprep.subr.mxu0 0.0
        %6215 = vmatpush1.msra.mxu0 0.0
        %6216 = vmatprep.subr.mxu0 0.0
        %6217 = vmatpush1.msra.mxu0 0.0
        %6218 = vmatprep.mubr.f32.mxu0 0.0
        %6219 = vmatmul.mubr.f32.gmra.mrb[0].mxu0 %v6152
        %v6220 = vpop.f32.mrb[0].mxu0
        %v6221 = vadd.f32 0.0, %v6220
        %v6222 = vpop.f32.mrb[0].mxu0
        %6223 = vdwg.mxu0
        %v6225 = vsel %vm1579, %v6076, 0
        %6227 = vmatprep.subr.mxu0 0.0
        %6228 = vmatpush1.msra.mxu0 %v5642
        %6229 = vmatprep.subr.mxu0 0.0
        %6230 = vmatpush1.msra.mxu0 0.0
        %6231 = vmatprep.subr.mxu0 0.0
        %6232 = vmatpush1.msra.mxu0 0.0
        %6233 = vmatprep.subr.mxu0 0.0
        %6234 = vmatpush1.msra.mxu0 0.0
        %6235 = vmatprep.subr.mxu0 0.0
        %6236 = vmatpush1.msra.mxu0 0.0
        %6237 = vmatprep.subr.mxu0 0.0
        %6238 = vmatpush1.msra.mxu0 0.0
        %6239 = vmatprep.subr.mxu0 0.0
        %6240 = vmatpush1.msra.mxu0 0.0
        %6241 = vmatprep.subr.mxu0 0.0
        %6242 = vmatpush1.msra.mxu0 0.0
        %6243 = vmatprep.subr.mxu0 0.0
        %6244 = vmatpush1.msra.mxu0 0.0
        %6245 = vmatprep.subr.mxu0 0.0
        %6246 = vmatpush1.msra.mxu0 0.0
        %6247 = vmatprep.subr.mxu0 0.0
        %6248 = vmatpush1.msra.mxu0 0.0
        %6249 = vmatprep.subr.mxu0 0.0
        %6250 = vmatpush1.msra.mxu0 0.0
        %6251 = vmatprep.subr.mxu0 0.0
        %6252 = vmatpush1.msra.mxu0 0.0
        %6253 = vmatprep.subr.mxu0 0.0
        %6254 = vmatpush1.msra.mxu0 0.0
        %6255 = vmatprep.subr.mxu0 0.0
        %6256 = vmatpush1.msra.mxu0 0.0
        %6257 = vmatprep.subr.mxu0 0.0
        %6258 = vmatpush1.msra.mxu0 0.0
        %6259 = vmatprep.subr.mxu0 0.0
        %6260 = vmatpush1.msra.mxu0 0.0
        %6261 = vmatprep.subr.mxu0 0.0
        %6262 = vmatpush1.msra.mxu0 0.0
        %6263 = vmatprep.subr.mxu0 0.0
        %6264 = vmatpush1.msra.mxu0 0.0
        %6265 = vmatprep.subr.mxu0 0.0
        %6266 = vmatpush1.msra.mxu0 0.0
        %6267 = vmatprep.subr.mxu0 0.0
        %6268 = vmatpush1.msra.mxu0 0.0
        %6269 = vmatprep.subr.mxu0 0.0
        %6270 = vmatpush1.msra.mxu0 0.0
        %6271 = vmatprep.subr.mxu0 0.0
        %6272 = vmatpush1.msra.mxu0 0.0
        %6273 = vmatprep.subr.mxu0 0.0
        %6274 = vmatpush1.msra.mxu0 0.0
        %6275 = vmatprep.subr.mxu0 0.0
        %6276 = vmatpush1.msra.mxu0 0.0
        %6277 = vmatprep.subr.mxu0 0.0
        %6278 = vmatpush1.msra.mxu0 0.0
        %6279 = vmatprep.subr.mxu0 0.0
        %6280 = vmatpush1.msra.mxu0 0.0
        %6281 = vmatprep.subr.mxu0 0.0
        %6282 = vmatpush1.msra.mxu0 0.0
        %6283 = vmatprep.subr.mxu0 0.0
        %6284 = vmatpush1.msra.mxu0 0.0
        %6285 = vmatprep.subr.mxu0 0.0
        %6286 = vmatpush1.msra.mxu0 0.0
        %6287 = vmatprep.subr.mxu0 0.0
        %6288 = vmatpush1.msra.mxu0 0.0
        %6289 = vmatprep.subr.mxu0 0.0
        %6290 = vmatpush1.msra.mxu0 0.0
        %6291 = vmatprep.mubr.f32.mxu0 0.0
        %6292 = vmatmul.mubr.f32.gmra.mrb[0].mxu0 %v6225
        %v6293 = vpop.f32.mrb[0].mxu0
        %v6294 = vadd.f32 0.0, %v6293
        %v6295 = vpop.f32.mrb[0].mxu0
        %6296 = vdwg.mxu0
        %v6298 = vsel %vm1579, %v6077, 0
        %6300 = vmatprep.subr.mxu0 0.0
        %6301 = vmatpush1.msra.mxu0 %v5712
        %6302 = vmatprep.subr.mxu0 0.0
        %6303 = vmatpush1.msra.mxu0 0.0
        %6304 = vmatprep.subr.mxu0 0.0
        %6305 = vmatpush1.msra.mxu0 0.0
        %6306 = vmatprep.subr.mxu0 0.0
        %6307 = vmatpush1.msra.mxu0 0.0
        %6308 = vmatprep.subr.mxu0 0.0
        %6309 = vmatpush1.msra.mxu0 0.0
        %6310 = vmatprep.subr.mxu0 0.0
        %6311 = vmatpush1.msra.mxu0 0.0
        %6312 = vmatprep.subr.mxu0 0.0
        %6313 = vmatpush1.msra.mxu0 0.0
        %6314 = vmatprep.subr.mxu0 0.0
        %6315 = vmatpush1.msra.mxu0 0.0
        %6316 = vmatprep.subr.mxu0 0.0
        %6317 = vmatpush1.msra.mxu0 0.0
        %6318 = vmatprep.subr.mxu0 0.0
        %6319 = vmatpush1.msra.mxu0 0.0
        %6320 = vmatprep.subr.mxu0 0.0
        %6321 = vmatpush1.msra.mxu0 0.0
        %6322 = vmatprep.subr.mxu0 0.0
        %6323 = vmatpush1.msra.mxu0 0.0
        %6324 = vmatprep.subr.mxu0 0.0
        %6325 = vmatpush1.msra.mxu0 0.0
        %6326 = vmatprep.subr.mxu0 0.0
        %6327 = vmatpush1.msra.mxu0 0.0
        %6328 = vmatprep.subr.mxu0 0.0
        %6329 = vmatpush1.msra.mxu0 0.0
        %6330 = vmatprep.subr.mxu0 0.0
        %6331 = vmatpush1.msra.mxu0 0.0
        %6332 = vmatprep.subr.mxu0 0.0
        %6333 = vmatpush1.msra.mxu0 0.0
        %6334 = vmatprep.subr.mxu0 0.0
        %6335 = vmatpush1.msra.mxu0 0.0
        %6336 = vmatprep.subr.mxu0 0.0
        %6337 = vmatpush1.msra.mxu0 0.0
        %6338 = vmatprep.subr.mxu0 0.0
        %6339 = vmatpush1.msra.mxu0 0.0
        %6340 = vmatprep.subr.mxu0 0.0
        %6341 = vmatpush1.msra.mxu0 0.0
        %6342 = vmatprep.subr.mxu0 0.0
        %6343 = vmatpush1.msra.mxu0 0.0
        %6344 = vmatprep.subr.mxu0 0.0
        %6345 = vmatpush1.msra.mxu0 0.0
        %6346 = vmatprep.subr.mxu0 0.0
        %6347 = vmatpush1.msra.mxu0 0.0
        %6348 = vmatprep.subr.mxu0 0.0
        %6349 = vmatpush1.msra.mxu0 0.0
        %6350 = vmatprep.subr.mxu0 0.0
        %6351 = vmatpush1.msra.mxu0 0.0
        %6352 = vmatprep.subr.mxu0 0.0
        %6353 = vmatpush1.msra.mxu0 0.0
        %6354 = vmatprep.subr.mxu0 0.0
        %6355 = vmatpush1.msra.mxu0 0.0
        %6356 = vmatprep.subr.mxu0 0.0
        %6357 = vmatpush1.msra.mxu0 0.0
        %6358 = vmatprep.subr.mxu0 0.0
        %6359 = vmatpush1.msra.mxu0 0.0
        %6360 = vmatprep.subr.mxu0 0.0
        %6361 = vmatpush1.msra.mxu0 0.0
        %6362 = vmatprep.subr.mxu0 0.0
        %6363 = vmatpush1.msra.mxu0 0.0
        %6364 = vmatprep.mubr.f32.mxu0 0.0
        %6365 = vmatmul.mubr.f32.gmra.mrb[0].mxu0 %v6298
        %v6366 = vpop.f32.mrb[0].mxu0
        %v6367 = vadd.f32 0.0, %v6366
        %v6368 = vpop.f32.mrb[0].mxu0
        %6369 = vdwg.mxu0
        %v6371 = vsel %vm1579, %v6148, 0
        %6373 = vmatprep.subr.mxu0 0.0
        %6374 = vmatpush1.msra.mxu0 %v5716
        %6375 = vmatprep.subr.mxu0 0.0
        %6376 = vmatpush1.msra.mxu0 0.0
        %6377 = vmatprep.subr.mxu0 0.0
        %6378 = vmatpush1.msra.mxu0 0.0
        %6379 = vmatprep.subr.mxu0 0.0
        %6380 = vmatpush1.msra.mxu0 0.0
        %6381 = vmatprep.subr.mxu0 0.0
        %6382 = vmatpush1.msra.mxu0 0.0
        %6383 = vmatprep.subr.mxu0 0.0
        %6384 = vmatpush1.msra.mxu0 0.0
        %6385 = vmatprep.subr.mxu0 0.0
        %6386 = vmatpush1.msra.mxu0 0.0
        %6387 = vmatprep.subr.mxu0 0.0
        %6388 = vmatpush1.msra.mxu0 0.0
        %6389 = vmatprep.subr.mxu0 0.0
        %6390 = vmatpush1.msra.mxu0 0.0
        %6391 = vmatprep.subr.mxu0 0.0
        %6392 = vmatpush1.msra.mxu0 0.0
        %6393 = vmatprep.subr.mxu0 0.0
        %6394 = vmatpush1.msra.mxu0 0.0
        %6395 = vmatprep.subr.mxu0 0.0
        %6396 = vmatpush1.msra.mxu0 0.0
        %6397 = vmatprep.subr.mxu0 0.0
        %6398 = vmatpush1.msra.mxu0 0.0
        %6399 = vmatprep.subr.mxu0 0.0
        %6400 = vmatpush1.msra.mxu0 0.0
        %6401 = vmatprep.subr.mxu0 0.0
        %6402 = vmatpush1.msra.mxu0 0.0
        %6403 = vmatprep.subr.mxu0 0.0
        %6404 = vmatpush1.msra.mxu0 0.0
        %6405 = vmatprep.subr.mxu0 0.0
        %6406 = vmatpush1.msra.mxu0 0.0
        %6407 = vmatprep.subr.mxu0 0.0
        %6408 = vmatpush1.msra.mxu0 0.0
        %6409 = vmatprep.subr.mxu0 0.0
        %6410 = vmatpush1.msra.mxu0 0.0
        %6411 = vmatprep.subr.mxu0 0.0
        %6412 = vmatpush1.msra.mxu0 0.0
        %6413 = vmatprep.subr.mxu0 0.0
        %6414 = vmatpush1.msra.mxu0 0.0
        %6415 = vmatprep.subr.mxu0 0.0
        %6416 = vmatpush1.msra.mxu0 0.0
        %6417 = vmatprep.subr.mxu0 0.0
        %6418 = vmatpush1.msra.mxu0 0.0
        %6419 = vmatprep.subr.mxu0 0.0
        %6420 = vmatpush1.msra.mxu0 0.0
        %6421 = vmatprep.subr.mxu0 0.0
        %6422 = vmatpush1.msra.mxu0 0.0
        %6423 = vmatprep.subr.mxu0 0.0
        %6424 = vmatpush1.msra.mxu0 0.0
        %6425 = vmatprep.subr.mxu0 0.0
        %6426 = vmatpush1.msra.mxu0 0.0
        %6427 = vmatprep.subr.mxu0 0.0
        %6428 = vmatpush1.msra.mxu0 0.0
        %6429 = vmatprep.subr.mxu0 0.0
        %6430 = vmatpush1.msra.mxu0 0.0
        %6431 = vmatprep.subr.mxu0 0.0
        %6432 = vmatpush1.msra.mxu0 0.0
        %6433 = vmatprep.subr.mxu0 0.0
        %6434 = vmatpush1.msra.mxu0 0.0
        %6435 = vmatprep.subr.mxu0 0.0
        %6436 = vmatpush1.msra.mxu0 0.0
        %6437 = vmatprep.mubr.f32.mxu0 0.0
        %6438 = vmatmul.mubr.f32.gmra.mrb[0].mxu0 %v6371
        %v6439 = vpop.f32.mrb[0].mxu0
        %v6440 = vadd.f32 0.0, %v6439
        %v6441 = vpop.f32.mrb[0].mxu0
        %6442 = vdwg.mxu0
        %v6444 = vsel %vm1579, %v6221, 0
        %6446 = vmatprep.subr.mxu0 0.0
        %6447 = vmatpush1.msra.mxu0 %v5717
        %6448 = vmatprep.subr.mxu0 0.0
        %6449 = vmatpush1.msra.mxu0 0.0
        %6450 = vmatprep.subr.mxu0 0.0
        %6451 = vmatpush1.msra.mxu0 0.0
        %6452 = vmatprep.subr.mxu0 0.0
        %6453 = vmatpush1.msra.mxu0 0.0
        %6454 = vmatprep.subr.mxu0 0.0
        %6455 = vmatpush1.msra.mxu0 0.0
        %6456 = vmatprep.subr.mxu0 0.0
        %6457 = vmatpush1.msra.mxu0 0.0
        %6458 = vmatprep.subr.mxu0 0.0
        %6459 = vmatpush1.msra.mxu0 0.0
        %6460 = vmatprep.subr.mxu0 0.0
        %6461 = vmatpush1.msra.mxu0 0.0
        %6462 = vmatprep.subr.mxu0 0.0
        %6463 = vmatpush1.msra.mxu0 0.0
        %6464 = vmatprep.subr.mxu0 0.0
        %6465 = vmatpush1.msra.mxu0 0.0
        %6466 = vmatprep.subr.mxu0 0.0
        %6467 = vmatpush1.msra.mxu0 0.0
        %6468 = vmatprep.subr.mxu0 0.0
        %6469 = vmatpush1.msra.mxu0 0.0
        %6470 = vmatprep.subr.mxu0 0.0
        %6471 = vmatpush1.msra.mxu0 0.0
        %6472 = vmatprep.subr.mxu0 0.0
        %6473 = vmatpush1.msra.mxu0 0.0
        %6474 = vmatprep.subr.mxu0 0.0
        %6475 = vmatpush1.msra.mxu0 0.0
        %6476 = vmatprep.subr.mxu0 0.0
        %6477 = vmatpush1.msra.mxu0 0.0
        %6478 = vmatprep.subr.mxu0 0.0
        %6479 = vmatpush1.msra.mxu0 0.0
        %6480 = vmatprep.subr.mxu0 0.0
        %6481 = vmatpush1.msra.mxu0 0.0
        %6482 = vmatprep.subr.mxu0 0.0
        %6483 = vmatpush1.msra.mxu0 0.0
        %6484 = vmatprep.subr.mxu0 0.0
        %6485 = vmatpush1.msra.mxu0 0.0
        %6486 = vmatprep.subr.mxu0 0.0
        %6487 = vmatpush1.msra.mxu0 0.0
        %6488 = vmatprep.subr.mxu0 0.0
        %6489 = vmatpush1.msra.mxu0 0.0
        %6490 = vmatprep.subr.mxu0 0.0
        %6491 = vmatpush1.msra.mxu0 0.0
        %6492 = vmatprep.subr.mxu0 0.0
        %6493 = vmatpush1.msra.mxu0 0.0
        %6494 = vmatprep.subr.mxu0 0.0
        %6495 = vmatpush1.msra.mxu0 0.0
        %6496 = vmatprep.subr.mxu0 0.0
        %6497 = vmatpush1.msra.mxu0 0.0
        %6498 = vmatprep.subr.mxu0 0.0
        %6499 = vmatpush1.msra.mxu0 0.0
        %6500 = vmatprep.subr.mxu0 0.0
        %6501 = vmatpush1.msra.mxu0 0.0
        %6502 = vmatprep.subr.mxu0 0.0
        %6503 = vmatpush1.msra.mxu0 0.0
        %6504 = vmatprep.subr.mxu0 0.0
        %6505 = vmatpush1.msra.mxu0 0.0
        %6506 = vmatprep.subr.mxu0 0.0
        %6507 = vmatpush1.msra.mxu0 0.0
        %6508 = vmatprep.subr.mxu0 0.0
        %6509 = vmatpush1.msra.mxu0 0.0
        %6510 = vmatprep.mubr.f32.mxu0 0.0
        %6511 = vmatmul.mubr.f32.gmra.mrb[0].mxu0 %v6444
        %v6512 = vpop.f32.mrb[0].mxu0
        %v6513 = vadd.f32 0.0, %v6512
        %v6514 = vpop.f32.mrb[0].mxu0
        %6515 = vdwg.mxu0
        %v6517 = vsel %vm1579, %v6294, 0
        %6519 = vmatprep.subr.mxu0 0.0
        %6520 = vmatpush1.msra.mxu0 %v5718
        %6521 = vmatprep.subr.mxu0 0.0
        %6522 = vmatpush1.msra.mxu0 0.0
        %6523 = vmatprep.subr.mxu0 0.0
        %6524 = vmatpush1.msra.mxu0 0.0
        %6525 = vmatprep.subr.mxu0 0.0
        %6526 = vmatpush1.msra.mxu0 0.0
        %6527 = vmatprep.subr.mxu0 0.0
        %6528 = vmatpush1.msra.mxu0 0.0
        %6529 = vmatprep.subr.mxu0 0.0
        %6530 = vmatpush1.msra.mxu0 0.0
        %6531 = vmatprep.subr.mxu0 0.0
        %6532 = vmatpush1.msra.mxu0 0.0
        %6533 = vmatprep.subr.mxu0 0.0
        %6534 = vmatpush1.msra.mxu0 0.0
        %6535 = vmatprep.subr.mxu0 0.0
        %6536 = vmatpush1.msra.mxu0 0.0
        %6537 = vmatprep.subr.mxu0 0.0
        %6538 = vmatpush1.msra.mxu0 0.0
        %6539 = vmatprep.subr.mxu0 0.0
        %6540 = vmatpush1.msra.mxu0 0.0
        %6541 = vmatprep.subr.mxu0 0.0
        %6542 = vmatpush1.msra.mxu0 0.0
        %6543 = vmatprep.subr.mxu0 0.0
        %6544 = vmatpush1.msra.mxu0 0.0
        %6545 = vmatprep.subr.mxu0 0.0
        %6546 = vmatpush1.msra.mxu0 0.0
        %6547 = vmatprep.subr.mxu0 0.0
        %6548 = vmatpush1.msra.mxu0 0.0
        %6549 = vmatprep.subr.mxu0 0.0
        %6550 = vmatpush1.msra.mxu0 0.0
        %6551 = vmatprep.subr.mxu0 0.0
        %6552 = vmatpush1.msra.mxu0 0.0
        %6553 = vmatprep.subr.mxu0 0.0
        %6554 = vmatpush1.msra.mxu0 0.0
        %6555 = vmatprep.subr.mxu0 0.0
        %6556 = vmatpush1.msra.mxu0 0.0
        %6557 = vmatprep.subr.mxu0 0.0
        %6558 = vmatpush1.msra.mxu0 0.0
        %6559 = vmatprep.subr.mxu0 0.0
        %6560 = vmatpush1.msra.mxu0 0.0
        %6561 = vmatprep.subr.mxu0 0.0
        %6562 = vmatpush1.msra.mxu0 0.0
        %6563 = vmatprep.subr.mxu0 0.0
        %6564 = vmatpush1.msra.mxu0 0.0
        %6565 = vmatprep.subr.mxu0 0.0
        %6566 = vmatpush1.msra.mxu0 0.0
        %6567 = vmatprep.subr.mxu0 0.0
        %6568 = vmatpush1.msra.mxu0 0.0
        %6569 = vmatprep.subr.mxu0 0.0
        %6570 = vmatpush1.msra.mxu0 0.0
        %6571 = vmatprep.subr.mxu0 0.0
        %6572 = vmatpush1.msra.mxu0 0.0
        %6573 = vmatprep.subr.mxu0 0.0
        %6574 = vmatpush1.msra.mxu0 0.0
        %6575 = vmatprep.subr.mxu0 0.0
        %6576 = vmatpush1.msra.mxu0 0.0
        %6577 = vmatprep.subr.mxu0 0.0
        %6578 = vmatpush1.msra.mxu0 0.0
        %6579 = vmatprep.subr.mxu0 0.0
        %6580 = vmatpush1.msra.mxu0 0.0
        %6581 = vmatprep.subr.mxu0 0.0
        %6582 = vmatpush1.msra.mxu0 0.0
        %6583 = vmatprep.mubr.f32.mxu0 0.0
        %6584 = vmatmul.mubr.f32.gmra.mrb[0].mxu0 %v6517
        %v6585 = vpop.f32.mrb[0].mxu0
        %v6586 = vadd.f32 0.0, %v6585
        %v6587 = vpop.f32.mrb[0].mxu0
        %6588 = vdwg.mxu0
        %v6590 = vsel %vm1579, %v6367, 0
        %6592 = vmatprep.subr.mxu0 0.0
        %6593 = vmatpush1.msra.mxu0 %v5719
        %6594 = vmatprep.subr.mxu0 0.0
        %6595 = vmatpush1.msra.mxu0 0.0
        %6596 = vmatprep.subr.mxu0 0.0
        %6597 = vmatpush1.msra.mxu0 0.0
        %6598 = vmatprep.subr.mxu0 0.0
        %6599 = vmatpush1.msra.mxu0 0.0
        %6600 = vmatprep.subr.mxu0 0.0
        %6601 = vmatpush1.msra.mxu0 0.0
        %6602 = vmatprep.subr.mxu0 0.0
        %6603 = vmatpush1.msra.mxu0 0.0
        %6604 = vmatprep.subr.mxu0 0.0
        %6605 = vmatpush1.msra.mxu0 0.0
        %6606 = vmatprep.subr.mxu0 0.0
        %6607 = vmatpush1.msra.mxu0 0.0
        %6608 = vmatprep.subr.mxu0 0.0
        %6609 = vmatpush1.msra.mxu0 0.0
        %6610 = vmatprep.subr.mxu0 0.0
        %6611 = vmatpush1.msra.mxu0 0.0
        %6612 = vmatprep.subr.mxu0 0.0
        %6613 = vmatpush1.msra.mxu0 0.0
        %6614 = vmatprep.subr.mxu0 0.0
        %6615 = vmatpush1.msra.mxu0 0.0
        %6616 = vmatprep.subr.mxu0 0.0
        %6617 = vmatpush1.msra.mxu0 0.0
        %6618 = vmatprep.subr.mxu0 0.0
        %6619 = vmatpush1.msra.mxu0 0.0
        %6620 = vmatprep.subr.mxu0 0.0
        %6621 = vmatpush1.msra.mxu0 0.0
        %6622 = vmatprep.subr.mxu0 0.0
        %6623 = vmatpush1.msra.mxu0 0.0
        %6624 = vmatprep.subr.mxu0 0.0
        %6625 = vmatpush1.msra.mxu0 0.0
        %6626 = vmatprep.subr.mxu0 0.0
        %6627 = vmatpush1.msra.mxu0 0.0
        %6628 = vmatprep.subr.mxu0 0.0
        %6629 = vmatpush1.msra.mxu0 0.0
        %6630 = vmatprep.subr.mxu0 0.0
        %6631 = vmatpush1.msra.mxu0 0.0
        %6632 = vmatprep.subr.mxu0 0.0
        %6633 = vmatpush1.msra.mxu0 0.0
        %6634 = vmatprep.subr.mxu0 0.0
        %6635 = vmatpush1.msra.mxu0 0.0
        %6636 = vmatprep.subr.mxu0 0.0
        %6637 = vmatpush1.msra.mxu0 0.0
        %6638 = vmatprep.subr.mxu0 0.0
        %6639 = vmatpush1.msra.mxu0 0.0
        %6640 = vmatprep.subr.mxu0 0.0
        %6641 = vmatpush1.msra.mxu0 0.0
        %6642 = vmatprep.subr.mxu0 0.0
        %6643 = vmatpush1.msra.mxu0 0.0
        %6644 = vmatprep.subr.mxu0 0.0
        %6645 = vmatpush1.msra.mxu0 0.0
        %6646 = vmatprep.subr.mxu0 0.0
        %6647 = vmatpush1.msra.mxu0 0.0
        %6648 = vmatprep.subr.mxu0 0.0
        %6649 = vmatpush1.msra.mxu0 0.0
        %6650 = vmatprep.subr.mxu0 0.0
        %6651 = vmatpush1.msra.mxu0 0.0
        %6652 = vmatprep.subr.mxu0 0.0
        %6653 = vmatpush1.msra.mxu0 0.0
        %6654 = vmatprep.subr.mxu0 0.0
        %6655 = vmatpush1.msra.mxu0 0.0
        %6656 = vmatprep.mubr.f32.mxu0 0.0
        %6657 = vmatmul.mubr.f32.gmra.mrb[0].mxu0 %v6590
        %v6658 = vpop.f32.mrb[0].mxu0
        %v6659 = vadd.f32 0.0, %v6658
        %v6660 = vpop.f32.mrb[0].mxu0
        %6661 = vdwg.mxu0
        %v6662 = vsel %vm730, %v6440, 0.0
        %v6663 = vsel %vm730, %v6513, 0.0
        %v6664 = vadd.f32 %v6662, %v6663
        %v6665 = vsel %vm730, %v6586, 0.0
        %v6666 = vadd.f32 %v6664, %v6665
        %v6667 = vsel %vm730, %v6659, 0.0
        %v6668 = vadd.f32 %v6666, %v6667
        %v6670 = vlaneseq
        %v6671 = vshrl.u32 %v6670, 7
        %v6672 = vsub.s32 0, %v6671
        %v6673 = vrot.slane %v5721, %v6672
        %v6675 = vadd.f32 %v6668, %v6673
        %v6676 = vadd.f32 %v6675, %v4729
        %v6677 = vsel %vm730, %v6676, 0.0
        %6678 = vadd.xlane.f32.xlu0 %v6677
        %v6679 = vpop.xlane.xlu0 %6678
        %v6680 = vmul.f32 %v6679, %v2538
        %v6681 = vsub.f32 %v6676, %v6680
        %v6682 = vmul.f32 %v6681, %v6681
        %v6683 = vsel %vm730, %v6682, 0.0
        %6684 = vadd.xlane.f32.xlu0 %v6683
        %v6685 = vpop.xlane.xlu0 %6684
        %v6686 = vmul.f32 %v6685, %v2538
        %v6687 = vadd.f32 %v6686, 1e-05
        %v6688 = vrsqrt.pop %v6687
        %v6689 = vmul.f32 %v6681, %v6688
        %v6691 = vlaneseq
        %v6692 = vshrl.u32 %v6691, 7
        %v6693 = vsub.s32 0, %v6692
        %v6694 = vrot.slane %v4731, %v6693
        %v6696 = vmul.f32 %v6689, %v6694
        %v6698 = vlaneseq
        %v6699 = vshrl.u32 %v6698, 7
        %v6700 = vsub.s32 0, %v6699
        %v6701 = vrot.slane %v4735, %v6700
        %v6703 = vadd.f32 %v6696, %v6701
        %s6704 = scalar_lea.vmem %s8, 384
        %v6705 = vld [vmem:[%s6704] sm:$0xff]
        %v6706 = vld [vmem:[%s6704 + $0x8] sm:$0xff]
        %v6707 = vld [vmem:[%s6704 + $0x10] sm:$0xff]
        %v6708 = vld [vmem:[%s6704 + $0x18] sm:$0xff]
        %v6709 = vld [vmem:[%s6704 + $0x20] sm:$0xff]
        %v6710 = vld [vmem:[%s6704 + $0x28] sm:$0xff]
        %v6711 = vld [vmem:[%s6704 + $0x30] sm:$0xff]
        %v6712 = vld [vmem:[%s6704 + $0x38] sm:$0xff]
        %v6713 = vld [vmem:[%s6704 + $0x40] sm:$0xff]
        %v6714 = vld [vmem:[%s6704 + $0x48] sm:$0xff]
        %v6715 = vld [vmem:[%s6704 + $0x50] sm:$0xff]
        %v6716 = vld [vmem:[%s6704 + $0x58] sm:$0xff]
        %v6717 = vld [vmem:[%s6704 + $0x60] sm:$0xff]
        %v6718 = vld [vmem:[%s6704 + $0x68] sm:$0xff]
        %v6719 = vld [vmem:[%s6704 + $0x70] sm:$0xff]
        %v6720 = vld [vmem:[%s6704 + $0x78] sm:$0xff]
        %s6721 = scalar_lea.vmem %s9, 12
        %v6722 = vld [vmem:[%s6721] sm:$0x1]
        %v6723 = vld [vmem:[%s6721 + $0x1] sm:$0x1]
        %v6724 = vld [vmem:[%s6721 + $0x2] sm:$0x1]
        %v6725 = vld [vmem:[%s6721 + $0x3] sm:$0x1]
        %v6730 = vlaneseq
        %v6731 = vshrl.u32 %v6730, 7
        %v6732 = vsub.s32 0, %v6731
        %v6733 = vrot.slane %v6722, %v6732
        %v6734 = vlaneseq
        %v6735 = vshrl.u32 %v6734, 7
        %v6736 = vsub.s32 0, %v6735
        %v6737 = vrot.slane %v6723, %v6736
        %v6738 = vlaneseq
        %v6739 = vshrl.u32 %v6738, 7
        %v6740 = vsub.s32 0, %v6739
        %v6741 = vrot.slane %v6724, %v6740
        %v6742 = vlaneseq
        %v6743 = vshrl.u32 %v6742, 7
        %v6744 = vsub.s32 0, %v6743
        %v6745 = vrot.slane %v6725, %v6744
        %v6751 = vsel %vm730, %v6703, 0
        %6753 = vmatprep.subr.mxu0 0.0
        %6754 = vmatpush1.msra.mxu0 %v6705
        %6755 = vmatprep.subr.mxu0 0.0
        %6756 = vmatpush1.msra.mxu0 %v6706
        %6757 = vmatprep.subr.mxu0 0.0
        %6758 = vmatpush1.msra.mxu0 %v6707
        %6759 = vmatprep.subr.mxu0 0.0
        %6760 = vmatpush1.msra.mxu0 %v6708
        %6761 = vmatprep.subr.mxu0 0.0
        %6762 = vmatpush1.msra.mxu0 0.0
        %6763 = vmatprep.subr.mxu0 0.0
        %6764 = vmatpush1.msra.mxu0 0.0
        %6765 = vmatprep.subr.mxu0 0.0
        %6766 = vmatpush1.msra.mxu0 0.0
        %6767 = vmatprep.subr.mxu0 0.0
        %6768 = vmatpush1.msra.mxu0 0.0
        %6769 = vmatprep.subr.mxu0 0.0
        %6770 = vmatpush1.msra.mxu0 0.0
        %6771 = vmatprep.subr.mxu0 0.0
        %6772 = vmatpush1.msra.mxu0 0.0
        %6773 = vmatprep.subr.mxu0 0.0
        %6774 = vmatpush1.msra.mxu0 0.0
        %6775 = vmatprep.subr.mxu0 0.0
        %6776 = vmatpush1.msra.mxu0 0.0
        %6777 = vmatprep.subr.mxu0 0.0
        %6778 = vmatpush1.msra.mxu0 0.0
        %6779 = vmatprep.subr.mxu0 0.0
        %6780 = vmatpush1.msra.mxu0 0.0
        %6781 = vmatprep.subr.mxu0 0.0
        %6782 = vmatpush1.msra.mxu0 0.0
        %6783 = vmatprep.subr.mxu0 0.0
        %6784 = vmatpush1.msra.mxu0 0.0
        %6785 = vmatprep.subr.mxu0 0.0
        %6786 = vmatpush1.msra.mxu0 0.0
        %6787 = vmatprep.subr.mxu0 0.0
        %6788 = vmatpush1.msra.mxu0 0.0
        %6789 = vmatprep.subr.mxu0 0.0
        %6790 = vmatpush1.msra.mxu0 0.0
        %6791 = vmatprep.subr.mxu0 0.0
        %6792 = vmatpush1.msra.mxu0 0.0
        %6793 = vmatprep.subr.mxu0 0.0
        %6794 = vmatpush1.msra.mxu0 0.0
        %6795 = vmatprep.subr.mxu0 0.0
        %6796 = vmatpush1.msra.mxu0 0.0
        %6797 = vmatprep.subr.mxu0 0.0
        %6798 = vmatpush1.msra.mxu0 0.0
        %6799 = vmatprep.subr.mxu0 0.0
        %6800 = vmatpush1.msra.mxu0 0.0
        %6801 = vmatprep.subr.mxu0 0.0
        %6802 = vmatpush1.msra.mxu0 0.0
        %6803 = vmatprep.subr.mxu0 0.0
        %6804 = vmatpush1.msra.mxu0 0.0
        %6805 = vmatprep.subr.mxu0 0.0
        %6806 = vmatpush1.msra.mxu0 0.0
        %6807 = vmatprep.subr.mxu0 0.0
        %6808 = vmatpush1.msra.mxu0 0.0
        %6809 = vmatprep.subr.mxu0 0.0
        %6810 = vmatpush1.msra.mxu0 0.0
        %6811 = vmatprep.subr.mxu0 0.0
        %6812 = vmatpush1.msra.mxu0 0.0
        %6813 = vmatprep.subr.mxu0 0.0
        %6814 = vmatpush1.msra.mxu0 0.0
        %6815 = vmatprep.subr.mxu0 0.0
        %6816 = vmatpush1.msra.mxu0 0.0
        %6817 = vmatprep.mubr.f32.mxu0 0.0
        %6818 = vmatmul.mubr.f32.gmra.mrb[0].mxu0 %v6751
        %v6819 = vpop.f32.mrb[0].mxu0
        %v6820 = vadd.f32 %v6733, %v6819
        %v6821 = vpop.f32.mrb[0].mxu0
        %6822 = vdwg.mxu0
        %6823 = vmatprep.subr.mxu0 0.0
        %6824 = vmatpush1.msra.mxu0 %v6709
        %6825 = vmatprep.subr.mxu0 0.0
        %6826 = vmatpush1.msra.mxu0 %v6710
        %6827 = vmatprep.subr.mxu0 0.0
        %6828 = vmatpush1.msra.mxu0 %v6711
        %6829 = vmatprep.subr.mxu0 0.0
        %6830 = vmatpush1.msra.mxu0 %v6712
        %6831 = vmatprep.subr.mxu0 0.0
        %6832 = vmatpush1.msra.mxu0 0.0
        %6833 = vmatprep.subr.mxu0 0.0
        %6834 = vmatpush1.msra.mxu0 0.0
        %6835 = vmatprep.subr.mxu0 0.0
        %6836 = vmatpush1.msra.mxu0 0.0
        %6837 = vmatprep.subr.mxu0 0.0
        %6838 = vmatpush1.msra.mxu0 0.0
        %6839 = vmatprep.subr.mxu0 0.0
        %6840 = vmatpush1.msra.mxu0 0.0
        %6841 = vmatprep.subr.mxu0 0.0
        %6842 = vmatpush1.msra.mxu0 0.0
        %6843 = vmatprep.subr.mxu0 0.0
        %6844 = vmatpush1.msra.mxu0 0.0
        %6845 = vmatprep.subr.mxu0 0.0
        %6846 = vmatpush1.msra.mxu0 0.0
        %6847 = vmatprep.subr.mxu0 0.0
        %6848 = vmatpush1.msra.mxu0 0.0
        %6849 = vmatprep.subr.mxu0 0.0
        %6850 = vmatpush1.msra.mxu0 0.0
        %6851 = vmatprep.subr.mxu0 0.0
        %6852 = vmatpush1.msra.mxu0 0.0
        %6853 = vmatprep.subr.mxu0 0.0
        %6854 = vmatpush1.msra.mxu0 0.0
        %6855 = vmatprep.subr.mxu0 0.0
        %6856 = vmatpush1.msra.mxu0 0.0
        %6857 = vmatprep.subr.mxu0 0.0
        %6858 = vmatpush1.msra.mxu0 0.0
        %6859 = vmatprep.subr.mxu0 0.0
        %6860 = vmatpush1.msra.mxu0 0.0
        %6861 = vmatprep.subr.mxu0 0.0
        %6862 = vmatpush1.msra.mxu0 0.0
        %6863 = vmatprep.subr.mxu0 0.0
        %6864 = vmatpush1.msra.mxu0 0.0
        %6865 = vmatprep.subr.mxu0 0.0
        %6866 = vmatpush1.msra.mxu0 0.0
        %6867 = vmatprep.subr.mxu0 0.0
        %6868 = vmatpush1.msra.mxu0 0.0
        %6869 = vmatprep.subr.mxu0 0.0
        %6870 = vmatpush1.msra.mxu0 0.0
        %6871 = vmatprep.subr.mxu0 0.0
        %6872 = vmatpush1.msra.mxu0 0.0
        %6873 = vmatprep.subr.mxu0 0.0
        %6874 = vmatpush1.msra.mxu0 0.0
        %6875 = vmatprep.subr.mxu0 0.0
        %6876 = vmatpush1.msra.mxu0 0.0
        %6877 = vmatprep.subr.mxu0 0.0
        %6878 = vmatpush1.msra.mxu0 0.0
        %6879 = vmatprep.subr.mxu0 0.0
        %6880 = vmatpush1.msra.mxu0 0.0
        %6881 = vmatprep.subr.mxu0 0.0
        %6882 = vmatpush1.msra.mxu0 0.0
        %6883 = vmatprep.subr.mxu0 0.0
        %6884 = vmatpush1.msra.mxu0 0.0
        %6885 = vmatprep.subr.mxu0 0.0
        %6886 = vmatpush1.msra.mxu0 0.0
        %6887 = vmatprep.mubr.f32.mxu0 0.0
        %6888 = vmatmul.mubr.f32.gmra.mrb[0].mxu0 %v6751
        %v6889 = vpop.f32.mrb[0].mxu0
        %v6890 = vadd.f32 %v6737, %v6889
        %v6891 = vpop.f32.mrb[0].mxu0
        %6892 = vdwg.mxu0
        %6893 = vmatprep.subr.mxu0 0.0
        %6894 = vmatpush1.msra.mxu0 %v6713
        %6895 = vmatprep.subr.mxu0 0.0
        %6896 = vmatpush1.msra.mxu0 %v6714
        %6897 = vmatprep.subr.mxu0 0.0
        %6898 = vmatpush1.msra.mxu0 %v6715
        %6899 = vmatprep.subr.mxu0 0.0
        %6900 = vmatpush1.msra.mxu0 %v6716
        %6901 = vmatprep.subr.mxu0 0.0
        %6902 = vmatpush1.msra.mxu0 0.0
        %6903 = vmatprep.subr.mxu0 0.0
        %6904 = vmatpush1.msra.mxu0 0.0
        %6905 = vmatprep.subr.mxu0 0.0
        %6906 = vmatpush1.msra.mxu0 0.0
        %6907 = vmatprep.subr.mxu0 0.0
        %6908 = vmatpush1.msra.mxu0 0.0
        %6909 = vmatprep.subr.mxu0 0.0
        %6910 = vmatpush1.msra.mxu0 0.0
        %6911 = vmatprep.subr.mxu0 0.0
        %6912 = vmatpush1.msra.mxu0 0.0
        %6913 = vmatprep.subr.mxu0 0.0
        %6914 = vmatpush1.msra.mxu0 0.0
        %6915 = vmatprep.subr.mxu0 0.0
        %6916 = vmatpush1.msra.mxu0 0.0
        %6917 = vmatprep.subr.mxu0 0.0
        %6918 = vmatpush1.msra.mxu0 0.0
        %6919 = vmatprep.subr.mxu0 0.0
        %6920 = vmatpush1.msra.mxu0 0.0
        %6921 = vmatprep.subr.mxu0 0.0
        %6922 = vmatpush1.msra.mxu0 0.0
        %6923 = vmatprep.subr.mxu0 0.0
        %6924 = vmatpush1.msra.mxu0 0.0
        %6925 = vmatprep.subr.mxu0 0.0
        %6926 = vmatpush1.msra.mxu0 0.0
        %6927 = vmatprep.subr.mxu0 0.0
        %6928 = vmatpush1.msra.mxu0 0.0
        %6929 = vmatprep.subr.mxu0 0.0
        %6930 = vmatpush1.msra.mxu0 0.0
        %6931 = vmatprep.subr.mxu0 0.0
        %6932 = vmatpush1.msra.mxu0 0.0
        %6933 = vmatprep.subr.mxu0 0.0
        %6934 = vmatpush1.msra.mxu0 0.0
        %6935 = vmatprep.subr.mxu0 0.0
        %6936 = vmatpush1.msra.mxu0 0.0
        %6937 = vmatprep.subr.mxu0 0.0
        %6938 = vmatpush1.msra.mxu0 0.0
        %6939 = vmatprep.subr.mxu0 0.0
        %6940 = vmatpush1.msra.mxu0 0.0
        %6941 = vmatprep.subr.mxu0 0.0
        %6942 = vmatpush1.msra.mxu0 0.0
        %6943 = vmatprep.subr.mxu0 0.0
        %6944 = vmatpush1.msra.mxu0 0.0
        %6945 = vmatprep.subr.mxu0 0.0
        %6946 = vmatpush1.msra.mxu0 0.0
        %6947 = vmatprep.subr.mxu0 0.0
        %6948 = vmatpush1.msra.mxu0 0.0
        %6949 = vmatprep.subr.mxu0 0.0
        %6950 = vmatpush1.msra.mxu0 0.0
        %6951 = vmatprep.subr.mxu0 0.0
        %6952 = vmatpush1.msra.mxu0 0.0
        %6953 = vmatprep.subr.mxu0 0.0
        %6954 = vmatpush1.msra.mxu0 0.0
        %6955 = vmatprep.subr.mxu0 0.0
        %6956 = vmatpush1.msra.mxu0 0.0
        %6957 = vmatprep.mubr.f32.mxu0 0.0
        %6958 = vmatmul.mubr.f32.gmra.mrb[0].mxu0 %v6751
        %v6959 = vpop.f32.mrb[0].mxu0
        %v6960 = vadd.f32 %v6741, %v6959
        %v6961 = vpop.f32.mrb[0].mxu0
        %6962 = vdwg.mxu0
        %6963 = vmatprep.subr.mxu0 0.0
        %6964 = vmatpush1.msra.mxu0 %v6717
        %6965 = vmatprep.subr.mxu0 0.0
        %6966 = vmatpush1.msra.mxu0 %v6718
        %6967 = vmatprep.subr.mxu0 0.0
        %6968 = vmatpush1.msra.mxu0 %v6719
        %6969 = vmatprep.subr.mxu0 0.0
        %6970 = vmatpush1.msra.mxu0 %v6720
        %6971 = vmatprep.subr.mxu0 0.0
        %6972 = vmatpush1.msra.mxu0 0.0
        %6973 = vmatprep.subr.mxu0 0.0
        %6974 = vmatpush1.msra.mxu0 0.0
        %6975 = vmatprep.subr.mxu0 0.0
        %6976 = vmatpush1.msra.mxu0 0.0
        %6977 = vmatprep.subr.mxu0 0.0
        %6978 = vmatpush1.msra.mxu0 0.0
        %6979 = vmatprep.subr.mxu0 0.0
        %6980 = vmatpush1.msra.mxu0 0.0
        %6981 = vmatprep.subr.mxu0 0.0
        %6982 = vmatpush1.msra.mxu0 0.0
        %6983 = vmatprep.subr.mxu0 0.0
        %6984 = vmatpush1.msra.mxu0 0.0
        %6985 = vmatprep.subr.mxu0 0.0
        %6986 = vmatpush1.msra.mxu0 0.0
        %6987 = vmatprep.subr.mxu0 0.0
        %6988 = vmatpush1.msra.mxu0 0.0
        %6989 = vmatprep.subr.mxu0 0.0
        %6990 = vmatpush1.msra.mxu0 0.0
        %6991 = vmatprep.subr.mxu0 0.0
        %6992 = vmatpush1.msra.mxu0 0.0
        %6993 = vmatprep.subr.mxu0 0.0
        %6994 = vmatpush1.msra.mxu0 0.0
        %6995 = vmatprep.subr.mxu0 0.0
        %6996 = vmatpush1.msra.mxu0 0.0
        %6997 = vmatprep.subr.mxu0 0.0
        %6998 = vmatpush1.msra.mxu0 0.0
        %6999 = vmatprep.subr.mxu0 0.0
        %7000 = vmatpush1.msra.mxu0 0.0
        %7001 = vmatprep.subr.mxu0 0.0
        %7002 = vmatpush1.msra.mxu0 0.0
        %7003 = vmatprep.subr.mxu0 0.0
        %7004 = vmatpush1.msra.mxu0 0.0
        %7005 = vmatprep.subr.mxu0 0.0
        %7006 = vmatpush1.msra.mxu0 0.0
        %7007 = vmatprep.subr.mxu0 0.0
        %7008 = vmatpush1.msra.mxu0 0.0
        %7009 = vmatprep.subr.mxu0 0.0
        %7010 = vmatpush1.msra.mxu0 0.0
        %7011 = vmatprep.subr.mxu0 0.0
        %7012 = vmatpush1.msra.mxu0 0.0
        %7013 = vmatprep.subr.mxu0 0.0
        %7014 = vmatpush1.msra.mxu0 0.0
        %7015 = vmatprep.subr.mxu0 0.0
        %7016 = vmatpush1.msra.mxu0 0.0
        %7017 = vmatprep.subr.mxu0 0.0
        %7018 = vmatpush1.msra.mxu0 0.0
        %7019 = vmatprep.subr.mxu0 0.0
        %7020 = vmatpush1.msra.mxu0 0.0
        %7021 = vmatprep.subr.mxu0 0.0
        %7022 = vmatpush1.msra.mxu0 0.0
        %7023 = vmatprep.subr.mxu0 0.0
        %7024 = vmatpush1.msra.mxu0 0.0
        %7025 = vmatprep.subr.mxu0 0.0
        %7026 = vmatpush1.msra.mxu0 0.0
        %7027 = vmatprep.mubr.f32.mxu0 0.0
        %7028 = vmatmul.mubr.f32.gmra.mrb[0].mxu0 %v6751
        %v7029 = vpop.f32.mrb[0].mxu0
        %v7030 = vadd.f32 %v6745, %v7029
        %v7031 = vpop.f32.mrb[0].mxu0
        %7032 = vdwg.mxu0
        %v7033 = vld [vmem:[%s6704 + $0x80] sm:$0xff]
        %v7034 = vld [vmem:[%s6704 + $0x88] sm:$0xff]
        %v7035 = vld [vmem:[%s6704 + $0x90] sm:$0xff]
        %v7036 = vld [vmem:[%s6704 + $0x98] sm:$0xff]
        %v7037 = vld [vmem:[%s6704 + $0xa0] sm:$0xff]
        %v7038 = vld [vmem:[%s6704 + $0xa8] sm:$0xff]
        %v7039 = vld [vmem:[%s6704 + $0xb0] sm:$0xff]
        %v7040 = vld [vmem:[%s6704 + $0xb8] sm:$0xff]
        %v7041 = vld [vmem:[%s6704 + $0xc0] sm:$0xff]
        %v7042 = vld [vmem:[%s6704 + $0xc8] sm:$0xff]
        %v7043 = vld [vmem:[%s6704 + $0xd0] sm:$0xff]
        %v7044 = vld [vmem:[%s6704 + $0xd8] sm:$0xff]
        %v7045 = vld [vmem:[%s6704 + $0xe0] sm:$0xff]
        %v7046 = vld [vmem:[%s6704 + $0xe8] sm:$0xff]
        %v7047 = vld [vmem:[%s6704 + $0xf0] sm:$0xff]
        %v7048 = vld [vmem:[%s6704 + $0xf8] sm:$0xff]
        %v7049 = vld [vmem:[%s6704 + $0x100] sm:$0xff]
        %v7050 = vld [vmem:[%s6704 + $0x108] sm:$0xff]
        %v7051 = vld [vmem:[%s6704 + $0x110] sm:$0xff]
        %v7052 = vld [vmem:[%s6704 + $0x118] sm:$0xff]
        %v7053 = vld [vmem:[%s6704 + $0x120] sm:$0xff]
        %v7054 = vld [vmem:[%s6704 + $0x128] sm:$0xff]
        %v7055 = vld [vmem:[%s6704 + $0x130] sm:$0xff]
        %v7056 = vld [vmem:[%s6704 + $0x138] sm:$0xff]
        %v7057 = vld [vmem:[%s6704 + $0x140] sm:$0xff]
        %v7058 = vld [vmem:[%s6704 + $0x148] sm:$0xff]
        %v7059 = vld [vmem:[%s6704 + $0x150] sm:$0xff]
        %v7060 = vld [vmem:[%s6704 + $0x158] sm:$0xff]
        %v7061 = vld [vmem:[%s6704 + $0x160] sm:$0xff]
        %v7062 = vld [vmem:[%s6704 + $0x168] sm:$0xff]
        %v7063 = vld [vmem:[%s6704 + $0x170] sm:$0xff]
        %v7064 = vld [vmem:[%s6704 + $0x178] sm:$0xff]
        %v7065 = vld [vmem:[%s6721 + $0x4] sm:$0x1]
        %v7066 = vld [vmem:[%s6721 + $0x5] sm:$0x1]
        %v7067 = vld [vmem:[%s6721 + $0x6] sm:$0x1]
        %v7068 = vld [vmem:[%s6721 + $0x7] sm:$0x1]
        %v7069 = vld [vmem:[%s6721 + $0x8] sm:$0x1]
        %v7070 = vld [vmem:[%s6721 + $0x9] sm:$0x1]
        %v7071 = vld [vmem:[%s6721 + $0xa] sm:$0x1]
        %v7072 = vld [vmem:[%s6721 + $0xb] sm:$0x1]
        %v7081 = vlaneseq
        %v7082 = vshrl.u32 %v7081, 7
        %v7083 = vsub.s32 0, %v7082
        %v7084 = vrot.slane %v7065, %v7083
        %v7085 = vlaneseq
        %v7086 = vshrl.u32 %v7085, 7
        %v7087 = vsub.s32 0, %v7086
        %v7088 = vrot.slane %v7066, %v7087
        %v7089 = vlaneseq
        %v7090 = vshrl.u32 %v7089, 7
        %v7091 = vsub.s32 0, %v7090
        %v7092 = vrot.slane %v7067, %v7091
        %v7093 = vlaneseq
        %v7094 = vshrl.u32 %v7093, 7
        %v7095 = vsub.s32 0, %v7094
        %v7096 = vrot.slane %v7068, %v7095
        %v7097 = vlaneseq
        %v7098 = vshrl.u32 %v7097, 7
        %v7099 = vsub.s32 0, %v7098
        %v7100 = vrot.slane %v7069, %v7099
        %v7101 = vlaneseq
        %v7102 = vshrl.u32 %v7101, 7
        %v7103 = vsub.s32 0, %v7102
        %v7104 = vrot.slane %v7070, %v7103
        %v7105 = vlaneseq
        %v7106 = vshrl.u32 %v7105, 7
        %v7107 = vsub.s32 0, %v7106
        %v7108 = vrot.slane %v7071, %v7107
        %v7109 = vlaneseq
        %v7110 = vshrl.u32 %v7109, 7
        %v7111 = vsub.s32 0, %v7110
        %v7112 = vrot.slane %v7072, %v7111
        %7121 = vmatprep.subr.mxu0 0.0
        %7122 = vmatpush1.msra.mxu0 %v7033
        %7123 = vmatprep.subr.mxu0 0.0
        %7124 = vmatpush1.msra.mxu0 %v7034
        %7125 = vmatprep.subr.mxu0 0.0
        %7126 = vmatpush1.msra.mxu0 %v7035
        %7127 = vmatprep.subr.mxu0 0.0
        %7128 = vmatpush1.msra.mxu0 %v7036
        %7129 = vmatprep.subr.mxu0 0.0
        %7130 = vmatpush1.msra.mxu0 0.0
        %7131 = vmatprep.subr.mxu0 0.0
        %7132 = vmatpush1.msra.mxu0 0.0
        %7133 = vmatprep.subr.mxu0 0.0
        %7134 = vmatpush1.msra.mxu0 0.0
        %7135 = vmatprep.subr.mxu0 0.0
        %7136 = vmatpush1.msra.mxu0 0.0
        %7137 = vmatprep.subr.mxu0 0.0
        %7138 = vmatpush1.msra.mxu0 0.0
        %7139 = vmatprep.subr.mxu0 0.0
        %7140 = vmatpush1.msra.mxu0 0.0
        %7141 = vmatprep.subr.mxu0 0.0
        %7142 = vmatpush1.msra.mxu0 0.0
        %7143 = vmatprep.subr.mxu0 0.0
        %7144 = vmatpush1.msra.mxu0 0.0
        %7145 = vmatprep.subr.mxu0 0.0
        %7146 = vmatpush1.msra.mxu0 0.0
        %7147 = vmatprep.subr.mxu0 0.0
        %7148 = vmatpush1.msra.mxu0 0.0
        %7149 = vmatprep.subr.mxu0 0.0
        %7150 = vmatpush1.msra.mxu0 0.0
        %7151 = vmatprep.subr.mxu0 0.0
        %7152 = vmatpush1.msra.mxu0 0.0
        %7153 = vmatprep.subr.mxu0 0.0
        %7154 = vmatpush1.msra.mxu0 0.0
        %7155 = vmatprep.subr.mxu0 0.0
        %7156 = vmatpush1.msra.mxu0 0.0
        %7157 = vmatprep.subr.mxu0 0.0
        %7158 = vmatpush1.msra.mxu0 0.0
        %7159 = vmatprep.subr.mxu0 0.0
        %7160 = vmatpush1.msra.mxu0 0.0
        %7161 = vmatprep.subr.mxu0 0.0
        %7162 = vmatpush1.msra.mxu0 0.0
        %7163 = vmatprep.subr.mxu0 0.0
        %7164 = vmatpush1.msra.mxu0 0.0
        %7165 = vmatprep.subr.mxu0 0.0
        %7166 = vmatpush1.msra.mxu0 0.0
        %7167 = vmatprep.subr.mxu0 0.0
        %7168 = vmatpush1.msra.mxu0 0.0
        %7169 = vmatprep.subr.mxu0 0.0
        %7170 = vmatpush1.msra.mxu0 0.0
        %7171 = vmatprep.subr.mxu0 0.0
        %7172 = vmatpush1.msra.mxu0 0.0
        %7173 = vmatprep.subr.mxu0 0.0
        %7174 = vmatpush1.msra.mxu0 0.0
        %7175 = vmatprep.subr.mxu0 0.0
        %7176 = vmatpush1.msra.mxu0 0.0
        %7177 = vmatprep.subr.mxu0 0.0
        %7178 = vmatpush1.msra.mxu0 0.0
        %7179 = vmatprep.subr.mxu0 0.0
        %7180 = vmatpush1.msra.mxu0 0.0
        %7181 = vmatprep.subr.mxu0 0.0
        %7182 = vmatpush1.msra.mxu0 0.0
        %7183 = vmatprep.subr.mxu0 0.0
        %7184 = vmatpush1.msra.mxu0 0.0
        %7185 = vmatprep.mubr.f32.mxu0 0.0
        %7186 = vmatmul.mubr.f32.gmra.mrb[0].mxu0 %v2979
        %v7187 = vpop.f32.mrb[0].mxu0
        %v7188 = vadd.f32 %v7084, %v7187
        %v7189 = vpop.f32.mrb[0].mxu0
        %7190 = vdwg.mxu0
        %7191 = vmatprep.subr.mxu0 0.0
        %7192 = vmatpush1.msra.mxu0 %v7037
        %7193 = vmatprep.subr.mxu0 0.0
        %7194 = vmatpush1.msra.mxu0 %v7038
        %7195 = vmatprep.subr.mxu0 0.0
        %7196 = vmatpush1.msra.mxu0 %v7039
        %7197 = vmatprep.subr.mxu0 0.0
        %7198 = vmatpush1.msra.mxu0 %v7040
        %7199 = vmatprep.subr.mxu0 0.0
        %7200 = vmatpush1.msra.mxu0 0.0
        %7201 = vmatprep.subr.mxu0 0.0
        %7202 = vmatpush1.msra.mxu0 0.0
        %7203 = vmatprep.subr.mxu0 0.0
        %7204 = vmatpush1.msra.mxu0 0.0
        %7205 = vmatprep.subr.mxu0 0.0
        %7206 = vmatpush1.msra.mxu0 0.0
        %7207 = vmatprep.subr.mxu0 0.0
        %7208 = vmatpush1.msra.mxu0 0.0
        %7209 = vmatprep.subr.mxu0 0.0
        %7210 = vmatpush1.msra.mxu0 0.0
        %7211 = vmatprep.subr.mxu0 0.0
        %7212 = vmatpush1.msra.mxu0 0.0
        %7213 = vmatprep.subr.mxu0 0.0
        %7214 = vmatpush1.msra.mxu0 0.0
        %7215 = vmatprep.subr.mxu0 0.0
        %7216 = vmatpush1.msra.mxu0 0.0
        %7217 = vmatprep.subr.mxu0 0.0
        %7218 = vmatpush1.msra.mxu0 0.0
        %7219 = vmatprep.subr.mxu0 0.0
        %7220 = vmatpush1.msra.mxu0 0.0
        %7221 = vmatprep.subr.mxu0 0.0
        %7222 = vmatpush1.msra.mxu0 0.0
        %7223 = vmatprep.subr.mxu0 0.0
        %7224 = vmatpush1.msra.mxu0 0.0
        %7225 = vmatprep.subr.mxu0 0.0
        %7226 = vmatpush1.msra.mxu0 0.0
        %7227 = vmatprep.subr.mxu0 0.0
        %7228 = vmatpush1.msra.mxu0 0.0
        %7229 = vmatprep.subr.mxu0 0.0
        %7230 = vmatpush1.msra.mxu0 0.0
        %7231 = vmatprep.subr.mxu0 0.0
        %7232 = vmatpush1.msra.mxu0 0.0
        %7233 = vmatprep.subr.mxu0 0.0
        %7234 = vmatpush1.msra.mxu0 0.0
        %7235 = vmatprep.subr.mxu0 0.0
        %7236 = vmatpush1.msra.mxu0 0.0
        %7237 = vmatprep.subr.mxu0 0.0
        %7238 = vmatpush1.msra.mxu0 0.0
        %7239 = vmatprep.subr.mxu0 0.0
        %7240 = vmatpush1.msra.mxu0 0.0
        %7241 = vmatprep.subr.mxu0 0.0
        %7242 = vmatpush1.msra.mxu0 0.0
        %7243 = vmatprep.subr.mxu0 0.0
        %7244 = vmatpush1.msra.mxu0 0.0
        %7245 = vmatprep.subr.mxu0 0.0
        %7246 = vmatpush1.msra.mxu0 0.0
        %7247 = vmatprep.subr.mxu0 0.0
        %7248 = vmatpush1.msra.mxu0 0.0
        %7249 = vmatprep.subr.mxu0 0.0
        %7250 = vmatpush1.msra.mxu0 0.0
        %7251 = vmatprep.subr.mxu0 0.0
        %7252 = vmatpush1.msra.mxu0 0.0
        %7253 = vmatprep.subr.mxu0 0.0
        %7254 = vmatpush1.msra.mxu0 0.0
        %7255 = vmatprep.mubr.f32.mxu0 0.0
        %7256 = vmatmul.mubr.f32.gmra.mrb[0].mxu0 %v2979
        %v7257 = vpop.f32.mrb[0].mxu0
        %v7258 = vadd.f32 %v7088, %v7257
        %v7259 = vpop.f32.mrb[0].mxu0
        %7260 = vdwg.mxu0
        %7261 = vmatprep.subr.mxu0 0.0
        %7262 = vmatpush1.msra.mxu0 %v7041
        %7263 = vmatprep.subr.mxu0 0.0
        %7264 = vmatpush1.msra.mxu0 %v7042
        %7265 = vmatprep.subr.mxu0 0.0
        %7266 = vmatpush1.msra.mxu0 %v7043
        %7267 = vmatprep.subr.mxu0 0.0
        %7268 = vmatpush1.msra.mxu0 %v7044
        %7269 = vmatprep.subr.mxu0 0.0
        %7270 = vmatpush1.msra.mxu0 0.0
        %7271 = vmatprep.subr.mxu0 0.0
        %7272 = vmatpush1.msra.mxu0 0.0
        %7273 = vmatprep.subr.mxu0 0.0
        %7274 = vmatpush1.msra.mxu0 0.0
        %7275 = vmatprep.subr.mxu0 0.0
        %7276 = vmatpush1.msra.mxu0 0.0
        %7277 = vmatprep.subr.mxu0 0.0
        %7278 = vmatpush1.msra.mxu0 0.0
        %7279 = vmatprep.subr.mxu0 0.0
        %7280 = vmatpush1.msra.mxu0 0.0
        %7281 = vmatprep.subr.mxu0 0.0
        %7282 = vmatpush1.msra.mxu0 0.0
        %7283 = vmatprep.subr.mxu0 0.0
        %7284 = vmatpush1.msra.mxu0 0.0
        %7285 = vmatprep.subr.mxu0 0.0
        %7286 = vmatpush1.msra.mxu0 0.0
        %7287 = vmatprep.subr.mxu0 0.0
        %7288 = vmatpush1.msra.mxu0 0.0
        %7289 = vmatprep.subr.mxu0 0.0
        %7290 = vmatpush1.msra.mxu0 0.0
        %7291 = vmatprep.subr.mxu0 0.0
        %7292 = vmatpush1.msra.mxu0 0.0
        %7293 = vmatprep.subr.mxu0 0.0
        %7294 = vmatpush1.msra.mxu0 0.0
        %7295 = vmatprep.subr.mxu0 0.0
        %7296 = vmatpush1.msra.mxu0 0.0
        %7297 = vmatprep.subr.mxu0 0.0
        %7298 = vmatpush1.msra.mxu0 0.0
        %7299 = vmatprep.subr.mxu0 0.0
        %7300 = vmatpush1.msra.mxu0 0.0
        %7301 = vmatprep.subr.mxu0 0.0
        %7302 = vmatpush1.msra.mxu0 0.0
        %7303 = vmatprep.subr.mxu0 0.0
        %7304 = vmatpush1.msra.mxu0 0.0
        %7305 = vmatprep.subr.mxu0 0.0
        %7306 = vmatpush1.msra.mxu0 0.0
        %7307 = vmatprep.subr.mxu0 0.0
        %7308 = vmatpush1.msra.mxu0 0.0
        %7309 = vmatprep.subr.mxu0 0.0
        %7310 = vmatpush1.msra.mxu0 0.0
        %7311 = vmatprep.subr.mxu0 0.0
        %7312 = vmatpush1.msra.mxu0 0.0
        %7313 = vmatprep.subr.mxu0 0.0
        %7314 = vmatpush1.msra.mxu0 0.0
        %7315 = vmatprep.subr.mxu0 0.0
        %7316 = vmatpush1.msra.mxu0 0.0
        %7317 = vmatprep.subr.mxu0 0.0
        %7318 = vmatpush1.msra.mxu0 0.0
        %7319 = vmatprep.subr.mxu0 0.0
        %7320 = vmatpush1.msra.mxu0 0.0
        %7321 = vmatprep.subr.mxu0 0.0
        %7322 = vmatpush1.msra.mxu0 0.0
        %7323 = vmatprep.subr.mxu0 0.0
        %7324 = vmatpush1.msra.mxu0 0.0
        %7325 = vmatprep.mubr.f32.mxu0 0.0
        %7326 = vmatmul.mubr.f32.gmra.mrb[0].mxu0 %v2979
        %v7327 = vpop.f32.mrb[0].mxu0
        %v7328 = vadd.f32 %v7092, %v7327
        %v7329 = vpop.f32.mrb[0].mxu0
        %7330 = vdwg.mxu0
        %7331 = vmatprep.subr.mxu0 0.0
        %7332 = vmatpush1.msra.mxu0 %v7045
        %7333 = vmatprep.subr.mxu0 0.0
        %7334 = vmatpush1.msra.mxu0 %v7046
        %7335 = vmatprep.subr.mxu0 0.0
        %7336 = vmatpush1.msra.mxu0 %v7047
        %7337 = vmatprep.subr.mxu0 0.0
        %7338 = vmatpush1.msra.mxu0 %v7048
        %7339 = vmatprep.subr.mxu0 0.0
        %7340 = vmatpush1.msra.mxu0 0.0
        %7341 = vmatprep.subr.mxu0 0.0
        %7342 = vmatpush1.msra.mxu0 0.0
        %7343 = vmatprep.subr.mxu0 0.0
        %7344 = vmatpush1.msra.mxu0 0.0
        %7345 = vmatprep.subr.mxu0 0.0
        %7346 = vmatpush1.msra.mxu0 0.0
        %7347 = vmatprep.subr.mxu0 0.0
        %7348 = vmatpush1.msra.mxu0 0.0
        %7349 = vmatprep.subr.mxu0 0.0
        %7350 = vmatpush1.msra.mxu0 0.0
        %7351 = vmatprep.subr.mxu0 0.0
        %7352 = vmatpush1.msra.mxu0 0.0
        %7353 = vmatprep.subr.mxu0 0.0
        %7354 = vmatpush1.msra.mxu0 0.0
        %7355 = vmatprep.subr.mxu0 0.0
        %7356 = vmatpush1.msra.mxu0 0.0
        %7357 = vmatprep.subr.mxu0 0.0
        %7358 = vmatpush1.msra.mxu0 0.0
        %7359 = vmatprep.subr.mxu0 0.0
        %7360 = vmatpush1.msra.mxu0 0.0
        %7361 = vmatprep.subr.mxu0 0.0
        %7362 = vmatpush1.msra.mxu0 0.0
        %7363 = vmatprep.subr.mxu0 0.0
        %7364 = vmatpush1.msra.mxu0 0.0
        %7365 = vmatprep.subr.mxu0 0.0
        %7366 = vmatpush1.msra.mxu0 0.0
        %7367 = vmatprep.subr.mxu0 0.0
        %7368 = vmatpush1.msra.mxu0 0.0
        %7369 = vmatprep.subr.mxu0 0.0
        %7370 = vmatpush1.msra.mxu0 0.0
        %7371 = vmatprep.subr.mxu0 0.0
        %7372 = vmatpush1.msra.mxu0 0.0
        %7373 = vmatprep.subr.mxu0 0.0
        %7374 = vmatpush1.msra.mxu0 0.0
        %7375 = vmatprep.subr.mxu0 0.0
        %7376 = vmatpush1.msra.mxu0 0.0
        %7377 = vmatprep.subr.mxu0 0.0
        %7378 = vmatpush1.msra.mxu0 0.0
        %7379 = vmatprep.subr.mxu0 0.0
        %7380 = vmatpush1.msra.mxu0 0.0
        %7381 = vmatprep.subr.mxu0 0.0
        %7382 = vmatpush1.msra.mxu0 0.0
        %7383 = vmatprep.subr.mxu0 0.0
        %7384 = vmatpush1.msra.mxu0 0.0
        %7385 = vmatprep.subr.mxu0 0.0
        %7386 = vmatpush1.msra.mxu0 0.0
        %7387 = vmatprep.subr.mxu0 0.0
        %7388 = vmatpush1.msra.mxu0 0.0
        %7389 = vmatprep.subr.mxu0 0.0
        %7390 = vmatpush1.msra.mxu0 0.0
        %7391 = vmatprep.subr.mxu0 0.0
        %7392 = vmatpush1.msra.mxu0 0.0
        %7393 = vmatprep.subr.mxu0 0.0
        %7394 = vmatpush1.msra.mxu0 0.0
        %7395 = vmatprep.mubr.f32.mxu0 0.0
        %7396 = vmatmul.mubr.f32.gmra.mrb[0].mxu0 %v2979
        %v7397 = vpop.f32.mrb[0].mxu0
        %v7398 = vadd.f32 %v7096, %v7397
        %v7399 = vpop.f32.mrb[0].mxu0
        %7400 = vdwg.mxu0
        %7401 = vmatprep.subr.mxu0 0.0
        %7402 = vmatpush1.msra.mxu0 %v7049
        %7403 = vmatprep.subr.mxu0 0.0
        %7404 = vmatpush1.msra.mxu0 %v7050
        %7405 = vmatprep.subr.mxu0 0.0
        %7406 = vmatpush1.msra.mxu0 %v7051
        %7407 = vmatprep.subr.mxu0 0.0
        %7408 = vmatpush1.msra.mxu0 %v7052
        %7409 = vmatprep.subr.mxu0 0.0
        %7410 = vmatpush1.msra.mxu0 0.0
        %7411 = vmatprep.subr.mxu0 0.0
        %7412 = vmatpush1.msra.mxu0 0.0
        %7413 = vmatprep.subr.mxu0 0.0
        %7414 = vmatpush1.msra.mxu0 0.0
        %7415 = vmatprep.subr.mxu0 0.0
        %7416 = vmatpush1.msra.mxu0 0.0
        %7417 = vmatprep.subr.mxu0 0.0
        %7418 = vmatpush1.msra.mxu0 0.0
        %7419 = vmatprep.subr.mxu0 0.0
        %7420 = vmatpush1.msra.mxu0 0.0
        %7421 = vmatprep.subr.mxu0 0.0
        %7422 = vmatpush1.msra.mxu0 0.0
        %7423 = vmatprep.subr.mxu0 0.0
        %7424 = vmatpush1.msra.mxu0 0.0
        %7425 = vmatprep.subr.mxu0 0.0
        %7426 = vmatpush1.msra.mxu0 0.0
        %7427 = vmatprep.subr.mxu0 0.0
        %7428 = vmatpush1.msra.mxu0 0.0
        %7429 = vmatprep.subr.mxu0 0.0
        %7430 = vmatpush1.msra.mxu0 0.0
        %7431 = vmatprep.subr.mxu0 0.0
        %7432 = vmatpush1.msra.mxu0 0.0
        %7433 = vmatprep.subr.mxu0 0.0
        %7434 = vmatpush1.msra.mxu0 0.0
        %7435 = vmatprep.subr.mxu0 0.0
        %7436 = vmatpush1.msra.mxu0 0.0
        %7437 = vmatprep.subr.mxu0 0.0
        %7438 = vmatpush1.msra.mxu0 0.0
        %7439 = vmatprep.subr.mxu0 0.0
        %7440 = vmatpush1.msra.mxu0 0.0
        %7441 = vmatprep.subr.mxu0 0.0
        %7442 = vmatpush1.msra.mxu0 0.0
        %7443 = vmatprep.subr.mxu0 0.0
        %7444 = vmatpush1.msra.mxu0 0.0
        %7445 = vmatprep.subr.mxu0 0.0
        %7446 = vmatpush1.msra.mxu0 0.0
        %7447 = vmatprep.subr.mxu0 0.0
        %7448 = vmatpush1.msra.mxu0 0.0
        %7449 = vmatprep.subr.mxu0 0.0
        %7450 = vmatpush1.msra.mxu0 0.0
        %7451 = vmatprep.subr.mxu0 0.0
        %7452 = vmatpush1.msra.mxu0 0.0
        %7453 = vmatprep.subr.mxu0 0.0
        %7454 = vmatpush1.msra.mxu0 0.0
        %7455 = vmatprep.subr.mxu0 0.0
        %7456 = vmatpush1.msra.mxu0 0.0
        %7457 = vmatprep.subr.mxu0 0.0
        %7458 = vmatpush1.msra.mxu0 0.0
        %7459 = vmatprep.subr.mxu0 0.0
        %7460 = vmatpush1.msra.mxu0 0.0
        %7461 = vmatprep.subr.mxu0 0.0
        %7462 = vmatpush1.msra.mxu0 0.0
        %7463 = vmatprep.subr.mxu0 0.0
        %7464 = vmatpush1.msra.mxu0 0.0
        %7465 = vmatprep.mubr.f32.mxu0 0.0
        %7466 = vmatmul.mubr.f32.gmra.mrb[0].mxu0 %v2979
        %v7467 = vpop.f32.mrb[0].mxu0
        %v7468 = vadd.f32 %v7100, %v7467
        %v7469 = vpop.f32.mrb[0].mxu0
        %7470 = vdwg.mxu0
        %7471 = vmatprep.subr.mxu0 0.0
        %7472 = vmatpush1.msra.mxu0 %v7053
        %7473 = vmatprep.subr.mxu0 0.0
        %7474 = vmatpush1.msra.mxu0 %v7054
        %7475 = vmatprep.subr.mxu0 0.0
        %7476 = vmatpush1.msra.mxu0 %v7055
        %7477 = vmatprep.subr.mxu0 0.0
        %7478 = vmatpush1.msra.mxu0 %v7056
        %7479 = vmatprep.subr.mxu0 0.0
        %7480 = vmatpush1.msra.mxu0 0.0
        %7481 = vmatprep.subr.mxu0 0.0
        %7482 = vmatpush1.msra.mxu0 0.0
        %7483 = vmatprep.subr.mxu0 0.0
        %7484 = vmatpush1.msra.mxu0 0.0
        %7485 = vmatprep.subr.mxu0 0.0
        %7486 = vmatpush1.msra.mxu0 0.0
        %7487 = vmatprep.subr.mxu0 0.0
        %7488 = vmatpush1.msra.mxu0 0.0
        %7489 = vmatprep.subr.mxu0 0.0
        %7490 = vmatpush1.msra.mxu0 0.0
        %7491 = vmatprep.subr.mxu0 0.0
        %7492 = vmatpush1.msra.mxu0 0.0
        %7493 = vmatprep.subr.mxu0 0.0
        %7494 = vmatpush1.msra.mxu0 0.0
        %7495 = vmatprep.subr.mxu0 0.0
        %7496 = vmatpush1.msra.mxu0 0.0
        %7497 = vmatprep.subr.mxu0 0.0
        %7498 = vmatpush1.msra.mxu0 0.0
        %7499 = vmatprep.subr.mxu0 0.0
        %7500 = vmatpush1.msra.mxu0 0.0
        %7501 = vmatprep.subr.mxu0 0.0
        %7502 = vmatpush1.msra.mxu0 0.0
        %7503 = vmatprep.subr.mxu0 0.0
        %7504 = vmatpush1.msra.mxu0 0.0
        %7505 = vmatprep.subr.mxu0 0.0
        %7506 = vmatpush1.msra.mxu0 0.0
        %7507 = vmatprep.subr.mxu0 0.0
        %7508 = vmatpush1.msra.mxu0 0.0
        %7509 = vmatprep.subr.mxu0 0.0
        %7510 = vmatpush1.msra.mxu0 0.0
        %7511 = vmatprep.subr.mxu0 0.0
        %7512 = vmatpush1.msra.mxu0 0.0
        %7513 = vmatprep.subr.mxu0 0.0
        %7514 = vmatpush1.msra.mxu0 0.0
        %7515 = vmatprep.subr.mxu0 0.0
        %7516 = vmatpush1.msra.mxu0 0.0
        %7517 = vmatprep.subr.mxu0 0.0
        %7518 = vmatpush1.msra.mxu0 0.0
        %7519 = vmatprep.subr.mxu0 0.0
        %7520 = vmatpush1.msra.mxu0 0.0
        %7521 = vmatprep.subr.mxu0 0.0
        %7522 = vmatpush1.msra.mxu0 0.0
        %7523 = vmatprep.subr.mxu0 0.0
        %7524 = vmatpush1.msra.mxu0 0.0
        %7525 = vmatprep.subr.mxu0 0.0
        %7526 = vmatpush1.msra.mxu0 0.0
        %7527 = vmatprep.subr.mxu0 0.0
        %7528 = vmatpush1.msra.mxu0 0.0
        %7529 = vmatprep.subr.mxu0 0.0
        %7530 = vmatpush1.msra.mxu0 0.0
        %7531 = vmatprep.subr.mxu0 0.0
        %7532 = vmatpush1.msra.mxu0 0.0
        %7533 = vmatprep.subr.mxu0 0.0
        %7534 = vmatpush1.msra.mxu0 0.0
        %7535 = vmatprep.mubr.f32.mxu0 0.0
        %7536 = vmatmul.mubr.f32.gmra.mrb[0].mxu0 %v2979
        %v7537 = vpop.f32.mrb[0].mxu0
        %v7538 = vadd.f32 %v7104, %v7537
        %v7539 = vpop.f32.mrb[0].mxu0
        %7540 = vdwg.mxu0
        %7541 = vmatprep.subr.mxu0 0.0
        %7542 = vmatpush1.msra.mxu0 %v7057
        %7543 = vmatprep.subr.mxu0 0.0
        %7544 = vmatpush1.msra.mxu0 %v7058
        %7545 = vmatprep.subr.mxu0 0.0
        %7546 = vmatpush1.msra.mxu0 %v7059
        %7547 = vmatprep.subr.mxu0 0.0
        %7548 = vmatpush1.msra.mxu0 %v7060
        %7549 = vmatprep.subr.mxu0 0.0
        %7550 = vmatpush1.msra.mxu0 0.0
        %7551 = vmatprep.subr.mxu0 0.0
        %7552 = vmatpush1.msra.mxu0 0.0
        %7553 = vmatprep.subr.mxu0 0.0
        %7554 = vmatpush1.msra.mxu0 0.0
        %7555 = vmatprep.subr.mxu0 0.0
        %7556 = vmatpush1.msra.mxu0 0.0
        %7557 = vmatprep.subr.mxu0 0.0
        %7558 = vmatpush1.msra.mxu0 0.0
        %7559 = vmatprep.subr.mxu0 0.0
        %7560 = vmatpush1.msra.mxu0 0.0
        %7561 = vmatprep.subr.mxu0 0.0
        %7562 = vmatpush1.msra.mxu0 0.0
        %7563 = vmatprep.subr.mxu0 0.0
        %7564 = vmatpush1.msra.mxu0 0.0
        %7565 = vmatprep.subr.mxu0 0.0
        %7566 = vmatpush1.msra.mxu0 0.0
        %7567 = vmatprep.subr.mxu0 0.0
        %7568 = vmatpush1.msra.mxu0 0.0
        %7569 = vmatprep.subr.mxu0 0.0
        %7570 = vmatpush1.msra.mxu0 0.0
        %7571 = vmatprep.subr.mxu0 0.0
        %7572 = vmatpush1.msra.mxu0 0.0
        %7573 = vmatprep.subr.mxu0 0.0
        %7574 = vmatpush1.msra.mxu0 0.0
        %7575 = vmatprep.subr.mxu0 0.0
        %7576 = vmatpush1.msra.mxu0 0.0
        %7577 = vmatprep.subr.mxu0 0.0
        %7578 = vmatpush1.msra.mxu0 0.0
        %7579 = vmatprep.subr.mxu0 0.0
        %7580 = vmatpush1.msra.mxu0 0.0
        %7581 = vmatprep.subr.mxu0 0.0
        %7582 = vmatpush1.msra.mxu0 0.0
        %7583 = vmatprep.subr.mxu0 0.0
        %7584 = vmatpush1.msra.mxu0 0.0
        %7585 = vmatprep.subr.mxu0 0.0
        %7586 = vmatpush1.msra.mxu0 0.0
        %7587 = vmatprep.subr.mxu0 0.0
        %7588 = vmatpush1.msra.mxu0 0.0
        %7589 = vmatprep.subr.mxu0 0.0
        %7590 = vmatpush1.msra.mxu0 0.0
        %7591 = vmatprep.subr.mxu0 0.0
        %7592 = vmatpush1.msra.mxu0 0.0
        %7593 = vmatprep.subr.mxu0 0.0
        %7594 = vmatpush1.msra.mxu0 0.0
        %7595 = vmatprep.subr.mxu0 0.0
        %7596 = vmatpush1.msra.mxu0 0.0
        %7597 = vmatprep.subr.mxu0 0.0
        %7598 = vmatpush1.msra.mxu0 0.0
        %7599 = vmatprep.subr.mxu0 0.0
        %7600 = vmatpush1.msra.mxu0 0.0
        %7601 = vmatprep.subr.mxu0 0.0
        %7602 = vmatpush1.msra.mxu0 0.0
        %7603 = vmatprep.subr.mxu0 0.0
        %7604 = vmatpush1.msra.mxu0 0.0
        %7605 = vmatprep.mubr.f32.mxu0 0.0
        %7606 = vmatmul.mubr.f32.gmra.mrb[0].mxu0 %v2979
        %v7607 = vpop.f32.mrb[0].mxu0
        %v7608 = vadd.f32 %v7108, %v7607
        %v7609 = vpop.f32.mrb[0].mxu0
        %7610 = vdwg.mxu0
        %7611 = vmatprep.subr.mxu0 0.0
        %7612 = vmatpush1.msra.mxu0 %v7061
        %7613 = vmatprep.subr.mxu0 0.0
        %7614 = vmatpush1.msra.mxu0 %v7062
        %7615 = vmatprep.subr.mxu0 0.0
        %7616 = vmatpush1.msra.mxu0 %v7063
        %7617 = vmatprep.subr.mxu0 0.0
        %7618 = vmatpush1.msra.mxu0 %v7064
        %7619 = vmatprep.subr.mxu0 0.0
        %7620 = vmatpush1.msra.mxu0 0.0
        %7621 = vmatprep.subr.mxu0 0.0
        %7622 = vmatpush1.msra.mxu0 0.0
        %7623 = vmatprep.subr.mxu0 0.0
        %7624 = vmatpush1.msra.mxu0 0.0
        %7625 = vmatprep.subr.mxu0 0.0
        %7626 = vmatpush1.msra.mxu0 0.0
        %7627 = vmatprep.subr.mxu0 0.0
        %7628 = vmatpush1.msra.mxu0 0.0
        %7629 = vmatprep.subr.mxu0 0.0
        %7630 = vmatpush1.msra.mxu0 0.0
        %7631 = vmatprep.subr.mxu0 0.0
        %7632 = vmatpush1.msra.mxu0 0.0
        %7633 = vmatprep.subr.mxu0 0.0
        %7634 = vmatpush1.msra.mxu0 0.0
        %7635 = vmatprep.subr.mxu0 0.0
        %7636 = vmatpush1.msra.mxu0 0.0
        %7637 = vmatprep.subr.mxu0 0.0
        %7638 = vmatpush1.msra.mxu0 0.0
        %7639 = vmatprep.subr.mxu0 0.0
        %7640 = vmatpush1.msra.mxu0 0.0
        %7641 = vmatprep.subr.mxu0 0.0
        %7642 = vmatpush1.msra.mxu0 0.0
        %7643 = vmatprep.subr.mxu0 0.0
        %7644 = vmatpush1.msra.mxu0 0.0
        %7645 = vmatprep.subr.mxu0 0.0
        %7646 = vmatpush1.msra.mxu0 0.0
        %7647 = vmatprep.subr.mxu0 0.0
        %7648 = vmatpush1.msra.mxu0 0.0
        %7649 = vmatprep.subr.mxu0 0.0
        %7650 = vmatpush1.msra.mxu0 0.0
        %7651 = vmatprep.subr.mxu0 0.0
        %7652 = vmatpush1.msra.mxu0 0.0
        %7653 = vmatprep.subr.mxu0 0.0
        %7654 = vmatpush1.msra.mxu0 0.0
        %7655 = vmatprep.subr.mxu0 0.0
        %7656 = vmatpush1.msra.mxu0 0.0
        %7657 = vmatprep.subr.mxu0 0.0
        %7658 = vmatpush1.msra.mxu0 0.0
        %7659 = vmatprep.subr.mxu0 0.0
        %7660 = vmatpush1.msra.mxu0 0.0
        %7661 = vmatprep.subr.mxu0 0.0
        %7662 = vmatpush1.msra.mxu0 0.0
        %7663 = vmatprep.subr.mxu0 0.0
        %7664 = vmatpush1.msra.mxu0 0.0
        %7665 = vmatprep.subr.mxu0 0.0
        %7666 = vmatpush1.msra.mxu0 0.0
        %7667 = vmatprep.subr.mxu0 0.0
        %7668 = vmatpush1.msra.mxu0 0.0
        %7669 = vmatprep.subr.mxu0 0.0
        %7670 = vmatpush1.msra.mxu0 0.0
        %7671 = vmatprep.subr.mxu0 0.0
        %7672 = vmatpush1.msra.mxu0 0.0
        %7673 = vmatprep.subr.mxu0 0.0
        %7674 = vmatpush1.msra.mxu0 0.0
        %7675 = vmatprep.mubr.f32.mxu0 0.0
        %7676 = vmatmul.mubr.f32.gmra.mrb[0].mxu0 %v2979
        %v7677 = vpop.f32.mrb[0].mxu0
        %v7678 = vadd.f32 %v7112, %v7677
        %v7679 = vpop.f32.mrb[0].mxu0
        %7680 = vdwg.mxu0
        %s7681 = scalar_lea.vmem %s10, 32
        %v7682 = vld [vmem:[%s7681] sm:$0xff]
        %v7683 = vld [vmem:[%s7681 + $0x8] sm:$0xff]
        %v7684 = vld [vmem:[%s7681 + $0x10] sm:$0xff]
        %v7685 = vld [vmem:[%s7681 + $0x18] sm:$0xff]
        %s7686 = scalar_lea.vmem %s11, 1
        %v7687 = vld [vmem:[%s7686] sm:$0x1]
        %v7689 = vsel %vm1579, %v6820, 0
        %v7692 = vsel %vm1579, %v7188, 0
        %7694 = vmatprep.subr.mxu0 0.0
        %7695 = vmatpush1.xpose.msra.mxu0 %v7692
        %7696 = vmatprep.subr.mxu0 0.0
        %7697 = vmatpush1.xpose.msra.mxu0 0.0
        %7698 = vmatprep.subr.mxu0 0.0
        %7699 = vmatpush1.xpose.msra.mxu0 0.0
        %7700 = vmatprep.subr.mxu0 0.0
        %7701 = vmatpush1.xpose.msra.mxu0 0.0
        %7702 = vmatprep.subr.mxu0 0.0
        %7703 = vmatpush1.xpose.msra.mxu0 0.0
        %7704 = vmatprep.subr.mxu0 0.0
        %7705 = vmatpush1.xpose.msra.mxu0 0.0
        %7706 = vmatprep.subr.mxu0 0.0
        %7707 = vmatpush1.xpose.msra.mxu0 0.0
        %7708 = vmatprep.subr.mxu0 0.0
        %7709 = vmatpush1.xpose.msra.mxu0 0.0
        %7710 = vmatprep.subr.mxu0 0.0
        %7711 = vmatpush1.xpose.msra.mxu0 0.0
        %7712 = vmatprep.subr.mxu0 0.0
        %7713 = vmatpush1.xpose.msra.mxu0 0.0
        %7714 = vmatprep.subr.mxu0 0.0
        %7715 = vmatpush1.xpose.msra.mxu0 0.0
        %7716 = vmatprep.subr.mxu0 0.0
        %7717 = vmatpush1.xpose.msra.mxu0 0.0
        %7718 = vmatprep.subr.mxu0 0.0
        %7719 = vmatpush1.xpose.msra.mxu0 0.0
        %7720 = vmatprep.subr.mxu0 0.0
        %7721 = vmatpush1.xpose.msra.mxu0 0.0
        %7722 = vmatprep.subr.mxu0 0.0
        %7723 = vmatpush1.xpose.msra.mxu0 0.0
        %7724 = vmatprep.subr.mxu0 0.0
        %7725 = vmatpush1.xpose.msra.mxu0 0.0
        %7726 = vmatprep.subr.mxu0 0.0
        %7727 = vmatpush1.xpose.msra.mxu0 0.0
        %7728 = vmatprep.subr.mxu0 0.0
        %7729 = vmatpush1.xpose.msra.mxu0 0.0
        %7730 = vmatprep.subr.mxu0 0.0
        %7731 = vmatpush1.xpose.msra.mxu0 0.0
        %7732 = vmatprep.subr.mxu0 0.0
        %7733 = vmatpush1.xpose.msra.mxu0 0.0
        %7734 = vmatprep.subr.mxu0 0.0
        %7735 = vmatpush1.xpose.msra.mxu0 0.0
        %7736 = vmatprep.subr.mxu0 0.0
        %7737 = vmatpush1.xpose.msra.mxu0 0.0
        %7738 = vmatprep.subr.mxu0 0.0
        %7739 = vmatpush1.xpose.msra.mxu0 0.0
        %7740 = vmatprep.subr.mxu0 0.0
        %7741 = vmatpush1.xpose.msra.mxu0 0.0
        %7742 = vmatprep.subr.mxu0 0.0
        %7743 = vmatpush1.xpose.msra.mxu0 0.0
        %7744 = vmatprep.subr.mxu0 0.0
        %7745 = vmatpush1.xpose.msra.mxu0 0.0
        %7746 = vmatprep.subr.mxu0 0.0
        %7747 = vmatpush1.xpose.msra.mxu0 0.0
        %7748 = vmatprep.subr.mxu0 0.0
        %7749 = vmatpush1.xpose.msra.mxu0 0.0
        %7750 = vmatprep.subr.mxu0 0.0
        %7751 = vmatpush1.xpose.msra.mxu0 0.0
        %7752 = vmatprep.subr.mxu0 0.0
        %7753 = vmatpush1.xpose.msra.mxu0 0.0
        %7754 = vmatprep.subr.mxu0 0.0
        %7755 = vmatpush1.xpose.msra.mxu0 0.0
        %7756 = vmatprep.subr.mxu0 0.0
        %7757 = vmatpush1.xpose.msra.mxu0 0.0
        %7758 = vmatprep.mubr.f32.mxu0 0.0
        %7759 = vmatmul.mubr.f32.gmra.mrb[0].mxu0 %v7689
        %v7760 = vpop.f32.mrb[0].mxu0
        %v7761 = vadd.f32 0.0, %v7760
        %v7762 = vpop.f32.mrb[0].mxu0
        %7763 = vdwg.mxu0
        %v7765 = vsel %vm1579, %v6890, 0
        %v7768 = vsel %vm1579, %v7258, 0
        %7770 = vmatprep.subr.mxu0 0.0
        %7771 = vmatpush1.xpose.msra.mxu0 %v7768
        %7772 = vmatprep.subr.mxu0 0.0
        %7773 = vmatpush1.xpose.msra.mxu0 0.0
        %7774 = vmatprep.subr.mxu0 0.0
        %7775 = vmatpush1.xpose.msra.mxu0 0.0
        %7776 = vmatprep.subr.mxu0 0.0
        %7777 = vmatpush1.xpose.msra.mxu0 0.0
        %7778 = vmatprep.subr.mxu0 0.0
        %7779 = vmatpush1.xpose.msra.mxu0 0.0
        %7780 = vmatprep.subr.mxu0 0.0
        %7781 = vmatpush1.xpose.msra.mxu0 0.0
        %7782 = vmatprep.subr.mxu0 0.0
        %7783 = vmatpush1.xpose.msra.mxu0 0.0
        %7784 = vmatprep.subr.mxu0 0.0
        %7785 = vmatpush1.xpose.msra.mxu0 0.0
        %7786 = vmatprep.subr.mxu0 0.0
        %7787 = vmatpush1.xpose.msra.mxu0 0.0
        %7788 = vmatprep.subr.mxu0 0.0
        %7789 = vmatpush1.xpose.msra.mxu0 0.0
        %7790 = vmatprep.subr.mxu0 0.0
        %7791 = vmatpush1.xpose.msra.mxu0 0.0
        %7792 = vmatprep.subr.mxu0 0.0
        %7793 = vmatpush1.xpose.msra.mxu0 0.0
        %7794 = vmatprep.subr.mxu0 0.0
        %7795 = vmatpush1.xpose.msra.mxu0 0.0
        %7796 = vmatprep.subr.mxu0 0.0
        %7797 = vmatpush1.xpose.msra.mxu0 0.0
        %7798 = vmatprep.subr.mxu0 0.0
        %7799 = vmatpush1.xpose.msra.mxu0 0.0
        %7800 = vmatprep.subr.mxu0 0.0
        %7801 = vmatpush1.xpose.msra.mxu0 0.0
        %7802 = vmatprep.subr.mxu0 0.0
        %7803 = vmatpush1.xpose.msra.mxu0 0.0
        %7804 = vmatprep.subr.mxu0 0.0
        %7805 = vmatpush1.xpose.msra.mxu0 0.0
        %7806 = vmatprep.subr.mxu0 0.0
        %7807 = vmatpush1.xpose.msra.mxu0 0.0
        %7808 = vmatprep.subr.mxu0 0.0
        %7809 = vmatpush1.xpose.msra.mxu0 0.0
        %7810 = vmatprep.subr.mxu0 0.0
        %7811 = vmatpush1.xpose.msra.mxu0 0.0
        %7812 = vmatprep.subr.mxu0 0.0
        %7813 = vmatpush1.xpose.msra.mxu0 0.0
        %7814 = vmatprep.subr.mxu0 0.0
        %7815 = vmatpush1.xpose.msra.mxu0 0.0
        %7816 = vmatprep.subr.mxu0 0.0
        %7817 = vmatpush1.xpose.msra.mxu0 0.0
        %7818 = vmatprep.subr.mxu0 0.0
        %7819 = vmatpush1.xpose.msra.mxu0 0.0
        %7820 = vmatprep.subr.mxu0 0.0
        %7821 = vmatpush1.xpose.msra.mxu0 0.0
        %7822 = vmatprep.subr.mxu0 0.0
        %7823 = vmatpush1.xpose.msra.mxu0 0.0
        %7824 = vmatprep.subr.mxu0 0.0
        %7825 = vmatpush1.xpose.msra.mxu0 0.0
        %7826 = vmatprep.subr.mxu0 0.0
        %7827 = vmatpush1.xpose.msra.mxu0 0.0
        %7828 = vmatprep.subr.mxu0 0.0
        %7829 = vmatpush1.xpose.msra.mxu0 0.0
        %7830 = vmatprep.subr.mxu0 0.0
        %7831 = vmatpush1.xpose.msra.mxu0 0.0
        %7832 = vmatprep.subr.mxu0 0.0
        %7833 = vmatpush1.xpose.msra.mxu0 0.0
        %7834 = vmatprep.mubr.f32.mxu0 0.0
        %7835 = vmatmul.mubr.f32.gmra.mrb[0].mxu0 %v7765
        %v7836 = vpop.f32.mrb[0].mxu0
        %v7837 = vadd.f32 0.0, %v7836
        %v7838 = vpop.f32.mrb[0].mxu0
        %7839 = vdwg.mxu0
        %v7841 = vsel %vm1579, %v6960, 0
        %v7844 = vsel %vm1579, %v7328, 0
        %7846 = vmatprep.subr.mxu0 0.0
        %7847 = vmatpush1.xpose.msra.mxu0 %v7844
        %7848 = vmatprep.subr.mxu0 0.0
        %7849 = vmatpush1.xpose.msra.mxu0 0.0
        %7850 = vmatprep.subr.mxu0 0.0
        %7851 = vmatpush1.xpose.msra.mxu0 0.0
        %7852 = vmatprep.subr.mxu0 0.0
        %7853 = vmatpush1.xpose.msra.mxu0 0.0
        %7854 = vmatprep.subr.mxu0 0.0
        %7855 = vmatpush1.xpose.msra.mxu0 0.0
        %7856 = vmatprep.subr.mxu0 0.0
        %7857 = vmatpush1.xpose.msra.mxu0 0.0
        %7858 = vmatprep.subr.mxu0 0.0
        %7859 = vmatpush1.xpose.msra.mxu0 0.0
        %7860 = vmatprep.subr.mxu0 0.0
        %7861 = vmatpush1.xpose.msra.mxu0 0.0
        %7862 = vmatprep.subr.mxu0 0.0
        %7863 = vmatpush1.xpose.msra.mxu0 0.0
        %7864 = vmatprep.subr.mxu0 0.0
        %7865 = vmatpush1.xpose.msra.mxu0 0.0
        %7866 = vmatprep.subr.mxu0 0.0
        %7867 = vmatpush1.xpose.msra.mxu0 0.0
        %7868 = vmatprep.subr.mxu0 0.0
        %7869 = vmatpush1.xpose.msra.mxu0 0.0
        %7870 = vmatprep.subr.mxu0 0.0
        %7871 = vmatpush1.xpose.msra.mxu0 0.0
        %7872 = vmatprep.subr.mxu0 0.0
        %7873 = vmatpush1.xpose.msra.mxu0 0.0
        %7874 = vmatprep.subr.mxu0 0.0
        %7875 = vmatpush1.xpose.msra.mxu0 0.0
        %7876 = vmatprep.subr.mxu0 0.0
        %7877 = vmatpush1.xpose.msra.mxu0 0.0
        %7878 = vmatprep.subr.mxu0 0.0
        %7879 = vmatpush1.xpose.msra.mxu0 0.0
        %7880 = vmatprep.subr.mxu0 0.0
        %7881 = vmatpush1.xpose.msra.mxu0 0.0
        %7882 = vmatprep.subr.mxu0 0.0
        %7883 = vmatpush1.xpose.msra.mxu0 0.0
        %7884 = vmatprep.subr.mxu0 0.0
        %7885 = vmatpush1.xpose.msra.mxu0 0.0
        %7886 = vmatprep.subr.mxu0 0.0
        %7887 = vmatpush1.xpose.msra.mxu0 0.0
        %7888 = vmatprep.subr.mxu0 0.0
        %7889 = vmatpush1.xpose.msra.mxu0 0.0
        %7890 = vmatprep.subr.mxu0 0.0
        %7891 = vmatpush1.xpose.msra.mxu0 0.0
        %7892 = vmatprep.subr.mxu0 0.0
        %7893 = vmatpush1.xpose.msra.mxu0 0.0
        %7894 = vmatprep.subr.mxu0 0.0
        %7895 = vmatpush1.xpose.msra.mxu0 0.0
        %7896 = vmatprep.subr.mxu0 0.0
        %7897 = vmatpush1.xpose.msra.mxu0 0.0
        %7898 = vmatprep.subr.mxu0 0.0
        %7899 = vmatpush1.xpose.msra.mxu0 0.0
        %7900 = vmatprep.subr.mxu0 0.0
        %7901 = vmatpush1.xpose.msra.mxu0 0.0
        %7902 = vmatprep.subr.mxu0 0.0
        %7903 = vmatpush1.xpose.msra.mxu0 0.0
        %7904 = vmatprep.subr.mxu0 0.0
        %7905 = vmatpush1.xpose.msra.mxu0 0.0
        %7906 = vmatprep.subr.mxu0 0.0
        %7907 = vmatpush1.xpose.msra.mxu0 0.0
        %7908 = vmatprep.subr.mxu0 0.0
        %7909 = vmatpush1.xpose.msra.mxu0 0.0
        %7910 = vmatprep.mubr.f32.mxu0 0.0
        %7911 = vmatmul.mubr.f32.gmra.mrb[0].mxu0 %v7841
        %v7912 = vpop.f32.mrb[0].mxu0
        %v7913 = vadd.f32 0.0, %v7912
        %v7914 = vpop.f32.mrb[0].mxu0
        %7915 = vdwg.mxu0
        %v7917 = vsel %vm1579, %v7030, 0
        %v7920 = vsel %vm1579, %v7398, 0
        %7922 = vmatprep.subr.mxu0 0.0
        %7923 = vmatpush1.xpose.msra.mxu0 %v7920
        %7924 = vmatprep.subr.mxu0 0.0
        %7925 = vmatpush1.xpose.msra.mxu0 0.0
        %7926 = vmatprep.subr.mxu0 0.0
        %7927 = vmatpush1.xpose.msra.mxu0 0.0
        %7928 = vmatprep.subr.mxu0 0.0
        %7929 = vmatpush1.xpose.msra.mxu0 0.0
        %7930 = vmatprep.subr.mxu0 0.0
        %7931 = vmatpush1.xpose.msra.mxu0 0.0
        %7932 = vmatprep.subr.mxu0 0.0
        %7933 = vmatpush1.xpose.msra.mxu0 0.0
        %7934 = vmatprep.subr.mxu0 0.0
        %7935 = vmatpush1.xpose.msra.mxu0 0.0
        %7936 = vmatprep.subr.mxu0 0.0
        %7937 = vmatpush1.xpose.msra.mxu0 0.0
        %7938 = vmatprep.subr.mxu0 0.0
        %7939 = vmatpush1.xpose.msra.mxu0 0.0
        %7940 = vmatprep.subr.mxu0 0.0
        %7941 = vmatpush1.xpose.msra.mxu0 0.0
        %7942 = vmatprep.subr.mxu0 0.0
        %7943 = vmatpush1.xpose.msra.mxu0 0.0
        %7944 = vmatprep.subr.mxu0 0.0
        %7945 = vmatpush1.xpose.msra.mxu0 0.0
        %7946 = vmatprep.subr.mxu0 0.0
        %7947 = vmatpush1.xpose.msra.mxu0 0.0
        %7948 = vmatprep.subr.mxu0 0.0
        %7949 = vmatpush1.xpose.msra.mxu0 0.0
        %7950 = vmatprep.subr.mxu0 0.0
        %7951 = vmatpush1.xpose.msra.mxu0 0.0
        %7952 = vmatprep.subr.mxu0 0.0
        %7953 = vmatpush1.xpose.msra.mxu0 0.0
        %7954 = vmatprep.subr.mxu0 0.0
        %7955 = vmatpush1.xpose.msra.mxu0 0.0
        %7956 = vmatprep.subr.mxu0 0.0
        %7957 = vmatpush1.xpose.msra.mxu0 0.0
        %7958 = vmatprep.subr.mxu0 0.0
        %7959 = vmatpush1.xpose.msra.mxu0 0.0
        %7960 = vmatprep.subr.mxu0 0.0
        %7961 = vmatpush1.xpose.msra.mxu0 0.0
        %7962 = vmatprep.subr.mxu0 0.0
        %7963 = vmatpush1.xpose.msra.mxu0 0.0
        %7964 = vmatprep.subr.mxu0 0.0
        %7965 = vmatpush1.xpose.msra.mxu0 0.0
        %7966 = vmatprep.subr.mxu0 0.0
        %7967 = vmatpush1.xpose.msra.mxu0 0.0
        %7968 = vmatprep.subr.mxu0 0.0
        %7969 = vmatpush1.xpose.msra.mxu0 0.0
        %7970 = vmatprep.subr.mxu0 0.0
        %7971 = vmatpush1.xpose.msra.mxu0 0.0
        %7972 = vmatprep.subr.mxu0 0.0
        %7973 = vmatpush1.xpose.msra.mxu0 0.0
        %7974 = vmatprep.subr.mxu0 0.0
        %7975 = vmatpush1.xpose.msra.mxu0 0.0
        %7976 = vmatprep.subr.mxu0 0.0
        %7977 = vmatpush1.xpose.msra.mxu0 0.0
        %7978 = vmatprep.subr.mxu0 0.0
        %7979 = vmatpush1.xpose.msra.mxu0 0.0
        %7980 = vmatprep.subr.mxu0 0.0
        %7981 = vmatpush1.xpose.msra.mxu0 0.0
        %7982 = vmatprep.subr.mxu0 0.0
        %7983 = vmatpush1.xpose.msra.mxu0 0.0
        %7984 = vmatprep.subr.mxu0 0.0
        %7985 = vmatpush1.xpose.msra.mxu0 0.0
        %7986 = vmatprep.mubr.f32.mxu0 0.0
        %7987 = vmatmul.mubr.f32.gmra.mrb[0].mxu0 %v7917
        %v7988 = vpop.f32.mrb[0].mxu0
        %v7989 = vadd.f32 0.0, %v7988
        %v7990 = vpop.f32.mrb[0].mxu0
        %7991 = vdwg.mxu0
        %v7992 = vmul.f32 %v7761, 0.35355338
        %v7993 = vmul.f32 %v7837, 0.35355338
        %v7994 = vmul.f32 %v7913, 0.35355338
        %v7995 = vmul.f32 %v7989, 0.35355338
        %v7996 = vadd.f32 %v7992, %v591
        %v7997 = vadd.f32 %v7993, %v591
        %v7998 = vadd.f32 %v7994, %v591
        %v7999 = vadd.f32 %v7995, %v591
        %v8000 = vsel %vm1579, %v7996, -inf
        %8001 = vmax.xlane.f32.xlu0 %v8000
        %v8002 = vpop.xlane.xlu0 %8001
        %v8003 = vsel %vm1579, %v7997, -inf
        %8004 = vmax.xlane.f32.xlu0 %v8003
        %v8005 = vpop.xlane.xlu0 %8004
        %v8006 = vsel %vm1579, %v7998, -inf
        %8007 = vmax.xlane.f32.xlu0 %v8006
        %v8008 = vpop.xlane.xlu0 %8007
        %v8009 = vsel %vm1579, %v7999, -inf
        %8010 = vmax.xlane.f32.xlu0 %v8009
        %v8011 = vpop.xlane.xlu0 %8010
        %v8012 = vsub.f32 %v7996, %v8002
        %v8013 = vsub.f32 %v7997, %v8005
        %v8014 = vsub.f32 %v7998, %v8008
        %v8015 = vsub.f32 %v7999, %v8011
        %v8016 = vmul.f32 %v8012, 1.442695
        %v8017 = vpow.pop %v8016
        %v8018 = vmul.f32 %v8013, 1.442695
        %v8019 = vpow.pop %v8018
        %v8020 = vmul.f32 %v8014, 1.442695
        %v8021 = vpow.pop %v8020
        %v8022 = vmul.f32 %v8015, 1.442695
        %v8023 = vpow.pop %v8022
        %v8024 = vsel %vm1579, %v8017, 0.0
        %8025 = vadd.xlane.f32.xlu0 %v8024
        %v8026 = vpop.xlane.xlu0 %8025
        %v8027 = vsel %vm1579, %v8019, 0.0
        %8028 = vadd.xlane.f32.xlu0 %v8027
        %v8029 = vpop.xlane.xlu0 %8028
        %v8030 = vsel %vm1579, %v8021, 0.0
        %8031 = vadd.xlane.f32.xlu0 %v8030
        %v8032 = vpop.xlane.xlu0 %8031
        %v8033 = vsel %vm1579, %v8023, 0.0
        %8034 = vadd.xlane.f32.xlu0 %v8033
        %v8035 = vpop.xlane.xlu0 %8034
        %v8036 = vrcp.pop %v8026
        %v8037 = vrcp.pop %v8029
        %v8038 = vrcp.pop %v8032
        %v8039 = vrcp.pop %v8035
        %v8040 = vmul.f32 %v8017, %v8036
        %v8041 = vmul.f32 %v8019, %v8037
        %v8042 = vmul.f32 %v8021, %v8038
        %v8043 = vmul.f32 %v8023, %v8039
        %v8045 = vsel %vm1579, %v8040, 0
        %8047 = vmatprep.subr.mxu0 0.0
        %8048 = vmatpush1.msra.mxu0 %v7468
        %8049 = vmatprep.subr.mxu0 0.0
        %8050 = vmatpush1.msra.mxu0 0.0
        %8051 = vmatprep.subr.mxu0 0.0
        %8052 = vmatpush1.msra.mxu0 0.0
        %8053 = vmatprep.subr.mxu0 0.0
        %8054 = vmatpush1.msra.mxu0 0.0
        %8055 = vmatprep.subr.mxu0 0.0
        %8056 = vmatpush1.msra.mxu0 0.0
        %8057 = vmatprep.subr.mxu0 0.0
        %8058 = vmatpush1.msra.mxu0 0.0
        %8059 = vmatprep.subr.mxu0 0.0
        %8060 = vmatpush1.msra.mxu0 0.0
        %8061 = vmatprep.subr.mxu0 0.0
        %8062 = vmatpush1.msra.mxu0 0.0
        %8063 = vmatprep.subr.mxu0 0.0
        %8064 = vmatpush1.msra.mxu0 0.0
        %8065 = vmatprep.subr.mxu0 0.0
        %8066 = vmatpush1.msra.mxu0 0.0
        %8067 = vmatprep.subr.mxu0 0.0
        %8068 = vmatpush1.msra.mxu0 0.0
        %8069 = vmatprep.subr.mxu0 0.0
        %8070 = vmatpush1.msra.mxu0 0.0
        %8071 = vmatprep.subr.mxu0 0.0
        %8072 = vmatpush1.msra.mxu0 0.0
        %8073 = vmatprep.subr.mxu0 0.0
        %8074 = vmatpush1.msra.mxu0 0.0
        %8075 = vmatprep.subr.mxu0 0.0
        %8076 = vmatpush1.msra.mxu0 0.0
        %8077 = vmatprep.subr.mxu0 0.0
        %8078 = vmatpush1.msra.mxu0 0.0
        %8079 = vmatprep.subr.mxu0 0.0
        %8080 = vmatpush1.msra.mxu0 0.0
        %8081 = vmatprep.subr.mxu0 0.0
        %8082 = vmatpush1.msra.mxu0 0.0
        %8083 = vmatprep.subr.mxu0 0.0
        %8084 = vmatpush1.msra.mxu0 0.0
        %8085 = vmatprep.subr.mxu0 0.0
        %8086 = vmatpush1.msra.mxu0 0.0
        %8087 = vmatprep.subr.mxu0 0.0
        %8088 = vmatpush1.msra.mxu0 0.0
        %8089 = vmatprep.subr.mxu0 0.0
        %8090 = vmatpush1.msra.mxu0 0.0
        %8091 = vmatprep.subr.mxu0 0.0
        %8092 = vmatpush1.msra.mxu0 0.0
        %8093 = vmatprep.subr.mxu0 0.0
        %8094 = vmatpush1.msra.mxu0 0.0
        %8095 = vmatprep.subr.mxu0 0.0
        %8096 = vmatpush1.msra.mxu0 0.0
        %8097 = vmatprep.subr.mxu0 0.0
        %8098 = vmatpush1.msra.mxu0 0.0
        %8099 = vmatprep.subr.mxu0 0.0
        %8100 = vmatpush1.msra.mxu0 0.0
        %8101 = vmatprep.subr.mxu0 0.0
        %8102 = vmatpush1.msra.mxu0 0.0
        %8103 = vmatprep.subr.mxu0 0.0
        %8104 = vmatpush1.msra.mxu0 0.0
        %8105 = vmatprep.subr.mxu0 0.0
        %8106 = vmatpush1.msra.mxu0 0.0
        %8107 = vmatprep.subr.mxu0 0.0
        %8108 = vmatpush1.msra.mxu0 0.0
        %8109 = vmatprep.subr.mxu0 0.0
        %8110 = vmatpush1.msra.mxu0 0.0
        %8111 = vmatprep.mubr.f32.mxu0 0.0
        %8112 = vmatmul.mubr.f32.gmra.mrb[0].mxu0 %v8045
        %v8113 = vpop.f32.mrb[0].mxu0
        %v8114 = vadd.f32 0.0, %v8113
        %v8115 = vpop.f32.mrb[0].mxu0
        %8116 = vdwg.mxu0
        %v8118 = vsel %vm1579, %v8041, 0
        %8120 = vmatprep.subr.mxu0 0.0
        %8121 = vmatpush1.msra.mxu0 %v7538
        %8122 = vmatprep.subr.mxu0 0.0
        %8123 = vmatpush1.msra.mxu0 0.0
        %8124 = vmatprep.subr.mxu0 0.0
        %8125 = vmatpush1.msra.mxu0 0.0
        %8126 = vmatprep.subr.mxu0 0.0
        %8127 = vmatpush1.msra.mxu0 0.0
        %8128 = vmatprep.subr.mxu0 0.0
        %8129 = vmatpush1.msra.mxu0 0.0
        %8130 = vmatprep.subr.mxu0 0.0
        %8131 = vmatpush1.msra.mxu0 0.0
        %8132 = vmatprep.subr.mxu0 0.0
        %8133 = vmatpush1.msra.mxu0 0.0
        %8134 = vmatprep.subr.mxu0 0.0
        %8135 = vmatpush1.msra.mxu0 0.0
        %8136 = vmatprep.subr.mxu0 0.0
        %8137 = vmatpush1.msra.mxu0 0.0
        %8138 = vmatprep.subr.mxu0 0.0
        %8139 = vmatpush1.msra.mxu0 0.0
        %8140 = vmatprep.subr.mxu0 0.0
        %8141 = vmatpush1.msra.mxu0 0.0
        %8142 = vmatprep.subr.mxu0 0.0
        %8143 = vmatpush1.msra.mxu0 0.0
        %8144 = vmatprep.subr.mxu0 0.0
        %8145 = vmatpush1.msra.mxu0 0.0
        %8146 = vmatprep.subr.mxu0 0.0
        %8147 = vmatpush1.msra.mxu0 0.0
        %8148 = vmatprep.subr.mxu0 0.0
        %8149 = vmatpush1.msra.mxu0 0.0
        %8150 = vmatprep.subr.mxu0 0.0
        %8151 = vmatpush1.msra.mxu0 0.0
        %8152 = vmatprep.subr.mxu0 0.0
        %8153 = vmatpush1.msra.mxu0 0.0
        %8154 = vmatprep.subr.mxu0 0.0
        %8155 = vmatpush1.msra.mxu0 0.0
        %8156 = vmatprep.subr.mxu0 0.0
        %8157 = vmatpush1.msra.mxu0 0.0
        %8158 = vmatprep.subr.mxu0 0.0
        %8159 = vmatpush1.msra.mxu0 0.0
        %8160 = vmatprep.subr.mxu0 0.0
        %8161 = vmatpush1.msra.mxu0 0.0
        %8162 = vmatprep.subr.mxu0 0.0
        %8163 = vmatpush1.msra.mxu0 0.0
        %8164 = vmatprep.subr.mxu0 0.0
        %8165 = vmatpush1.msra.mxu0 0.0
        %8166 = vmatprep.subr.mxu0 0.0
        %8167 = vmatpush1.msra.mxu0 0.0
        %8168 = vmatprep.subr.mxu0 0.0
        %8169 = vmatpush1.msra.mxu0 0.0
        %8170 = vmatprep.subr.mxu0 0.0
        %8171 = vmatpush1.msra.mxu0 0.0
        %8172 = vmatprep.subr.mxu0 0.0
        %8173 = vmatpush1.msra.mxu0 0.0
        %8174 = vmatprep.subr.mxu0 0.0
        %8175 = vmatpush1.msra.mxu0 0.0
        %8176 = vmatprep.subr.mxu0 0.0
        %8177 = vmatpush1.msra.mxu0 0.0
        %8178 = vmatprep.subr.mxu0 0.0
        %8179 = vmatpush1.msra.mxu0 0.0
        %8180 = vmatprep.subr.mxu0 0.0
        %8181 = vmatpush1.msra.mxu0 0.0
        %8182 = vmatprep.subr.mxu0 0.0
        %8183 = vmatpush1.msra.mxu0 0.0
        %8184 = vmatprep.mubr.f32.mxu0 0.0
        %8185 = vmatmul.mubr.f32.gmra.mrb[0].mxu0 %v8118
        %v8186 = vpop.f32.mrb[0].mxu0
        %v8187 = vadd.f32 0.0, %v8186
        %v8188 = vpop.f32.mrb[0].mxu0
        %8189 = vdwg.mxu0
        %v8191 = vsel %vm1579, %v8042, 0
        %8193 = vmatprep.subr.mxu0 0.0
        %8194 = vmatpush1.msra.mxu0 %v7608
        %8195 = vmatprep.subr.mxu0 0.0
        %8196 = vmatpush1.msra.mxu0 0.0
        %8197 = vmatprep.subr.mxu0 0.0
        %8198 = vmatpush1.msra.mxu0 0.0
        %8199 = vmatprep.subr.mxu0 0.0
        %8200 = vmatpush1.msra.mxu0 0.0
        %8201 = vmatprep.subr.mxu0 0.0
        %8202 = vmatpush1.msra.mxu0 0.0
        %8203 = vmatprep.subr.mxu0 0.0
        %8204 = vmatpush1.msra.mxu0 0.0
        %8205 = vmatprep.subr.mxu0 0.0
        %8206 = vmatpush1.msra.mxu0 0.0
        %8207 = vmatprep.subr.mxu0 0.0
        %8208 = vmatpush1.msra.mxu0 0.0
        %8209 = vmatprep.subr.mxu0 0.0
        %8210 = vmatpush1.msra.mxu0 0.0
        %8211 = vmatprep.subr.mxu0 0.0
        %8212 = vmatpush1.msra.mxu0 0.0
        %8213 = vmatprep.subr.mxu0 0.0
        %8214 = vmatpush1.msra.mxu0 0.0
        %8215 = vmatprep.subr.mxu0 0.0
        %8216 = vmatpush1.msra.mxu0 0.0
        %8217 = vmatprep.subr.mxu0 0.0
        %8218 = vmatpush1.msra.mxu0 0.0
        %8219 = vmatprep.subr.mxu0 0.0
        %8220 = vmatpush1.msra.mxu0 0.0
        %8221 = vmatprep.subr.mxu0 0.0
        %8222 = vmatpush1.msra.mxu0 0.0
        %8223 = vmatprep.subr.mxu0 0.0
        %8224 = vmatpush1.msra.mxu0 0.0
        %8225 = vmatprep.subr.mxu0 0.0
        %8226 = vmatpush1.msra.mxu0 0.0
        %8227 = vmatprep.subr.mxu0 0.0
        %8228 = vmatpush1.msra.mxu0 0.0
        %8229 = vmatprep.subr.mxu0 0.0
        %8230 = vmatpush1.msra.mxu0 0.0
        %8231 = vmatprep.subr.mxu0 0.0
        %8232 = vmatpush1.msra.mxu0 0.0
        %8233 = vmatprep.subr.mxu0 0.0
        %8234 = vmatpush1.msra.mxu0 0.0
        %8235 = vmatprep.subr.mxu0 0.0
        %8236 = vmatpush1.msra.mxu0 0.0
        %8237 = vmatprep.subr.mxu0 0.0
        %8238 = vmatpush1.msra.mxu0 0.0
        %8239 = vmatprep.subr.mxu0 0.0
        %8240 = vmatpush1.msra.mxu0 0.0
        %8241 = vmatprep.subr.mxu0 0.0
        %8242 = vmatpush1.msra.mxu0 0.0
        %8243 = vmatprep.subr.mxu0 0.0
        %8244 = vmatpush1.msra.mxu0 0.0
        %8245 = vmatprep.subr.mxu0 0.0
        %8246 = vmatpush1.msra.mxu0 0.0
        %8247 = vmatprep.subr.mxu0 0.0
        %8248 = vmatpush1.msra.mxu0 0.0
        %8249 = vmatprep.subr.mxu0 0.0
        %8250 = vmatpush1.msra.mxu0 0.0
        %8251 = vmatprep.subr.mxu0 0.0
        %8252 = vmatpush1.msra.mxu0 0.0
        %8253 = vmatprep.subr.mxu0 0.0
        %8254 = vmatpush1.msra.mxu0 0.0
        %8255 = vmatprep.subr.mxu0 0.0
        %8256 = vmatpush1.msra.mxu0 0.0
        %8257 = vmatprep.mubr.f32.mxu0 0.0
        %8258 = vmatmul.mubr.f32.gmra.mrb[0].mxu0 %v8191
        %v8259 = vpop.f32.mrb[0].mxu0
        %v8260 = vadd.f32 0.0, %v8259
        %v8261 = vpop.f32.mrb[0].mxu0
        %8262 = vdwg.mxu0
        %v8264 = vsel %vm1579, %v8043, 0
        %8266 = vmatprep.subr.mxu0 0.0
        %8267 = vmatpush1.msra.mxu0 %v7678
        %8268 = vmatprep.subr.mxu0 0.0
        %8269 = vmatpush1.msra.mxu0 0.0
        %8270 = vmatprep.subr.mxu0 0.0
        %8271 = vmatpush1.msra.mxu0 0.0
        %8272 = vmatprep.subr.mxu0 0.0
        %8273 = vmatpush1.msra.mxu0 0.0
        %8274 = vmatprep.subr.mxu0 0.0
        %8275 = vmatpush1.msra.mxu0 0.0
        %8276 = vmatprep.subr.mxu0 0.0
        %8277 = vmatpush1.msra.mxu0 0.0
        %8278 = vmatprep.subr.mxu0 0.0
        %8279 = vmatpush1.msra.mxu0 0.0
        %8280 = vmatprep.subr.mxu0 0.0
        %8281 = vmatpush1.msra.mxu0 0.0
        %8282 = vmatprep.subr.mxu0 0.0
        %8283 = vmatpush1.msra.mxu0 0.0
        %8284 = vmatprep.subr.mxu0 0.0
        %8285 = vmatpush1.msra.mxu0 0.0
        %8286 = vmatprep.subr.mxu0 0.0
        %8287 = vmatpush1.msra.mxu0 0.0
        %8288 = vmatprep.subr.mxu0 0.0
        %8289 = vmatpush1.msra.mxu0 0.0
        %8290 = vmatprep.subr.mxu0 0.0
        %8291 = vmatpush1.msra.mxu0 0.0
        %8292 = vmatprep.subr.mxu0 0.0
        %8293 = vmatpush1.msra.mxu0 0.0
        %8294 = vmatprep.subr.mxu0 0.0
        %8295 = vmatpush1.msra.mxu0 0.0
        %8296 = vmatprep.subr.mxu0 0.0
        %8297 = vmatpush1.msra.mxu0 0.0
        %8298 = vmatprep.subr.mxu0 0.0
        %8299 = vmatpush1.msra.mxu0 0.0
        %8300 = vmatprep.subr.mxu0 0.0
        %8301 = vmatpush1.msra.mxu0 0.0
        %8302 = vmatprep.subr.mxu0 0.0
        %8303 = vmatpush1.msra.mxu0 0.0
        %8304 = vmatprep.subr.mxu0 0.0
        %8305 = vmatpush1.msra.mxu0 0.0
        %8306 = vmatprep.subr.mxu0 0.0
        %8307 = vmatpush1.msra.mxu0 0.0
        %8308 = vmatprep.subr.mxu0 0.0
        %8309 = vmatpush1.msra.mxu0 0.0
        %8310 = vmatprep.subr.mxu0 0.0
        %8311 = vmatpush1.msra.mxu0 0.0
        %8312 = vmatprep.subr.mxu0 0.0
        %8313 = vmatpush1.msra.mxu0 0.0
        %8314 = vmatprep.subr.mxu0 0.0
        %8315 = vmatpush1.msra.mxu0 0.0
        %8316 = vmatprep.subr.mxu0 0.0
        %8317 = vmatpush1.msra.mxu0 0.0
        %8318 = vmatprep.subr.mxu0 0.0
        %8319 = vmatpush1.msra.mxu0 0.0
        %8320 = vmatprep.subr.mxu0 0.0
        %8321 = vmatpush1.msra.mxu0 0.0
        %8322 = vmatprep.subr.mxu0 0.0
        %8323 = vmatpush1.msra.mxu0 0.0
        %8324 = vmatprep.subr.mxu0 0.0
        %8325 = vmatpush1.msra.mxu0 0.0
        %8326 = vmatprep.subr.mxu0 0.0
        %8327 = vmatpush1.msra.mxu0 0.0
        %8328 = vmatprep.subr.mxu0 0.0
        %8329 = vmatpush1.msra.mxu0 0.0
        %8330 = vmatprep.mubr.f32.mxu0 0.0
        %8331 = vmatmul.mubr.f32.gmra.mrb[0].mxu0 %v8264
        %v8332 = vpop.f32.mrb[0].mxu0
        %v8333 = vadd.f32 0.0, %v8332
        %v8334 = vpop.f32.mrb[0].mxu0
        %8335 = vdwg.mxu0
        %v8337 = vsel %vm1579, %v8114, 0
        %8339 = vmatprep.subr.mxu0 0.0
        %8340 = vmatpush1.msra.mxu0 %v7682
        %8341 = vmatprep.subr.mxu0 0.0
        %8342 = vmatpush1.msra.mxu0 0.0
        %8343 = vmatprep.subr.mxu0 0.0
        %8344 = vmatpush1.msra.mxu0 0.0
        %8345 = vmatprep.subr.mxu0 0.0
        %8346 = vmatpush1.msra.mxu0 0.0
        %8347 = vmatprep.subr.mxu0 0.0
        %8348 = vmatpush1.msra.mxu0 0.0
        %8349 = vmatprep.subr.mxu0 0.0
        %8350 = vmatpush1.msra.mxu0 0.0
        %8351 = vmatprep.subr.mxu0 0.0
        %8352 = vmatpush1.msra.mxu0 0.0
        %8353 = vmatprep.subr.mxu0 0.0
        %8354 = vmatpush1.msra.mxu0 0.0
        %8355 = vmatprep.subr.mxu0 0.0
        %8356 = vmatpush1.msra.mxu0 0.0
        %8357 = vmatprep.subr.mxu0 0.0
        %8358 = vmatpush1.msra.mxu0 0.0
        %8359 = vmatprep.subr.mxu0 0.0
        %8360 = vmatpush1.msra.mxu0 0.0
        %8361 = vmatprep.subr.mxu0 0.0
        %8362 = vmatpush1.msra.mxu0 0.0
        %8363 = vmatprep.subr.mxu0 0.0
        %8364 = vmatpush1.msra.mxu0 0.0
        %8365 = vmatprep.subr.mxu0 0.0
        %8366 = vmatpush1.msra.mxu0 0.0
        %8367 = vmatprep.subr.mxu0 0.0
        %8368 = vmatpush1.msra.mxu0 0.0
        %8369 = vmatprep.subr.mxu0 0.0
        %8370 = vmatpush1.msra.mxu0 0.0
        %8371 = vmatprep.subr.mxu0 0.0
        %8372 = vmatpush1.msra.mxu0 0.0
        %8373 = vmatprep.subr.mxu0 0.0
        %8374 = vmatpush1.msra.mxu0 0.0
        %8375 = vmatprep.subr.mxu0 0.0
        %8376 = vmatpush1.msra.mxu0 0.0
        %8377 = vmatprep.subr.mxu0 0.0
        %8378 = vmatpush1.msra.mxu0 0.0
        %8379 = vmatprep.subr.mxu0 0.0
        %8380 = vmatpush1.msra.mxu0 0.0
        %8381 = vmatprep.subr.mxu0 0.0
        %8382 = vmatpush1.msra.mxu0 0.0
        %8383 = vmatprep.subr.mxu0 0.0
        %8384 = vmatpush1.msra.mxu0 0.0
        %8385 = vmatprep.subr.mxu0 0.0
        %8386 = vmatpush1.msra.mxu0 0.0
        %8387 = vmatprep.subr.mxu0 0.0
        %8388 = vmatpush1.msra.mxu0 0.0
        %8389 = vmatprep.subr.mxu0 0.0
        %8390 = vmatpush1.msra.mxu0 0.0
        %8391 = vmatprep.subr.mxu0 0.0
        %8392 = vmatpush1.msra.mxu0 0.0
        %8393 = vmatprep.subr.mxu0 0.0
        %8394 = vmatpush1.msra.mxu0 0.0
        %8395 = vmatprep.subr.mxu0 0.0
        %8396 = vmatpush1.msra.mxu0 0.0
        %8397 = vmatprep.subr.mxu0 0.0
        %8398 = vmatpush1.msra.mxu0 0.0
        %8399 = vmatprep.subr.mxu0 0.0
        %8400 = vmatpush1.msra.mxu0 0.0
        %8401 = vmatprep.subr.mxu0 0.0
        %8402 = vmatpush1.msra.mxu0 0.0
        %8403 = vmatprep.mubr.f32.mxu0 0.0
        %8404 = vmatmul.mubr.f32.gmra.mrb[0].mxu0 %v8337
        %v8405 = vpop.f32.mrb[0].mxu0
        %v8406 = vadd.f32 0.0, %v8405
        %v8407 = vpop.f32.mrb[0].mxu0
        %8408 = vdwg.mxu0
        %v8410 = vsel %vm1579, %v8187, 0
        %8412 = vmatprep.subr.mxu0 0.0
        %8413 = vmatpush1.msra.mxu0 %v7683
        %8414 = vmatprep.subr.mxu0 0.0
        %8415 = vmatpush1.msra.mxu0 0.0
        %8416 = vmatprep.subr.mxu0 0.0
        %8417 = vmatpush1.msra.mxu0 0.0
        %8418 = vmatprep.subr.mxu0 0.0
        %8419 = vmatpush1.msra.mxu0 0.0
        %8420 = vmatprep.subr.mxu0 0.0
        %8421 = vmatpush1.msra.mxu0 0.0
        %8422 = vmatprep.subr.mxu0 0.0
        %8423 = vmatpush1.msra.mxu0 0.0
        %8424 = vmatprep.subr.mxu0 0.0
        %8425 = vmatpush1.msra.mxu0 0.0
        %8426 = vmatprep.subr.mxu0 0.0
        %8427 = vmatpush1.msra.mxu0 0.0
        %8428 = vmatprep.subr.mxu0 0.0
        %8429 = vmatpush1.msra.mxu0 0.0
        %8430 = vmatprep.subr.mxu0 0.0
        %8431 = vmatpush1.msra.mxu0 0.0
        %8432 = vmatprep.subr.mxu0 0.0
        %8433 = vmatpush1.msra.mxu0 0.0
        %8434 = vmatprep.subr.mxu0 0.0
        %8435 = vmatpush1.msra.mxu0 0.0
        %8436 = vmatprep.subr.mxu0 0.0
        %8437 = vmatpush1.msra.mxu0 0.0
        %8438 = vmatprep.subr.mxu0 0.0
        %8439 = vmatpush1.msra.mxu0 0.0
        %8440 = vmatprep.subr.mxu0 0.0
        %8441 = vmatpush1.msra.mxu0 0.0
        %8442 = vmatprep.subr.mxu0 0.0
        %8443 = vmatpush1.msra.mxu0 0.0
        %8444 = vmatprep.subr.mxu0 0.0
        %8445 = vmatpush1.msra.mxu0 0.0
        %8446 = vmatprep.subr.mxu0 0.0
        %8447 = vmatpush1.msra.mxu0 0.0
        %8448 = vmatprep.subr.mxu0 0.0
        %8449 = vmatpush1.msra.mxu0 0.0
        %8450 = vmatprep.subr.mxu0 0.0
        %8451 = vmatpush1.msra.mxu0 0.0
        %8452 = vmatprep.subr.mxu0 0.0
        %8453 = vmatpush1.msra.mxu0 0.0
        %8454 = vmatprep.subr.mxu0 0.0
        %8455 = vmatpush1.msra.mxu0 0.0
        %8456 = vmatprep.subr.mxu0 0.0
        %8457 = vmatpush1.msra.mxu0 0.0
        %8458 = vmatprep.subr.mxu0 0.0
        %8459 = vmatpush1.msra.mxu0 0.0
        %8460 = vmatprep.subr.mxu0 0.0
        %8461 = vmatpush1.msra.mxu0 0.0
        %8462 = vmatprep.subr.mxu0 0.0
        %8463 = vmatpush1.msra.mxu0 0.0
        %8464 = vmatprep.subr.mxu0 0.0
        %8465 = vmatpush1.msra.mxu0 0.0
        %8466 = vmatprep.subr.mxu0 0.0
        %8467 = vmatpush1.msra.mxu0 0.0
        %8468 = vmatprep.subr.mxu0 0.0
        %8469 = vmatpush1.msra.mxu0 0.0
        %8470 = vmatprep.subr.mxu0 0.0
        %8471 = vmatpush1.msra.mxu0 0.0
        %8472 = vmatprep.subr.mxu0 0.0
        %8473 = vmatpush1.msra.mxu0 0.0
        %8474 = vmatprep.subr.mxu0 0.0
        %8475 = vmatpush1.msra.mxu0 0.0
        %8476 = vmatprep.mubr.f32.mxu0 0.0
        %8477 = vmatmul.mubr.f32.gmra.mrb[0].mxu0 %v8410
        %v8478 = vpop.f32.mrb[0].mxu0
        %v8479 = vadd.f32 0.0, %v8478
        %v8480 = vpop.f32.mrb[0].mxu0
        %8481 = vdwg.mxu0
        %v8483 = vsel %vm1579, %v8260, 0
        %8485 = vmatprep.subr.mxu0 0.0
        %8486 = vmatpush1.msra.mxu0 %v7684
        %8487 = vmatprep.subr.mxu0 0.0
        %8488 = vmatpush1.msra.mxu0 0.0
        %8489 = vmatprep.subr.mxu0 0.0
        %8490 = vmatpush1.msra.mxu0 0.0
        %8491 = vmatprep.subr.mxu0 0.0
        %8492 = vmatpush1.msra.mxu0 0.0
        %8493 = vmatprep.subr.mxu0 0.0
        %8494 = vmatpush1.msra.mxu0 0.0
        %8495 = vmatprep.subr.mxu0 0.0
        %8496 = vmatpush1.msra.mxu0 0.0
        %8497 = vmatprep.subr.mxu0 0.0
        %8498 = vmatpush1.msra.mxu0 0.0
        %8499 = vmatprep.subr.mxu0 0.0
        %8500 = vmatpush1.msra.mxu0 0.0
        %8501 = vmatprep.subr.mxu0 0.0
        %8502 = vmatpush1.msra.mxu0 0.0
        %8503 = vmatprep.subr.mxu0 0.0
        %8504 = vmatpush1.msra.mxu0 0.0
        %8505 = vmatprep.subr.mxu0 0.0
        %8506 = vmatpush1.msra.mxu0 0.0
        %8507 = vmatprep.subr.mxu0 0.0
        %8508 = vmatpush1.msra.mxu0 0.0
        %8509 = vmatprep.subr.mxu0 0.0
        %8510 = vmatpush1.msra.mxu0 0.0
        %8511 = vmatprep.subr.mxu0 0.0
        %8512 = vmatpush1.msra.mxu0 0.0
        %8513 = vmatprep.subr.mxu0 0.0
        %8514 = vmatpush1.msra.mxu0 0.0
        %8515 = vmatprep.subr.mxu0 0.0
        %8516 = vmatpush1.msra.mxu0 0.0
        %8517 = vmatprep.subr.mxu0 0.0
        %8518 = vmatpush1.msra.mxu0 0.0
        %8519 = vmatprep.subr.mxu0 0.0
        %8520 = vmatpush1.msra.mxu0 0.0
        %8521 = vmatprep.subr.mxu0 0.0
        %8522 = vmatpush1.msra.mxu0 0.0
        %8523 = vmatprep.subr.mxu0 0.0
        %8524 = vmatpush1.msra.mxu0 0.0
        %8525 = vmatprep.subr.mxu0 0.0
        %8526 = vmatpush1.msra.mxu0 0.0
        %8527 = vmatprep.subr.mxu0 0.0
        %8528 = vmatpush1.msra.mxu0 0.0
        %8529 = vmatprep.subr.mxu0 0.0
        %8530 = vmatpush1.msra.mxu0 0.0
        %8531 = vmatprep.subr.mxu0 0.0
        %8532 = vmatpush1.msra.mxu0 0.0
        %8533 = vmatprep.subr.mxu0 0.0
        %8534 = vmatpush1.msra.mxu0 0.0
        %8535 = vmatprep.subr.mxu0 0.0
        %8536 = vmatpush1.msra.mxu0 0.0
        %8537 = vmatprep.subr.mxu0 0.0
        %8538 = vmatpush1.msra.mxu0 0.0
        %8539 = vmatprep.subr.mxu0 0.0
        %8540 = vmatpush1.msra.mxu0 0.0
        %8541 = vmatprep.subr.mxu0 0.0
        %8542 = vmatpush1.msra.mxu0 0.0
        %8543 = vmatprep.subr.mxu0 0.0
        %8544 = vmatpush1.msra.mxu0 0.0
        %8545 = vmatprep.subr.mxu0 0.0
        %8546 = vmatpush1.msra.mxu0 0.0
        %8547 = vmatprep.subr.mxu0 0.0
        %8548 = vmatpush1.msra.mxu0 0.0
        %8549 = vmatprep.mubr.f32.mxu0 0.0
        %8550 = vmatmul.mubr.f32.gmra.mrb[0].mxu0 %v8483
        %v8551 = vpop.f32.mrb[0].mxu0
        %v8552 = vadd.f32 0.0, %v8551
        %v8553 = vpop.f32.mrb[0].mxu0
        %8554 = vdwg.mxu0
        %v8556 = vsel %vm1579, %v8333, 0
        %8558 = vmatprep.subr.mxu0 0.0
        %8559 = vmatpush1.msra.mxu0 %v7685
        %8560 = vmatprep.subr.mxu0 0.0
        %8561 = vmatpush1.msra.mxu0 0.0
        %8562 = vmatprep.subr.mxu0 0.0
        %8563 = vmatpush1.msra.mxu0 0.0
        %8564 = vmatprep.subr.mxu0 0.0
        %8565 = vmatpush1.msra.mxu0 0.0
        %8566 = vmatprep.subr.mxu0 0.0
        %8567 = vmatpush1.msra.mxu0 0.0
        %8568 = vmatprep.subr.mxu0 0.0
        %8569 = vmatpush1.msra.mxu0 0.0
        %8570 = vmatprep.subr.mxu0 0.0
        %8571 = vmatpush1.msra.mxu0 0.0
        %8572 = vmatprep.subr.mxu0 0.0
        %8573 = vmatpush1.msra.mxu0 0.0
        %8574 = vmatprep.subr.mxu0 0.0
        %8575 = vmatpush1.msra.mxu0 0.0
        %8576 = vmatprep.subr.mxu0 0.0
        %8577 = vmatpush1.msra.mxu0 0.0
        %8578 = vmatprep.subr.mxu0 0.0
        %8579 = vmatpush1.msra.mxu0 0.0
        %8580 = vmatprep.subr.mxu0 0.0
        %8581 = vmatpush1.msra.mxu0 0.0
        %8582 = vmatprep.subr.mxu0 0.0
        %8583 = vmatpush1.msra.mxu0 0.0
        %8584 = vmatprep.subr.mxu0 0.0
        %8585 = vmatpush1.msra.mxu0 0.0
        %8586 = vmatprep.subr.mxu0 0.0
        %8587 = vmatpush1.msra.mxu0 0.0
        %8588 = vmatprep.subr.mxu0 0.0
        %8589 = vmatpush1.msra.mxu0 0.0
        %8590 = vmatprep.subr.mxu0 0.0
        %8591 = vmatpush1.msra.mxu0 0.0
        %8592 = vmatprep.subr.mxu0 0.0
        %8593 = vmatpush1.msra.mxu0 0.0
        %8594 = vmatprep.subr.mxu0 0.0
        %8595 = vmatpush1.msra.mxu0 0.0
        %8596 = vmatprep.subr.mxu0 0.0
        %8597 = vmatpush1.msra.mxu0 0.0
        %8598 = vmatprep.subr.mxu0 0.0
        %8599 = vmatpush1.msra.mxu0 0.0
        %8600 = vmatprep.subr.mxu0 0.0
        %8601 = vmatpush1.msra.mxu0 0.0
        %8602 = vmatprep.subr.mxu0 0.0
        %8603 = vmatpush1.msra.mxu0 0.0
        %8604 = vmatprep.subr.mxu0 0.0
        %8605 = vmatpush1.msra.mxu0 0.0
        %8606 = vmatprep.subr.mxu0 0.0
        %8607 = vmatpush1.msra.mxu0 0.0
        %8608 = vmatprep.subr.mxu0 0.0
        %8609 = vmatpush1.msra.mxu0 0.0
        %8610 = vmatprep.subr.mxu0 0.0
        %8611 = vmatpush1.msra.mxu0 0.0
        %8612 = vmatprep.subr.mxu0 0.0
        %8613 = vmatpush1.msra.mxu0 0.0
        %8614 = vmatprep.subr.mxu0 0.0
        %8615 = vmatpush1.msra.mxu0 0.0
        %8616 = vmatprep.subr.mxu0 0.0
        %8617 = vmatpush1.msra.mxu0 0.0
        %8618 = vmatprep.subr.mxu0 0.0
        %8619 = vmatpush1.msra.mxu0 0.0
        %8620 = vmatprep.subr.mxu0 0.0
        %8621 = vmatpush1.msra.mxu0 0.0
        %8622 = vmatprep.mubr.f32.mxu0 0.0
        %8623 = vmatmul.mubr.f32.gmra.mrb[0].mxu0 %v8556
        %v8624 = vpop.f32.mrb[0].mxu0
        %v8625 = vadd.f32 0.0, %v8624
        %v8626 = vpop.f32.mrb[0].mxu0
        %8627 = vdwg.mxu0
        %v8628 = vsel %vm730, %v8406, 0.0
        %v8629 = vsel %vm730, %v8479, 0.0
        %v8630 = vadd.f32 %v8628, %v8629
        %v8631 = vsel %vm730, %v8552, 0.0
        %v8632 = vadd.f32 %v8630, %v8631
        %v8633 = vsel %vm730, %v8625, 0.0
        %v8634 = vadd.f32 %v8632, %v8633
        %v8636 = vlaneseq
        %v8637 = vshrl.u32 %v8636, 7
        %v8638 = vsub.s32 0, %v8637
        %v8639 = vrot.slane %v7687, %v8638
        %v8641 = vadd.f32 %v8634, %v8639
        %v8642 = vadd.f32 %v8641, %v6703
        %v8643 = vsel %vm730, %v8642, 0.0
        %8644 = vadd.xlane.f32.xlu0 %v8643
        %v8645 = vpop.xlane.xlu0 %8644
        %v8646 = vmul.f32 %v8645, %v2538
        %v8647 = vsub.f32 %v8642, %v8646
        %v8648 = vmul.f32 %v8647, %v8647
        %v8649 = vsel %vm730, %v8648, 0.0
        %8650 = vadd.xlane.f32.xlu0 %v8649
        %v8651 = vpop.xlane.xlu0 %8650
        %v8652 = vmul.f32 %v8651, %v2538
        %v8653 = vadd.f32 %v8652, 1e-05
        %v8654 = vrsqrt.pop %v8653
        %v8655 = vmul.f32 %v8647, %v8654
        %v8657 = vlaneseq
        %v8658 = vshrl.u32 %v8657, 7
        %v8659 = vsub.s32 0, %v8658
        %v8660 = vrot.slane %v4732, %v8659
        %v8662 = vmul.f32 %v8655, %v8660
        %v8664 = vlaneseq
        %v8665 = vshrl.u32 %v8664, 7
        %v8666 = vsub.s32 0, %v8665
        %v8667 = vrot.slane %v4736, %v8666
        %v8669 = vadd.f32 %v8662, %v8667
        %s8670 = scalar_lea.vmem %s12, 32
        %v8671 = vld [vmem:[%s8670] sm:$0xff]
        %v8672 = vld [vmem:[%s8670 + $0x8] sm:$0xff]
        %v8673 = vld [vmem:[%s8670 + $0x10] sm:$0xff]
        %v8674 = vld [vmem:[%s8670 + $0x18] sm:$0xff]
        %s8675 = scalar_lea.vmem %s13, 1
        %v8676 = vld [vmem:[%s8675] sm:$0x1]
        %v8678 = vlaneseq
        %v8679 = vshrl.u32 %v8678, 7
        %v8680 = vsub.s32 0, %v8679
        %v8681 = vrot.slane %v8676, %v8680
        %v8684 = vsel %vm730, %v8669, 0
        %8686 = vmatprep.subr.mxu0 0.0
        %8687 = vmatpush1.msra.mxu0 %v8671
        %8688 = vmatprep.subr.mxu0 0.0
        %8689 = vmatpush1.msra.mxu0 %v8672
        %8690 = vmatprep.subr.mxu0 0.0
        %8691 = vmatpush1.msra.mxu0 %v8673
        %8692 = vmatprep.subr.mxu0 0.0
        %8693 = vmatpush1.msra.mxu0 %v8674
        %8694 = vmatprep.subr.mxu0 0.0
        %8695 = vmatpush1.msra.mxu0 0.0
        %8696 = vmatprep.subr.mxu0 0.0
        %8697 = vmatpush1.msra.mxu0 0.0
        %8698 = vmatprep.subr.mxu0 0.0
        %8699 = vmatpush1.msra.mxu0 0.0
        %8700 = vmatprep.subr.mxu0 0.0
        %8701 = vmatpush1.msra.mxu0 0.0
        %8702 = vmatprep.subr.mxu0 0.0
        %8703 = vmatpush1.msra.mxu0 0.0
        %8704 = vmatprep.subr.mxu0 0.0
        %8705 = vmatpush1.msra.mxu0 0.0
        %8706 = vmatprep.subr.mxu0 0.0
        %8707 = vmatpush1.msra.mxu0 0.0
        %8708 = vmatprep.subr.mxu0 0.0
        %8709 = vmatpush1.msra.mxu0 0.0
        %8710 = vmatprep.subr.mxu0 0.0
        %8711 = vmatpush1.msra.mxu0 0.0
        %8712 = vmatprep.subr.mxu0 0.0
        %8713 = vmatpush1.msra.mxu0 0.0
        %8714 = vmatprep.subr.mxu0 0.0
        %8715 = vmatpush1.msra.mxu0 0.0
        %8716 = vmatprep.subr.mxu0 0.0
        %8717 = vmatpush1.msra.mxu0 0.0
        %8718 = vmatprep.subr.mxu0 0.0
        %8719 = vmatpush1.msra.mxu0 0.0
        %8720 = vmatprep.subr.mxu0 0.0
        %8721 = vmatpush1.msra.mxu0 0.0
        %8722 = vmatprep.subr.mxu0 0.0
        %8723 = vmatpush1.msra.mxu0 0.0
        %8724 = vmatprep.subr.mxu0 0.0
        %8725 = vmatpush1.msra.mxu0 0.0
        %8726 = vmatprep.subr.mxu0 0.0
        %8727 = vmatpush1.msra.mxu0 0.0
        %8728 = vmatprep.subr.mxu0 0.0
        %8729 = vmatpush1.msra.mxu0 0.0
        %8730 = vmatprep.subr.mxu0 0.0
        %8731 = vmatpush1.msra.mxu0 0.0
        %8732 = vmatprep.subr.mxu0 0.0
        %8733 = vmatpush1.msra.mxu0 0.0
        %8734 = vmatprep.subr.mxu0 0.0
        %8735 = vmatpush1.msra.mxu0 0.0
        %8736 = vmatprep.subr.mxu0 0.0
        %8737 = vmatpush1.msra.mxu0 0.0
        %8738 = vmatprep.subr.mxu0 0.0
        %8739 = vmatpush1.msra.mxu0 0.0
        %8740 = vmatprep.subr.mxu0 0.0
        %8741 = vmatpush1.msra.mxu0 0.0
        %8742 = vmatprep.subr.mxu0 0.0
        %8743 = vmatpush1.msra.mxu0 0.0
        %8744 = vmatprep.subr.mxu0 0.0
        %8745 = vmatpush1.msra.mxu0 0.0
        %8746 = vmatprep.subr.mxu0 0.0
        %8747 = vmatpush1.msra.mxu0 0.0
        %8748 = vmatprep.subr.mxu0 0.0
        %8749 = vmatpush1.msra.mxu0 0.0
        %8750 = vmatprep.mubr.f32.mxu0 0.0
        %8751 = vmatmul.mubr.f32.gmra.mrb[0].mxu0 %v8684
        %v8752 = vpop.f32.mrb[0].mxu0
        %v8753 = vadd.f32 %v8681, %v8752
        %v8754 = vpop.f32.mrb[0].mxu0
        %8755 = vdwg.mxu0
        %v8756 = vmax.f32 %v8753, 0.0
        %s8757 = scalar_lea.vmem %s14, 64
        %v8758 = vld [vmem:[%s8757] sm:$0xff]
        %v8759 = vld [vmem:[%s8757 + $0x8] sm:$0xff]
        %v8760 = vld [vmem:[%s8757 + $0x10] sm:$0xff]
        %v8761 = vld [vmem:[%s8757 + $0x18] sm:$0xff]
        %v8762 = vld [vmem:[%s8757 + $0x20] sm:$0xff]
        %v8763 = vld [vmem:[%s8757 + $0x28] sm:$0xff]
        %v8764 = vld [vmem:[%s8757 + $0x30] sm:$0xff]
        %v8765 = vld [vmem:[%s8757 + $0x38] sm:$0xff]
        %s8766 = scalar_lea.vmem %s15, 1
        %v8767 = vld [vmem:[%s8766] sm:$0x1]
        %v8769 = vlaneseq
        %v8770 = vshrl.u32 %v8769, 7
        %v8771 = vsub.s32 0, %v8770
        %v8772 = vrot.slane %v8767, %v8771
        %v8775 = vsel %vm4628, %v8756, 0
        %8777 = vmatprep.subr.mxu0 0.0
        %8778 = vmatpush1.msra.mxu0 %v8758
        %8779 = vmatprep.subr.mxu0 0.0
        %8780 = vmatpush1.msra.mxu0 %v8759
        %8781 = vmatprep.subr.mxu0 0.0
        %8782 = vmatpush1.msra.mxu0 %v8760
        %8783 = vmatprep.subr.mxu0 0.0
        %8784 = vmatpush1.msra.mxu0 %v8761
        %8785 = vmatprep.subr.mxu0 0.0
        %8786 = vmatpush1.msra.mxu0 %v8762
        %8787 = vmatprep.subr.mxu0 0.0
        %8788 = vmatpush1.msra.mxu0 %v8763
        %8789 = vmatprep.subr.mxu0 0.0
        %8790 = vmatpush1.msra.mxu0 %v8764
        %8791 = vmatprep.subr.mxu0 0.0
        %8792 = vmatpush1.msra.mxu0 %v8765
        %8793 = vmatprep.subr.mxu0 0.0
        %8794 = vmatpush1.msra.mxu0 0.0
        %8795 = vmatprep.subr.mxu0 0.0
        %8796 = vmatpush1.msra.mxu0 0.0
        %8797 = vmatprep.subr.mxu0 0.0
        %8798 = vmatpush1.msra.mxu0 0.0
        %8799 = vmatprep.subr.mxu0 0.0
        %8800 = vmatpush1.msra.mxu0 0.0
        %8801 = vmatprep.subr.mxu0 0.0
        %8802 = vmatpush1.msra.mxu0 0.0
        %8803 = vmatprep.subr.mxu0 0.0
        %8804 = vmatpush1.msra.mxu0 0.0
        %8805 = vmatprep.subr.mxu0 0.0
        %8806 = vmatpush1.msra.mxu0 0.0
        %8807 = vmatprep.subr.mxu0 0.0
        %8808 = vmatpush1.msra.mxu0 0.0
        %8809 = vmatprep.subr.mxu0 0.0
        %8810 = vmatpush1.msra.mxu0 0.0
        %8811 = vmatprep.subr.mxu0 0.0
        %8812 = vmatpush1.msra.mxu0 0.0
        %8813 = vmatprep.subr.mxu0 0.0
        %8814 = vmatpush1.msra.mxu0 0.0
        %8815 = vmatprep.subr.mxu0 0.0
        %8816 = vmatpush1.msra.mxu0 0.0
        %8817 = vmatprep.subr.mxu0 0.0
        %8818 = vmatpush1.msra.mxu0 0.0
        %8819 = vmatprep.subr.mxu0 0.0
        %8820 = vmatpush1.msra.mxu0 0.0
        %8821 = vmatprep.subr.mxu0 0.0
        %8822 = vmatpush1.msra.mxu0 0.0
        %8823 = vmatprep.subr.mxu0 0.0
        %8824 = vmatpush1.msra.mxu0 0.0
        %8825 = vmatprep.subr.mxu0 0.0
        %8826 = vmatpush1.msra.mxu0 0.0
        %8827 = vmatprep.subr.mxu0 0.0
        %8828 = vmatpush1.msra.mxu0 0.0
        %8829 = vmatprep.subr.mxu0 0.0
        %8830 = vmatpush1.msra.mxu0 0.0
        %8831 = vmatprep.subr.mxu0 0.0
        %8832 = vmatpush1.msra.mxu0 0.0
        %8833 = vmatprep.subr.mxu0 0.0
        %8834 = vmatpush1.msra.mxu0 0.0
        %8835 = vmatprep.subr.mxu0 0.0
        %8836 = vmatpush1.msra.mxu0 0.0
        %8837 = vmatprep.subr.mxu0 0.0
        %8838 = vmatpush1.msra.mxu0 0.0
        %8839 = vmatprep.subr.mxu0 0.0
        %8840 = vmatpush1.msra.mxu0 0.0
        %8841 = vmatprep.mubr.f32.mxu0 0.0
        %8842 = vmatmul.mubr.f32.gmra.mrb[0].mxu0 %v8775
        %v8843 = vpop.f32.mrb[0].mxu0
        %v8844 = vadd.f32 %v8772, %v8843
        %v8845 = vpop.f32.mrb[0].mxu0
        %8846 = vdwg.mxu0
        %v8847 = vadd.f32 %v8844, %v8669
        %v8848 = vsel %vm730, %v8847, 0.0
        %8849 = vadd.xlane.f32.xlu0 %v8848
        %v8850 = vpop.xlane.xlu0 %8849
        %v8851 = vmul.f32 %v8850, %v2538
        %v8852 = vsub.f32 %v8847, %v8851
        %v8853 = vmul.f32 %v8852, %v8852
        %v8854 = vsel %vm730, %v8853, 0.0
        %8855 = vadd.xlane.f32.xlu0 %v8854
        %v8856 = vpop.xlane.xlu0 %8855
        %v8857 = vmul.f32 %v8856, %v2538
        %v8858 = vadd.f32 %v8857, 1e-05
        %v8859 = vrsqrt.pop %v8858
        %v8860 = vmul.f32 %v8852, %v8859
        %v8862 = vlaneseq
        %v8863 = vshrl.u32 %v8862, 7
        %v8864 = vsub.s32 0, %v8863
        %v8865 = vrot.slane %v4733, %v8864
        %v8867 = vmul.f32 %v8860, %v8865
        %v8869 = vlaneseq
        %v8870 = vshrl.u32 %v8869, 7
        %v8871 = vsub.s32 0, %v8870
        %v8872 = vrot.slane %v4737, %v8871
        %v8874 = vadd.f32 %v8867, %v8872
        %8875 = vst.msk [vmem:[%s579] sm:$0xff] %vm730, %v8874
        %s8876 = sand.u32 %s428, 1
        %s8877 = scalar_lea.sflag [#allocation3], %s8876
        %s8878 = sand.u32 %s428, 1
        %s8879 = smul.addr %s8878, 8
        %s8880 = scalar_lea.vmem [#allocation2], %s8879
        // Predicated region
        $region93: #{tpu_custom_call.1} parent=91 // pred_check
          %p8881 = pneg %p438
        $region94: #{tpu_custom_call.1} parent=91 // pred_check_branch
          %8883 = sbr.rel (%p8881) target = $region96
        $region95: #{tpu_custom_call.1} parent=91 // pred_region
          %s8885 = ssub.s32 128, 128
          %8886 = vsyncadd %s8877, %s8885
          %s8887 = smul.addr %s32, 128
          %s8888 = scalar_lea.hbm %s18, %s8887
          %s8890 = sshll.u32 %s8880, 4
          %s8891 = int_to_ptr.vmem [resolvable:$true] %s8890
          %8893 = dma.vmem_to_hbm [thread:$0]  %s8891, 128, %s8888, %s8877
        $region96: #{tpu_custom_call.1} parent=91 // pred_fallthru
          _
      $region92: #{tpu_custom_call.1} parent=5 // pred_fallthru
        _
      %p8894 = scmp.le.s32.totalorder 2, %s27
      // Predicated region
      $region97: #{tpu_custom_call.1} parent=5 // pred_check
        %p8895 = pneg %p8894
      $region98: #{tpu_custom_call.1} parent=5 // pred_check_branch
        %8897 = sbr.rel (%p8895) target = $region100
      $region99: #{tpu_custom_call.1} parent=5 // pred_region
        %s8898 = ssub.s32 %s27, 2
        // Predicated region
        $region101: #{tpu_custom_call.1} parent=99 // pred_check
          %p8899 = pneg %p444
        $region102: #{tpu_custom_call.1} parent=99 // pred_check_branch
          %8901 = sbr.rel (%p8899) target = $region104
        $region103: #{tpu_custom_call.1} parent=99 // pred_region
          %s8902 = sand.u32 %s429, 1
          %s8903 = scalar_lea.sflag [#allocation3], %s8902
          %s8904 = sand.u32 %s429, 1
          %s8905 = smul.addr %s8904, 8
          %s8906 = scalar_lea.vmem [#allocation2], %s8905
          %8907 = dma.done %s8903, 128
        $region104: #{tpu_custom_call.1} parent=99 // pred_fallthru
          _
      $region100: #{tpu_custom_call.1} parent=5 // pred_fallthru
        _
    $region6: #{tpu_custom_call.1} parent=1 // loop_footer
      %s31 = sadd.s32 1, %s27
    $region7: #{tpu_custom_call.1} parent=1 // loop_footer_branch
      %26 = sbr.rel target = $region3
    $region8: #{tpu_custom_call.1} parent=1 // loop_exit
      _
    %8908 = vsyncpa [#allocation3], 1
    %s8909 = scalar_lea.sflag [#allocation3], 1
    %8910 = vsyncpa %s8909, 1

</llo_original>
